<compile_context>
chip_gen: v7x
topology: tpu7x:2x2x1
jax: 0.10.0
libtpu: 0.0.40
codegen_flags: <defaults>
</compile_context>

<pallas_src>
import jax
import jax.numpy as jnp
import numpy as np
from jax.experimental import pallas as pl
from jax.experimental.pallas import tpu as pltpu

P_ROWS = 16  # batch rows packed per lane-row; P_ROWS * K = 128 lanes when K = 8


def _sigmoid(t):
    # Single EUP op (tanh) instead of exp + reciprocal.
    return 0.5 * (jnp.tanh(0.5 * t) + 1.0)


def het_vs_sl_kernel(x_ref, w1_ref, b1_ref, w2_ref, b2_ref, w3_ref, b3_ref,
                     w4_ref, b4_ref, bi_ref, seg_ref, out_ref):
    pk = out_ref.shape[-1]                       # P_ROWS * K lanes

    # Fused g/s towers, P_ROWS batch rows packed per lane-row -> 128-lane fill.
    # bf16 MXU operands, f32 accumulation; all elementwise math stays f32.
    x = x_ref[...].astype(jnp.bfloat16)
    h = _sigmoid(jnp.dot(x, w1_ref[...],
                         preferred_element_type=jnp.float32) + b1_ref[...])
    h = _sigmoid(jnp.dot(h.astype(jnp.bfloat16), w2_ref[...],
                         preferred_element_type=jnp.float32) + b2_ref[...])
    h = _sigmoid(jnp.dot(h.astype(jnp.bfloat16), w3_ref[...],
                         preferred_element_type=jnp.float32) + b3_ref[...])

    # Both 1-column heads in one MXU matmul whose output already lands in the
    # lane-dense tail layout: lanes [i*K, (i+1)*K) of the g-half (resp. s-half)
    # hold row i's scalar repeated K times.
    head = jnp.dot(h.astype(jnp.bfloat16), w4_ref[...],
                   preferred_element_type=jnp.float32) + b4_ref[...]
    g = head[:, :pk]                             # (tile_rows, P*K)
    s = 1.0 + jnp.exp(head[:, pk:] / 10.0)       # (tile_rows, P*K)

    # Softmax tail, fully lane-dense (P_ROWS rows x K classes per 128-lane row).
    tmp = (bi_ref[...] - g) / s
    z = -(tmp * tmp)                             # z <= 0 -> exp never overflows,
    e = jnp.exp(z)                               #   so max-subtraction is dropped.
    # Per-K-group sum (broadcast back) as one f32 MXU matmul against a
    # block-diagonal ones matrix; exact normalisation (no approx reciprocal).
    denom = jnp.dot(e, seg_ref[...], preferred_element_type=jnp.float32)
    out_ref[...] = e / denom


def _pick_tile_rows(r_total, target=256, min_steps=2):
    """Packed-row tile: big (256 packed rows == 4096 batch rows) to amortise the
    per-grid-step overhead, but capped so the grid has >= min_steps steps so both
    v7x TensorCores get work."""
    if r_total <= 8:
        return r_total                                      # full dim, always legal
    t = min(target, (r_total // 8) * 8)
    per_step = max(8, (pl.cdiv(r_total, min_steps) // 8) * 8)
    return max(8, min(t, per_step))


def het_vs_sl_forward(x, params, K, *, tile_rows=None):
    """x: (N, d) float32 -> (N, K) float32 class probabilities."""
    (w1g, b1g, w2g, b2g, w3g, b3g, w4g, b4g,
     w1s, b1s, w2s, b2s, w3s, b3s, w4s, b4s, tmp_bi) = params
    N, d = x.shape
    M = w1g.shape[1]
    P = P_ROWS
    f32, bf16 = jnp.float32, jnp.bfloat16

    # ---- one-time parameter packing (tiny, plain XLA) ---------------------------
    eyeP = jnp.eye(P, dtype=f32)

    def bdiag2(a, b):
        m = a.shape[0]
        z = jnp.zeros((m, m), f32)
        return jnp.concatenate([jnp.concatenate([a, z], 1),
                                jnp.concatenate([z, b], 1)], 0)

    # Tower fusion: layer 1 column-concat, layers 2/3 block-diagonal (g | s).
    W1f = jnp.concatenate([w1g, w1s], axis=1)               # (d, 2M)
    W2f = bdiag2(w2g, w2s)                                  # (2M, 2M)
    W3f = bdiag2(w3g, w3s)                                  # (2M, 2M)
    B1f = jnp.concatenate([b1g, b1s])                       # (2M,)
    B2f = jnp.concatenate([b2g, b2s])
    B3f = jnp.concatenate([b3g, b3s])

    # 16x row packing: block-diagonalise the fused weights, tile the biases.
    W1p = jnp.kron(eyeP, W1f).astype(bf16)                  # (P*d,   P*2M)
    W2p = jnp.kron(eyeP, W2f).astype(bf16)                  # (P*2M,  P*2M)
    W3p = jnp.kron(eyeP, W3f).astype(bf16)                  # (P*2M,  P*2M)
    B1p = jnp.tile(B1f, P).reshape(1, P * 2 * M).astype(f32)
    B2p = jnp.tile(B2f, P).reshape(1, P * 2 * M).astype(f32)
    B3p = jnp.tile(B3f, P).reshape(1, P * 2 * M).astype(f32)

    # Heads: (P*2M, 2*P*K) matmul whose g-half / s-half already broadcast each
    # packed row's scalar across its K output lanes.
    zMK = jnp.zeros((M, K), f32)
    Bg = jnp.concatenate([jnp.tile(w4g.reshape(M, 1), (1, K)), zMK], axis=0)  # (2M, K)
    Bs = jnp.concatenate([zMK, jnp.tile(w4s.reshape(M, 1), (1, K))], axis=0)  # (2M, K)
    W4p = jnp.concatenate([jnp.kron(eyeP, Bg), jnp.kron(eyeP, Bs)],
                          axis=1).astype(bf16)              # (P*2M, 2*P*K)
    B4p = jnp.concatenate([jnp.broadcast_to(b4g, (P * K,)),
                           jnp.broadcast_to(b4s, (P * K,))]
                          ).reshape(1, 2 * P * K).astype(f32)

    # bi[k] = sum_{j<k} exp(tmp_bi[j]) (the PyTorch python loop), tiled P times.
    bi = jnp.concatenate([jnp.zeros((1,), f32), jnp.cumsum(jnp.exp(tmp_bi))])
    BIp = jnp.tile(bi, P).reshape(1, P * K).astype(f32)

    # Block-diagonal ones matrix: per-K-group sum with broadcast-back, on the MXU.
    SEG = jnp.kron(eyeP, jnp.ones((K, K), f32))             # (P*K, P*K)

    # ---- batch packing + tiling -------------------------------------------------
    n_pad = pl.cdiv(N, P) * P
    if n_pad != N:
        x = jnp.pad(x, ((0, n_pad - N), (0, 0)))            # rows independent; sliced off
    xp = x.astype(f32).reshape(n_pad // P, P * d)            # free, row-major
    r_total = n_pad // P

    if tile_rows is None:
        tr = _pick_tile_rows(r_total)
    else:
        tr = r_total if tile_rows >= r_total else max(8, (tile_rows // 8) * 8)
        tr = min(tr, r_total)
    grid = (pl.cdiv(r_total, tr),)

    def const(shape):
        return pl.BlockSpec(shape, lambda i: (0, 0))         # VMEM-resident params

    in_specs = [
        pl.BlockSpec((tr, P * d), lambda i: (i, 0)),          # packed x
        const(W1p.shape), const(B1p.shape),
        const(W2p.shape), const(B2p.shape),
        const(W3p.shape), const(B3p.shape),
        const(W4p.shape), const(B4p.shape),
        const(BIp.shape), const(SEG.shape),
    ]
    out_specs = pl.BlockSpec((tr, P * K), lambda i: (i, 0))   # lane-dense output

    # Advisory cost estimate for the XLA scheduler.
    macs = r_total * (P * d * P * 2 * M + 2 * (P * 2 * M) ** 2
                      + P * 2 * M * 2 * P * K + (P * K) ** 2)
    flops = 2 * macs + 12 * n_pad * K
    transcendentals = n_pad * (6 * M + 2 * K)
    bytes_accessed = (n_pad * (d + K) * 4
                      + 2 * (W1p.size + W2p.size + W3p.size + W4p.size)
                      + 4 * (B1p.size + B2p.size + B3p.size + B4p.size
                             + BIp.size + SEG.size))

    out_p = pl.pallas_call(
        het_vs_sl_kernel,
        out_shape=jax.ShapeDtypeStruct((r_total, P * K), f32),
        grid=grid,
        in_specs=in_specs,
        out_specs=out_specs,
        compiler_params=pltpu.CompilerParams(
            dimension_semantics=("parallel",),                # megacore-shard batch
            vmem_limit_bytes=32 * 1024 * 1024,                # safe on v5e/v6e/v7x
        ),
        cost_estimate=pl.CostEstimate(
            flops=flops, transcendentals=transcendentals,
            bytes_accessed=bytes_accessed),
    )(xp, W1p, B1p, W2p, B2p, W3p, B3p, W4p, B4p, BIp, SEG)

    return out_p.reshape(n_pad, K)[:N]                        # free reshape + slice


def init_params(key, d, M, K):
    """Deterministic synthetic init mirroring torch.nn.init.normal_(std=0.1);
    weights stored transposed vs PyTorch, i.e. (in, out), so y = x @ W + b."""
    ks = jax.random.split(key, 16)
    std = 0.1

    def lin(kw, kb, nin, nout):
        return (std * jax.random.normal(kw, (nin, nout), jnp.float32),
                std * jax.random.normal(kb, (nout,), jnp.float32))

    w1g, b1g = lin(ks[0], ks[1], d, M)
    w2g, b2g = lin(ks[2], ks[3], M, M)
    w3g, b3g = lin(ks[4], ks[5], M, M)
    w4g, b4g = lin(ks[6], ks[7], M, 1)
    w1s, b1s = lin(ks[8], ks[9], d, M)
    w2s, b2s = lin(ks[10], ks[11], M, M)
    w3s, b3s = lin(ks[12], ks[13], M, M)
    w4s, b4s = lin(ks[14], ks[15], M, 1)
    tmp_bi = jnp.zeros((K - 1,), jnp.float32)   # nn.Parameter(torch.zeros(K-1))
    return (w1g, b1g, w2g, b2g, w3g, b3g, w4g, b4g,
            w1s, b1s, w2s, b2s, w3s, b3s, w4s, b4s, tmp_bi)


def het_vs_sl_reference(x, params, K):
    """Pure-JAX f32 reference replicating the PyTorch forward exactly."""
    (w1g, b1g, w2g, b2g, w3g, b3g, w4g, b4g,
     w1s, b1s, w2s, b2s, w3s, b3s, w4s, b4s, tmp_bi) = params
    g = jax.nn.sigmoid(x @ w1g + b1g)
    g = jax.nn.sigmoid(g @ w2g + b2g)
    g = jax.nn.sigmoid(g @ w3g + b3g)
    g = g @ w4g + b4g                                    # (N, 1)
    s = jax.nn.sigmoid(x @ w1s + b1s)
    s = jax.nn.sigmoid(s @ w2s + b2s)
    s = jax.nn.sigmoid(s @ w3s + b3s)
    s = 1.0 + jnp.exp((s @ w4s + b4s) / 10.0)            # (N, 1)
    bi = jnp.concatenate([jnp.zeros((1,), jnp.float32),
                          jnp.cumsum(jnp.exp(tmp_bi))])  # (K,)
    tmp = (bi[None, :] - g) / s
    return jax.nn.softmax(-jnp.square(tmp), axis=1)


if __name__ == "__main__":
    d, M, K = 32, 32, 8
    N = 512            # 512 rows -> 32 packed rows -> tile 16 -> grid of 2 steps

    key = jax.random.PRNGKey(0)
    k_params, k_x = jax.random.split(key)
    params = init_params(k_params, d, M, K)
    x = jax.random.normal(k_x, (N, d), jnp.float32)

    fwd = jax.jit(lambda x_, p_: het_vs_sl_forward(x_, p_, K))
    out = jax.block_until_ready(fwd(x, params))

    ref = het_vs_sl_reference(x, params, K)

    # bf16 MXU operands -> relaxed elementwise tolerance vs the f32 reference.
    np.testing.assert_allclose(np.asarray(out), np.asarray(ref), rtol=5e-2, atol=1e-2)
    assert out.shape == (N, K)
    # Normalisation is exact (f32 segmented-sum matmul, real divide) up to matmul
    # rounding: rows of the softmax must sum to ~1.
    np.testing.assert_allclose(np.asarray(out).sum(axis=1), np.ones(N), rtol=0, atol=5e-3)

    print("KERNEL_OK")
</pallas_src>

<mosaic_0001>
module attributes {stable_mosaic.version = 11 : i64} {
  func.func @het_vs_sl_kernel(%arg0: i32, %arg1: memref<16x512xf32, #tpu.memory_space<vmem>>, %arg2: memref<512x1024xbf16, #tpu.memory_space<vmem>>, %arg3: memref<1x1024xf32, #tpu.memory_space<vmem>>, %arg4: memref<1024x1024xbf16, #tpu.memory_space<vmem>>, %arg5: memref<1x1024xf32, #tpu.memory_space<vmem>>, %arg6: memref<1024x1024xbf16, #tpu.memory_space<vmem>>, %arg7: memref<1x1024xf32, #tpu.memory_space<vmem>>, %arg8: memref<1024x256xbf16, #tpu.memory_space<vmem>>, %arg9: memref<1x256xf32, #tpu.memory_space<vmem>>, %arg10: memref<1x128xf32, #tpu.memory_space<vmem>>, %arg11: memref<128x128xf32, #tpu.memory_space<vmem>>, %arg12: memref<16x128xf32, #tpu.memory_space<vmem>>) attributes {dimension_semantics = [#tpu.dimension_semantics<parallel>], iteration_bounds = array<i64: 2>, scalar_prefetch = 0 : i64, scratch_operands = 0 : i64, tpu.core_type = #tpu.core_type<tc>, window_params = [{transform_indices = @transform_0, window_bounds = array<i64: 16, 512>}, {pipeline_mode = #tpu.pipeline_mode<synchronous>, transform_indices = @transform_1, window_bounds = array<i64: 512, 1024>}, {pipeline_mode = #tpu.pipeline_mode<synchronous>, transform_indices = @transform_2, window_bounds = array<i64: 1, 1024>}, {pipeline_mode = #tpu.pipeline_mode<synchronous>, transform_indices = @transform_3, window_bounds = array<i64: 1024, 1024>}, {pipeline_mode = #tpu.pipeline_mode<synchronous>, transform_indices = @transform_4, window_bounds = array<i64: 1, 1024>}, {pipeline_mode = #tpu.pipeline_mode<synchronous>, transform_indices = @transform_5, window_bounds = array<i64: 1024, 1024>}, {pipeline_mode = #tpu.pipeline_mode<synchronous>, transform_indices = @transform_6, window_bounds = array<i64: 1, 1024>}, {pipeline_mode = #tpu.pipeline_mode<synchronous>, transform_indices = @transform_7, window_bounds = array<i64: 1024, 256>}, {pipeline_mode = #tpu.pipeline_mode<synchronous>, transform_indices = @transform_8, window_bounds = array<i64: 1, 256>}, {pipeline_mode = #tpu.pipeline_mode<synchronous>, transform_indices = @transform_9, window_bounds = array<i64: 1, 128>}, {pipeline_mode = #tpu.pipeline_mode<synchronous>, transform_indices = @transform_10, window_bounds = array<i64: 128, 128>}, {transform_indices = @transform_11, window_bounds = array<i64: 16, 128>}]} {
    %c0 = arith.constant 0 : index
    %c0_0 = arith.constant 0 : index
    %0 = vector.load %arg1[%c0, %c0_0] : memref<16x512xf32, #tpu.memory_space<vmem>>, vector<16x512xf32>
    %1 = arith.truncf %0 : vector<16x512xf32> to vector<16x512xbf16>
    %c0_1 = arith.constant 0 : index
    %c0_2 = arith.constant 0 : index
    %2 = vector.load %arg2[%c0_1, %c0_2] : memref<512x1024xbf16, #tpu.memory_space<vmem>>, vector<512x1024xbf16>
    %cst = arith.constant dense<0.000000e+00> : vector<16x1024xf32>
    %3 = tpu.matmul %1, %2, %cst {dimension_numbers = #tpu.dot_dimension_numbers<[1], [0], [0], [1], [0, 0, 1, 1], [], []>} : vector<16x512xbf16>, vector<512x1024xbf16>, vector<16x1024xf32> -> vector<16x1024xf32>
    %c0_3 = arith.constant 0 : index
    %c0_4 = arith.constant 0 : index
    %4 = vector.load %arg3[%c0_3, %c0_4] : memref<1x1024xf32, #tpu.memory_space<vmem>>, vector<1x1024xf32>
    %5 = vector.broadcast %4 : vector<1x1024xf32> to vector<16x1024xf32>
    %6 = arith.addf %3, %5 : vector<16x1024xf32>
    %cst_5 = arith.constant 5.000000e-01 : f32
    %7 = vector.broadcast %cst_5 : f32 to vector<16x1024xf32>
    %8 = arith.mulf %7, %6 : vector<16x1024xf32>
    %9 = math.tanh %8 : vector<16x1024xf32>
    %cst_6 = arith.constant 1.000000e+00 : f32
    %10 = vector.broadcast %cst_6 : f32 to vector<16x1024xf32>
    %11 = arith.addf %9, %10 : vector<16x1024xf32>
    %cst_7 = arith.constant 5.000000e-01 : f32
    %12 = vector.broadcast %cst_7 : f32 to vector<16x1024xf32>
    %13 = arith.mulf %12, %11 : vector<16x1024xf32>
    %14 = arith.truncf %13 : vector<16x1024xf32> to vector<16x1024xbf16>
    %c0_8 = arith.constant 0 : index
    %c0_9 = arith.constant 0 : index
    %15 = vector.load %arg4[%c0_8, %c0_9] : memref<1024x1024xbf16, #tpu.memory_space<vmem>>, vector<1024x1024xbf16>
    %cst_10 = arith.constant dense<0.000000e+00> : vector<16x1024xf32>
    %16 = tpu.matmul %14, %15, %cst_10 {dimension_numbers = #tpu.dot_dimension_numbers<[1], [0], [0], [1], [0, 0, 1, 1], [], []>} : vector<16x1024xbf16>, vector<1024x1024xbf16>, vector<16x1024xf32> -> vector<16x1024xf32>
    %c0_11 = arith.constant 0 : index
    %c0_12 = arith.constant 0 : index
    %17 = vector.load %arg5[%c0_11, %c0_12] : memref<1x1024xf32, #tpu.memory_space<vmem>>, vector<1x1024xf32>
    %18 = vector.broadcast %17 : vector<1x1024xf32> to vector<16x1024xf32>
    %19 = arith.addf %16, %18 : vector<16x1024xf32>
    %cst_13 = arith.constant 5.000000e-01 : f32
    %20 = vector.broadcast %cst_13 : f32 to vector<16x1024xf32>
    %21 = arith.mulf %20, %19 : vector<16x1024xf32>
    %22 = math.tanh %21 : vector<16x1024xf32>
    %cst_14 = arith.constant 1.000000e+00 : f32
    %23 = vector.broadcast %cst_14 : f32 to vector<16x1024xf32>
    %24 = arith.addf %22, %23 : vector<16x1024xf32>
    %cst_15 = arith.constant 5.000000e-01 : f32
    %25 = vector.broadcast %cst_15 : f32 to vector<16x1024xf32>
    %26 = arith.mulf %25, %24 : vector<16x1024xf32>
    %27 = arith.truncf %26 : vector<16x1024xf32> to vector<16x1024xbf16>
    %c0_16 = arith.constant 0 : index
    %c0_17 = arith.constant 0 : index
    %28 = vector.load %arg6[%c0_16, %c0_17] : memref<1024x1024xbf16, #tpu.memory_space<vmem>>, vector<1024x1024xbf16>
    %cst_18 = arith.constant dense<0.000000e+00> : vector<16x1024xf32>
    %29 = tpu.matmul %27, %28, %cst_18 {dimension_numbers = #tpu.dot_dimension_numbers<[1], [0], [0], [1], [0, 0, 1, 1], [], []>} : vector<16x1024xbf16>, vector<1024x1024xbf16>, vector<16x1024xf32> -> vector<16x1024xf32>
    %c0_19 = arith.constant 0 : index
    %c0_20 = arith.constant 0 : index
    %30 = vector.load %arg7[%c0_19, %c0_20] : memref<1x1024xf32, #tpu.memory_space<vmem>>, vector<1x1024xf32>
    %31 = vector.broadcast %30 : vector<1x1024xf32> to vector<16x1024xf32>
    %32 = arith.addf %29, %31 : vector<16x1024xf32>
    %cst_21 = arith.constant 5.000000e-01 : f32
    %33 = vector.broadcast %cst_21 : f32 to vector<16x1024xf32>
    %34 = arith.mulf %33, %32 : vector<16x1024xf32>
    %35 = math.tanh %34 : vector<16x1024xf32>
    %cst_22 = arith.constant 1.000000e+00 : f32
    %36 = vector.broadcast %cst_22 : f32 to vector<16x1024xf32>
    %37 = arith.addf %35, %36 : vector<16x1024xf32>
    %cst_23 = arith.constant 5.000000e-01 : f32
    %38 = vector.broadcast %cst_23 : f32 to vector<16x1024xf32>
    %39 = arith.mulf %38, %37 : vector<16x1024xf32>
    %40 = arith.truncf %39 : vector<16x1024xf32> to vector<16x1024xbf16>
    %c0_24 = arith.constant 0 : index
    %c0_25 = arith.constant 0 : index
    %41 = vector.load %arg8[%c0_24, %c0_25] : memref<1024x256xbf16, #tpu.memory_space<vmem>>, vector<1024x256xbf16>
    %cst_26 = arith.constant dense<0.000000e+00> : vector<16x256xf32>
    %42 = tpu.matmul %40, %41, %cst_26 {dimension_numbers = #tpu.dot_dimension_numbers<[1], [0], [0], [1], [0, 0, 1, 1], [], []>} : vector<16x1024xbf16>, vector<1024x256xbf16>, vector<16x256xf32> -> vector<16x256xf32>
    %c0_27 = arith.constant 0 : index
    %c0_28 = arith.constant 0 : index
    %43 = vector.load %arg9[%c0_27, %c0_28] : memref<1x256xf32, #tpu.memory_space<vmem>>, vector<1x256xf32>
    %44 = vector.broadcast %43 : vector<1x256xf32> to vector<16x256xf32>
    %45 = arith.addf %42, %44 : vector<16x256xf32>
    %46 = vector.extract_strided_slice %45 {offsets = [0, 0], sizes = [16, 128], strides = [1, 1]} : vector<16x256xf32> to vector<16x128xf32>
    %47 = vector.extract_strided_slice %45 {offsets = [0, 128], sizes = [16, 128], strides = [1, 1]} : vector<16x256xf32> to vector<16x128xf32>
    %cst_29 = arith.constant 1.000000e+01 : f32
    %48 = vector.broadcast %cst_29 : f32 to vector<16x128xf32>
    %49 = arith.divf %47, %48 : vector<16x128xf32>
    %50 = math.exp %49 : vector<16x128xf32>
    %cst_30 = arith.constant 1.000000e+00 : f32
    %51 = vector.broadcast %cst_30 : f32 to vector<16x128xf32>
    %52 = arith.addf %51, %50 : vector<16x128xf32>
    %c0_31 = arith.constant 0 : index
    %c0_32 = arith.constant 0 : index
    %53 = vector.load %arg10[%c0_31, %c0_32] : memref<1x128xf32, #tpu.memory_space<vmem>>, vector<1x128xf32>
    %54 = vector.broadcast %53 : vector<1x128xf32> to vector<16x128xf32>
    %55 = arith.subf %54, %46 : vector<16x128xf32>
    %56 = arith.divf %55, %52 : vector<16x128xf32>
    %57 = arith.mulf %56, %56 : vector<16x128xf32>
    %cst_33 = arith.constant 0.000000e+00 : f32
    %58 = vector.broadcast %cst_33 : f32 to vector<16x128xf32>
    %59 = arith.subf %58, %57 : vector<16x128xf32>
    %60 = math.exp %59 : vector<16x128xf32>
    %c0_34 = arith.constant 0 : index
    %c0_35 = arith.constant 0 : index
    %61 = vector.load %arg11[%c0_34, %c0_35] : memref<128x128xf32, #tpu.memory_space<vmem>>, vector<128x128xf32>
    %cst_36 = arith.constant dense<0.000000e+00> : vector<16x128xf32>
    %62 = tpu.matmul %60, %61, %cst_36 {dimension_numbers = #tpu.dot_dimension_numbers<[1], [0], [0], [1], [0, 0, 1, 1], [], []>} : vector<16x128xf32>, vector<128x128xf32>, vector<16x128xf32> -> vector<16x128xf32>
    %63 = arith.divf %60, %62 : vector<16x128xf32>
    %c0_37 = arith.constant 0 : index
    %c0_38 = arith.constant 0 : index
    %64 = vector.load %arg12[%c0_37, %c0_38] : memref<16x128xf32, #tpu.memory_space<vmem>>, vector<16x128xf32>
    tpu.vector_store %arg12[%c0_37, %c0_38], %63 {strides = array<i32>} : memref<16x128xf32, #tpu.memory_space<vmem>>, vector<16x128xf32>,
    return
  }
  func.func @transform_0(%arg0: i32) -> (i32, i32) {
    %c0_i32 = arith.constant 0 : i32
    %c0_i32_0 = arith.constant 0 : i32
    return %arg0, %c0_i32 : i32, i32
  }
  func.func @transform_1(%arg0: i32) -> (i32, i32) {
    %c0_i32 = arith.constant 0 : i32
    %c0_i32_0 = arith.constant 0 : i32
    %c0_i32_1 = arith.constant 0 : i32
    return %c0_i32, %c0_i32_0 : i32, i32
  }
  func.func @transform_2(%arg0: i32) -> (i32, i32) {
    %c0_i32 = arith.constant 0 : i32
    %c0_i32_0 = arith.constant 0 : i32
    %c0_i32_1 = arith.constant 0 : i32
    return %c0_i32, %c0_i32_0 : i32, i32
  }
  func.func @transform_3(%arg0: i32) -> (i32, i32) {
    %c0_i32 = arith.constant 0 : i32
    %c0_i32_0 = arith.constant 0 : i32
    %c0_i32_1 = arith.constant 0 : i32
    return %c0_i32, %c0_i32_0 : i32, i32
  }
  func.func @transform_4(%arg0: i32) -> (i32, i32) {
    %c0_i32 = arith.constant 0 : i32
    %c0_i32_0 = arith.constant 0 : i32
    %c0_i32_1 = arith.constant 0 : i32
    return %c0_i32, %c0_i32_0 : i32, i32
  }
  func.func @transform_5(%arg0: i32) -> (i32, i32) {
    %c0_i32 = arith.constant 0 : i32
    %c0_i32_0 = arith.constant 0 : i32
    %c0_i32_1 = arith.constant 0 : i32
    return %c0_i32, %c0_i32_0 : i32, i32
  }
  func.func @transform_6(%arg0: i32) -> (i32, i32) {
    %c0_i32 = arith.constant 0 : i32
    %c0_i32_0 = arith.constant 0 : i32
    %c0_i32_1 = arith.constant 0 : i32
    return %c0_i32, %c0_i32_0 : i32, i32
  }
  func.func @transform_7(%arg0: i32) -> (i32, i32) {
    %c0_i32 = arith.constant 0 : i32
    %c0_i32_0 = arith.constant 0 : i32
    %c0_i32_1 = arith.constant 0 : i32
    return %c0_i32, %c0_i32_0 : i32, i32
  }
  func.func @transform_8(%arg0: i32) -> (i32, i32) {
    %c0_i32 = arith.constant 0 : i32
    %c0_i32_0 = arith.constant 0 : i32
    %c0_i32_1 = arith.constant 0 : i32
    return %c0_i32, %c0_i32_0 : i32, i32
  }
  func.func @transform_9(%arg0: i32) -> (i32, i32) {
    %c0_i32 = arith.constant 0 : i32
    %c0_i32_0 = arith.constant 0 : i32
    %c0_i32_1 = arith.constant 0 : i32
    return %c0_i32, %c0_i32_0 : i32, i32
  }
  func.func @transform_10(%arg0: i32) -> (i32, i32) {
    %c0_i32 = arith.constant 0 : i32
    %c0_i32_0 = arith.constant 0 : i32
    %c0_i32_1 = arith.constant 0 : i32
    return %c0_i32, %c0_i32_0 : i32, i32
  }
  func.func @transform_11(%arg0: i32) -> (i32, i32) {
    %c0_i32 = arith.constant 0 : i32
    %c0_i32_0 = arith.constant 0 : i32
    return %arg0, %c0_i32 : i32, i32
  }
}

</mosaic_0001>

<llo_original>
// kernel: tile.34
$region0: #{tile.34}
  %s0 = inlined_call_operand.vmem [shape: f32[16,64], index: 0, kind: input, shape index: {}]
  %s1 = inlined_call_operand.vmem [shape: f32[1,1024], index: 1, kind: output, shape index: {}]
  $region1: #{tile.34} parent=0
    #allocation0 [shape = 'u8[32768]{0}', space=vmem, size = 0x8000, scoped, tag = 'scoped mem for output reshape']
    %v2 = vld [vmem:[%s0] ss:$2 sm:$0xff]
    %vm3 = vcmask 523264
    %4 = vst.msk [vmem:[#allocation0] ss:$8 sm:$0xf] %vm3, %v2
    %5 = vst.msk [vmem:[#allocation0] ss:$8 sm:$0xf0] %vm3, %v2
    %s6 = scalar_lea.vmem %s0, 1
    %v7 = vld [vmem:[%s6] ss:$2 sm:$0xff]
    %8 = vrot.lane.b32.xlu0 %v7, 64
    %v9 = vpop.permute.xlu0 %8
    %vm10 = vcmask 1048064
    %11 = vst.msk [vmem:[#allocation0] ss:$8 sm:$0xf] %vm10, %v9
    %12 = vst.msk [vmem:[#allocation0] ss:$8 sm:$0xf0] %vm10, %v9
    %s14 = sshllo.u32 0, 1
    %v16 = vld [vmem:[#allocation0] sm:%s14]
    %s17 = sshllo.u32 0, 1
    %18 = vst [vmem:[%s1] sm:%s17] %v16
    %s19 = scalar_lea.vmem [#allocation0], 8
    %v20 = vld [vmem:[%s19] sm:%s14]
    %s21 = sshllo.u32 0, 1
    %s22 = scalar_lea.vmem %s1, 1
    %23 = vst [vmem:[%s22] sm:%s21] %v20
    %s24 = scalar_lea.vmem [#allocation0], 16
    %v25 = vld [vmem:[%s24] sm:%s14]
    %s26 = sshllo.u32 0, 1
    %s27 = smul.addr 1, 2
    %s28 = scalar_lea.vmem %s1, %s27
    %29 = vst [vmem:[%s28] sm:%s26] %v25
    %s30 = scalar_lea.vmem [#allocation0], 24
    %v31 = vld [vmem:[%s30] sm:%s14]
    %s32 = sshllo.u32 0, 1
    %s33 = smul.addr 1, 3
    %s34 = scalar_lea.vmem %s1, %s33
    %35 = vst [vmem:[%s34] sm:%s32] %v31
    %s36 = scalar_lea.vmem [#allocation0], 32
    %v37 = vld [vmem:[%s36] sm:%s14]
    %s38 = sshllo.u32 0, 1
    %s39 = smul.addr 1, 4
    %s40 = scalar_lea.vmem %s1, %s39
    %41 = vst [vmem:[%s40] sm:%s38] %v37
    %s42 = scalar_lea.vmem [#allocation0], 40
    %v43 = vld [vmem:[%s42] sm:%s14]
    %s44 = sshllo.u32 0, 1
    %s45 = smul.addr 1, 5
    %s46 = scalar_lea.vmem %s1, %s45
    %47 = vst [vmem:[%s46] sm:%s44] %v43
    %s48 = scalar_lea.vmem [#allocation0], 48
    %v49 = vld [vmem:[%s48] sm:%s14]
    %s50 = sshllo.u32 0, 1
    %s51 = smul.addr 1, 6
    %s52 = scalar_lea.vmem %s1, %s51
    %53 = vst [vmem:[%s52] sm:%s50] %v49
    %s54 = scalar_lea.vmem [#allocation0], 56
    %v55 = vld [vmem:[%s54] sm:%s14]
    %s56 = sshllo.u32 0, 1
    %s57 = smul.addr 1, 7
    %s58 = scalar_lea.vmem %s1, %s57
    %59 = vst [vmem:[%s58] sm:%s56] %v55

// kernel: tile.58
$region0: #{tile.58}
  #allocation0 [shape = 's32[1]{0}', space=sflag, size = 0x4, scoped, tag = 'scoped memory for tile.58']
  %s0 = inlined_call_operand.vmem [shape: f32[8], index: 0, kind: input, shape index: {}]
  %s1 = inlined_call_operand.vmem [shape: f32[16,8], index: 1, kind: output, shape index: {}]
  // Predicated region
  $region2: #{tile.58} parent=0 // pred_check
    _
  $region3: #{tile.58} parent=0 // pred_check_branch
    %3 = sbr.rel (0) target = $region5
  $region4: #{tile.58} parent=0 // pred_region
    _
  $region5: #{tile.58} parent=0 // pred_fallthru
    _
  %v4 = vld [vmem:[%s0] ss:$0 sm:$0xff]
  %5 = vst [vmem:[%s1] sm:$0xff] %v4
  %s6 = scalar_lea.vmem %s1, 8
  %7 = vst [vmem:[%s6] sm:$0xff] %v4

// kernel: tile.59
$region0: #{tile.59}
  %s0 = inlined_call_operand.vmem [shape: f32[16,8], index: 0, kind: input, shape index: {}]
  %s1 = inlined_call_operand.vmem [shape: f32[1,128], index: 1, kind: output, shape index: {}]
  $region1: #{tile.59} parent=0
    #allocation0 [shape = 'u8[4096]{0}', space=vmem, size = 0x1000, scoped, tag = 'scoped mem for output reshape']
    %v2 = vld [vmem:[%s0] sm:$0x1]
    %vm3 = vcmask 64512
    %4 = vst.msk [vmem:[#allocation0] sm:$0x1] %vm3, %v2
    %s5 = scalar_lea.vmem %s0, 15
    %v6 = vld [vmem:[%s5] sm:$0x1]
    %7 = vrot.lane.b32.xlu0 %v6, 120
    %v8 = vpop.permute.xlu0 %7
    %vm9 = vcmask 1048512
    %10 = vst.msk [vmem:[#allocation0] sm:$0x1] %vm9, %v8
    %s11 = scalar_lea.vmem %s0, 14
    %v12 = vld [vmem:[%s11] sm:$0x1]
    %13 = vrot.lane.b32.xlu0 %v12, 112
    %v14 = vpop.permute.xlu0 %13
    %vm15 = vcmask 982912
    %16 = vst.msk [vmem:[#allocation0] sm:$0x1] %vm15, %v14
    %s17 = scalar_lea.vmem %s0, 13
    %v18 = vld [vmem:[%s17] sm:$0x1]
    %19 = vrot.lane.b32.xlu0 %v18, 104
    %v20 = vpop.permute.xlu0 %19
    %vm21 = vcmask 917312
    %22 = vst.msk [vmem:[#allocation0] sm:$0x1] %vm21, %v20
    %s23 = scalar_lea.vmem %s0, 12
    %v24 = vld [vmem:[%s23] sm:$0x1]
    %25 = vrot.lane.b32.xlu0 %v24, 96
    %v26 = vpop.permute.xlu0 %25
    %vm27 = vcmask 851712
    %28 = vst.msk [vmem:[#allocation0] sm:$0x1] %vm27, %v26
    %s29 = scalar_lea.vmem %s0, 11
    %v30 = vld [vmem:[%s29] sm:$0x1]
    %31 = vrot.lane.b32.xlu0 %v30, 88
    %v32 = vpop.permute.xlu0 %31
    %vm33 = vcmask 786112
    %34 = vst.msk [vmem:[#allocation0] sm:$0x1] %vm33, %v32
    %s35 = scalar_lea.vmem %s0, 10
    %v36 = vld [vmem:[%s35] sm:$0x1]
    %37 = vrot.lane.b32.xlu0 %v36, 80
    %v38 = vpop.permute.xlu0 %37
    %vm39 = vcmask 720512
    %40 = vst.msk [vmem:[#allocation0] sm:$0x1] %vm39, %v38
    %s41 = scalar_lea.vmem %s0, 9
    %v42 = vld [vmem:[%s41] sm:$0x1]
    %43 = vrot.lane.b32.xlu0 %v42, 72
    %v44 = vpop.permute.xlu0 %43
    %vm45 = vcmask 654912
    %46 = vst.msk [vmem:[#allocation0] sm:$0x1] %vm45, %v44
    %s47 = scalar_lea.vmem %s0, 8
    %v48 = vld [vmem:[%s47] sm:$0x1]
    %49 = vrot.lane.b32.xlu0 %v48, 64
    %v50 = vpop.permute.xlu0 %49
    %vm51 = vcmask 589312
    %52 = vst.msk [vmem:[#allocation0] sm:$0x1] %vm51, %v50
    %s53 = scalar_lea.vmem %s0, 7
    %v54 = vld [vmem:[%s53] sm:$0x1]
    %55 = vrot.lane.b32.xlu0 %v54, 56
    %v56 = vpop.permute.xlu0 %55
    %vm57 = vcmask 523712
    %58 = vst.msk [vmem:[#allocation0] sm:$0x1] %vm57, %v56
    %s59 = scalar_lea.vmem %s0, 6
    %v60 = vld [vmem:[%s59] sm:$0x1]
    %61 = vrot.lane.b32.xlu0 %v60, 48
    %v62 = vpop.permute.xlu0 %61
    %vm63 = vcmask 458112
    %64 = vst.msk [vmem:[#allocation0] sm:$0x1] %vm63, %v62
    %s65 = scalar_lea.vmem %s0, 5
    %v66 = vld [vmem:[%s65] sm:$0x1]
    %67 = vrot.lane.b32.xlu0 %v66, 40
    %v68 = vpop.permute.xlu0 %67
    %vm69 = vcmask 392512
    %70 = vst.msk [vmem:[#allocation0] sm:$0x1] %vm69, %v68
    %s71 = scalar_lea.vmem %s0, 4
    %v72 = vld [vmem:[%s71] sm:$0x1]
    %73 = vrot.lane.b32.xlu0 %v72, 32
    %v74 = vpop.permute.xlu0 %73
    %vm75 = vcmask 326912
    %76 = vst.msk [vmem:[#allocation0] sm:$0x1] %vm75, %v74
    %s77 = scalar_lea.vmem %s0, 3
    %v78 = vld [vmem:[%s77] sm:$0x1]
    %79 = vrot.lane.b32.xlu0 %v78, 24
    %v80 = vpop.permute.xlu0 %79
    %vm81 = vcmask 261312
    %82 = vst.msk [vmem:[#allocation0] sm:$0x1] %vm81, %v80
    %s83 = scalar_lea.vmem %s0, 2
    %v84 = vld [vmem:[%s83] sm:$0x1]
    %85 = vrot.lane.b32.xlu0 %v84, 16
    %v86 = vpop.permute.xlu0 %85
    %vm87 = vcmask 195712
    %88 = vst.msk [vmem:[#allocation0] sm:$0x1] %vm87, %v86
    %s89 = scalar_lea.vmem %s0, 1
    %v90 = vld [vmem:[%s89] sm:$0x1]
    %91 = vrot.lane.b32.xlu0 %v90, 8
    %v92 = vpop.permute.xlu0 %91
    %vm93 = vcmask 130112
    %94 = vst.msk [vmem:[#allocation0] sm:$0x1] %vm93, %v92
    %s96 = sshllo.u32 0, 1
    %v98 = vld [vmem:[#allocation0] sm:%s96]
    %s99 = sshllo.u32 0, 1
    %100 = vst [vmem:[%s1] sm:%s99] %v98

// kernel: _lambda_.1
$region0: #{_lambda_.1}
  #allocation0 [shape = 'u32[]', space=smem, size = 0x4, offset = 0x4, fixed_abs, tag = 'smem constant byte address 0x4 - core index']
  #allocation1 [shape = 'u32[144,128]{1,0:T(1,128)}', space=vmem, size = 0x12000, scoped, tag = 'internal scratch']
  %s0 = inlined_call_operand.vmem [shape: f32[32,512], index: 0, kind: input, shape index: {}]
  %s1 = inlined_call_operand.vmem [shape: bf16[512,1024], index: 1, kind: input, shape index: {}]
  %s2 = inlined_call_operand.vmem [shape: f32[1,1024], index: 2, kind: input, shape index: {}]
  %s3 = inlined_call_operand.vmem [shape: bf16[1024,1024], index: 3, kind: input, shape index: {}]
  %s4 = inlined_call_operand.vmem [shape: f32[1,1024], index: 4, kind: input, shape index: {}]
  %s5 = inlined_call_operand.vmem [shape: bf16[1024,1024], index: 5, kind: input, shape index: {}]
  %s6 = inlined_call_operand.vmem [shape: f32[1,1024], index: 6, kind: input, shape index: {}]
  %s7 = inlined_call_operand.vmem [shape: bf16[1024,256], index: 7, kind: input, shape index: {}]
  %s8 = inlined_call_operand.vmem [shape: f32[1,256], index: 8, kind: input, shape index: {}]
  %s9 = inlined_call_operand.vmem [shape: f32[1,128], index: 9, kind: input, shape index: {}]
  %s10 = inlined_call_operand.vmem [shape: f32[128,128], index: 10, kind: input, shape index: {}]
  %s11 = inlined_call_operand.vmem [shape: f32[32,128], index: 11, kind: output, shape index: {}]
  %s12 = sld [smem:[#allocation0]]
  $region77: #{_lambda_.1} parent=0
    _
  %s14 = ssub.s32 1, %s12
  %s15 = scalar_select 0, %s14, %s12
  loop: start=0, step=1, limit=4
  $region2: #{_lambda_.1} parent=0 // loop_pre_header
    _
  $region3: #{_lambda_.1} parent=0 // loop_header
    %s17 = sphi 0, %s21
    %p18 = scmp.ge.s32.totalorder %s17, 4
    %s27 = sphi 0, %s29
    %s30 = sphi 0, %s27
    %s31 = sphi 0, %s30
    %s47 = sphi 0, %s31
    %s51 = sphi 0, %s51
    %s53 = sphi 0, %s51
    %s54 = sphi 0, %s53
    %s68 = sphi 0, %s54
    %s72 = sphi 0, %s72
    %s74 = sphi 0, %s72
    %s75 = sphi 0, %s74
    %s89 = sphi 0, %s75
    %s93 = sphi 0, %s93
    %s95 = sphi 0, %s93
    %s96 = sphi 0, %s95
    %s110 = sphi 0, %s96
    %s114 = sphi 0, %s114
    %s116 = sphi 0, %s114
    %s117 = sphi 0, %s116
    %s131 = sphi 0, %s117
    %s135 = sphi 0, %s135
    %s137 = sphi 0, %s135
    %s138 = sphi 0, %s137
    %s152 = sphi 0, %s138
    %s156 = sphi 0, %s156
    %s158 = sphi 0, %s156
    %s159 = sphi 0, %s158
    %s173 = sphi 0, %s159
    %s177 = sphi 0, %s177
    %s179 = sphi 0, %s177
    %s180 = sphi 0, %s179
    %s194 = sphi 0, %s180
    %s198 = sphi 0, %s198
    %s200 = sphi 0, %s198
    %s201 = sphi 0, %s200
    %s215 = sphi 0, %s201
    %s219 = sphi 0, %s219
    %s221 = sphi 0, %s219
    %s222 = sphi 0, %s221
    %s236 = sphi 0, %s222
    %s240 = sphi 0, %s240
    %s242 = sphi 0, %s240
    %s243 = sphi 0, %s242
    %s257 = sphi 0, %s243
    %s263 = sphi 0, %s265
    %s266 = sphi 0, %s263
    %s267 = sphi 0, %s266
    %s283 = sphi 0, %s267
  $region4: #{_lambda_.1} parent=0 // loop_header_branch
    %20 = sbr.rel (%p18) target = $region8
  $region5: #{_lambda_.1} parent=0 // loop_body
    %s22 = ssub.s32 %s17, 1
    %s23 = ssub.s32 %s17, 2
    %s24 = sadd.s32 %s17, 1
    %s25 = ssub.s32 %s17, %s24
    %p26 = scmp.eq.s32.totalorder %s25, 0
    %s28 = sadd.s32 %s27, 1
    %s29 = scalar_select %p26, %s27, %s28
    %p32 = pneg %p26
    %p33 = scmp.eq.s32.totalorder %s17, 1
    %p34 = por %p32, %p33
    %p35 = scmp.ne.s32.totalorder %s27, %s30
    %p36 = scmp.eq.s32.totalorder %s17, 0
    %p37 = por %p35, %p36
    %p38 = scmp.ne.s32.totalorder %s27, %s30
    %p39 = scmp.eq.s32.totalorder %s22, 1
    %p40 = por %p38, %p39
    %p41 = scmp.ne.s32.totalorder %s30, %s31
    %p42 = scmp.eq.s32.totalorder %s22, 0
    %p43 = por %p41, %p42
    %p44 = scmp.ne.s32.totalorder %s30, %s31
    %p45 = scmp.eq.s32.totalorder %s23, 1
    %p46 = por %p44, %p45
    %p48 = scmp.ne.s32.totalorder %s31, %s47
    %p49 = scmp.eq.s32.totalorder %s23, 0
    %p50 = por %p48, %p49
    %s52 = sadd.s32 %s51, 1
    %p55 = scmp.eq.s32.totalorder %s17, 1
    %p56 = scmp.ne.s32.totalorder %s51, %s53
    %p57 = scmp.eq.s32.totalorder %s17, 0
    %p58 = por %p56, %p57
    %p59 = scmp.ne.s32.totalorder %s51, %s53
    %p60 = scmp.eq.s32.totalorder %s22, 1
    %p61 = por %p59, %p60
    %p62 = scmp.ne.s32.totalorder %s53, %s54
    %p63 = scmp.eq.s32.totalorder %s22, 0
    %p64 = por %p62, %p63
    %p65 = scmp.ne.s32.totalorder %s53, %s54
    %p66 = scmp.eq.s32.totalorder %s23, 1
    %p67 = por %p65, %p66
    %p69 = scmp.ne.s32.totalorder %s54, %s68
    %p70 = scmp.eq.s32.totalorder %s23, 0
    %p71 = por %p69, %p70
    %s73 = sadd.s32 %s72, 1
    %p76 = scmp.eq.s32.totalorder %s17, 1
    %p77 = scmp.ne.s32.totalorder %s72, %s74
    %p78 = scmp.eq.s32.totalorder %s17, 0
    %p79 = por %p77, %p78
    %p80 = scmp.ne.s32.totalorder %s72, %s74
    %p81 = scmp.eq.s32.totalorder %s22, 1
    %p82 = por %p80, %p81
    %p83 = scmp.ne.s32.totalorder %s74, %s75
    %p84 = scmp.eq.s32.totalorder %s22, 0
    %p85 = por %p83, %p84
    %p86 = scmp.ne.s32.totalorder %s74, %s75
    %p87 = scmp.eq.s32.totalorder %s23, 1
    %p88 = por %p86, %p87
    %p90 = scmp.ne.s32.totalorder %s75, %s89
    %p91 = scmp.eq.s32.totalorder %s23, 0
    %p92 = por %p90, %p91
    %s94 = sadd.s32 %s93, 1
    %p97 = scmp.eq.s32.totalorder %s17, 1
    %p98 = scmp.ne.s32.totalorder %s93, %s95
    %p99 = scmp.eq.s32.totalorder %s17, 0
    %p100 = por %p98, %p99
    %p101 = scmp.ne.s32.totalorder %s93, %s95
    %p102 = scmp.eq.s32.totalorder %s22, 1
    %p103 = por %p101, %p102
    %p104 = scmp.ne.s32.totalorder %s95, %s96
    %p105 = scmp.eq.s32.totalorder %s22, 0
    %p106 = por %p104, %p105
    %p107 = scmp.ne.s32.totalorder %s95, %s96
    %p108 = scmp.eq.s32.totalorder %s23, 1
    %p109 = por %p107, %p108
    %p111 = scmp.ne.s32.totalorder %s96, %s110
    %p112 = scmp.eq.s32.totalorder %s23, 0
    %p113 = por %p111, %p112
    %s115 = sadd.s32 %s114, 1
    %p118 = scmp.eq.s32.totalorder %s17, 1
    %p119 = scmp.ne.s32.totalorder %s114, %s116
    %p120 = scmp.eq.s32.totalorder %s17, 0
    %p121 = por %p119, %p120
    %p122 = scmp.ne.s32.totalorder %s114, %s116
    %p123 = scmp.eq.s32.totalorder %s22, 1
    %p124 = por %p122, %p123
    %p125 = scmp.ne.s32.totalorder %s116, %s117
    %p126 = scmp.eq.s32.totalorder %s22, 0
    %p127 = por %p125, %p126
    %p128 = scmp.ne.s32.totalorder %s116, %s117
    %p129 = scmp.eq.s32.totalorder %s23, 1
    %p130 = por %p128, %p129
    %p132 = scmp.ne.s32.totalorder %s117, %s131
    %p133 = scmp.eq.s32.totalorder %s23, 0
    %p134 = por %p132, %p133
    %s136 = sadd.s32 %s135, 1
    %p139 = scmp.eq.s32.totalorder %s17, 1
    %p140 = scmp.ne.s32.totalorder %s135, %s137
    %p141 = scmp.eq.s32.totalorder %s17, 0
    %p142 = por %p140, %p141
    %p143 = scmp.ne.s32.totalorder %s135, %s137
    %p144 = scmp.eq.s32.totalorder %s22, 1
    %p145 = por %p143, %p144
    %p146 = scmp.ne.s32.totalorder %s137, %s138
    %p147 = scmp.eq.s32.totalorder %s22, 0
    %p148 = por %p146, %p147
    %p149 = scmp.ne.s32.totalorder %s137, %s138
    %p150 = scmp.eq.s32.totalorder %s23, 1
    %p151 = por %p149, %p150
    %p153 = scmp.ne.s32.totalorder %s138, %s152
    %p154 = scmp.eq.s32.totalorder %s23, 0
    %p155 = por %p153, %p154
    %s157 = sadd.s32 %s156, 1
    %p160 = scmp.eq.s32.totalorder %s17, 1
    %p161 = scmp.ne.s32.totalorder %s156, %s158
    %p162 = scmp.eq.s32.totalorder %s17, 0
    %p163 = por %p161, %p162
    %p164 = scmp.ne.s32.totalorder %s156, %s158
    %p165 = scmp.eq.s32.totalorder %s22, 1
    %p166 = por %p164, %p165
    %p167 = scmp.ne.s32.totalorder %s158, %s159
    %p168 = scmp.eq.s32.totalorder %s22, 0
    %p169 = por %p167, %p168
    %p170 = scmp.ne.s32.totalorder %s158, %s159
    %p171 = scmp.eq.s32.totalorder %s23, 1
    %p172 = por %p170, %p171
    %p174 = scmp.ne.s32.totalorder %s159, %s173
    %p175 = scmp.eq.s32.totalorder %s23, 0
    %p176 = por %p174, %p175
    %s178 = sadd.s32 %s177, 1
    %p181 = scmp.eq.s32.totalorder %s17, 1
    %p182 = scmp.ne.s32.totalorder %s177, %s179
    %p183 = scmp.eq.s32.totalorder %s17, 0
    %p184 = por %p182, %p183
    %p185 = scmp.ne.s32.totalorder %s177, %s179
    %p186 = scmp.eq.s32.totalorder %s22, 1
    %p187 = por %p185, %p186
    %p188 = scmp.ne.s32.totalorder %s179, %s180
    %p189 = scmp.eq.s32.totalorder %s22, 0
    %p190 = por %p188, %p189
    %p191 = scmp.ne.s32.totalorder %s179, %s180
    %p192 = scmp.eq.s32.totalorder %s23, 1
    %p193 = por %p191, %p192
    %p195 = scmp.ne.s32.totalorder %s180, %s194
    %p196 = scmp.eq.s32.totalorder %s23, 0
    %p197 = por %p195, %p196
    %s199 = sadd.s32 %s198, 1
    %p202 = scmp.eq.s32.totalorder %s17, 1
    %p203 = scmp.ne.s32.totalorder %s198, %s200
    %p204 = scmp.eq.s32.totalorder %s17, 0
    %p205 = por %p203, %p204
    %p206 = scmp.ne.s32.totalorder %s198, %s200
    %p207 = scmp.eq.s32.totalorder %s22, 1
    %p208 = por %p206, %p207
    %p209 = scmp.ne.s32.totalorder %s200, %s201
    %p210 = scmp.eq.s32.totalorder %s22, 0
    %p211 = por %p209, %p210
    %p212 = scmp.ne.s32.totalorder %s200, %s201
    %p213 = scmp.eq.s32.totalorder %s23, 1
    %p214 = por %p212, %p213
    %p216 = scmp.ne.s32.totalorder %s201, %s215
    %p217 = scmp.eq.s32.totalorder %s23, 0
    %p218 = por %p216, %p217
    %s220 = sadd.s32 %s219, 1
    %p223 = scmp.eq.s32.totalorder %s17, 1
    %p224 = scmp.ne.s32.totalorder %s219, %s221
    %p225 = scmp.eq.s32.totalorder %s17, 0
    %p226 = por %p224, %p225
    %p227 = scmp.ne.s32.totalorder %s219, %s221
    %p228 = scmp.eq.s32.totalorder %s22, 1
    %p229 = por %p227, %p228
    %p230 = scmp.ne.s32.totalorder %s221, %s222
    %p231 = scmp.eq.s32.totalorder %s22, 0
    %p232 = por %p230, %p231
    %p233 = scmp.ne.s32.totalorder %s221, %s222
    %p234 = scmp.eq.s32.totalorder %s23, 1
    %p235 = por %p233, %p234
    %p237 = scmp.ne.s32.totalorder %s222, %s236
    %p238 = scmp.eq.s32.totalorder %s23, 0
    %p239 = por %p237, %p238
    %s241 = sadd.s32 %s240, 1
    %p244 = scmp.eq.s32.totalorder %s17, 1
    %p245 = scmp.ne.s32.totalorder %s240, %s242
    %p246 = scmp.eq.s32.totalorder %s17, 0
    %p247 = por %p245, %p246
    %p248 = scmp.ne.s32.totalorder %s240, %s242
    %p249 = scmp.eq.s32.totalorder %s22, 1
    %p250 = por %p248, %p249
    %p251 = scmp.ne.s32.totalorder %s242, %s243
    %p252 = scmp.eq.s32.totalorder %s22, 0
    %p253 = por %p251, %p252
    %p254 = scmp.ne.s32.totalorder %s242, %s243
    %p255 = scmp.eq.s32.totalorder %s23, 1
    %p256 = por %p254, %p255
    %p258 = scmp.ne.s32.totalorder %s243, %s257
    %p259 = scmp.eq.s32.totalorder %s23, 0
    %p260 = por %p258, %p259
    %s261 = ssub.s32 %s17, %s24
    %p262 = scmp.eq.s32.totalorder %s261, 0
    %s264 = sadd.s32 %s263, 1
    %s265 = scalar_select %p262, %s263, %s264
    %p268 = pneg %p262
    %p269 = scmp.eq.s32.totalorder %s17, 1
    %p270 = por %p268, %p269
    %p271 = scmp.ne.s32.totalorder %s263, %s266
    %p272 = scmp.eq.s32.totalorder %s17, 0
    %p273 = por %p271, %p272
    %p274 = scmp.ne.s32.totalorder %s263, %s266
    %p275 = scmp.eq.s32.totalorder %s22, 1
    %p276 = por %p274, %p275
    %p277 = scmp.ne.s32.totalorder %s266, %s267
    %p278 = scmp.eq.s32.totalorder %s22, 0
    %p279 = por %p277, %p278
    %p280 = scmp.ne.s32.totalorder %s266, %s267
    %p281 = scmp.eq.s32.totalorder %s23, 1
    %p282 = por %p280, %p281
    %p284 = scmp.ne.s32.totalorder %s267, %s283
    %p285 = scmp.eq.s32.totalorder %s23, 0
    %p286 = por %p284, %p285
    %p287 = scmp.le.s32.totalorder 1, %s17
    %p288 = scmp.lt.s32.totalorder %s17, 3
    %p289 = pnand %p287, %p288
    %p290 = pneg %p289
    // Predicated region
    $region9: #{_lambda_.1} parent=5 // pred_check
      _
    $region10: #{_lambda_.1} parent=5 // pred_check_branch
      %292 = sbr.rel (%p289) target = $region12
    $region11: #{_lambda_.1} parent=5 // pred_region
      %s293 = ssub.s32 %s17, 1
      // Predicated region
      $region13: #{_lambda_.1} parent=11 // pred_check
        %p294 = pneg %p64
      $region14: #{_lambda_.1} parent=11 // pred_check_branch
        %296 = sbr.rel (%p294) target = $region16
      $region15: #{_lambda_.1} parent=11 // pred_region
        _
      $region16: #{_lambda_.1} parent=11 // pred_fallthru
        _
      // Predicated region
      $region17: #{_lambda_.1} parent=11 // pred_check
        %p297 = pneg %p85
      $region18: #{_lambda_.1} parent=11 // pred_check_branch
        %299 = sbr.rel (%p297) target = $region20
      $region19: #{_lambda_.1} parent=11 // pred_region
        _
      $region20: #{_lambda_.1} parent=11 // pred_fallthru
        _
      // Predicated region
      $region21: #{_lambda_.1} parent=11 // pred_check
        %p300 = pneg %p106
      $region22: #{_lambda_.1} parent=11 // pred_check_branch
        %302 = sbr.rel (%p300) target = $region24
      $region23: #{_lambda_.1} parent=11 // pred_region
        _
      $region24: #{_lambda_.1} parent=11 // pred_fallthru
        _
      // Predicated region
      $region25: #{_lambda_.1} parent=11 // pred_check
        %p303 = pneg %p127
      $region26: #{_lambda_.1} parent=11 // pred_check_branch
        %305 = sbr.rel (%p303) target = $region28
      $region27: #{_lambda_.1} parent=11 // pred_region
        _
      $region28: #{_lambda_.1} parent=11 // pred_fallthru
        _
      // Predicated region
      $region29: #{_lambda_.1} parent=11 // pred_check
        %p306 = pneg %p148
      $region30: #{_lambda_.1} parent=11 // pred_check_branch
        %308 = sbr.rel (%p306) target = $region32
      $region31: #{_lambda_.1} parent=11 // pred_region
        _
      $region32: #{_lambda_.1} parent=11 // pred_fallthru
        _
      // Predicated region
      $region33: #{_lambda_.1} parent=11 // pred_check
        %p309 = pneg %p169
      $region34: #{_lambda_.1} parent=11 // pred_check_branch
        %311 = sbr.rel (%p309) target = $region36
      $region35: #{_lambda_.1} parent=11 // pred_region
        _
      $region36: #{_lambda_.1} parent=11 // pred_fallthru
        _
      // Predicated region
      $region37: #{_lambda_.1} parent=11 // pred_check
        %p312 = pneg %p190
      $region38: #{_lambda_.1} parent=11 // pred_check_branch
        %314 = sbr.rel (%p312) target = $region40
      $region39: #{_lambda_.1} parent=11 // pred_region
        _
      $region40: #{_lambda_.1} parent=11 // pred_fallthru
        _
      // Predicated region
      $region41: #{_lambda_.1} parent=11 // pred_check
        %p315 = pneg %p211
      $region42: #{_lambda_.1} parent=11 // pred_check_branch
        %317 = sbr.rel (%p315) target = $region44
      $region43: #{_lambda_.1} parent=11 // pred_region
        _
      $region44: #{_lambda_.1} parent=11 // pred_fallthru
        _
      // Predicated region
      $region45: #{_lambda_.1} parent=11 // pred_check
        %p318 = pneg %p232
      $region46: #{_lambda_.1} parent=11 // pred_check_branch
        %320 = sbr.rel (%p318) target = $region48
      $region47: #{_lambda_.1} parent=11 // pred_region
        _
      $region48: #{_lambda_.1} parent=11 // pred_fallthru
        _
      // Predicated region
      $region49: #{_lambda_.1} parent=11 // pred_check
        %p321 = pneg %p253
      $region50: #{_lambda_.1} parent=11 // pred_check_branch
        %323 = sbr.rel (%p321) target = $region52
      $region51: #{_lambda_.1} parent=11 // pred_region
        _
      $region52: #{_lambda_.1} parent=11 // pred_fallthru
        _
    $region12: #{_lambda_.1} parent=5 // pred_fallthru
      _
    %p324 = scmp.lt.s32.totalorder %s17, 2
    // Predicated region
    $region53: #{_lambda_.1} parent=5 // pred_check
      %p325 = pneg %p324
    $region54: #{_lambda_.1} parent=5 // pred_check_branch
      %327 = sbr.rel (%p325) target = $region56
    $region55: #{_lambda_.1} parent=5 // pred_region
      // Predicated region
      $region57: #{_lambda_.1} parent=55 // pred_check
        %p328 = pneg %p37
      $region58: #{_lambda_.1} parent=55 // pred_check_branch
        %330 = sbr.rel (%p328) target = $region60
      $region59: #{_lambda_.1} parent=55 // pred_region
        %s331 = smul.u32 2, %s17
        %p332 = scmp.lt.s32.totalorder %s331, 3
        %s333 = scalar_select %p332, %s331, 3
        %s334 = smul.addr %s333, 4
        %s335 = smul.addr %s334, 8
        %s336 = scalar_lea.vmem %s0, %s335
        %s337 = smul.u32 2, %s17
      $region60: #{_lambda_.1} parent=55 // pred_fallthru
        _
    $region56: #{_lambda_.1} parent=5 // pred_fallthru
      _
    %p338 = scmp.le.s32.totalorder 1, %s17
    %p339 = scmp.lt.s32.totalorder %s17, 3
    %p340 = pnand %p338, %p339
    %p341 = pneg %p340
    // Predicated region
    $region61: #{_lambda_.1} parent=5 // pred_check
      _
    $region62: #{_lambda_.1} parent=5 // pred_check_branch
      %343 = sbr.rel (%p340) target = $region64
    $region63: #{_lambda_.1} parent=5 // pred_region
      %s344 = ssub.s32 %s17, 1
      %s345 = smul.u32 2, %s22
      %p346 = scmp.lt.s32.totalorder %s345, 3
      %s347 = scalar_select %p346, %s345, 3
      %s348 = smul.addr %s347, 4
      %s349 = smul.addr %s348, 8
      %s350 = scalar_lea.vmem %s0, %s349
      %p351 = pneg %p43
      %p352 = pneg %p40
      %p353 = pneg %p64
      %p354 = pneg %p61
      %p355 = pneg %p85
      %p356 = pneg %p82
      %p357 = pneg %p106
      %p358 = pneg %p103
      %p359 = pneg %p127
      %p360 = pneg %p124
      %p361 = pneg %p148
      %p362 = pneg %p145
      %p363 = pneg %p169
      %p364 = pneg %p166
      %p365 = pneg %p190
      %p366 = pneg %p187
      %p367 = pneg %p211
      %p368 = pneg %p208
      %p369 = pneg %p232
      %p370 = pneg %p229
      %p371 = pneg %p253
      %p372 = pneg %p250
      %p373 = pneg %p279
      %p374 = pneg %p276
      %s375 = smul.u32 2, %s22
      %p376 = scmp.lt.s32.totalorder %s375, 3
      %s377 = scalar_select %p376, %s375, 3
      %s378 = smul.addr %s377, 8
      %s379 = scalar_lea.vmem %s11, %s378
      %s380 = smul.u32 2, %s22
      %p381 = scmp.lt.s32.totalorder %s380, 3
      %s382 = scalar_select %p381, %s380, 3
      %s383 = smul.addr %s382, 4
      %s384 = smul.addr %s383, 8
      %s385 = scalar_lea.vmem %s0, %s384
      %s386 = smul.u32 2, %s22
      %s387 = smul.u32 2, %s22
      %p388 = scmp.lt.s32.totalorder %s387, 3
      %s389 = scalar_select %p388, %s387, 3
      %s390 = smul.addr %s389, 8
      %s391 = scalar_lea.vmem %s11, %s390
      %s392 = smul.u32 2, %s22
      %v393 = vld [vmem:[%s385] sm:$0xff]
      %v394 = vld [vmem:[%s385 + $0x8] sm:$0xff]
      %v395 = vld [vmem:[%s385 + $0x10] sm:$0xff]
      %v396 = vld [vmem:[%s385 + $0x18] sm:$0xff]
      %v397 = vld [vmem:[%s385 + $0x20] sm:$0xff]
      %v398 = vld [vmem:[%s385 + $0x28] sm:$0xff]
      %v399 = vld [vmem:[%s385 + $0x30] sm:$0xff]
      %v400 = vld [vmem:[%s385 + $0x38] sm:$0xff]
      %v401 = vpack.c.bf16 %v397, %v393
      %v402 = vpack.c.bf16 %v398, %v394
      %v403 = vpack.c.bf16 %v399, %v395
      %v404 = vpack.c.bf16 %v400, %v396
      %v405 = vld [vmem:[%s1] sm:$0xff]
      %v406 = vld [vmem:[%s1 + $0x8] sm:$0xff]
      %v407 = vld [vmem:[%s1 + $0x10] sm:$0xff]
      %v408 = vld [vmem:[%s1 + $0x18] sm:$0xff]
      %v409 = vld [vmem:[%s1 + $0x20] sm:$0xff]
      %v410 = vld [vmem:[%s1 + $0x28] sm:$0xff]
      %v411 = vld [vmem:[%s1 + $0x30] sm:$0xff]
      %v412 = vld [vmem:[%s1 + $0x38] sm:$0xff]
      %v413 = vld [vmem:[%s1 + $0x40] sm:$0xff]
      %v414 = vld [vmem:[%s1 + $0x48] sm:$0xff]
      %v415 = vld [vmem:[%s1 + $0x50] sm:$0xff]
      %v416 = vld [vmem:[%s1 + $0x58] sm:$0xff]
      %v417 = vld [vmem:[%s1 + $0x60] sm:$0xff]
      %v418 = vld [vmem:[%s1 + $0x68] sm:$0xff]
      %v419 = vld [vmem:[%s1 + $0x70] sm:$0xff]
      %v420 = vld [vmem:[%s1 + $0x78] sm:$0xff]
      %v421 = vld [vmem:[%s1 + $0x80] sm:$0xff]
      %v422 = vld [vmem:[%s1 + $0x88] sm:$0xff]
      %v423 = vld [vmem:[%s1 + $0x90] sm:$0xff]
      %v424 = vld [vmem:[%s1 + $0x98] sm:$0xff]
      %v425 = vld [vmem:[%s1 + $0xa0] sm:$0xff]
      %v426 = vld [vmem:[%s1 + $0xa8] sm:$0xff]
      %v427 = vld [vmem:[%s1 + $0xb0] sm:$0xff]
      %v428 = vld [vmem:[%s1 + $0xb8] sm:$0xff]
      %v429 = vld [vmem:[%s1 + $0xc0] sm:$0xff]
      %v430 = vld [vmem:[%s1 + $0xc8] sm:$0xff]
      %v431 = vld [vmem:[%s1 + $0xd0] sm:$0xff]
      %v432 = vld [vmem:[%s1 + $0xd8] sm:$0xff]
      %v433 = vld [vmem:[%s1 + $0xe0] sm:$0xff]
      %v434 = vld [vmem:[%s1 + $0xe8] sm:$0xff]
      %v435 = vld [vmem:[%s1 + $0xf0] sm:$0xff]
      %v436 = vld [vmem:[%s1 + $0xf8] sm:$0xff]
      %v437 = vld [vmem:[%s1 + $0x100] sm:$0xff]
      %v438 = vld [vmem:[%s1 + $0x108] sm:$0xff]
      %v439 = vld [vmem:[%s1 + $0x110] sm:$0xff]
      %v440 = vld [vmem:[%s1 + $0x118] sm:$0xff]
      %v441 = vld [vmem:[%s1 + $0x120] sm:$0xff]
      %v442 = vld [vmem:[%s1 + $0x128] sm:$0xff]
      %v443 = vld [vmem:[%s1 + $0x130] sm:$0xff]
      %v444 = vld [vmem:[%s1 + $0x138] sm:$0xff]
      %v445 = vld [vmem:[%s1 + $0x140] sm:$0xff]
      %v446 = vld [vmem:[%s1 + $0x148] sm:$0xff]
      %v447 = vld [vmem:[%s1 + $0x150] sm:$0xff]
      %v448 = vld [vmem:[%s1 + $0x158] sm:$0xff]
      %v449 = vld [vmem:[%s1 + $0x160] sm:$0xff]
      %v450 = vld [vmem:[%s1 + $0x168] sm:$0xff]
      %v451 = vld [vmem:[%s1 + $0x170] sm:$0xff]
      %v452 = vld [vmem:[%s1 + $0x178] sm:$0xff]
      %v453 = vld [vmem:[%s1 + $0x180] sm:$0xff]
      %v454 = vld [vmem:[%s1 + $0x188] sm:$0xff]
      %v455 = vld [vmem:[%s1 + $0x190] sm:$0xff]
      %v456 = vld [vmem:[%s1 + $0x198] sm:$0xff]
      %v457 = vld [vmem:[%s1 + $0x1a0] sm:$0xff]
      %v458 = vld [vmem:[%s1 + $0x1a8] sm:$0xff]
      %v459 = vld [vmem:[%s1 + $0x1b0] sm:$0xff]
      %v460 = vld [vmem:[%s1 + $0x1b8] sm:$0xff]
      %v461 = vld [vmem:[%s1 + $0x1c0] sm:$0xff]
      %v462 = vld [vmem:[%s1 + $0x1c8] sm:$0xff]
      %v463 = vld [vmem:[%s1 + $0x1d0] sm:$0xff]
      %v464 = vld [vmem:[%s1 + $0x1d8] sm:$0xff]
      %v465 = vld [vmem:[%s1 + $0x1e0] sm:$0xff]
      %v466 = vld [vmem:[%s1 + $0x1e8] sm:$0xff]
      %v467 = vld [vmem:[%s1 + $0x1f0] sm:$0xff]
      %v468 = vld [vmem:[%s1 + $0x1f8] sm:$0xff]
      %v469 = vld [vmem:[%s1 + $0x200] sm:$0xff]
      %v470 = vld [vmem:[%s1 + $0x208] sm:$0xff]
      %v471 = vld [vmem:[%s1 + $0x210] sm:$0xff]
      %v472 = vld [vmem:[%s1 + $0x218] sm:$0xff]
      %v473 = vld [vmem:[%s1 + $0x220] sm:$0xff]
      %v474 = vld [vmem:[%s1 + $0x228] sm:$0xff]
      %v475 = vld [vmem:[%s1 + $0x230] sm:$0xff]
      %v476 = vld [vmem:[%s1 + $0x238] sm:$0xff]
      %v477 = vld [vmem:[%s1 + $0x240] sm:$0xff]
      %v478 = vld [vmem:[%s1 + $0x248] sm:$0xff]
      %v479 = vld [vmem:[%s1 + $0x250] sm:$0xff]
      %v480 = vld [vmem:[%s1 + $0x258] sm:$0xff]
      %v481 = vld [vmem:[%s1 + $0x260] sm:$0xff]
      %v482 = vld [vmem:[%s1 + $0x268] sm:$0xff]
      %v483 = vld [vmem:[%s1 + $0x270] sm:$0xff]
      %v484 = vld [vmem:[%s1 + $0x278] sm:$0xff]
      %v485 = vld [vmem:[%s1 + $0x280] sm:$0xff]
      %v486 = vld [vmem:[%s1 + $0x288] sm:$0xff]
      %v487 = vld [vmem:[%s1 + $0x290] sm:$0xff]
      %v488 = vld [vmem:[%s1 + $0x298] sm:$0xff]
      %v489 = vld [vmem:[%s1 + $0x2a0] sm:$0xff]
      %v490 = vld [vmem:[%s1 + $0x2a8] sm:$0xff]
      %v491 = vld [vmem:[%s1 + $0x2b0] sm:$0xff]
      %v492 = vld [vmem:[%s1 + $0x2b8] sm:$0xff]
      %v493 = vld [vmem:[%s1 + $0x2c0] sm:$0xff]
      %v494 = vld [vmem:[%s1 + $0x2c8] sm:$0xff]
      %v495 = vld [vmem:[%s1 + $0x2d0] sm:$0xff]
      %v496 = vld [vmem:[%s1 + $0x2d8] sm:$0xff]
      %v497 = vld [vmem:[%s1 + $0x2e0] sm:$0xff]
      %v498 = vld [vmem:[%s1 + $0x2e8] sm:$0xff]
      %v499 = vld [vmem:[%s1 + $0x2f0] sm:$0xff]
      %v500 = vld [vmem:[%s1 + $0x2f8] sm:$0xff]
      %v501 = vld [vmem:[%s1 + $0x300] sm:$0xff]
      %v502 = vld [vmem:[%s1 + $0x308] sm:$0xff]
      %v503 = vld [vmem:[%s1 + $0x310] sm:$0xff]
      %v504 = vld [vmem:[%s1 + $0x318] sm:$0xff]
      %v505 = vld [vmem:[%s1 + $0x320] sm:$0xff]
      %v506 = vld [vmem:[%s1 + $0x328] sm:$0xff]
      %v507 = vld [vmem:[%s1 + $0x330] sm:$0xff]
      %v508 = vld [vmem:[%s1 + $0x338] sm:$0xff]
      %v509 = vld [vmem:[%s1 + $0x340] sm:$0xff]
      %v510 = vld [vmem:[%s1 + $0x348] sm:$0xff]
      %v511 = vld [vmem:[%s1 + $0x350] sm:$0xff]
      %v512 = vld [vmem:[%s1 + $0x358] sm:$0xff]
      %v513 = vld [vmem:[%s1 + $0x360] sm:$0xff]
      %v514 = vld [vmem:[%s1 + $0x368] sm:$0xff]
      %v515 = vld [vmem:[%s1 + $0x370] sm:$0xff]
      %v516 = vld [vmem:[%s1 + $0x378] sm:$0xff]
      %v517 = vld [vmem:[%s1 + $0x380] sm:$0xff]
      %v518 = vld [vmem:[%s1 + $0x388] sm:$0xff]
      %v519 = vld [vmem:[%s1 + $0x390] sm:$0xff]
      %v520 = vld [vmem:[%s1 + $0x398] sm:$0xff]
      %v521 = vld [vmem:[%s1 + $0x3a0] sm:$0xff]
      %v522 = vld [vmem:[%s1 + $0x3a8] sm:$0xff]
      %v523 = vld [vmem:[%s1 + $0x3b0] sm:$0xff]
      %v524 = vld [vmem:[%s1 + $0x3b8] sm:$0xff]
      %v525 = vld [vmem:[%s1 + $0x3c0] sm:$0xff]
      %v526 = vld [vmem:[%s1 + $0x3c8] sm:$0xff]
      %v527 = vld [vmem:[%s1 + $0x3d0] sm:$0xff]
      %v528 = vld [vmem:[%s1 + $0x3d8] sm:$0xff]
      %v529 = vld [vmem:[%s1 + $0x3e0] sm:$0xff]
      %v530 = vld [vmem:[%s1 + $0x3e8] sm:$0xff]
      %v531 = vld [vmem:[%s1 + $0x3f0] sm:$0xff]
      %v532 = vld [vmem:[%s1 + $0x3f8] sm:$0xff]
      %v533 = vld [vmem:[%s1 + $0x400] sm:$0xff]
      %v534 = vld [vmem:[%s1 + $0x408] sm:$0xff]
      %v535 = vld [vmem:[%s1 + $0x410] sm:$0xff]
      %v536 = vld [vmem:[%s1 + $0x418] sm:$0xff]
      %v537 = vld [vmem:[%s1 + $0x420] sm:$0xff]
      %v538 = vld [vmem:[%s1 + $0x428] sm:$0xff]
      %v539 = vld [vmem:[%s1 + $0x430] sm:$0xff]
      %v540 = vld [vmem:[%s1 + $0x438] sm:$0xff]
      %v541 = vld [vmem:[%s1 + $0x440] sm:$0xff]
      %v542 = vld [vmem:[%s1 + $0x448] sm:$0xff]
      %v543 = vld [vmem:[%s1 + $0x450] sm:$0xff]
      %v544 = vld [vmem:[%s1 + $0x458] sm:$0xff]
      %v545 = vld [vmem:[%s1 + $0x460] sm:$0xff]
      %v546 = vld [vmem:[%s1 + $0x468] sm:$0xff]
      %v547 = vld [vmem:[%s1 + $0x470] sm:$0xff]
      %v548 = vld [vmem:[%s1 + $0x478] sm:$0xff]
      %v549 = vld [vmem:[%s1 + $0x480] sm:$0xff]
      %v550 = vld [vmem:[%s1 + $0x488] sm:$0xff]
      %v551 = vld [vmem:[%s1 + $0x490] sm:$0xff]
      %v552 = vld [vmem:[%s1 + $0x498] sm:$0xff]
      %v553 = vld [vmem:[%s1 + $0x4a0] sm:$0xff]
      %v554 = vld [vmem:[%s1 + $0x4a8] sm:$0xff]
      %v555 = vld [vmem:[%s1 + $0x4b0] sm:$0xff]
      %v556 = vld [vmem:[%s1 + $0x4b8] sm:$0xff]
      %v557 = vld [vmem:[%s1 + $0x4c0] sm:$0xff]
      %v558 = vld [vmem:[%s1 + $0x4c8] sm:$0xff]
      %v559 = vld [vmem:[%s1 + $0x4d0] sm:$0xff]
      %v560 = vld [vmem:[%s1 + $0x4d8] sm:$0xff]
      %v561 = vld [vmem:[%s1 + $0x4e0] sm:$0xff]
      %v562 = vld [vmem:[%s1 + $0x4e8] sm:$0xff]
      %v563 = vld [vmem:[%s1 + $0x4f0] sm:$0xff]
      %v564 = vld [vmem:[%s1 + $0x4f8] sm:$0xff]
      %v565 = vld [vmem:[%s1 + $0x500] sm:$0xff]
      %v566 = vld [vmem:[%s1 + $0x508] sm:$0xff]
      %v567 = vld [vmem:[%s1 + $0x510] sm:$0xff]
      %v568 = vld [vmem:[%s1 + $0x518] sm:$0xff]
      %v569 = vld [vmem:[%s1 + $0x520] sm:$0xff]
      %v570 = vld [vmem:[%s1 + $0x528] sm:$0xff]
      %v571 = vld [vmem:[%s1 + $0x530] sm:$0xff]
      %v572 = vld [vmem:[%s1 + $0x538] sm:$0xff]
      %v573 = vld [vmem:[%s1 + $0x540] sm:$0xff]
      %v574 = vld [vmem:[%s1 + $0x548] sm:$0xff]
      %v575 = vld [vmem:[%s1 + $0x550] sm:$0xff]
      %v576 = vld [vmem:[%s1 + $0x558] sm:$0xff]
      %v577 = vld [vmem:[%s1 + $0x560] sm:$0xff]
      %v578 = vld [vmem:[%s1 + $0x568] sm:$0xff]
      %v579 = vld [vmem:[%s1 + $0x570] sm:$0xff]
      %v580 = vld [vmem:[%s1 + $0x578] sm:$0xff]
      %v581 = vld [vmem:[%s1 + $0x580] sm:$0xff]
      %v582 = vld [vmem:[%s1 + $0x588] sm:$0xff]
      %v583 = vld [vmem:[%s1 + $0x590] sm:$0xff]
      %v584 = vld [vmem:[%s1 + $0x598] sm:$0xff]
      %v585 = vld [vmem:[%s1 + $0x5a0] sm:$0xff]
      %v586 = vld [vmem:[%s1 + $0x5a8] sm:$0xff]
      %v587 = vld [vmem:[%s1 + $0x5b0] sm:$0xff]
      %v588 = vld [vmem:[%s1 + $0x5b8] sm:$0xff]
      %v589 = vld [vmem:[%s1 + $0x5c0] sm:$0xff]
      %v590 = vld [vmem:[%s1 + $0x5c8] sm:$0xff]
      %v591 = vld [vmem:[%s1 + $0x5d0] sm:$0xff]
      %v592 = vld [vmem:[%s1 + $0x5d8] sm:$0xff]
      %v593 = vld [vmem:[%s1 + $0x5e0] sm:$0xff]
      %v594 = vld [vmem:[%s1 + $0x5e8] sm:$0xff]
      %v595 = vld [vmem:[%s1 + $0x5f0] sm:$0xff]
      %v596 = vld [vmem:[%s1 + $0x5f8] sm:$0xff]
      %v597 = vld [vmem:[%s1 + $0x600] sm:$0xff]
      %v598 = vld [vmem:[%s1 + $0x608] sm:$0xff]
      %v599 = vld [vmem:[%s1 + $0x610] sm:$0xff]
      %v600 = vld [vmem:[%s1 + $0x618] sm:$0xff]
      %v601 = vld [vmem:[%s1 + $0x620] sm:$0xff]
      %v602 = vld [vmem:[%s1 + $0x628] sm:$0xff]
      %v603 = vld [vmem:[%s1 + $0x630] sm:$0xff]
      %v604 = vld [vmem:[%s1 + $0x638] sm:$0xff]
      %v605 = vld [vmem:[%s1 + $0x640] sm:$0xff]
      %v606 = vld [vmem:[%s1 + $0x648] sm:$0xff]
      %v607 = vld [vmem:[%s1 + $0x650] sm:$0xff]
      %v608 = vld [vmem:[%s1 + $0x658] sm:$0xff]
      %v609 = vld [vmem:[%s1 + $0x660] sm:$0xff]
      %v610 = vld [vmem:[%s1 + $0x668] sm:$0xff]
      %v611 = vld [vmem:[%s1 + $0x670] sm:$0xff]
      %v612 = vld [vmem:[%s1 + $0x678] sm:$0xff]
      %v613 = vld [vmem:[%s1 + $0x680] sm:$0xff]
      %v614 = vld [vmem:[%s1 + $0x688] sm:$0xff]
      %v615 = vld [vmem:[%s1 + $0x690] sm:$0xff]
      %v616 = vld [vmem:[%s1 + $0x698] sm:$0xff]
      %v617 = vld [vmem:[%s1 + $0x6a0] sm:$0xff]
      %v618 = vld [vmem:[%s1 + $0x6a8] sm:$0xff]
      %v619 = vld [vmem:[%s1 + $0x6b0] sm:$0xff]
      %v620 = vld [vmem:[%s1 + $0x6b8] sm:$0xff]
      %v621 = vld [vmem:[%s1 + $0x6c0] sm:$0xff]
      %v622 = vld [vmem:[%s1 + $0x6c8] sm:$0xff]
      %v623 = vld [vmem:[%s1 + $0x6d0] sm:$0xff]
      %v624 = vld [vmem:[%s1 + $0x6d8] sm:$0xff]
      %v625 = vld [vmem:[%s1 + $0x6e0] sm:$0xff]
      %v626 = vld [vmem:[%s1 + $0x6e8] sm:$0xff]
      %v627 = vld [vmem:[%s1 + $0x6f0] sm:$0xff]
      %v628 = vld [vmem:[%s1 + $0x6f8] sm:$0xff]
      %v629 = vld [vmem:[%s1 + $0x700] sm:$0xff]
      %v630 = vld [vmem:[%s1 + $0x708] sm:$0xff]
      %v631 = vld [vmem:[%s1 + $0x710] sm:$0xff]
      %v632 = vld [vmem:[%s1 + $0x718] sm:$0xff]
      %v633 = vld [vmem:[%s1 + $0x720] sm:$0xff]
      %v634 = vld [vmem:[%s1 + $0x728] sm:$0xff]
      %v635 = vld [vmem:[%s1 + $0x730] sm:$0xff]
      %v636 = vld [vmem:[%s1 + $0x738] sm:$0xff]
      %v637 = vld [vmem:[%s1 + $0x740] sm:$0xff]
      %v638 = vld [vmem:[%s1 + $0x748] sm:$0xff]
      %v639 = vld [vmem:[%s1 + $0x750] sm:$0xff]
      %v640 = vld [vmem:[%s1 + $0x758] sm:$0xff]
      %v641 = vld [vmem:[%s1 + $0x760] sm:$0xff]
      %v642 = vld [vmem:[%s1 + $0x768] sm:$0xff]
      %v643 = vld [vmem:[%s1 + $0x770] sm:$0xff]
      %v644 = vld [vmem:[%s1 + $0x778] sm:$0xff]
      %v645 = vld [vmem:[%s1 + $0x780] sm:$0xff]
      %v646 = vld [vmem:[%s1 + $0x788] sm:$0xff]
      %v647 = vld [vmem:[%s1 + $0x790] sm:$0xff]
      %v648 = vld [vmem:[%s1 + $0x798] sm:$0xff]
      %v649 = vld [vmem:[%s1 + $0x7a0] sm:$0xff]
      %v650 = vld [vmem:[%s1 + $0x7a8] sm:$0xff]
      %v651 = vld [vmem:[%s1 + $0x7b0] sm:$0xff]
      %v652 = vld [vmem:[%s1 + $0x7b8] sm:$0xff]
      %v653 = vld [vmem:[%s1 + $0x7c0] sm:$0xff]
      %v654 = vld [vmem:[%s1 + $0x7c8] sm:$0xff]
      %v655 = vld [vmem:[%s1 + $0x7d0] sm:$0xff]
      %v656 = vld [vmem:[%s1 + $0x7d8] sm:$0xff]
      %v657 = vld [vmem:[%s1 + $0x7e0] sm:$0xff]
      %v658 = vld [vmem:[%s1 + $0x7e8] sm:$0xff]
      %v659 = vld [vmem:[%s1 + $0x7f0] sm:$0xff]
      %v660 = vld [vmem:[%s1 + $0x7f8] sm:$0xff]
      %v661 = vld [vmem:[%s2] sm:$0xff]
      %v663 = vlaneseq
      %v664 = vshrl.u32 %v663, 7
      %v665 = vsub.s32 0, %v664
      %v666 = vrot.slane %v661, %v665
      %v667 = vlaneseq
      %v668 = vshrl.u32 %v667, 7
      %v669 = vsub.s32 1, %v668
      %v670 = vrot.slane %v661, %v669
      %v671 = vlaneseq
      %v672 = vshrl.u32 %v671, 7
      %v673 = vsub.s32 2, %v672
      %v674 = vrot.slane %v661, %v673
      %v675 = vlaneseq
      %v676 = vshrl.u32 %v675, 7
      %v677 = vsub.s32 3, %v676
      %v678 = vrot.slane %v661, %v677
      %v679 = vlaneseq
      %v680 = vshrl.u32 %v679, 7
      %v681 = vsub.s32 4, %v680
      %v682 = vrot.slane %v661, %v681
      %v683 = vlaneseq
      %v684 = vshrl.u32 %v683, 7
      %v685 = vsub.s32 5, %v684
      %v686 = vrot.slane %v661, %v685
      %v687 = vlaneseq
      %v688 = vshrl.u32 %v687, 7
      %v689 = vsub.s32 6, %v688
      %v690 = vrot.slane %v661, %v689
      %v691 = vlaneseq
      %v692 = vshrl.u32 %v691, 7
      %v693 = vsub.s32 7, %v692
      %v694 = vrot.slane %v661, %v693
      %v959 = vunpack.c.l.b16 %v405
      %v960 = vunpack.c.h.b16 %v405
      %v961 = vunpack.c.l.b16 %v406
      %v962 = vunpack.c.h.b16 %v406
      %v963 = vunpack.c.l.b16 %v407
      %v964 = vunpack.c.h.b16 %v407
      %v965 = vunpack.c.l.b16 %v408
      %v966 = vunpack.c.h.b16 %v408
      %v967 = vunpack.c.l.b16 %v409
      %v968 = vunpack.c.h.b16 %v409
      %v969 = vunpack.c.l.b16 %v410
      %v970 = vunpack.c.h.b16 %v410
      %v971 = vunpack.c.l.b16 %v411
      %v972 = vunpack.c.h.b16 %v411
      %v973 = vunpack.c.l.b16 %v412
      %v974 = vunpack.c.h.b16 %v412
      %v975 = vunpack.c.l.b16 %v413
      %v976 = vunpack.c.h.b16 %v413
      %v977 = vunpack.c.l.b16 %v414
      %v978 = vunpack.c.h.b16 %v414
      %v979 = vunpack.c.l.b16 %v415
      %v980 = vunpack.c.h.b16 %v415
      %v981 = vunpack.c.l.b16 %v416
      %v982 = vunpack.c.h.b16 %v416
      %v983 = vunpack.c.l.b16 %v417
      %v984 = vunpack.c.h.b16 %v417
      %v985 = vunpack.c.l.b16 %v418
      %v986 = vunpack.c.h.b16 %v418
      %v987 = vunpack.c.l.b16 %v419
      %v988 = vunpack.c.h.b16 %v419
      %v989 = vunpack.c.l.b16 %v420
      %v990 = vunpack.c.h.b16 %v420
      %v991 = vunpack.c.l.b16 %v421
      %v992 = vunpack.c.h.b16 %v421
      %v993 = vunpack.c.l.b16 %v422
      %v994 = vunpack.c.h.b16 %v422
      %v995 = vunpack.c.l.b16 %v423
      %v996 = vunpack.c.h.b16 %v423
      %v997 = vunpack.c.l.b16 %v424
      %v998 = vunpack.c.h.b16 %v424
      %v999 = vunpack.c.l.b16 %v425
      %v1000 = vunpack.c.h.b16 %v425
      %v1001 = vunpack.c.l.b16 %v426
      %v1002 = vunpack.c.h.b16 %v426
      %v1003 = vunpack.c.l.b16 %v427
      %v1004 = vunpack.c.h.b16 %v427
      %v1005 = vunpack.c.l.b16 %v428
      %v1006 = vunpack.c.h.b16 %v428
      %v1007 = vunpack.c.l.b16 %v429
      %v1008 = vunpack.c.h.b16 %v429
      %v1009 = vunpack.c.l.b16 %v430
      %v1010 = vunpack.c.h.b16 %v430
      %v1011 = vunpack.c.l.b16 %v431
      %v1012 = vunpack.c.h.b16 %v431
      %v1013 = vunpack.c.l.b16 %v432
      %v1014 = vunpack.c.h.b16 %v432
      %v1015 = vunpack.c.l.b16 %v433
      %v1016 = vunpack.c.h.b16 %v433
      %v1017 = vunpack.c.l.b16 %v434
      %v1018 = vunpack.c.h.b16 %v434
      %v1019 = vunpack.c.l.b16 %v435
      %v1020 = vunpack.c.h.b16 %v435
      %v1021 = vunpack.c.l.b16 %v436
      %v1022 = vunpack.c.h.b16 %v436
      %v1023 = vunpack.c.l.b16 %v437
      %v1024 = vunpack.c.h.b16 %v437
      %v1025 = vunpack.c.l.b16 %v438
      %v1026 = vunpack.c.h.b16 %v438
      %v1027 = vunpack.c.l.b16 %v439
      %v1028 = vunpack.c.h.b16 %v439
      %v1029 = vunpack.c.l.b16 %v440
      %v1030 = vunpack.c.h.b16 %v440
      %v1031 = vunpack.c.l.b16 %v441
      %v1032 = vunpack.c.h.b16 %v441
      %v1033 = vunpack.c.l.b16 %v442
      %v1034 = vunpack.c.h.b16 %v442
      %v1035 = vunpack.c.l.b16 %v443
      %v1036 = vunpack.c.h.b16 %v443
      %v1037 = vunpack.c.l.b16 %v444
      %v1038 = vunpack.c.h.b16 %v444
      %v1039 = vunpack.c.l.b16 %v445
      %v1040 = vunpack.c.h.b16 %v445
      %v1041 = vunpack.c.l.b16 %v446
      %v1042 = vunpack.c.h.b16 %v446
      %v1043 = vunpack.c.l.b16 %v447
      %v1044 = vunpack.c.h.b16 %v447
      %v1045 = vunpack.c.l.b16 %v448
      %v1046 = vunpack.c.h.b16 %v448
      %v1047 = vunpack.c.l.b16 %v449
      %v1048 = vunpack.c.h.b16 %v449
      %v1049 = vunpack.c.l.b16 %v450
      %v1050 = vunpack.c.h.b16 %v450
      %v1051 = vunpack.c.l.b16 %v451
      %v1052 = vunpack.c.h.b16 %v451
      %v1053 = vunpack.c.l.b16 %v452
      %v1054 = vunpack.c.h.b16 %v452
      %v1055 = vunpack.c.l.b16 %v453
      %v1056 = vunpack.c.h.b16 %v453
      %v1057 = vunpack.c.l.b16 %v454
      %v1058 = vunpack.c.h.b16 %v454
      %v1059 = vunpack.c.l.b16 %v455
      %v1060 = vunpack.c.h.b16 %v455
      %v1061 = vunpack.c.l.b16 %v456
      %v1062 = vunpack.c.h.b16 %v456
      %v1063 = vunpack.c.l.b16 %v457
      %v1064 = vunpack.c.h.b16 %v457
      %v1065 = vunpack.c.l.b16 %v458
      %v1066 = vunpack.c.h.b16 %v458
      %v1067 = vunpack.c.l.b16 %v459
      %v1068 = vunpack.c.h.b16 %v459
      %v1069 = vunpack.c.l.b16 %v460
      %v1070 = vunpack.c.h.b16 %v460
      %v1071 = vunpack.c.l.b16 %v461
      %v1072 = vunpack.c.h.b16 %v461
      %v1073 = vunpack.c.l.b16 %v462
      %v1074 = vunpack.c.h.b16 %v462
      %v1075 = vunpack.c.l.b16 %v463
      %v1076 = vunpack.c.h.b16 %v463
      %v1077 = vunpack.c.l.b16 %v464
      %v1078 = vunpack.c.h.b16 %v464
      %v1079 = vunpack.c.l.b16 %v465
      %v1080 = vunpack.c.h.b16 %v465
      %v1081 = vunpack.c.l.b16 %v466
      %v1082 = vunpack.c.h.b16 %v466
      %v1083 = vunpack.c.l.b16 %v467
      %v1084 = vunpack.c.h.b16 %v467
      %v1085 = vunpack.c.l.b16 %v468
      %v1086 = vunpack.c.h.b16 %v468
      %v1087 = vunpack.c.l.b16 %v469
      %v1088 = vunpack.c.h.b16 %v469
      %v1089 = vunpack.c.l.b16 %v470
      %v1090 = vunpack.c.h.b16 %v470
      %v1091 = vunpack.c.l.b16 %v471
      %v1092 = vunpack.c.h.b16 %v471
      %v1093 = vunpack.c.l.b16 %v472
      %v1094 = vunpack.c.h.b16 %v472
      %v1095 = vunpack.c.l.b16 %v473
      %v1096 = vunpack.c.h.b16 %v473
      %v1097 = vunpack.c.l.b16 %v474
      %v1098 = vunpack.c.h.b16 %v474
      %v1099 = vunpack.c.l.b16 %v475
      %v1100 = vunpack.c.h.b16 %v475
      %v1101 = vunpack.c.l.b16 %v476
      %v1102 = vunpack.c.h.b16 %v476
      %v1103 = vunpack.c.l.b16 %v477
      %v1104 = vunpack.c.h.b16 %v477
      %v1105 = vunpack.c.l.b16 %v478
      %v1106 = vunpack.c.h.b16 %v478
      %v1107 = vunpack.c.l.b16 %v479
      %v1108 = vunpack.c.h.b16 %v479
      %v1109 = vunpack.c.l.b16 %v480
      %v1110 = vunpack.c.h.b16 %v480
      %v1111 = vunpack.c.l.b16 %v481
      %v1112 = vunpack.c.h.b16 %v481
      %v1113 = vunpack.c.l.b16 %v482
      %v1114 = vunpack.c.h.b16 %v482
      %v1115 = vunpack.c.l.b16 %v483
      %v1116 = vunpack.c.h.b16 %v483
      %v1117 = vunpack.c.l.b16 %v484
      %v1118 = vunpack.c.h.b16 %v484
      %v1119 = vunpack.c.l.b16 %v485
      %v1120 = vunpack.c.h.b16 %v485
      %v1121 = vunpack.c.l.b16 %v486
      %v1122 = vunpack.c.h.b16 %v486
      %v1123 = vunpack.c.l.b16 %v487
      %v1124 = vunpack.c.h.b16 %v487
      %v1125 = vunpack.c.l.b16 %v488
      %v1126 = vunpack.c.h.b16 %v488
      %v1127 = vunpack.c.l.b16 %v489
      %v1128 = vunpack.c.h.b16 %v489
      %v1129 = vunpack.c.l.b16 %v490
      %v1130 = vunpack.c.h.b16 %v490
      %v1131 = vunpack.c.l.b16 %v491
      %v1132 = vunpack.c.h.b16 %v491
      %v1133 = vunpack.c.l.b16 %v492
      %v1134 = vunpack.c.h.b16 %v492
      %v1135 = vunpack.c.l.b16 %v493
      %v1136 = vunpack.c.h.b16 %v493
      %v1137 = vunpack.c.l.b16 %v494
      %v1138 = vunpack.c.h.b16 %v494
      %v1139 = vunpack.c.l.b16 %v495
      %v1140 = vunpack.c.h.b16 %v495
      %v1141 = vunpack.c.l.b16 %v496
      %v1142 = vunpack.c.h.b16 %v496
      %v1143 = vunpack.c.l.b16 %v497
      %v1144 = vunpack.c.h.b16 %v497
      %v1145 = vunpack.c.l.b16 %v498
      %v1146 = vunpack.c.h.b16 %v498
      %v1147 = vunpack.c.l.b16 %v499
      %v1148 = vunpack.c.h.b16 %v499
      %v1149 = vunpack.c.l.b16 %v500
      %v1150 = vunpack.c.h.b16 %v500
      %v1151 = vunpack.c.l.b16 %v501
      %v1152 = vunpack.c.h.b16 %v501
      %v1153 = vunpack.c.l.b16 %v502
      %v1154 = vunpack.c.h.b16 %v502
      %v1155 = vunpack.c.l.b16 %v503
      %v1156 = vunpack.c.h.b16 %v503
      %v1157 = vunpack.c.l.b16 %v504
      %v1158 = vunpack.c.h.b16 %v504
      %v1159 = vunpack.c.l.b16 %v505
      %v1160 = vunpack.c.h.b16 %v505
      %v1161 = vunpack.c.l.b16 %v506
      %v1162 = vunpack.c.h.b16 %v506
      %v1163 = vunpack.c.l.b16 %v507
      %v1164 = vunpack.c.h.b16 %v507
      %v1165 = vunpack.c.l.b16 %v508
      %v1166 = vunpack.c.h.b16 %v508
      %v1167 = vunpack.c.l.b16 %v509
      %v1168 = vunpack.c.h.b16 %v509
      %v1169 = vunpack.c.l.b16 %v510
      %v1170 = vunpack.c.h.b16 %v510
      %v1171 = vunpack.c.l.b16 %v511
      %v1172 = vunpack.c.h.b16 %v511
      %v1173 = vunpack.c.l.b16 %v512
      %v1174 = vunpack.c.h.b16 %v512
      %v1175 = vunpack.c.l.b16 %v513
      %v1176 = vunpack.c.h.b16 %v513
      %v1177 = vunpack.c.l.b16 %v514
      %v1178 = vunpack.c.h.b16 %v514
      %v1179 = vunpack.c.l.b16 %v515
      %v1180 = vunpack.c.h.b16 %v515
      %v1181 = vunpack.c.l.b16 %v516
      %v1182 = vunpack.c.h.b16 %v516
      %v1183 = vunpack.c.l.b16 %v517
      %v1184 = vunpack.c.h.b16 %v517
      %v1185 = vunpack.c.l.b16 %v518
      %v1186 = vunpack.c.h.b16 %v518
      %v1187 = vunpack.c.l.b16 %v519
      %v1188 = vunpack.c.h.b16 %v519
      %v1189 = vunpack.c.l.b16 %v520
      %v1190 = vunpack.c.h.b16 %v520
      %v1191 = vunpack.c.l.b16 %v521
      %v1192 = vunpack.c.h.b16 %v521
      %v1193 = vunpack.c.l.b16 %v522
      %v1194 = vunpack.c.h.b16 %v522
      %v1195 = vunpack.c.l.b16 %v523
      %v1196 = vunpack.c.h.b16 %v523
      %v1197 = vunpack.c.l.b16 %v524
      %v1198 = vunpack.c.h.b16 %v524
      %v1199 = vunpack.c.l.b16 %v525
      %v1200 = vunpack.c.h.b16 %v525
      %v1201 = vunpack.c.l.b16 %v526
      %v1202 = vunpack.c.h.b16 %v526
      %v1203 = vunpack.c.l.b16 %v527
      %v1204 = vunpack.c.h.b16 %v527
      %v1205 = vunpack.c.l.b16 %v528
      %v1206 = vunpack.c.h.b16 %v528
      %v1207 = vunpack.c.l.b16 %v529
      %v1208 = vunpack.c.h.b16 %v529
      %v1209 = vunpack.c.l.b16 %v530
      %v1210 = vunpack.c.h.b16 %v530
      %v1211 = vunpack.c.l.b16 %v531
      %v1212 = vunpack.c.h.b16 %v531
      %v1213 = vunpack.c.l.b16 %v532
      %v1214 = vunpack.c.h.b16 %v532
      %v1215 = vunpack.c.l.b16 %v533
      %v1216 = vunpack.c.h.b16 %v533
      %v1217 = vunpack.c.l.b16 %v534
      %v1218 = vunpack.c.h.b16 %v534
      %v1219 = vunpack.c.l.b16 %v535
      %v1220 = vunpack.c.h.b16 %v535
      %v1221 = vunpack.c.l.b16 %v536
      %v1222 = vunpack.c.h.b16 %v536
      %v1223 = vunpack.c.l.b16 %v537
      %v1224 = vunpack.c.h.b16 %v537
      %v1225 = vunpack.c.l.b16 %v538
      %v1226 = vunpack.c.h.b16 %v538
      %v1227 = vunpack.c.l.b16 %v539
      %v1228 = vunpack.c.h.b16 %v539
      %v1229 = vunpack.c.l.b16 %v540
      %v1230 = vunpack.c.h.b16 %v540
      %v1231 = vunpack.c.l.b16 %v541
      %v1232 = vunpack.c.h.b16 %v541
      %v1233 = vunpack.c.l.b16 %v542
      %v1234 = vunpack.c.h.b16 %v542
      %v1235 = vunpack.c.l.b16 %v543
      %v1236 = vunpack.c.h.b16 %v543
      %v1237 = vunpack.c.l.b16 %v544
      %v1238 = vunpack.c.h.b16 %v544
      %v1239 = vunpack.c.l.b16 %v545
      %v1240 = vunpack.c.h.b16 %v545
      %v1241 = vunpack.c.l.b16 %v546
      %v1242 = vunpack.c.h.b16 %v546
      %v1243 = vunpack.c.l.b16 %v547
      %v1244 = vunpack.c.h.b16 %v547
      %v1245 = vunpack.c.l.b16 %v548
      %v1246 = vunpack.c.h.b16 %v548
      %v1247 = vunpack.c.l.b16 %v549
      %v1248 = vunpack.c.h.b16 %v549
      %v1249 = vunpack.c.l.b16 %v550
      %v1250 = vunpack.c.h.b16 %v550
      %v1251 = vunpack.c.l.b16 %v551
      %v1252 = vunpack.c.h.b16 %v551
      %v1253 = vunpack.c.l.b16 %v552
      %v1254 = vunpack.c.h.b16 %v552
      %v1255 = vunpack.c.l.b16 %v553
      %v1256 = vunpack.c.h.b16 %v553
      %v1257 = vunpack.c.l.b16 %v554
      %v1258 = vunpack.c.h.b16 %v554
      %v1259 = vunpack.c.l.b16 %v555
      %v1260 = vunpack.c.h.b16 %v555
      %v1261 = vunpack.c.l.b16 %v556
      %v1262 = vunpack.c.h.b16 %v556
      %v1263 = vunpack.c.l.b16 %v557
      %v1264 = vunpack.c.h.b16 %v557
      %v1265 = vunpack.c.l.b16 %v558
      %v1266 = vunpack.c.h.b16 %v558
      %v1267 = vunpack.c.l.b16 %v559
      %v1268 = vunpack.c.h.b16 %v559
      %v1269 = vunpack.c.l.b16 %v560
      %v1270 = vunpack.c.h.b16 %v560
      %v1271 = vunpack.c.l.b16 %v561
      %v1272 = vunpack.c.h.b16 %v561
      %v1273 = vunpack.c.l.b16 %v562
      %v1274 = vunpack.c.h.b16 %v562
      %v1275 = vunpack.c.l.b16 %v563
      %v1276 = vunpack.c.h.b16 %v563
      %v1277 = vunpack.c.l.b16 %v564
      %v1278 = vunpack.c.h.b16 %v564
      %v1279 = vunpack.c.l.b16 %v565
      %v1280 = vunpack.c.h.b16 %v565
      %v1281 = vunpack.c.l.b16 %v566
      %v1282 = vunpack.c.h.b16 %v566
      %v1283 = vunpack.c.l.b16 %v567
      %v1284 = vunpack.c.h.b16 %v567
      %v1285 = vunpack.c.l.b16 %v568
      %v1286 = vunpack.c.h.b16 %v568
      %v1287 = vunpack.c.l.b16 %v569
      %v1288 = vunpack.c.h.b16 %v569
      %v1289 = vunpack.c.l.b16 %v570
      %v1290 = vunpack.c.h.b16 %v570
      %v1291 = vunpack.c.l.b16 %v571
      %v1292 = vunpack.c.h.b16 %v571
      %v1293 = vunpack.c.l.b16 %v572
      %v1294 = vunpack.c.h.b16 %v572
      %v1295 = vunpack.c.l.b16 %v573
      %v1296 = vunpack.c.h.b16 %v573
      %v1297 = vunpack.c.l.b16 %v574
      %v1298 = vunpack.c.h.b16 %v574
      %v1299 = vunpack.c.l.b16 %v575
      %v1300 = vunpack.c.h.b16 %v575
      %v1301 = vunpack.c.l.b16 %v576
      %v1302 = vunpack.c.h.b16 %v576
      %v1303 = vunpack.c.l.b16 %v577
      %v1304 = vunpack.c.h.b16 %v577
      %v1305 = vunpack.c.l.b16 %v578
      %v1306 = vunpack.c.h.b16 %v578
      %v1307 = vunpack.c.l.b16 %v579
      %v1308 = vunpack.c.h.b16 %v579
      %v1309 = vunpack.c.l.b16 %v580
      %v1310 = vunpack.c.h.b16 %v580
      %v1311 = vunpack.c.l.b16 %v581
      %v1312 = vunpack.c.h.b16 %v581
      %v1313 = vunpack.c.l.b16 %v582
      %v1314 = vunpack.c.h.b16 %v582
      %v1315 = vunpack.c.l.b16 %v583
      %v1316 = vunpack.c.h.b16 %v583
      %v1317 = vunpack.c.l.b16 %v584
      %v1318 = vunpack.c.h.b16 %v584
      %v1319 = vunpack.c.l.b16 %v585
      %v1320 = vunpack.c.h.b16 %v585
      %v1321 = vunpack.c.l.b16 %v586
      %v1322 = vunpack.c.h.b16 %v586
      %v1323 = vunpack.c.l.b16 %v587
      %v1324 = vunpack.c.h.b16 %v587
      %v1325 = vunpack.c.l.b16 %v588
      %v1326 = vunpack.c.h.b16 %v588
      %v1327 = vunpack.c.l.b16 %v589
      %v1328 = vunpack.c.h.b16 %v589
      %v1329 = vunpack.c.l.b16 %v590
      %v1330 = vunpack.c.h.b16 %v590
      %v1331 = vunpack.c.l.b16 %v591
      %v1332 = vunpack.c.h.b16 %v591
      %v1333 = vunpack.c.l.b16 %v592
      %v1334 = vunpack.c.h.b16 %v592
      %v1335 = vunpack.c.l.b16 %v593
      %v1336 = vunpack.c.h.b16 %v593
      %v1337 = vunpack.c.l.b16 %v594
      %v1338 = vunpack.c.h.b16 %v594
      %v1339 = vunpack.c.l.b16 %v595
      %v1340 = vunpack.c.h.b16 %v595
      %v1341 = vunpack.c.l.b16 %v596
      %v1342 = vunpack.c.h.b16 %v596
      %v1343 = vunpack.c.l.b16 %v597
      %v1344 = vunpack.c.h.b16 %v597
      %v1345 = vunpack.c.l.b16 %v598
      %v1346 = vunpack.c.h.b16 %v598
      %v1347 = vunpack.c.l.b16 %v599
      %v1348 = vunpack.c.h.b16 %v599
      %v1349 = vunpack.c.l.b16 %v600
      %v1350 = vunpack.c.h.b16 %v600
      %v1351 = vunpack.c.l.b16 %v601
      %v1352 = vunpack.c.h.b16 %v601
      %v1353 = vunpack.c.l.b16 %v602
      %v1354 = vunpack.c.h.b16 %v602
      %v1355 = vunpack.c.l.b16 %v603
      %v1356 = vunpack.c.h.b16 %v603
      %v1357 = vunpack.c.l.b16 %v604
      %v1358 = vunpack.c.h.b16 %v604
      %v1359 = vunpack.c.l.b16 %v605
      %v1360 = vunpack.c.h.b16 %v605
      %v1361 = vunpack.c.l.b16 %v606
      %v1362 = vunpack.c.h.b16 %v606
      %v1363 = vunpack.c.l.b16 %v607
      %v1364 = vunpack.c.h.b16 %v607
      %v1365 = vunpack.c.l.b16 %v608
      %v1366 = vunpack.c.h.b16 %v608
      %v1367 = vunpack.c.l.b16 %v609
      %v1368 = vunpack.c.h.b16 %v609
      %v1369 = vunpack.c.l.b16 %v610
      %v1370 = vunpack.c.h.b16 %v610
      %v1371 = vunpack.c.l.b16 %v611
      %v1372 = vunpack.c.h.b16 %v611
      %v1373 = vunpack.c.l.b16 %v612
      %v1374 = vunpack.c.h.b16 %v612
      %v1375 = vunpack.c.l.b16 %v613
      %v1376 = vunpack.c.h.b16 %v613
      %v1377 = vunpack.c.l.b16 %v614
      %v1378 = vunpack.c.h.b16 %v614
      %v1379 = vunpack.c.l.b16 %v615
      %v1380 = vunpack.c.h.b16 %v615
      %v1381 = vunpack.c.l.b16 %v616
      %v1382 = vunpack.c.h.b16 %v616
      %v1383 = vunpack.c.l.b16 %v617
      %v1384 = vunpack.c.h.b16 %v617
      %v1385 = vunpack.c.l.b16 %v618
      %v1386 = vunpack.c.h.b16 %v618
      %v1387 = vunpack.c.l.b16 %v619
      %v1388 = vunpack.c.h.b16 %v619
      %v1389 = vunpack.c.l.b16 %v620
      %v1390 = vunpack.c.h.b16 %v620
      %v1391 = vunpack.c.l.b16 %v621
      %v1392 = vunpack.c.h.b16 %v621
      %v1393 = vunpack.c.l.b16 %v622
      %v1394 = vunpack.c.h.b16 %v622
      %v1395 = vunpack.c.l.b16 %v623
      %v1396 = vunpack.c.h.b16 %v623
      %v1397 = vunpack.c.l.b16 %v624
      %v1398 = vunpack.c.h.b16 %v624
      %v1399 = vunpack.c.l.b16 %v625
      %v1400 = vunpack.c.h.b16 %v625
      %v1401 = vunpack.c.l.b16 %v626
      %v1402 = vunpack.c.h.b16 %v626
      %v1403 = vunpack.c.l.b16 %v627
      %v1404 = vunpack.c.h.b16 %v627
      %v1405 = vunpack.c.l.b16 %v628
      %v1406 = vunpack.c.h.b16 %v628
      %v1407 = vunpack.c.l.b16 %v629
      %v1408 = vunpack.c.h.b16 %v629
      %v1409 = vunpack.c.l.b16 %v630
      %v1410 = vunpack.c.h.b16 %v630
      %v1411 = vunpack.c.l.b16 %v631
      %v1412 = vunpack.c.h.b16 %v631
      %v1413 = vunpack.c.l.b16 %v632
      %v1414 = vunpack.c.h.b16 %v632
      %v1415 = vunpack.c.l.b16 %v633
      %v1416 = vunpack.c.h.b16 %v633
      %v1417 = vunpack.c.l.b16 %v634
      %v1418 = vunpack.c.h.b16 %v634
      %v1419 = vunpack.c.l.b16 %v635
      %v1420 = vunpack.c.h.b16 %v635
      %v1421 = vunpack.c.l.b16 %v636
      %v1422 = vunpack.c.h.b16 %v636
      %v1423 = vunpack.c.l.b16 %v637
      %v1424 = vunpack.c.h.b16 %v637
      %v1425 = vunpack.c.l.b16 %v638
      %v1426 = vunpack.c.h.b16 %v638
      %v1427 = vunpack.c.l.b16 %v639
      %v1428 = vunpack.c.h.b16 %v639
      %v1429 = vunpack.c.l.b16 %v640
      %v1430 = vunpack.c.h.b16 %v640
      %v1431 = vunpack.c.l.b16 %v641
      %v1432 = vunpack.c.h.b16 %v641
      %v1433 = vunpack.c.l.b16 %v642
      %v1434 = vunpack.c.h.b16 %v642
      %v1435 = vunpack.c.l.b16 %v643
      %v1436 = vunpack.c.h.b16 %v643
      %v1437 = vunpack.c.l.b16 %v644
      %v1438 = vunpack.c.h.b16 %v644
      %v1439 = vunpack.c.l.b16 %v645
      %v1440 = vunpack.c.h.b16 %v645
      %v1441 = vunpack.c.l.b16 %v646
      %v1442 = vunpack.c.h.b16 %v646
      %v1443 = vunpack.c.l.b16 %v647
      %v1444 = vunpack.c.h.b16 %v647
      %v1445 = vunpack.c.l.b16 %v648
      %v1446 = vunpack.c.h.b16 %v648
      %v1447 = vunpack.c.l.b16 %v649
      %v1448 = vunpack.c.h.b16 %v649
      %v1449 = vunpack.c.l.b16 %v650
      %v1450 = vunpack.c.h.b16 %v650
      %v1451 = vunpack.c.l.b16 %v651
      %v1452 = vunpack.c.h.b16 %v651
      %v1453 = vunpack.c.l.b16 %v652
      %v1454 = vunpack.c.h.b16 %v652
      %v1455 = vunpack.c.l.b16 %v653
      %v1456 = vunpack.c.h.b16 %v653
      %v1457 = vunpack.c.l.b16 %v654
      %v1458 = vunpack.c.h.b16 %v654
      %v1459 = vunpack.c.l.b16 %v655
      %v1460 = vunpack.c.h.b16 %v655
      %v1461 = vunpack.c.l.b16 %v656
      %v1462 = vunpack.c.h.b16 %v656
      %v1463 = vunpack.c.l.b16 %v657
      %v1464 = vunpack.c.h.b16 %v657
      %v1465 = vunpack.c.l.b16 %v658
      %v1466 = vunpack.c.h.b16 %v658
      %v1467 = vunpack.c.l.b16 %v659
      %v1468 = vunpack.c.h.b16 %v659
      %v1469 = vunpack.c.l.b16 %v660
      %v1470 = vunpack.c.h.b16 %v660
      %v1471 = vpack.c.b16 %v967, %v959
      %v1472 = vpack.c.b16 %v968, %v960
      %v1473 = vpack.c.b16 %v969, %v961
      %v1474 = vpack.c.b16 %v970, %v962
      %v1475 = vpack.c.b16 %v971, %v963
      %v1476 = vpack.c.b16 %v972, %v964
      %v1477 = vpack.c.b16 %v973, %v965
      %v1478 = vpack.c.b16 %v974, %v966
      %v1479 = vpack.c.b16 %v983, %v975
      %v1480 = vpack.c.b16 %v984, %v976
      %v1481 = vpack.c.b16 %v985, %v977
      %v1482 = vpack.c.b16 %v986, %v978
      %v1483 = vpack.c.b16 %v987, %v979
      %v1484 = vpack.c.b16 %v988, %v980
      %v1485 = vpack.c.b16 %v989, %v981
      %v1486 = vpack.c.b16 %v990, %v982
      %v1487 = vpack.c.b16 %v999, %v991
      %v1488 = vpack.c.b16 %v1000, %v992
      %v1489 = vpack.c.b16 %v1001, %v993
      %v1490 = vpack.c.b16 %v1002, %v994
      %v1491 = vpack.c.b16 %v1003, %v995
      %v1492 = vpack.c.b16 %v1004, %v996
      %v1493 = vpack.c.b16 %v1005, %v997
      %v1494 = vpack.c.b16 %v1006, %v998
      %v1495 = vpack.c.b16 %v1015, %v1007
      %v1496 = vpack.c.b16 %v1016, %v1008
      %v1497 = vpack.c.b16 %v1017, %v1009
      %v1498 = vpack.c.b16 %v1018, %v1010
      %v1499 = vpack.c.b16 %v1019, %v1011
      %v1500 = vpack.c.b16 %v1020, %v1012
      %v1501 = vpack.c.b16 %v1021, %v1013
      %v1502 = vpack.c.b16 %v1022, %v1014
      %v1503 = vpack.c.b16 %v1031, %v1023
      %v1504 = vpack.c.b16 %v1032, %v1024
      %v1505 = vpack.c.b16 %v1033, %v1025
      %v1506 = vpack.c.b16 %v1034, %v1026
      %v1507 = vpack.c.b16 %v1035, %v1027
      %v1508 = vpack.c.b16 %v1036, %v1028
      %v1509 = vpack.c.b16 %v1037, %v1029
      %v1510 = vpack.c.b16 %v1038, %v1030
      %v1511 = vpack.c.b16 %v1047, %v1039
      %v1512 = vpack.c.b16 %v1048, %v1040
      %v1513 = vpack.c.b16 %v1049, %v1041
      %v1514 = vpack.c.b16 %v1050, %v1042
      %v1515 = vpack.c.b16 %v1051, %v1043
      %v1516 = vpack.c.b16 %v1052, %v1044
      %v1517 = vpack.c.b16 %v1053, %v1045
      %v1518 = vpack.c.b16 %v1054, %v1046
      %v1519 = vpack.c.b16 %v1063, %v1055
      %v1520 = vpack.c.b16 %v1064, %v1056
      %v1521 = vpack.c.b16 %v1065, %v1057
      %v1522 = vpack.c.b16 %v1066, %v1058
      %v1523 = vpack.c.b16 %v1067, %v1059
      %v1524 = vpack.c.b16 %v1068, %v1060
      %v1525 = vpack.c.b16 %v1069, %v1061
      %v1526 = vpack.c.b16 %v1070, %v1062
      %v1527 = vpack.c.b16 %v1079, %v1071
      %v1528 = vpack.c.b16 %v1080, %v1072
      %v1529 = vpack.c.b16 %v1081, %v1073
      %v1530 = vpack.c.b16 %v1082, %v1074
      %v1531 = vpack.c.b16 %v1083, %v1075
      %v1532 = vpack.c.b16 %v1084, %v1076
      %v1533 = vpack.c.b16 %v1085, %v1077
      %v1534 = vpack.c.b16 %v1086, %v1078
      %v1535 = vpack.c.b16 %v1095, %v1087
      %v1536 = vpack.c.b16 %v1096, %v1088
      %v1537 = vpack.c.b16 %v1097, %v1089
      %v1538 = vpack.c.b16 %v1098, %v1090
      %v1539 = vpack.c.b16 %v1099, %v1091
      %v1540 = vpack.c.b16 %v1100, %v1092
      %v1541 = vpack.c.b16 %v1101, %v1093
      %v1542 = vpack.c.b16 %v1102, %v1094
      %v1543 = vpack.c.b16 %v1111, %v1103
      %v1544 = vpack.c.b16 %v1112, %v1104
      %v1545 = vpack.c.b16 %v1113, %v1105
      %v1546 = vpack.c.b16 %v1114, %v1106
      %v1547 = vpack.c.b16 %v1115, %v1107
      %v1548 = vpack.c.b16 %v1116, %v1108
      %v1549 = vpack.c.b16 %v1117, %v1109
      %v1550 = vpack.c.b16 %v1118, %v1110
      %v1551 = vpack.c.b16 %v1127, %v1119
      %v1552 = vpack.c.b16 %v1128, %v1120
      %v1553 = vpack.c.b16 %v1129, %v1121
      %v1554 = vpack.c.b16 %v1130, %v1122
      %v1555 = vpack.c.b16 %v1131, %v1123
      %v1556 = vpack.c.b16 %v1132, %v1124
      %v1557 = vpack.c.b16 %v1133, %v1125
      %v1558 = vpack.c.b16 %v1134, %v1126
      %v1559 = vpack.c.b16 %v1143, %v1135
      %v1560 = vpack.c.b16 %v1144, %v1136
      %v1561 = vpack.c.b16 %v1145, %v1137
      %v1562 = vpack.c.b16 %v1146, %v1138
      %v1563 = vpack.c.b16 %v1147, %v1139
      %v1564 = vpack.c.b16 %v1148, %v1140
      %v1565 = vpack.c.b16 %v1149, %v1141
      %v1566 = vpack.c.b16 %v1150, %v1142
      %v1567 = vpack.c.b16 %v1159, %v1151
      %v1568 = vpack.c.b16 %v1160, %v1152
      %v1569 = vpack.c.b16 %v1161, %v1153
      %v1570 = vpack.c.b16 %v1162, %v1154
      %v1571 = vpack.c.b16 %v1163, %v1155
      %v1572 = vpack.c.b16 %v1164, %v1156
      %v1573 = vpack.c.b16 %v1165, %v1157
      %v1574 = vpack.c.b16 %v1166, %v1158
      %v1575 = vpack.c.b16 %v1175, %v1167
      %v1576 = vpack.c.b16 %v1176, %v1168
      %v1577 = vpack.c.b16 %v1177, %v1169
      %v1578 = vpack.c.b16 %v1178, %v1170
      %v1579 = vpack.c.b16 %v1179, %v1171
      %v1580 = vpack.c.b16 %v1180, %v1172
      %v1581 = vpack.c.b16 %v1181, %v1173
      %v1582 = vpack.c.b16 %v1182, %v1174
      %v1583 = vpack.c.b16 %v1191, %v1183
      %v1584 = vpack.c.b16 %v1192, %v1184
      %v1585 = vpack.c.b16 %v1193, %v1185
      %v1586 = vpack.c.b16 %v1194, %v1186
      %v1587 = vpack.c.b16 %v1195, %v1187
      %v1588 = vpack.c.b16 %v1196, %v1188
      %v1589 = vpack.c.b16 %v1197, %v1189
      %v1590 = vpack.c.b16 %v1198, %v1190
      %v1591 = vpack.c.b16 %v1207, %v1199
      %v1592 = vpack.c.b16 %v1208, %v1200
      %v1593 = vpack.c.b16 %v1209, %v1201
      %v1594 = vpack.c.b16 %v1210, %v1202
      %v1595 = vpack.c.b16 %v1211, %v1203
      %v1596 = vpack.c.b16 %v1212, %v1204
      %v1597 = vpack.c.b16 %v1213, %v1205
      %v1598 = vpack.c.b16 %v1214, %v1206
      %v1599 = vpack.c.b16 %v1223, %v1215
      %v1600 = vpack.c.b16 %v1224, %v1216
      %v1601 = vpack.c.b16 %v1225, %v1217
      %v1602 = vpack.c.b16 %v1226, %v1218
      %v1603 = vpack.c.b16 %v1227, %v1219
      %v1604 = vpack.c.b16 %v1228, %v1220
      %v1605 = vpack.c.b16 %v1229, %v1221
      %v1606 = vpack.c.b16 %v1230, %v1222
      %v1607 = vpack.c.b16 %v1239, %v1231
      %v1608 = vpack.c.b16 %v1240, %v1232
      %v1609 = vpack.c.b16 %v1241, %v1233
      %v1610 = vpack.c.b16 %v1242, %v1234
      %v1611 = vpack.c.b16 %v1243, %v1235
      %v1612 = vpack.c.b16 %v1244, %v1236
      %v1613 = vpack.c.b16 %v1245, %v1237
      %v1614 = vpack.c.b16 %v1246, %v1238
      %v1615 = vpack.c.b16 %v1255, %v1247
      %v1616 = vpack.c.b16 %v1256, %v1248
      %v1617 = vpack.c.b16 %v1257, %v1249
      %v1618 = vpack.c.b16 %v1258, %v1250
      %v1619 = vpack.c.b16 %v1259, %v1251
      %v1620 = vpack.c.b16 %v1260, %v1252
      %v1621 = vpack.c.b16 %v1261, %v1253
      %v1622 = vpack.c.b16 %v1262, %v1254
      %v1623 = vpack.c.b16 %v1271, %v1263
      %v1624 = vpack.c.b16 %v1272, %v1264
      %v1625 = vpack.c.b16 %v1273, %v1265
      %v1626 = vpack.c.b16 %v1274, %v1266
      %v1627 = vpack.c.b16 %v1275, %v1267
      %v1628 = vpack.c.b16 %v1276, %v1268
      %v1629 = vpack.c.b16 %v1277, %v1269
      %v1630 = vpack.c.b16 %v1278, %v1270
      %v1631 = vpack.c.b16 %v1287, %v1279
      %v1632 = vpack.c.b16 %v1288, %v1280
      %v1633 = vpack.c.b16 %v1289, %v1281
      %v1634 = vpack.c.b16 %v1290, %v1282
      %v1635 = vpack.c.b16 %v1291, %v1283
      %v1636 = vpack.c.b16 %v1292, %v1284
      %v1637 = vpack.c.b16 %v1293, %v1285
      %v1638 = vpack.c.b16 %v1294, %v1286
      %v1639 = vpack.c.b16 %v1303, %v1295
      %v1640 = vpack.c.b16 %v1304, %v1296
      %v1641 = vpack.c.b16 %v1305, %v1297
      %v1642 = vpack.c.b16 %v1306, %v1298
      %v1643 = vpack.c.b16 %v1307, %v1299
      %v1644 = vpack.c.b16 %v1308, %v1300
      %v1645 = vpack.c.b16 %v1309, %v1301
      %v1646 = vpack.c.b16 %v1310, %v1302
      %v1647 = vpack.c.b16 %v1319, %v1311
      %v1648 = vpack.c.b16 %v1320, %v1312
      %v1649 = vpack.c.b16 %v1321, %v1313
      %v1650 = vpack.c.b16 %v1322, %v1314
      %v1651 = vpack.c.b16 %v1323, %v1315
      %v1652 = vpack.c.b16 %v1324, %v1316
      %v1653 = vpack.c.b16 %v1325, %v1317
      %v1654 = vpack.c.b16 %v1326, %v1318
      %v1655 = vpack.c.b16 %v1335, %v1327
      %v1656 = vpack.c.b16 %v1336, %v1328
      %v1657 = vpack.c.b16 %v1337, %v1329
      %v1658 = vpack.c.b16 %v1338, %v1330
      %v1659 = vpack.c.b16 %v1339, %v1331
      %v1660 = vpack.c.b16 %v1340, %v1332
      %v1661 = vpack.c.b16 %v1341, %v1333
      %v1662 = vpack.c.b16 %v1342, %v1334
      %v1663 = vpack.c.b16 %v1351, %v1343
      %v1664 = vpack.c.b16 %v1352, %v1344
      %v1665 = vpack.c.b16 %v1353, %v1345
      %v1666 = vpack.c.b16 %v1354, %v1346
      %v1667 = vpack.c.b16 %v1355, %v1347
      %v1668 = vpack.c.b16 %v1356, %v1348
      %v1669 = vpack.c.b16 %v1357, %v1349
      %v1670 = vpack.c.b16 %v1358, %v1350
      %v1671 = vpack.c.b16 %v1367, %v1359
      %v1672 = vpack.c.b16 %v1368, %v1360
      %v1673 = vpack.c.b16 %v1369, %v1361
      %v1674 = vpack.c.b16 %v1370, %v1362
      %v1675 = vpack.c.b16 %v1371, %v1363
      %v1676 = vpack.c.b16 %v1372, %v1364
      %v1677 = vpack.c.b16 %v1373, %v1365
      %v1678 = vpack.c.b16 %v1374, %v1366
      %v1679 = vpack.c.b16 %v1383, %v1375
      %v1680 = vpack.c.b16 %v1384, %v1376
      %v1681 = vpack.c.b16 %v1385, %v1377
      %v1682 = vpack.c.b16 %v1386, %v1378
      %v1683 = vpack.c.b16 %v1387, %v1379
      %v1684 = vpack.c.b16 %v1388, %v1380
      %v1685 = vpack.c.b16 %v1389, %v1381
      %v1686 = vpack.c.b16 %v1390, %v1382
      %v1687 = vpack.c.b16 %v1399, %v1391
      %v1688 = vpack.c.b16 %v1400, %v1392
      %v1689 = vpack.c.b16 %v1401, %v1393
      %v1690 = vpack.c.b16 %v1402, %v1394
      %v1691 = vpack.c.b16 %v1403, %v1395
      %v1692 = vpack.c.b16 %v1404, %v1396
      %v1693 = vpack.c.b16 %v1405, %v1397
      %v1694 = vpack.c.b16 %v1406, %v1398
      %v1695 = vpack.c.b16 %v1415, %v1407
      %v1696 = vpack.c.b16 %v1416, %v1408
      %v1697 = vpack.c.b16 %v1417, %v1409
      %v1698 = vpack.c.b16 %v1418, %v1410
      %v1699 = vpack.c.b16 %v1419, %v1411
      %v1700 = vpack.c.b16 %v1420, %v1412
      %v1701 = vpack.c.b16 %v1421, %v1413
      %v1702 = vpack.c.b16 %v1422, %v1414
      %v1703 = vpack.c.b16 %v1431, %v1423
      %v1704 = vpack.c.b16 %v1432, %v1424
      %v1705 = vpack.c.b16 %v1433, %v1425
      %v1706 = vpack.c.b16 %v1434, %v1426
      %v1707 = vpack.c.b16 %v1435, %v1427
      %v1708 = vpack.c.b16 %v1436, %v1428
      %v1709 = vpack.c.b16 %v1437, %v1429
      %v1710 = vpack.c.b16 %v1438, %v1430
      %v1711 = vpack.c.b16 %v1447, %v1439
      %v1712 = vpack.c.b16 %v1448, %v1440
      %v1713 = vpack.c.b16 %v1449, %v1441
      %v1714 = vpack.c.b16 %v1450, %v1442
      %v1715 = vpack.c.b16 %v1451, %v1443
      %v1716 = vpack.c.b16 %v1452, %v1444
      %v1717 = vpack.c.b16 %v1453, %v1445
      %v1718 = vpack.c.b16 %v1454, %v1446
      %v1719 = vpack.c.b16 %v1463, %v1455
      %v1720 = vpack.c.b16 %v1464, %v1456
      %v1721 = vpack.c.b16 %v1465, %v1457
      %v1722 = vpack.c.b16 %v1466, %v1458
      %v1723 = vpack.c.b16 %v1467, %v1459
      %v1724 = vpack.c.b16 %v1468, %v1460
      %v1725 = vpack.c.b16 %v1469, %v1461
      %v1726 = vpack.c.b16 %v1470, %v1462
      %1983 = vmatprep.subr.bf16.mxu0 %v1472
      %1984 = vmatpush1.bf16.msra.mxu0 %v1471
      %1985 = vmatprep.subr.bf16.mxu0 %v1480
      %1986 = vmatpush1.bf16.msra.mxu0 %v1479
      %1987 = vmatprep.subr.bf16.mxu0 %v1488
      %1988 = vmatpush1.bf16.msra.mxu0 %v1487
      %1989 = vmatprep.subr.bf16.mxu0 %v1496
      %1990 = vmatpush1.bf16.msra.mxu0 %v1495
      %1991 = vmatprep.subr.bf16.mxu0 %v1504
      %1992 = vmatpush1.bf16.msra.mxu0 %v1503
      %1993 = vmatprep.subr.bf16.mxu0 %v1512
      %1994 = vmatpush1.bf16.msra.mxu0 %v1511
      %1995 = vmatprep.subr.bf16.mxu0 %v1520
      %1996 = vmatpush1.bf16.msra.mxu0 %v1519
      %1997 = vmatprep.subr.bf16.mxu0 %v1528
      %1998 = vmatpush1.bf16.msra.mxu0 %v1527
      %1999 = vmatprep.subr.bf16.mxu0 %v1536
      %2000 = vmatpush1.bf16.msra.mxu0 %v1535
      %2001 = vmatprep.subr.bf16.mxu0 %v1544
      %2002 = vmatpush1.bf16.msra.mxu0 %v1543
      %2003 = vmatprep.subr.bf16.mxu0 %v1552
      %2004 = vmatpush1.bf16.msra.mxu0 %v1551
      %2005 = vmatprep.subr.bf16.mxu0 %v1560
      %2006 = vmatpush1.bf16.msra.mxu0 %v1559
      %2007 = vmatprep.subr.bf16.mxu0 %v1568
      %2008 = vmatpush1.bf16.msra.mxu0 %v1567
      %2009 = vmatprep.subr.bf16.mxu0 %v1576
      %2010 = vmatpush1.bf16.msra.mxu0 %v1575
      %2011 = vmatprep.subr.bf16.mxu0 %v1584
      %2012 = vmatpush1.bf16.msra.mxu0 %v1583
      %2013 = vmatprep.subr.bf16.mxu0 %v1592
      %2014 = vmatpush1.bf16.msra.mxu0 %v1591
      %2015 = vmatprep.mubr.bf16.mxu0 %v402
      %2016 = vmatmul.mubr.bf16.gmra.mrb[0].mxu0 %v401
      %v2017 = vpop.f32.mrb[0].mxu0
      %v2018 = vadd.f32 %v666, %v2017
      %v2019 = vpop.f32.mrb[0].mxu0
      %v2020 = vadd.f32 %v670, %v2019
      %v2021 = vpop.f32.mrb[0].mxu0
      %v2022 = vadd.f32 %v666, %v2021
      %v2023 = vpop.f32.mrb[0].mxu0
      %v2024 = vadd.f32 %v670, %v2023
      %2025 = vdwg.mxu0
      %2026 = vmatprep.subr.bf16.mxu0 %v1600
      %2027 = vmatpush1.bf16.msra.mxu0 %v1599
      %2028 = vmatprep.subr.bf16.mxu0 %v1608
      %2029 = vmatpush1.bf16.msra.mxu0 %v1607
      %2030 = vmatprep.subr.bf16.mxu0 %v1616
      %2031 = vmatpush1.bf16.msra.mxu0 %v1615
      %2032 = vmatprep.subr.bf16.mxu0 %v1624
      %2033 = vmatpush1.bf16.msra.mxu0 %v1623
      %2034 = vmatprep.subr.bf16.mxu0 %v1632
      %2035 = vmatpush1.bf16.msra.mxu0 %v1631
      %2036 = vmatprep.subr.bf16.mxu0 %v1640
      %2037 = vmatpush1.bf16.msra.mxu0 %v1639
      %2038 = vmatprep.subr.bf16.mxu0 %v1648
      %2039 = vmatpush1.bf16.msra.mxu0 %v1647
      %2040 = vmatprep.subr.bf16.mxu0 %v1656
      %2041 = vmatpush1.bf16.msra.mxu0 %v1655
      %2042 = vmatprep.subr.bf16.mxu0 %v1664
      %2043 = vmatpush1.bf16.msra.mxu0 %v1663
      %2044 = vmatprep.subr.bf16.mxu0 %v1672
      %2045 = vmatpush1.bf16.msra.mxu0 %v1671
      %2046 = vmatprep.subr.bf16.mxu0 %v1680
      %2047 = vmatpush1.bf16.msra.mxu0 %v1679
      %2048 = vmatprep.subr.bf16.mxu0 %v1688
      %2049 = vmatpush1.bf16.msra.mxu0 %v1687
      %2050 = vmatprep.subr.bf16.mxu0 %v1696
      %2051 = vmatpush1.bf16.msra.mxu0 %v1695
      %2052 = vmatprep.subr.bf16.mxu0 %v1704
      %2053 = vmatpush1.bf16.msra.mxu0 %v1703
      %2054 = vmatprep.subr.bf16.mxu0 %v1712
      %2055 = vmatpush1.bf16.msra.mxu0 %v1711
      %2056 = vmatprep.subr.bf16.mxu0 %v1720
      %2057 = vmatpush1.bf16.msra.mxu0 %v1719
      %2058 = vmatprep.mubr.bf16.mxu0 %v404
      %2059 = vmatmul.mubr.bf16.gmra.mrb[0].mxu0 %v403
      %v2060 = vpop.f32.mrb[0].mxu0
      %v2061 = vadd.f32 %v2018, %v2060
      %v2062 = vpop.f32.mrb[0].mxu0
      %v2063 = vadd.f32 %v2020, %v2062
      %v2064 = vpop.f32.mrb[0].mxu0
      %v2065 = vadd.f32 %v2022, %v2064
      %v2066 = vpop.f32.mrb[0].mxu0
      %v2067 = vadd.f32 %v2024, %v2066
      %2068 = vdwg.mxu0
      %2069 = vmatprep.subr.bf16.mxu0 %v1474
      %2070 = vmatpush1.bf16.msra.mxu0 %v1473
      %2071 = vmatprep.subr.bf16.mxu0 %v1482
      %2072 = vmatpush1.bf16.msra.mxu0 %v1481
      %2073 = vmatprep.subr.bf16.mxu0 %v1490
      %2074 = vmatpush1.bf16.msra.mxu0 %v1489
      %2075 = vmatprep.subr.bf16.mxu0 %v1498
      %2076 = vmatpush1.bf16.msra.mxu0 %v1497
      %2077 = vmatprep.subr.bf16.mxu0 %v1506
      %2078 = vmatpush1.bf16.msra.mxu0 %v1505
      %2079 = vmatprep.subr.bf16.mxu0 %v1514
      %2080 = vmatpush1.bf16.msra.mxu0 %v1513
      %2081 = vmatprep.subr.bf16.mxu0 %v1522
      %2082 = vmatpush1.bf16.msra.mxu0 %v1521
      %2083 = vmatprep.subr.bf16.mxu0 %v1530
      %2084 = vmatpush1.bf16.msra.mxu0 %v1529
      %2085 = vmatprep.subr.bf16.mxu0 %v1538
      %2086 = vmatpush1.bf16.msra.mxu0 %v1537
      %2087 = vmatprep.subr.bf16.mxu0 %v1546
      %2088 = vmatpush1.bf16.msra.mxu0 %v1545
      %2089 = vmatprep.subr.bf16.mxu0 %v1554
      %2090 = vmatpush1.bf16.msra.mxu0 %v1553
      %2091 = vmatprep.subr.bf16.mxu0 %v1562
      %2092 = vmatpush1.bf16.msra.mxu0 %v1561
      %2093 = vmatprep.subr.bf16.mxu0 %v1570
      %2094 = vmatpush1.bf16.msra.mxu0 %v1569
      %2095 = vmatprep.subr.bf16.mxu0 %v1578
      %2096 = vmatpush1.bf16.msra.mxu0 %v1577
      %2097 = vmatprep.subr.bf16.mxu0 %v1586
      %2098 = vmatpush1.bf16.msra.mxu0 %v1585
      %2099 = vmatprep.subr.bf16.mxu0 %v1594
      %2100 = vmatpush1.bf16.msra.mxu0 %v1593
      %2101 = vmatprep.mubr.bf16.mxu0 %v402
      %2102 = vmatmul.mubr.bf16.gmra.mrb[0].mxu0 %v401
      %v2103 = vpop.f32.mrb[0].mxu0
      %v2104 = vadd.f32 %v674, %v2103
      %v2105 = vpop.f32.mrb[0].mxu0
      %v2106 = vadd.f32 %v678, %v2105
      %v2107 = vpop.f32.mrb[0].mxu0
      %v2108 = vadd.f32 %v674, %v2107
      %v2109 = vpop.f32.mrb[0].mxu0
      %v2110 = vadd.f32 %v678, %v2109
      %2111 = vdwg.mxu0
      %2112 = vmatprep.subr.bf16.mxu0 %v1602
      %2113 = vmatpush1.bf16.msra.mxu0 %v1601
      %2114 = vmatprep.subr.bf16.mxu0 %v1610
      %2115 = vmatpush1.bf16.msra.mxu0 %v1609
      %2116 = vmatprep.subr.bf16.mxu0 %v1618
      %2117 = vmatpush1.bf16.msra.mxu0 %v1617
      %2118 = vmatprep.subr.bf16.mxu0 %v1626
      %2119 = vmatpush1.bf16.msra.mxu0 %v1625
      %2120 = vmatprep.subr.bf16.mxu0 %v1634
      %2121 = vmatpush1.bf16.msra.mxu0 %v1633
      %2122 = vmatprep.subr.bf16.mxu0 %v1642
      %2123 = vmatpush1.bf16.msra.mxu0 %v1641
      %2124 = vmatprep.subr.bf16.mxu0 %v1650
      %2125 = vmatpush1.bf16.msra.mxu0 %v1649
      %2126 = vmatprep.subr.bf16.mxu0 %v1658
      %2127 = vmatpush1.bf16.msra.mxu0 %v1657
      %2128 = vmatprep.subr.bf16.mxu0 %v1666
      %2129 = vmatpush1.bf16.msra.mxu0 %v1665
      %2130 = vmatprep.subr.bf16.mxu0 %v1674
      %2131 = vmatpush1.bf16.msra.mxu0 %v1673
      %2132 = vmatprep.subr.bf16.mxu0 %v1682
      %2133 = vmatpush1.bf16.msra.mxu0 %v1681
      %2134 = vmatprep.subr.bf16.mxu0 %v1690
      %2135 = vmatpush1.bf16.msra.mxu0 %v1689
      %2136 = vmatprep.subr.bf16.mxu0 %v1698
      %2137 = vmatpush1.bf16.msra.mxu0 %v1697
      %2138 = vmatprep.subr.bf16.mxu0 %v1706
      %2139 = vmatpush1.bf16.msra.mxu0 %v1705
      %2140 = vmatprep.subr.bf16.mxu0 %v1714
      %2141 = vmatpush1.bf16.msra.mxu0 %v1713
      %2142 = vmatprep.subr.bf16.mxu0 %v1722
      %2143 = vmatpush1.bf16.msra.mxu0 %v1721
      %2144 = vmatprep.mubr.bf16.mxu0 %v404
      %2145 = vmatmul.mubr.bf16.gmra.mrb[0].mxu0 %v403
      %v2146 = vpop.f32.mrb[0].mxu0
      %v2147 = vadd.f32 %v2104, %v2146
      %v2148 = vpop.f32.mrb[0].mxu0
      %v2149 = vadd.f32 %v2106, %v2148
      %v2150 = vpop.f32.mrb[0].mxu0
      %v2151 = vadd.f32 %v2108, %v2150
      %v2152 = vpop.f32.mrb[0].mxu0
      %v2153 = vadd.f32 %v2110, %v2152
      %2154 = vdwg.mxu0
      %2155 = vmatprep.subr.bf16.mxu0 %v1476
      %2156 = vmatpush1.bf16.msra.mxu0 %v1475
      %2157 = vmatprep.subr.bf16.mxu0 %v1484
      %2158 = vmatpush1.bf16.msra.mxu0 %v1483
      %2159 = vmatprep.subr.bf16.mxu0 %v1492
      %2160 = vmatpush1.bf16.msra.mxu0 %v1491
      %2161 = vmatprep.subr.bf16.mxu0 %v1500
      %2162 = vmatpush1.bf16.msra.mxu0 %v1499
      %2163 = vmatprep.subr.bf16.mxu0 %v1508
      %2164 = vmatpush1.bf16.msra.mxu0 %v1507
      %2165 = vmatprep.subr.bf16.mxu0 %v1516
      %2166 = vmatpush1.bf16.msra.mxu0 %v1515
      %2167 = vmatprep.subr.bf16.mxu0 %v1524
      %2168 = vmatpush1.bf16.msra.mxu0 %v1523
      %2169 = vmatprep.subr.bf16.mxu0 %v1532
      %2170 = vmatpush1.bf16.msra.mxu0 %v1531
      %2171 = vmatprep.subr.bf16.mxu0 %v1540
      %2172 = vmatpush1.bf16.msra.mxu0 %v1539
      %2173 = vmatprep.subr.bf16.mxu0 %v1548
      %2174 = vmatpush1.bf16.msra.mxu0 %v1547
      %2175 = vmatprep.subr.bf16.mxu0 %v1556
      %2176 = vmatpush1.bf16.msra.mxu0 %v1555
      %2177 = vmatprep.subr.bf16.mxu0 %v1564
      %2178 = vmatpush1.bf16.msra.mxu0 %v1563
      %2179 = vmatprep.subr.bf16.mxu0 %v1572
      %2180 = vmatpush1.bf16.msra.mxu0 %v1571
      %2181 = vmatprep.subr.bf16.mxu0 %v1580
      %2182 = vmatpush1.bf16.msra.mxu0 %v1579
      %2183 = vmatprep.subr.bf16.mxu0 %v1588
      %2184 = vmatpush1.bf16.msra.mxu0 %v1587
      %2185 = vmatprep.subr.bf16.mxu0 %v1596
      %2186 = vmatpush1.bf16.msra.mxu0 %v1595
      %2187 = vmatprep.mubr.bf16.mxu0 %v402
      %2188 = vmatmul.mubr.bf16.gmra.mrb[0].mxu0 %v401
      %v2189 = vpop.f32.mrb[0].mxu0
      %v2190 = vadd.f32 %v682, %v2189
      %v2191 = vpop.f32.mrb[0].mxu0
      %v2192 = vadd.f32 %v686, %v2191
      %v2193 = vpop.f32.mrb[0].mxu0
      %v2194 = vadd.f32 %v682, %v2193
      %v2195 = vpop.f32.mrb[0].mxu0
      %v2196 = vadd.f32 %v686, %v2195
      %2197 = vdwg.mxu0
      %2198 = vmatprep.subr.bf16.mxu0 %v1604
      %2199 = vmatpush1.bf16.msra.mxu0 %v1603
      %2200 = vmatprep.subr.bf16.mxu0 %v1612
      %2201 = vmatpush1.bf16.msra.mxu0 %v1611
      %2202 = vmatprep.subr.bf16.mxu0 %v1620
      %2203 = vmatpush1.bf16.msra.mxu0 %v1619
      %2204 = vmatprep.subr.bf16.mxu0 %v1628
      %2205 = vmatpush1.bf16.msra.mxu0 %v1627
      %2206 = vmatprep.subr.bf16.mxu0 %v1636
      %2207 = vmatpush1.bf16.msra.mxu0 %v1635
      %2208 = vmatprep.subr.bf16.mxu0 %v1644
      %2209 = vmatpush1.bf16.msra.mxu0 %v1643
      %2210 = vmatprep.subr.bf16.mxu0 %v1652
      %2211 = vmatpush1.bf16.msra.mxu0 %v1651
      %2212 = vmatprep.subr.bf16.mxu0 %v1660
      %2213 = vmatpush1.bf16.msra.mxu0 %v1659
      %2214 = vmatprep.subr.bf16.mxu0 %v1668
      %2215 = vmatpush1.bf16.msra.mxu0 %v1667
      %2216 = vmatprep.subr.bf16.mxu0 %v1676
      %2217 = vmatpush1.bf16.msra.mxu0 %v1675
      %2218 = vmatprep.subr.bf16.mxu0 %v1684
      %2219 = vmatpush1.bf16.msra.mxu0 %v1683
      %2220 = vmatprep.subr.bf16.mxu0 %v1692
      %2221 = vmatpush1.bf16.msra.mxu0 %v1691
      %2222 = vmatprep.subr.bf16.mxu0 %v1700
      %2223 = vmatpush1.bf16.msra.mxu0 %v1699
      %2224 = vmatprep.subr.bf16.mxu0 %v1708
      %2225 = vmatpush1.bf16.msra.mxu0 %v1707
      %2226 = vmatprep.subr.bf16.mxu0 %v1716
      %2227 = vmatpush1.bf16.msra.mxu0 %v1715
      %2228 = vmatprep.subr.bf16.mxu0 %v1724
      %2229 = vmatpush1.bf16.msra.mxu0 %v1723
      %2230 = vmatprep.mubr.bf16.mxu0 %v404
      %2231 = vmatmul.mubr.bf16.gmra.mrb[0].mxu0 %v403
      %v2232 = vpop.f32.mrb[0].mxu0
      %v2233 = vadd.f32 %v2190, %v2232
      %v2234 = vpop.f32.mrb[0].mxu0
      %v2235 = vadd.f32 %v2192, %v2234
      %v2236 = vpop.f32.mrb[0].mxu0
      %v2237 = vadd.f32 %v2194, %v2236
      %v2238 = vpop.f32.mrb[0].mxu0
      %v2239 = vadd.f32 %v2196, %v2238
      %2240 = vdwg.mxu0
      %2241 = vmatprep.subr.bf16.mxu0 %v1478
      %2242 = vmatpush1.bf16.msra.mxu0 %v1477
      %2243 = vmatprep.subr.bf16.mxu0 %v1486
      %2244 = vmatpush1.bf16.msra.mxu0 %v1485
      %2245 = vmatprep.subr.bf16.mxu0 %v1494
      %2246 = vmatpush1.bf16.msra.mxu0 %v1493
      %2247 = vmatprep.subr.bf16.mxu0 %v1502
      %2248 = vmatpush1.bf16.msra.mxu0 %v1501
      %2249 = vmatprep.subr.bf16.mxu0 %v1510
      %2250 = vmatpush1.bf16.msra.mxu0 %v1509
      %2251 = vmatprep.subr.bf16.mxu0 %v1518
      %2252 = vmatpush1.bf16.msra.mxu0 %v1517
      %2253 = vmatprep.subr.bf16.mxu0 %v1526
      %2254 = vmatpush1.bf16.msra.mxu0 %v1525
      %2255 = vmatprep.subr.bf16.mxu0 %v1534
      %2256 = vmatpush1.bf16.msra.mxu0 %v1533
      %2257 = vmatprep.subr.bf16.mxu0 %v1542
      %2258 = vmatpush1.bf16.msra.mxu0 %v1541
      %2259 = vmatprep.subr.bf16.mxu0 %v1550
      %2260 = vmatpush1.bf16.msra.mxu0 %v1549
      %2261 = vmatprep.subr.bf16.mxu0 %v1558
      %2262 = vmatpush1.bf16.msra.mxu0 %v1557
      %2263 = vmatprep.subr.bf16.mxu0 %v1566
      %2264 = vmatpush1.bf16.msra.mxu0 %v1565
      %2265 = vmatprep.subr.bf16.mxu0 %v1574
      %2266 = vmatpush1.bf16.msra.mxu0 %v1573
      %2267 = vmatprep.subr.bf16.mxu0 %v1582
      %2268 = vmatpush1.bf16.msra.mxu0 %v1581
      %2269 = vmatprep.subr.bf16.mxu0 %v1590
      %2270 = vmatpush1.bf16.msra.mxu0 %v1589
      %2271 = vmatprep.subr.bf16.mxu0 %v1598
      %2272 = vmatpush1.bf16.msra.mxu0 %v1597
      %2273 = vmatprep.mubr.bf16.mxu0 %v402
      %2274 = vmatmul.mubr.bf16.gmra.mrb[0].mxu0 %v401
      %v2275 = vpop.f32.mrb[0].mxu0
      %v2276 = vadd.f32 %v690, %v2275
      %v2277 = vpop.f32.mrb[0].mxu0
      %v2278 = vadd.f32 %v694, %v2277
      %v2279 = vpop.f32.mrb[0].mxu0
      %v2280 = vadd.f32 %v690, %v2279
      %v2281 = vpop.f32.mrb[0].mxu0
      %v2282 = vadd.f32 %v694, %v2281
      %2283 = vdwg.mxu0
      %2284 = vmatprep.subr.bf16.mxu0 %v1606
      %2285 = vmatpush1.bf16.msra.mxu0 %v1605
      %2286 = vmatprep.subr.bf16.mxu0 %v1614
      %2287 = vmatpush1.bf16.msra.mxu0 %v1613
      %2288 = vmatprep.subr.bf16.mxu0 %v1622
      %2289 = vmatpush1.bf16.msra.mxu0 %v1621
      %2290 = vmatprep.subr.bf16.mxu0 %v1630
      %2291 = vmatpush1.bf16.msra.mxu0 %v1629
      %2292 = vmatprep.subr.bf16.mxu0 %v1638
      %2293 = vmatpush1.bf16.msra.mxu0 %v1637
      %2294 = vmatprep.subr.bf16.mxu0 %v1646
      %2295 = vmatpush1.bf16.msra.mxu0 %v1645
      %2296 = vmatprep.subr.bf16.mxu0 %v1654
      %2297 = vmatpush1.bf16.msra.mxu0 %v1653
      %2298 = vmatprep.subr.bf16.mxu0 %v1662
      %2299 = vmatpush1.bf16.msra.mxu0 %v1661
      %2300 = vmatprep.subr.bf16.mxu0 %v1670
      %2301 = vmatpush1.bf16.msra.mxu0 %v1669
      %2302 = vmatprep.subr.bf16.mxu0 %v1678
      %2303 = vmatpush1.bf16.msra.mxu0 %v1677
      %2304 = vmatprep.subr.bf16.mxu0 %v1686
      %2305 = vmatpush1.bf16.msra.mxu0 %v1685
      %2306 = vmatprep.subr.bf16.mxu0 %v1694
      %2307 = vmatpush1.bf16.msra.mxu0 %v1693
      %2308 = vmatprep.subr.bf16.mxu0 %v1702
      %2309 = vmatpush1.bf16.msra.mxu0 %v1701
      %2310 = vmatprep.subr.bf16.mxu0 %v1710
      %2311 = vmatpush1.bf16.msra.mxu0 %v1709
      %2312 = vmatprep.subr.bf16.mxu0 %v1718
      %2313 = vmatpush1.bf16.msra.mxu0 %v1717
      %2314 = vmatprep.subr.bf16.mxu0 %v1726
      %2315 = vmatpush1.bf16.msra.mxu0 %v1725
      %2316 = vmatprep.mubr.bf16.mxu0 %v404
      %2317 = vmatmul.mubr.bf16.gmra.mrb[0].mxu0 %v403
      %v2318 = vpop.f32.mrb[0].mxu0
      %v2319 = vadd.f32 %v2276, %v2318
      %v2320 = vpop.f32.mrb[0].mxu0
      %v2321 = vadd.f32 %v2278, %v2320
      %v2322 = vpop.f32.mrb[0].mxu0
      %v2323 = vadd.f32 %v2280, %v2322
      %v2324 = vpop.f32.mrb[0].mxu0
      %v2325 = vadd.f32 %v2282, %v2324
      %2326 = vdwg.mxu0
      %v2327 = vmul.f32 %v2061, 0.5
      %v2328 = vmul.f32 %v2063, 0.5
      %v2329 = vmul.f32 %v2147, 0.5
      %v2330 = vmul.f32 %v2149, 0.5
      %v2331 = vmul.f32 %v2233, 0.5
      %v2332 = vmul.f32 %v2235, 0.5
      %v2333 = vmul.f32 %v2319, 0.5
      %v2334 = vmul.f32 %v2321, 0.5
      %v2335 = vmul.f32 %v2065, 0.5
      %v2336 = vmul.f32 %v2067, 0.5
      %v2337 = vmul.f32 %v2151, 0.5
      %v2338 = vmul.f32 %v2153, 0.5
      %v2339 = vmul.f32 %v2237, 0.5
      %v2340 = vmul.f32 %v2239, 0.5
      %v2341 = vmul.f32 %v2323, 0.5
      %v2342 = vmul.f32 %v2325, 0.5
      %v2343 = vtanh.pop %v2327
      %v2344 = vtanh.pop %v2328
      %v2345 = vtanh.pop %v2329
      %v2346 = vtanh.pop %v2330
      %v2347 = vtanh.pop %v2331
      %v2348 = vtanh.pop %v2332
      %v2349 = vtanh.pop %v2333
      %v2350 = vtanh.pop %v2334
      %v2351 = vtanh.pop %v2335
      %v2352 = vtanh.pop %v2336
      %v2353 = vtanh.pop %v2337
      %v2354 = vtanh.pop %v2338
      %v2355 = vtanh.pop %v2339
      %v2356 = vtanh.pop %v2340
      %v2357 = vtanh.pop %v2341
      %v2358 = vtanh.pop %v2342
      %v2359 = vadd.f32 %v2343, 1.0
      %v2360 = vadd.f32 %v2344, 1.0
      %v2361 = vadd.f32 %v2345, 1.0
      %v2362 = vadd.f32 %v2346, 1.0
      %v2363 = vadd.f32 %v2347, 1.0
      %v2364 = vadd.f32 %v2348, 1.0
      %v2365 = vadd.f32 %v2349, 1.0
      %v2366 = vadd.f32 %v2350, 1.0
      %v2367 = vadd.f32 %v2351, 1.0
      %v2368 = vadd.f32 %v2352, 1.0
      %v2369 = vadd.f32 %v2353, 1.0
      %v2370 = vadd.f32 %v2354, 1.0
      %v2371 = vadd.f32 %v2355, 1.0
      %v2372 = vadd.f32 %v2356, 1.0
      %v2373 = vadd.f32 %v2357, 1.0
      %v2374 = vadd.f32 %v2358, 1.0
      %v2375 = vmul.f32 %v2359, 0.5
      %v2376 = vmul.f32 %v2360, 0.5
      %v2377 = vmul.f32 %v2361, 0.5
      %v2378 = vmul.f32 %v2362, 0.5
      %v2379 = vmul.f32 %v2363, 0.5
      %v2380 = vmul.f32 %v2364, 0.5
      %v2381 = vmul.f32 %v2365, 0.5
      %v2382 = vmul.f32 %v2366, 0.5
      %v2383 = vmul.f32 %v2367, 0.5
      %v2384 = vmul.f32 %v2368, 0.5
      %v2385 = vmul.f32 %v2369, 0.5
      %v2386 = vmul.f32 %v2370, 0.5
      %v2387 = vmul.f32 %v2371, 0.5
      %v2388 = vmul.f32 %v2372, 0.5
      %v2389 = vmul.f32 %v2373, 0.5
      %v2390 = vmul.f32 %v2374, 0.5
      %v2391 = vpack.c.bf16 %v2383, %v2375
      %v2392 = vpack.c.bf16 %v2384, %v2376
      %v2393 = vpack.c.bf16 %v2385, %v2377
      %v2394 = vpack.c.bf16 %v2386, %v2378
      %v2395 = vpack.c.bf16 %v2387, %v2379
      %v2396 = vpack.c.bf16 %v2388, %v2380
      %v2397 = vpack.c.bf16 %v2389, %v2381
      %v2398 = vpack.c.bf16 %v2390, %v2382
      %v2399 = vld [vmem:[%s3] sm:$0xff]
      %v2400 = vld [vmem:[%s3 + $0x8] sm:$0xff]
      %v2401 = vld [vmem:[%s3 + $0x10] sm:$0xff]
      %v2402 = vld [vmem:[%s3 + $0x18] sm:$0xff]
      %v2403 = vld [vmem:[%s3 + $0x20] sm:$0xff]
      %v2404 = vld [vmem:[%s3 + $0x28] sm:$0xff]
      %v2405 = vld [vmem:[%s3 + $0x30] sm:$0xff]
      %v2406 = vld [vmem:[%s3 + $0x38] sm:$0xff]
      %v2407 = vld [vmem:[%s3 + $0x40] sm:$0xff]
      %v2408 = vld [vmem:[%s3 + $0x48] sm:$0xff]
      %v2409 = vld [vmem:[%s3 + $0x50] sm:$0xff]
      %v2410 = vld [vmem:[%s3 + $0x58] sm:$0xff]
      %v2411 = vld [vmem:[%s3 + $0x60] sm:$0xff]
      %v2412 = vld [vmem:[%s3 + $0x68] sm:$0xff]
      %v2413 = vld [vmem:[%s3 + $0x70] sm:$0xff]
      %v2414 = vld [vmem:[%s3 + $0x78] sm:$0xff]
      %v2415 = vld [vmem:[%s3 + $0x80] sm:$0xff]
      %v2416 = vld [vmem:[%s3 + $0x88] sm:$0xff]
      %v2417 = vld [vmem:[%s3 + $0x90] sm:$0xff]
      %v2418 = vld [vmem:[%s3 + $0x98] sm:$0xff]
      %v2419 = vld [vmem:[%s3 + $0xa0] sm:$0xff]
      %v2420 = vld [vmem:[%s3 + $0xa8] sm:$0xff]
      %v2421 = vld [vmem:[%s3 + $0xb0] sm:$0xff]
      %v2422 = vld [vmem:[%s3 + $0xb8] sm:$0xff]
      %v2423 = vld [vmem:[%s3 + $0xc0] sm:$0xff]
      %v2424 = vld [vmem:[%s3 + $0xc8] sm:$0xff]
      %v2425 = vld [vmem:[%s3 + $0xd0] sm:$0xff]
      %v2426 = vld [vmem:[%s3 + $0xd8] sm:$0xff]
      %v2427 = vld [vmem:[%s3 + $0xe0] sm:$0xff]
      %v2428 = vld [vmem:[%s3 + $0xe8] sm:$0xff]
      %v2429 = vld [vmem:[%s3 + $0xf0] sm:$0xff]
      %v2430 = vld [vmem:[%s3 + $0xf8] sm:$0xff]
      %v2431 = vld [vmem:[%s3 + $0x100] sm:$0xff]
      %v2432 = vld [vmem:[%s3 + $0x108] sm:$0xff]
      %v2433 = vld [vmem:[%s3 + $0x110] sm:$0xff]
      %v2434 = vld [vmem:[%s3 + $0x118] sm:$0xff]
      %v2435 = vld [vmem:[%s3 + $0x120] sm:$0xff]
      %v2436 = vld [vmem:[%s3 + $0x128] sm:$0xff]
      %v2437 = vld [vmem:[%s3 + $0x130] sm:$0xff]
      %v2438 = vld [vmem:[%s3 + $0x138] sm:$0xff]
      %v2439 = vld [vmem:[%s3 + $0x140] sm:$0xff]
      %v2440 = vld [vmem:[%s3 + $0x148] sm:$0xff]
      %v2441 = vld [vmem:[%s3 + $0x150] sm:$0xff]
      %v2442 = vld [vmem:[%s3 + $0x158] sm:$0xff]
      %v2443 = vld [vmem:[%s3 + $0x160] sm:$0xff]
      %v2444 = vld [vmem:[%s3 + $0x168] sm:$0xff]
      %v2445 = vld [vmem:[%s3 + $0x170] sm:$0xff]
      %v2446 = vld [vmem:[%s3 + $0x178] sm:$0xff]
      %v2447 = vld [vmem:[%s3 + $0x180] sm:$0xff]
      %v2448 = vld [vmem:[%s3 + $0x188] sm:$0xff]
      %v2449 = vld [vmem:[%s3 + $0x190] sm:$0xff]
      %v2450 = vld [vmem:[%s3 + $0x198] sm:$0xff]
      %v2451 = vld [vmem:[%s3 + $0x1a0] sm:$0xff]
      %v2452 = vld [vmem:[%s3 + $0x1a8] sm:$0xff]
      %v2453 = vld [vmem:[%s3 + $0x1b0] sm:$0xff]
      %v2454 = vld [vmem:[%s3 + $0x1b8] sm:$0xff]
      %v2455 = vld [vmem:[%s3 + $0x1c0] sm:$0xff]
      %v2456 = vld [vmem:[%s3 + $0x1c8] sm:$0xff]
      %v2457 = vld [vmem:[%s3 + $0x1d0] sm:$0xff]
      %v2458 = vld [vmem:[%s3 + $0x1d8] sm:$0xff]
      %v2459 = vld [vmem:[%s3 + $0x1e0] sm:$0xff]
      %v2460 = vld [vmem:[%s3 + $0x1e8] sm:$0xff]
      %v2461 = vld [vmem:[%s3 + $0x1f0] sm:$0xff]
      %v2462 = vld [vmem:[%s3 + $0x1f8] sm:$0xff]
      %v2463 = vld [vmem:[%s3 + $0x200] sm:$0xff]
      %v2464 = vld [vmem:[%s3 + $0x208] sm:$0xff]
      %v2465 = vld [vmem:[%s3 + $0x210] sm:$0xff]
      %v2466 = vld [vmem:[%s3 + $0x218] sm:$0xff]
      %v2467 = vld [vmem:[%s3 + $0x220] sm:$0xff]
      %v2468 = vld [vmem:[%s3 + $0x228] sm:$0xff]
      %v2469 = vld [vmem:[%s3 + $0x230] sm:$0xff]
      %v2470 = vld [vmem:[%s3 + $0x238] sm:$0xff]
      %v2471 = vld [vmem:[%s3 + $0x240] sm:$0xff]
      %v2472 = vld [vmem:[%s3 + $0x248] sm:$0xff]
      %v2473 = vld [vmem:[%s3 + $0x250] sm:$0xff]
      %v2474 = vld [vmem:[%s3 + $0x258] sm:$0xff]
      %v2475 = vld [vmem:[%s3 + $0x260] sm:$0xff]
      %v2476 = vld [vmem:[%s3 + $0x268] sm:$0xff]
      %v2477 = vld [vmem:[%s3 + $0x270] sm:$0xff]
      %v2478 = vld [vmem:[%s3 + $0x278] sm:$0xff]
      %v2479 = vld [vmem:[%s3 + $0x280] sm:$0xff]
      %v2480 = vld [vmem:[%s3 + $0x288] sm:$0xff]
      %v2481 = vld [vmem:[%s3 + $0x290] sm:$0xff]
      %v2482 = vld [vmem:[%s3 + $0x298] sm:$0xff]
      %v2483 = vld [vmem:[%s3 + $0x2a0] sm:$0xff]
      %v2484 = vld [vmem:[%s3 + $0x2a8] sm:$0xff]
      %v2485 = vld [vmem:[%s3 + $0x2b0] sm:$0xff]
      %v2486 = vld [vmem:[%s3 + $0x2b8] sm:$0xff]
      %v2487 = vld [vmem:[%s3 + $0x2c0] sm:$0xff]
      %v2488 = vld [vmem:[%s3 + $0x2c8] sm:$0xff]
      %v2489 = vld [vmem:[%s3 + $0x2d0] sm:$0xff]
      %v2490 = vld [vmem:[%s3 + $0x2d8] sm:$0xff]
      %v2491 = vld [vmem:[%s3 + $0x2e0] sm:$0xff]
      %v2492 = vld [vmem:[%s3 + $0x2e8] sm:$0xff]
      %v2493 = vld [vmem:[%s3 + $0x2f0] sm:$0xff]
      %v2494 = vld [vmem:[%s3 + $0x2f8] sm:$0xff]
      %v2495 = vld [vmem:[%s3 + $0x300] sm:$0xff]
      %v2496 = vld [vmem:[%s3 + $0x308] sm:$0xff]
      %v2497 = vld [vmem:[%s3 + $0x310] sm:$0xff]
      %v2498 = vld [vmem:[%s3 + $0x318] sm:$0xff]
      %v2499 = vld [vmem:[%s3 + $0x320] sm:$0xff]
      %v2500 = vld [vmem:[%s3 + $0x328] sm:$0xff]
      %v2501 = vld [vmem:[%s3 + $0x330] sm:$0xff]
      %v2502 = vld [vmem:[%s3 + $0x338] sm:$0xff]
      %v2503 = vld [vmem:[%s3 + $0x340] sm:$0xff]
      %v2504 = vld [vmem:[%s3 + $0x348] sm:$0xff]
      %v2505 = vld [vmem:[%s3 + $0x350] sm:$0xff]
      %v2506 = vld [vmem:[%s3 + $0x358] sm:$0xff]
      %v2507 = vld [vmem:[%s3 + $0x360] sm:$0xff]
      %v2508 = vld [vmem:[%s3 + $0x368] sm:$0xff]
      %v2509 = vld [vmem:[%s3 + $0x370] sm:$0xff]
      %v2510 = vld [vmem:[%s3 + $0x378] sm:$0xff]
      %v2511 = vld [vmem:[%s3 + $0x380] sm:$0xff]
      %v2512 = vld [vmem:[%s3 + $0x388] sm:$0xff]
      %v2513 = vld [vmem:[%s3 + $0x390] sm:$0xff]
      %v2514 = vld [vmem:[%s3 + $0x398] sm:$0xff]
      %v2515 = vld [vmem:[%s3 + $0x3a0] sm:$0xff]
      %v2516 = vld [vmem:[%s3 + $0x3a8] sm:$0xff]
      %v2517 = vld [vmem:[%s3 + $0x3b0] sm:$0xff]
      %v2518 = vld [vmem:[%s3 + $0x3b8] sm:$0xff]
      %v2519 = vld [vmem:[%s3 + $0x3c0] sm:$0xff]
      %v2520 = vld [vmem:[%s3 + $0x3c8] sm:$0xff]
      %v2521 = vld [vmem:[%s3 + $0x3d0] sm:$0xff]
      %v2522 = vld [vmem:[%s3 + $0x3d8] sm:$0xff]
      %v2523 = vld [vmem:[%s3 + $0x3e0] sm:$0xff]
      %v2524 = vld [vmem:[%s3 + $0x3e8] sm:$0xff]
      %v2525 = vld [vmem:[%s3 + $0x3f0] sm:$0xff]
      %v2526 = vld [vmem:[%s3 + $0x3f8] sm:$0xff]
      %v2527 = vld [vmem:[%s3 + $0x400] sm:$0xff]
      %v2528 = vld [vmem:[%s3 + $0x408] sm:$0xff]
      %v2529 = vld [vmem:[%s3 + $0x410] sm:$0xff]
      %v2530 = vld [vmem:[%s3 + $0x418] sm:$0xff]
      %v2531 = vld [vmem:[%s3 + $0x420] sm:$0xff]
      %v2532 = vld [vmem:[%s3 + $0x428] sm:$0xff]
      %v2533 = vld [vmem:[%s3 + $0x430] sm:$0xff]
      %v2534 = vld [vmem:[%s3 + $0x438] sm:$0xff]
      %v2535 = vld [vmem:[%s3 + $0x440] sm:$0xff]
      %v2536 = vld [vmem:[%s3 + $0x448] sm:$0xff]
      %v2537 = vld [vmem:[%s3 + $0x450] sm:$0xff]
      %v2538 = vld [vmem:[%s3 + $0x458] sm:$0xff]
      %v2539 = vld [vmem:[%s3 + $0x460] sm:$0xff]
      %v2540 = vld [vmem:[%s3 + $0x468] sm:$0xff]
      %v2541 = vld [vmem:[%s3 + $0x470] sm:$0xff]
      %v2542 = vld [vmem:[%s3 + $0x478] sm:$0xff]
      %v2543 = vld [vmem:[%s3 + $0x480] sm:$0xff]
      %v2544 = vld [vmem:[%s3 + $0x488] sm:$0xff]
      %v2545 = vld [vmem:[%s3 + $0x490] sm:$0xff]
      %v2546 = vld [vmem:[%s3 + $0x498] sm:$0xff]
      %v2547 = vld [vmem:[%s3 + $0x4a0] sm:$0xff]
      %v2548 = vld [vmem:[%s3 + $0x4a8] sm:$0xff]
      %v2549 = vld [vmem:[%s3 + $0x4b0] sm:$0xff]
      %v2550 = vld [vmem:[%s3 + $0x4b8] sm:$0xff]
      %v2551 = vld [vmem:[%s3 + $0x4c0] sm:$0xff]
      %v2552 = vld [vmem:[%s3 + $0x4c8] sm:$0xff]
      %v2553 = vld [vmem:[%s3 + $0x4d0] sm:$0xff]
      %v2554 = vld [vmem:[%s3 + $0x4d8] sm:$0xff]
      %v2555 = vld [vmem:[%s3 + $0x4e0] sm:$0xff]
      %v2556 = vld [vmem:[%s3 + $0x4e8] sm:$0xff]
      %v2557 = vld [vmem:[%s3 + $0x4f0] sm:$0xff]
      %v2558 = vld [vmem:[%s3 + $0x4f8] sm:$0xff]
      %v2559 = vld [vmem:[%s3 + $0x500] sm:$0xff]
      %v2560 = vld [vmem:[%s3 + $0x508] sm:$0xff]
      %v2561 = vld [vmem:[%s3 + $0x510] sm:$0xff]
      %v2562 = vld [vmem:[%s3 + $0x518] sm:$0xff]
      %v2563 = vld [vmem:[%s3 + $0x520] sm:$0xff]
      %v2564 = vld [vmem:[%s3 + $0x528] sm:$0xff]
      %v2565 = vld [vmem:[%s3 + $0x530] sm:$0xff]
      %v2566 = vld [vmem:[%s3 + $0x538] sm:$0xff]
      %v2567 = vld [vmem:[%s3 + $0x540] sm:$0xff]
      %v2568 = vld [vmem:[%s3 + $0x548] sm:$0xff]
      %v2569 = vld [vmem:[%s3 + $0x550] sm:$0xff]
      %v2570 = vld [vmem:[%s3 + $0x558] sm:$0xff]
      %v2571 = vld [vmem:[%s3 + $0x560] sm:$0xff]
      %v2572 = vld [vmem:[%s3 + $0x568] sm:$0xff]
      %v2573 = vld [vmem:[%s3 + $0x570] sm:$0xff]
      %v2574 = vld [vmem:[%s3 + $0x578] sm:$0xff]
      %v2575 = vld [vmem:[%s3 + $0x580] sm:$0xff]
      %v2576 = vld [vmem:[%s3 + $0x588] sm:$0xff]
      %v2577 = vld [vmem:[%s3 + $0x590] sm:$0xff]
      %v2578 = vld [vmem:[%s3 + $0x598] sm:$0xff]
      %v2579 = vld [vmem:[%s3 + $0x5a0] sm:$0xff]
      %v2580 = vld [vmem:[%s3 + $0x5a8] sm:$0xff]
      %v2581 = vld [vmem:[%s3 + $0x5b0] sm:$0xff]
      %v2582 = vld [vmem:[%s3 + $0x5b8] sm:$0xff]
      %v2583 = vld [vmem:[%s3 + $0x5c0] sm:$0xff]
      %v2584 = vld [vmem:[%s3 + $0x5c8] sm:$0xff]
      %v2585 = vld [vmem:[%s3 + $0x5d0] sm:$0xff]
      %v2586 = vld [vmem:[%s3 + $0x5d8] sm:$0xff]
      %v2587 = vld [vmem:[%s3 + $0x5e0] sm:$0xff]
      %v2588 = vld [vmem:[%s3 + $0x5e8] sm:$0xff]
      %v2589 = vld [vmem:[%s3 + $0x5f0] sm:$0xff]
      %v2590 = vld [vmem:[%s3 + $0x5f8] sm:$0xff]
      %v2591 = vld [vmem:[%s3 + $0x600] sm:$0xff]
      %v2592 = vld [vmem:[%s3 + $0x608] sm:$0xff]
      %v2593 = vld [vmem:[%s3 + $0x610] sm:$0xff]
      %v2594 = vld [vmem:[%s3 + $0x618] sm:$0xff]
      %v2595 = vld [vmem:[%s3 + $0x620] sm:$0xff]
      %v2596 = vld [vmem:[%s3 + $0x628] sm:$0xff]
      %v2597 = vld [vmem:[%s3 + $0x630] sm:$0xff]
      %v2598 = vld [vmem:[%s3 + $0x638] sm:$0xff]
      %v2599 = vld [vmem:[%s3 + $0x640] sm:$0xff]
      %v2600 = vld [vmem:[%s3 + $0x648] sm:$0xff]
      %v2601 = vld [vmem:[%s3 + $0x650] sm:$0xff]
      %v2602 = vld [vmem:[%s3 + $0x658] sm:$0xff]
      %v2603 = vld [vmem:[%s3 + $0x660] sm:$0xff]
      %v2604 = vld [vmem:[%s3 + $0x668] sm:$0xff]
      %v2605 = vld [vmem:[%s3 + $0x670] sm:$0xff]
      %v2606 = vld [vmem:[%s3 + $0x678] sm:$0xff]
      %v2607 = vld [vmem:[%s3 + $0x680] sm:$0xff]
      %v2608 = vld [vmem:[%s3 + $0x688] sm:$0xff]
      %v2609 = vld [vmem:[%s3 + $0x690] sm:$0xff]
      %v2610 = vld [vmem:[%s3 + $0x698] sm:$0xff]
      %v2611 = vld [vmem:[%s3 + $0x6a0] sm:$0xff]
      %v2612 = vld [vmem:[%s3 + $0x6a8] sm:$0xff]
      %v2613 = vld [vmem:[%s3 + $0x6b0] sm:$0xff]
      %v2614 = vld [vmem:[%s3 + $0x6b8] sm:$0xff]
      %v2615 = vld [vmem:[%s3 + $0x6c0] sm:$0xff]
      %v2616 = vld [vmem:[%s3 + $0x6c8] sm:$0xff]
      %v2617 = vld [vmem:[%s3 + $0x6d0] sm:$0xff]
      %v2618 = vld [vmem:[%s3 + $0x6d8] sm:$0xff]
      %v2619 = vld [vmem:[%s3 + $0x6e0] sm:$0xff]
      %v2620 = vld [vmem:[%s3 + $0x6e8] sm:$0xff]
      %v2621 = vld [vmem:[%s3 + $0x6f0] sm:$0xff]
      %v2622 = vld [vmem:[%s3 + $0x6f8] sm:$0xff]
      %v2623 = vld [vmem:[%s3 + $0x700] sm:$0xff]
      %v2624 = vld [vmem:[%s3 + $0x708] sm:$0xff]
      %v2625 = vld [vmem:[%s3 + $0x710] sm:$0xff]
      %v2626 = vld [vmem:[%s3 + $0x718] sm:$0xff]
      %v2627 = vld [vmem:[%s3 + $0x720] sm:$0xff]
      %v2628 = vld [vmem:[%s3 + $0x728] sm:$0xff]
      %v2629 = vld [vmem:[%s3 + $0x730] sm:$0xff]
      %v2630 = vld [vmem:[%s3 + $0x738] sm:$0xff]
      %v2631 = vld [vmem:[%s3 + $0x740] sm:$0xff]
      %v2632 = vld [vmem:[%s3 + $0x748] sm:$0xff]
      %v2633 = vld [vmem:[%s3 + $0x750] sm:$0xff]
      %v2634 = vld [vmem:[%s3 + $0x758] sm:$0xff]
      %v2635 = vld [vmem:[%s3 + $0x760] sm:$0xff]
      %v2636 = vld [vmem:[%s3 + $0x768] sm:$0xff]
      %v2637 = vld [vmem:[%s3 + $0x770] sm:$0xff]
      %v2638 = vld [vmem:[%s3 + $0x778] sm:$0xff]
      %v2639 = vld [vmem:[%s3 + $0x780] sm:$0xff]
      %v2640 = vld [vmem:[%s3 + $0x788] sm:$0xff]
      %v2641 = vld [vmem:[%s3 + $0x790] sm:$0xff]
      %v2642 = vld [vmem:[%s3 + $0x798] sm:$0xff]
      %v2643 = vld [vmem:[%s3 + $0x7a0] sm:$0xff]
      %v2644 = vld [vmem:[%s3 + $0x7a8] sm:$0xff]
      %v2645 = vld [vmem:[%s3 + $0x7b0] sm:$0xff]
      %v2646 = vld [vmem:[%s3 + $0x7b8] sm:$0xff]
      %v2647 = vld [vmem:[%s3 + $0x7c0] sm:$0xff]
      %v2648 = vld [vmem:[%s3 + $0x7c8] sm:$0xff]
      %v2649 = vld [vmem:[%s3 + $0x7d0] sm:$0xff]
      %v2650 = vld [vmem:[%s3 + $0x7d8] sm:$0xff]
      %v2651 = vld [vmem:[%s3 + $0x7e0] sm:$0xff]
      %v2652 = vld [vmem:[%s3 + $0x7e8] sm:$0xff]
      %v2653 = vld [vmem:[%s3 + $0x7f0] sm:$0xff]
      %v2654 = vld [vmem:[%s3 + $0x7f8] sm:$0xff]
      %v2655 = vld [vmem:[%s3 + $0x800] sm:$0xff]
      %v2656 = vld [vmem:[%s3 + $0x808] sm:$0xff]
      %v2657 = vld [vmem:[%s3 + $0x810] sm:$0xff]
      %v2658 = vld [vmem:[%s3 + $0x818] sm:$0xff]
      %v2659 = vld [vmem:[%s3 + $0x820] sm:$0xff]
      %v2660 = vld [vmem:[%s3 + $0x828] sm:$0xff]
      %v2661 = vld [vmem:[%s3 + $0x830] sm:$0xff]
      %v2662 = vld [vmem:[%s3 + $0x838] sm:$0xff]
      %v2663 = vld [vmem:[%s3 + $0x840] sm:$0xff]
      %v2664 = vld [vmem:[%s3 + $0x848] sm:$0xff]
      %v2665 = vld [vmem:[%s3 + $0x850] sm:$0xff]
      %v2666 = vld [vmem:[%s3 + $0x858] sm:$0xff]
      %v2667 = vld [vmem:[%s3 + $0x860] sm:$0xff]
      %v2668 = vld [vmem:[%s3 + $0x868] sm:$0xff]
      %v2669 = vld [vmem:[%s3 + $0x870] sm:$0xff]
      %v2670 = vld [vmem:[%s3 + $0x878] sm:$0xff]
      %v2671 = vld [vmem:[%s3 + $0x880] sm:$0xff]
      %v2672 = vld [vmem:[%s3 + $0x888] sm:$0xff]
      %v2673 = vld [vmem:[%s3 + $0x890] sm:$0xff]
      %v2674 = vld [vmem:[%s3 + $0x898] sm:$0xff]
      %v2675 = vld [vmem:[%s3 + $0x8a0] sm:$0xff]
      %v2676 = vld [vmem:[%s3 + $0x8a8] sm:$0xff]
      %v2677 = vld [vmem:[%s3 + $0x8b0] sm:$0xff]
      %v2678 = vld [vmem:[%s3 + $0x8b8] sm:$0xff]
      %v2679 = vld [vmem:[%s3 + $0x8c0] sm:$0xff]
      %v2680 = vld [vmem:[%s3 + $0x8c8] sm:$0xff]
      %v2681 = vld [vmem:[%s3 + $0x8d0] sm:$0xff]
      %v2682 = vld [vmem:[%s3 + $0x8d8] sm:$0xff]
      %v2683 = vld [vmem:[%s3 + $0x8e0] sm:$0xff]
      %v2684 = vld [vmem:[%s3 + $0x8e8] sm:$0xff]
      %v2685 = vld [vmem:[%s3 + $0x8f0] sm:$0xff]
      %v2686 = vld [vmem:[%s3 + $0x8f8] sm:$0xff]
      %v2687 = vld [vmem:[%s3 + $0x900] sm:$0xff]
      %v2688 = vld [vmem:[%s3 + $0x908] sm:$0xff]
      %v2689 = vld [vmem:[%s3 + $0x910] sm:$0xff]
      %v2690 = vld [vmem:[%s3 + $0x918] sm:$0xff]
      %v2691 = vld [vmem:[%s3 + $0x920] sm:$0xff]
      %v2692 = vld [vmem:[%s3 + $0x928] sm:$0xff]
      %v2693 = vld [vmem:[%s3 + $0x930] sm:$0xff]
      %v2694 = vld [vmem:[%s3 + $0x938] sm:$0xff]
      %v2695 = vld [vmem:[%s3 + $0x940] sm:$0xff]
      %v2696 = vld [vmem:[%s3 + $0x948] sm:$0xff]
      %v2697 = vld [vmem:[%s3 + $0x950] sm:$0xff]
      %v2698 = vld [vmem:[%s3 + $0x958] sm:$0xff]
      %v2699 = vld [vmem:[%s3 + $0x960] sm:$0xff]
      %v2700 = vld [vmem:[%s3 + $0x968] sm:$0xff]
      %v2701 = vld [vmem:[%s3 + $0x970] sm:$0xff]
      %v2702 = vld [vmem:[%s3 + $0x978] sm:$0xff]
      %v2703 = vld [vmem:[%s3 + $0x980] sm:$0xff]
      %v2704 = vld [vmem:[%s3 + $0x988] sm:$0xff]
      %v2705 = vld [vmem:[%s3 + $0x990] sm:$0xff]
      %v2706 = vld [vmem:[%s3 + $0x998] sm:$0xff]
      %v2707 = vld [vmem:[%s3 + $0x9a0] sm:$0xff]
      %v2708 = vld [vmem:[%s3 + $0x9a8] sm:$0xff]
      %v2709 = vld [vmem:[%s3 + $0x9b0] sm:$0xff]
      %v2710 = vld [vmem:[%s3 + $0x9b8] sm:$0xff]
      %v2711 = vld [vmem:[%s3 + $0x9c0] sm:$0xff]
      %v2712 = vld [vmem:[%s3 + $0x9c8] sm:$0xff]
      %v2713 = vld [vmem:[%s3 + $0x9d0] sm:$0xff]
      %v2714 = vld [vmem:[%s3 + $0x9d8] sm:$0xff]
      %v2715 = vld [vmem:[%s3 + $0x9e0] sm:$0xff]
      %v2716 = vld [vmem:[%s3 + $0x9e8] sm:$0xff]
      %v2717 = vld [vmem:[%s3 + $0x9f0] sm:$0xff]
      %v2718 = vld [vmem:[%s3 + $0x9f8] sm:$0xff]
      %v2719 = vld [vmem:[%s3 + $0xa00] sm:$0xff]
      %v2720 = vld [vmem:[%s3 + $0xa08] sm:$0xff]
      %v2721 = vld [vmem:[%s3 + $0xa10] sm:$0xff]
      %v2722 = vld [vmem:[%s3 + $0xa18] sm:$0xff]
      %v2723 = vld [vmem:[%s3 + $0xa20] sm:$0xff]
      %v2724 = vld [vmem:[%s3 + $0xa28] sm:$0xff]
      %v2725 = vld [vmem:[%s3 + $0xa30] sm:$0xff]
      %v2726 = vld [vmem:[%s3 + $0xa38] sm:$0xff]
      %v2727 = vld [vmem:[%s3 + $0xa40] sm:$0xff]
      %v2728 = vld [vmem:[%s3 + $0xa48] sm:$0xff]
      %v2729 = vld [vmem:[%s3 + $0xa50] sm:$0xff]
      %v2730 = vld [vmem:[%s3 + $0xa58] sm:$0xff]
      %v2731 = vld [vmem:[%s3 + $0xa60] sm:$0xff]
      %v2732 = vld [vmem:[%s3 + $0xa68] sm:$0xff]
      %v2733 = vld [vmem:[%s3 + $0xa70] sm:$0xff]
      %v2734 = vld [vmem:[%s3 + $0xa78] sm:$0xff]
      %v2735 = vld [vmem:[%s3 + $0xa80] sm:$0xff]
      %v2736 = vld [vmem:[%s3 + $0xa88] sm:$0xff]
      %v2737 = vld [vmem:[%s3 + $0xa90] sm:$0xff]
      %v2738 = vld [vmem:[%s3 + $0xa98] sm:$0xff]
      %v2739 = vld [vmem:[%s3 + $0xaa0] sm:$0xff]
      %v2740 = vld [vmem:[%s3 + $0xaa8] sm:$0xff]
      %v2741 = vld [vmem:[%s3 + $0xab0] sm:$0xff]
      %v2742 = vld [vmem:[%s3 + $0xab8] sm:$0xff]
      %v2743 = vld [vmem:[%s3 + $0xac0] sm:$0xff]
      %v2744 = vld [vmem:[%s3 + $0xac8] sm:$0xff]
      %v2745 = vld [vmem:[%s3 + $0xad0] sm:$0xff]
      %v2746 = vld [vmem:[%s3 + $0xad8] sm:$0xff]
      %v2747 = vld [vmem:[%s3 + $0xae0] sm:$0xff]
      %v2748 = vld [vmem:[%s3 + $0xae8] sm:$0xff]
      %v2749 = vld [vmem:[%s3 + $0xaf0] sm:$0xff]
      %v2750 = vld [vmem:[%s3 + $0xaf8] sm:$0xff]
      %v2751 = vld [vmem:[%s3 + $0xb00] sm:$0xff]
      %v2752 = vld [vmem:[%s3 + $0xb08] sm:$0xff]
      %v2753 = vld [vmem:[%s3 + $0xb10] sm:$0xff]
      %v2754 = vld [vmem:[%s3 + $0xb18] sm:$0xff]
      %v2755 = vld [vmem:[%s3 + $0xb20] sm:$0xff]
      %v2756 = vld [vmem:[%s3 + $0xb28] sm:$0xff]
      %v2757 = vld [vmem:[%s3 + $0xb30] sm:$0xff]
      %v2758 = vld [vmem:[%s3 + $0xb38] sm:$0xff]
      %v2759 = vld [vmem:[%s3 + $0xb40] sm:$0xff]
      %v2760 = vld [vmem:[%s3 + $0xb48] sm:$0xff]
      %v2761 = vld [vmem:[%s3 + $0xb50] sm:$0xff]
      %v2762 = vld [vmem:[%s3 + $0xb58] sm:$0xff]
      %v2763 = vld [vmem:[%s3 + $0xb60] sm:$0xff]
      %v2764 = vld [vmem:[%s3 + $0xb68] sm:$0xff]
      %v2765 = vld [vmem:[%s3 + $0xb70] sm:$0xff]
      %v2766 = vld [vmem:[%s3 + $0xb78] sm:$0xff]
      %v2767 = vld [vmem:[%s3 + $0xb80] sm:$0xff]
      %v2768 = vld [vmem:[%s3 + $0xb88] sm:$0xff]
      %v2769 = vld [vmem:[%s3 + $0xb90] sm:$0xff]
      %v2770 = vld [vmem:[%s3 + $0xb98] sm:$0xff]
      %v2771 = vld [vmem:[%s3 + $0xba0] sm:$0xff]
      %v2772 = vld [vmem:[%s3 + $0xba8] sm:$0xff]
      %v2773 = vld [vmem:[%s3 + $0xbb0] sm:$0xff]
      %v2774 = vld [vmem:[%s3 + $0xbb8] sm:$0xff]
      %v2775 = vld [vmem:[%s3 + $0xbc0] sm:$0xff]
      %v2776 = vld [vmem:[%s3 + $0xbc8] sm:$0xff]
      %v2777 = vld [vmem:[%s3 + $0xbd0] sm:$0xff]
      %v2778 = vld [vmem:[%s3 + $0xbd8] sm:$0xff]
      %v2779 = vld [vmem:[%s3 + $0xbe0] sm:$0xff]
      %v2780 = vld [vmem:[%s3 + $0xbe8] sm:$0xff]
      %v2781 = vld [vmem:[%s3 + $0xbf0] sm:$0xff]
      %v2782 = vld [vmem:[%s3 + $0xbf8] sm:$0xff]
      %v2783 = vld [vmem:[%s3 + $0xc00] sm:$0xff]
      %v2784 = vld [vmem:[%s3 + $0xc08] sm:$0xff]
      %v2785 = vld [vmem:[%s3 + $0xc10] sm:$0xff]
      %v2786 = vld [vmem:[%s3 + $0xc18] sm:$0xff]
      %v2787 = vld [vmem:[%s3 + $0xc20] sm:$0xff]
      %v2788 = vld [vmem:[%s3 + $0xc28] sm:$0xff]
      %v2789 = vld [vmem:[%s3 + $0xc30] sm:$0xff]
      %v2790 = vld [vmem:[%s3 + $0xc38] sm:$0xff]
      %v2791 = vld [vmem:[%s3 + $0xc40] sm:$0xff]
      %v2792 = vld [vmem:[%s3 + $0xc48] sm:$0xff]
      %v2793 = vld [vmem:[%s3 + $0xc50] sm:$0xff]
      %v2794 = vld [vmem:[%s3 + $0xc58] sm:$0xff]
      %v2795 = vld [vmem:[%s3 + $0xc60] sm:$0xff]
      %v2796 = vld [vmem:[%s3 + $0xc68] sm:$0xff]
      %v2797 = vld [vmem:[%s3 + $0xc70] sm:$0xff]
      %v2798 = vld [vmem:[%s3 + $0xc78] sm:$0xff]
      %v2799 = vld [vmem:[%s3 + $0xc80] sm:$0xff]
      %v2800 = vld [vmem:[%s3 + $0xc88] sm:$0xff]
      %v2801 = vld [vmem:[%s3 + $0xc90] sm:$0xff]
      %v2802 = vld [vmem:[%s3 + $0xc98] sm:$0xff]
      %v2803 = vld [vmem:[%s3 + $0xca0] sm:$0xff]
      %v2804 = vld [vmem:[%s3 + $0xca8] sm:$0xff]
      %v2805 = vld [vmem:[%s3 + $0xcb0] sm:$0xff]
      %v2806 = vld [vmem:[%s3 + $0xcb8] sm:$0xff]
      %v2807 = vld [vmem:[%s3 + $0xcc0] sm:$0xff]
      %v2808 = vld [vmem:[%s3 + $0xcc8] sm:$0xff]
      %v2809 = vld [vmem:[%s3 + $0xcd0] sm:$0xff]
      %v2810 = vld [vmem:[%s3 + $0xcd8] sm:$0xff]
      %v2811 = vld [vmem:[%s3 + $0xce0] sm:$0xff]
      %v2812 = vld [vmem:[%s3 + $0xce8] sm:$0xff]
      %v2813 = vld [vmem:[%s3 + $0xcf0] sm:$0xff]
      %v2814 = vld [vmem:[%s3 + $0xcf8] sm:$0xff]
      %v2815 = vld [vmem:[%s3 + $0xd00] sm:$0xff]
      %v2816 = vld [vmem:[%s3 + $0xd08] sm:$0xff]
      %v2817 = vld [vmem:[%s3 + $0xd10] sm:$0xff]
      %v2818 = vld [vmem:[%s3 + $0xd18] sm:$0xff]
      %v2819 = vld [vmem:[%s3 + $0xd20] sm:$0xff]
      %v2820 = vld [vmem:[%s3 + $0xd28] sm:$0xff]
      %v2821 = vld [vmem:[%s3 + $0xd30] sm:$0xff]
      %v2822 = vld [vmem:[%s3 + $0xd38] sm:$0xff]
      %v2823 = vld [vmem:[%s3 + $0xd40] sm:$0xff]
      %v2824 = vld [vmem:[%s3 + $0xd48] sm:$0xff]
      %v2825 = vld [vmem:[%s3 + $0xd50] sm:$0xff]
      %v2826 = vld [vmem:[%s3 + $0xd58] sm:$0xff]
      %v2827 = vld [vmem:[%s3 + $0xd60] sm:$0xff]
      %v2828 = vld [vmem:[%s3 + $0xd68] sm:$0xff]
      %v2829 = vld [vmem:[%s3 + $0xd70] sm:$0xff]
      %v2830 = vld [vmem:[%s3 + $0xd78] sm:$0xff]
      %v2831 = vld [vmem:[%s3 + $0xd80] sm:$0xff]
      %v2832 = vld [vmem:[%s3 + $0xd88] sm:$0xff]
      %v2833 = vld [vmem:[%s3 + $0xd90] sm:$0xff]
      %v2834 = vld [vmem:[%s3 + $0xd98] sm:$0xff]
      %v2835 = vld [vmem:[%s3 + $0xda0] sm:$0xff]
      %v2836 = vld [vmem:[%s3 + $0xda8] sm:$0xff]
      %v2837 = vld [vmem:[%s3 + $0xdb0] sm:$0xff]
      %v2838 = vld [vmem:[%s3 + $0xdb8] sm:$0xff]
      %v2839 = vld [vmem:[%s3 + $0xdc0] sm:$0xff]
      %v2840 = vld [vmem:[%s3 + $0xdc8] sm:$0xff]
      %v2841 = vld [vmem:[%s3 + $0xdd0] sm:$0xff]
      %v2842 = vld [vmem:[%s3 + $0xdd8] sm:$0xff]
      %v2843 = vld [vmem:[%s3 + $0xde0] sm:$0xff]
      %v2844 = vld [vmem:[%s3 + $0xde8] sm:$0xff]
      %v2845 = vld [vmem:[%s3 + $0xdf0] sm:$0xff]
      %v2846 = vld [vmem:[%s3 + $0xdf8] sm:$0xff]
      %v2847 = vld [vmem:[%s3 + $0xe00] sm:$0xff]
      %v2848 = vld [vmem:[%s3 + $0xe08] sm:$0xff]
      %v2849 = vld [vmem:[%s3 + $0xe10] sm:$0xff]
      %v2850 = vld [vmem:[%s3 + $0xe18] sm:$0xff]
      %v2851 = vld [vmem:[%s3 + $0xe20] sm:$0xff]
      %v2852 = vld [vmem:[%s3 + $0xe28] sm:$0xff]
      %v2853 = vld [vmem:[%s3 + $0xe30] sm:$0xff]
      %v2854 = vld [vmem:[%s3 + $0xe38] sm:$0xff]
      %v2855 = vld [vmem:[%s3 + $0xe40] sm:$0xff]
      %v2856 = vld [vmem:[%s3 + $0xe48] sm:$0xff]
      %v2857 = vld [vmem:[%s3 + $0xe50] sm:$0xff]
      %v2858 = vld [vmem:[%s3 + $0xe58] sm:$0xff]
      %v2859 = vld [vmem:[%s3 + $0xe60] sm:$0xff]
      %v2860 = vld [vmem:[%s3 + $0xe68] sm:$0xff]
      %v2861 = vld [vmem:[%s3 + $0xe70] sm:$0xff]
      %v2862 = vld [vmem:[%s3 + $0xe78] sm:$0xff]
      %v2863 = vld [vmem:[%s3 + $0xe80] sm:$0xff]
      %v2864 = vld [vmem:[%s3 + $0xe88] sm:$0xff]
      %v2865 = vld [vmem:[%s3 + $0xe90] sm:$0xff]
      %v2866 = vld [vmem:[%s3 + $0xe98] sm:$0xff]
      %v2867 = vld [vmem:[%s3 + $0xea0] sm:$0xff]
      %v2868 = vld [vmem:[%s3 + $0xea8] sm:$0xff]
      %v2869 = vld [vmem:[%s3 + $0xeb0] sm:$0xff]
      %v2870 = vld [vmem:[%s3 + $0xeb8] sm:$0xff]
      %v2871 = vld [vmem:[%s3 + $0xec0] sm:$0xff]
      %v2872 = vld [vmem:[%s3 + $0xec8] sm:$0xff]
      %v2873 = vld [vmem:[%s3 + $0xed0] sm:$0xff]
      %v2874 = vld [vmem:[%s3 + $0xed8] sm:$0xff]
      %v2875 = vld [vmem:[%s3 + $0xee0] sm:$0xff]
      %v2876 = vld [vmem:[%s3 + $0xee8] sm:$0xff]
      %v2877 = vld [vmem:[%s3 + $0xef0] sm:$0xff]
      %v2878 = vld [vmem:[%s3 + $0xef8] sm:$0xff]
      %v2879 = vld [vmem:[%s3 + $0xf00] sm:$0xff]
      %v2880 = vld [vmem:[%s3 + $0xf08] sm:$0xff]
      %v2881 = vld [vmem:[%s3 + $0xf10] sm:$0xff]
      %v2882 = vld [vmem:[%s3 + $0xf18] sm:$0xff]
      %v2883 = vld [vmem:[%s3 + $0xf20] sm:$0xff]
      %v2884 = vld [vmem:[%s3 + $0xf28] sm:$0xff]
      %v2885 = vld [vmem:[%s3 + $0xf30] sm:$0xff]
      %v2886 = vld [vmem:[%s3 + $0xf38] sm:$0xff]
      %v2887 = vld [vmem:[%s3 + $0xf40] sm:$0xff]
      %v2888 = vld [vmem:[%s3 + $0xf48] sm:$0xff]
      %v2889 = vld [vmem:[%s3 + $0xf50] sm:$0xff]
      %v2890 = vld [vmem:[%s3 + $0xf58] sm:$0xff]
      %v2891 = vld [vmem:[%s3 + $0xf60] sm:$0xff]
      %v2892 = vld [vmem:[%s3 + $0xf68] sm:$0xff]
      %v2893 = vld [vmem:[%s3 + $0xf70] sm:$0xff]
      %v2894 = vld [vmem:[%s3 + $0xf78] sm:$0xff]
      %v2895 = vld [vmem:[%s3 + $0xf80] sm:$0xff]
      %v2896 = vld [vmem:[%s3 + $0xf88] sm:$0xff]
      %v2897 = vld [vmem:[%s3 + $0xf90] sm:$0xff]
      %v2898 = vld [vmem:[%s3 + $0xf98] sm:$0xff]
      %v2899 = vld [vmem:[%s3 + $0xfa0] sm:$0xff]
      %v2900 = vld [vmem:[%s3 + $0xfa8] sm:$0xff]
      %v2901 = vld [vmem:[%s3 + $0xfb0] sm:$0xff]
      %v2902 = vld [vmem:[%s3 + $0xfb8] sm:$0xff]
      %v2903 = vld [vmem:[%s3 + $0xfc0] sm:$0xff]
      %v2904 = vld [vmem:[%s3 + $0xfc8] sm:$0xff]
      %v2905 = vld [vmem:[%s3 + $0xfd0] sm:$0xff]
      %v2906 = vld [vmem:[%s3 + $0xfd8] sm:$0xff]
      %v2907 = vld [vmem:[%s3 + $0xfe0] sm:$0xff]
      %v2908 = vld [vmem:[%s3 + $0xfe8] sm:$0xff]
      %v2909 = vld [vmem:[%s3 + $0xff0] sm:$0xff]
      %v2910 = vld [vmem:[%s3 + $0xff8] sm:$0xff]
      %v2911 = vld [vmem:[%s4] sm:$0xff]
      %v2913 = vlaneseq
      %v2914 = vshrl.u32 %v2913, 7
      %v2915 = vsub.s32 0, %v2914
      %v2916 = vrot.slane %v2911, %v2915
      %v2917 = vlaneseq
      %v2918 = vshrl.u32 %v2917, 7
      %v2919 = vsub.s32 1, %v2918
      %v2920 = vrot.slane %v2911, %v2919
      %v2921 = vlaneseq
      %v2922 = vshrl.u32 %v2921, 7
      %v2923 = vsub.s32 2, %v2922
      %v2924 = vrot.slane %v2911, %v2923
      %v2925 = vlaneseq
      %v2926 = vshrl.u32 %v2925, 7
      %v2927 = vsub.s32 3, %v2926
      %v2928 = vrot.slane %v2911, %v2927
      %v2929 = vlaneseq
      %v2930 = vshrl.u32 %v2929, 7
      %v2931 = vsub.s32 4, %v2930
      %v2932 = vrot.slane %v2911, %v2931
      %v2933 = vlaneseq
      %v2934 = vshrl.u32 %v2933, 7
      %v2935 = vsub.s32 5, %v2934
      %v2936 = vrot.slane %v2911, %v2935
      %v2937 = vlaneseq
      %v2938 = vshrl.u32 %v2937, 7
      %v2939 = vsub.s32 6, %v2938
      %v2940 = vrot.slane %v2911, %v2939
      %v2941 = vlaneseq
      %v2942 = vshrl.u32 %v2941, 7
      %v2943 = vsub.s32 7, %v2942
      %v2944 = vrot.slane %v2911, %v2943
      %v3465 = vunpack.c.l.b16 %v2399
      %v3466 = vunpack.c.h.b16 %v2399
      %v3467 = vunpack.c.l.b16 %v2400
      %v3468 = vunpack.c.h.b16 %v2400
      %v3469 = vunpack.c.l.b16 %v2401
      %v3470 = vunpack.c.h.b16 %v2401
      %v3471 = vunpack.c.l.b16 %v2402
      %v3472 = vunpack.c.h.b16 %v2402
      %v3473 = vunpack.c.l.b16 %v2403
      %v3474 = vunpack.c.h.b16 %v2403
      %v3475 = vunpack.c.l.b16 %v2404
      %v3476 = vunpack.c.h.b16 %v2404
      %v3477 = vunpack.c.l.b16 %v2405
      %v3478 = vunpack.c.h.b16 %v2405
      %v3479 = vunpack.c.l.b16 %v2406
      %v3480 = vunpack.c.h.b16 %v2406
      %v3481 = vunpack.c.l.b16 %v2407
      %v3482 = vunpack.c.h.b16 %v2407
      %v3483 = vunpack.c.l.b16 %v2408
      %v3484 = vunpack.c.h.b16 %v2408
      %v3485 = vunpack.c.l.b16 %v2409
      %v3486 = vunpack.c.h.b16 %v2409
      %v3487 = vunpack.c.l.b16 %v2410
      %v3488 = vunpack.c.h.b16 %v2410
      %v3489 = vunpack.c.l.b16 %v2411
      %v3490 = vunpack.c.h.b16 %v2411
      %v3491 = vunpack.c.l.b16 %v2412
      %v3492 = vunpack.c.h.b16 %v2412
      %v3493 = vunpack.c.l.b16 %v2413
      %v3494 = vunpack.c.h.b16 %v2413
      %v3495 = vunpack.c.l.b16 %v2414
      %v3496 = vunpack.c.h.b16 %v2414
      %v3497 = vunpack.c.l.b16 %v2415
      %v3498 = vunpack.c.h.b16 %v2415
      %v3499 = vunpack.c.l.b16 %v2416
      %v3500 = vunpack.c.h.b16 %v2416
      %v3501 = vunpack.c.l.b16 %v2417
      %v3502 = vunpack.c.h.b16 %v2417
      %v3503 = vunpack.c.l.b16 %v2418
      %v3504 = vunpack.c.h.b16 %v2418
      %v3505 = vunpack.c.l.b16 %v2419
      %v3506 = vunpack.c.h.b16 %v2419
      %v3507 = vunpack.c.l.b16 %v2420
      %v3508 = vunpack.c.h.b16 %v2420
      %v3509 = vunpack.c.l.b16 %v2421
      %v3510 = vunpack.c.h.b16 %v2421
      %v3511 = vunpack.c.l.b16 %v2422
      %v3512 = vunpack.c.h.b16 %v2422
      %v3513 = vunpack.c.l.b16 %v2423
      %v3514 = vunpack.c.h.b16 %v2423
      %v3515 = vunpack.c.l.b16 %v2424
      %v3516 = vunpack.c.h.b16 %v2424
      %v3517 = vunpack.c.l.b16 %v2425
      %v3518 = vunpack.c.h.b16 %v2425
      %v3519 = vunpack.c.l.b16 %v2426
      %v3520 = vunpack.c.h.b16 %v2426
      %v3521 = vunpack.c.l.b16 %v2427
      %v3522 = vunpack.c.h.b16 %v2427
      %v3523 = vunpack.c.l.b16 %v2428
      %v3524 = vunpack.c.h.b16 %v2428
      %v3525 = vunpack.c.l.b16 %v2429
      %v3526 = vunpack.c.h.b16 %v2429
      %v3527 = vunpack.c.l.b16 %v2430
      %v3528 = vunpack.c.h.b16 %v2430
      %v3529 = vunpack.c.l.b16 %v2431
      %v3530 = vunpack.c.h.b16 %v2431
      %v3531 = vunpack.c.l.b16 %v2432
      %v3532 = vunpack.c.h.b16 %v2432
      %v3533 = vunpack.c.l.b16 %v2433
      %v3534 = vunpack.c.h.b16 %v2433
      %v3535 = vunpack.c.l.b16 %v2434
      %v3536 = vunpack.c.h.b16 %v2434
      %v3537 = vunpack.c.l.b16 %v2435
      %v3538 = vunpack.c.h.b16 %v2435
      %v3539 = vunpack.c.l.b16 %v2436
      %v3540 = vunpack.c.h.b16 %v2436
      %v3541 = vunpack.c.l.b16 %v2437
      %v3542 = vunpack.c.h.b16 %v2437
      %v3543 = vunpack.c.l.b16 %v2438
      %v3544 = vunpack.c.h.b16 %v2438
      %v3545 = vunpack.c.l.b16 %v2439
      %v3546 = vunpack.c.h.b16 %v2439
      %v3547 = vunpack.c.l.b16 %v2440
      %v3548 = vunpack.c.h.b16 %v2440
      %v3549 = vunpack.c.l.b16 %v2441
      %v3550 = vunpack.c.h.b16 %v2441
      %v3551 = vunpack.c.l.b16 %v2442
      %v3552 = vunpack.c.h.b16 %v2442
      %v3553 = vunpack.c.l.b16 %v2443
      %v3554 = vunpack.c.h.b16 %v2443
      %v3555 = vunpack.c.l.b16 %v2444
      %v3556 = vunpack.c.h.b16 %v2444
      %v3557 = vunpack.c.l.b16 %v2445
      %v3558 = vunpack.c.h.b16 %v2445
      %v3559 = vunpack.c.l.b16 %v2446
      %v3560 = vunpack.c.h.b16 %v2446
      %v3561 = vunpack.c.l.b16 %v2447
      %v3562 = vunpack.c.h.b16 %v2447
      %v3563 = vunpack.c.l.b16 %v2448
      %v3564 = vunpack.c.h.b16 %v2448
      %v3565 = vunpack.c.l.b16 %v2449
      %v3566 = vunpack.c.h.b16 %v2449
      %v3567 = vunpack.c.l.b16 %v2450
      %v3568 = vunpack.c.h.b16 %v2450
      %v3569 = vunpack.c.l.b16 %v2451
      %v3570 = vunpack.c.h.b16 %v2451
      %v3571 = vunpack.c.l.b16 %v2452
      %v3572 = vunpack.c.h.b16 %v2452
      %v3573 = vunpack.c.l.b16 %v2453
      %v3574 = vunpack.c.h.b16 %v2453
      %v3575 = vunpack.c.l.b16 %v2454
      %v3576 = vunpack.c.h.b16 %v2454
      %v3577 = vunpack.c.l.b16 %v2455
      %v3578 = vunpack.c.h.b16 %v2455
      %v3579 = vunpack.c.l.b16 %v2456
      %v3580 = vunpack.c.h.b16 %v2456
      %v3581 = vunpack.c.l.b16 %v2457
      %v3582 = vunpack.c.h.b16 %v2457
      %v3583 = vunpack.c.l.b16 %v2458
      %v3584 = vunpack.c.h.b16 %v2458
      %v3585 = vunpack.c.l.b16 %v2459
      %v3586 = vunpack.c.h.b16 %v2459
      %v3587 = vunpack.c.l.b16 %v2460
      %v3588 = vunpack.c.h.b16 %v2460
      %v3589 = vunpack.c.l.b16 %v2461
      %v3590 = vunpack.c.h.b16 %v2461
      %v3591 = vunpack.c.l.b16 %v2462
      %v3592 = vunpack.c.h.b16 %v2462
      %v3593 = vunpack.c.l.b16 %v2463
      %v3594 = vunpack.c.h.b16 %v2463
      %v3595 = vunpack.c.l.b16 %v2464
      %v3596 = vunpack.c.h.b16 %v2464
      %v3597 = vunpack.c.l.b16 %v2465
      %v3598 = vunpack.c.h.b16 %v2465
      %v3599 = vunpack.c.l.b16 %v2466
      %v3600 = vunpack.c.h.b16 %v2466
      %v3601 = vunpack.c.l.b16 %v2467
      %v3602 = vunpack.c.h.b16 %v2467
      %v3603 = vunpack.c.l.b16 %v2468
      %v3604 = vunpack.c.h.b16 %v2468
      %v3605 = vunpack.c.l.b16 %v2469
      %v3606 = vunpack.c.h.b16 %v2469
      %v3607 = vunpack.c.l.b16 %v2470
      %v3608 = vunpack.c.h.b16 %v2470
      %v3609 = vunpack.c.l.b16 %v2471
      %v3610 = vunpack.c.h.b16 %v2471
      %v3611 = vunpack.c.l.b16 %v2472
      %v3612 = vunpack.c.h.b16 %v2472
      %v3613 = vunpack.c.l.b16 %v2473
      %v3614 = vunpack.c.h.b16 %v2473
      %v3615 = vunpack.c.l.b16 %v2474
      %v3616 = vunpack.c.h.b16 %v2474
      %v3617 = vunpack.c.l.b16 %v2475
      %v3618 = vunpack.c.h.b16 %v2475
      %v3619 = vunpack.c.l.b16 %v2476
      %v3620 = vunpack.c.h.b16 %v2476
      %v3621 = vunpack.c.l.b16 %v2477
      %v3622 = vunpack.c.h.b16 %v2477
      %v3623 = vunpack.c.l.b16 %v2478
      %v3624 = vunpack.c.h.b16 %v2478
      %v3625 = vunpack.c.l.b16 %v2479
      %v3626 = vunpack.c.h.b16 %v2479
      %v3627 = vunpack.c.l.b16 %v2480
      %v3628 = vunpack.c.h.b16 %v2480
      %v3629 = vunpack.c.l.b16 %v2481
      %v3630 = vunpack.c.h.b16 %v2481
      %v3631 = vunpack.c.l.b16 %v2482
      %v3632 = vunpack.c.h.b16 %v2482
      %v3633 = vunpack.c.l.b16 %v2483
      %v3634 = vunpack.c.h.b16 %v2483
      %v3635 = vunpack.c.l.b16 %v2484
      %v3636 = vunpack.c.h.b16 %v2484
      %v3637 = vunpack.c.l.b16 %v2485
      %v3638 = vunpack.c.h.b16 %v2485
      %v3639 = vunpack.c.l.b16 %v2486
      %v3640 = vunpack.c.h.b16 %v2486
      %v3641 = vunpack.c.l.b16 %v2487
      %v3642 = vunpack.c.h.b16 %v2487
      %v3643 = vunpack.c.l.b16 %v2488
      %v3644 = vunpack.c.h.b16 %v2488
      %v3645 = vunpack.c.l.b16 %v2489
      %v3646 = vunpack.c.h.b16 %v2489
      %v3647 = vunpack.c.l.b16 %v2490
      %v3648 = vunpack.c.h.b16 %v2490
      %v3649 = vunpack.c.l.b16 %v2491
      %v3650 = vunpack.c.h.b16 %v2491
      %v3651 = vunpack.c.l.b16 %v2492
      %v3652 = vunpack.c.h.b16 %v2492
      %v3653 = vunpack.c.l.b16 %v2493
      %v3654 = vunpack.c.h.b16 %v2493
      %v3655 = vunpack.c.l.b16 %v2494
      %v3656 = vunpack.c.h.b16 %v2494
      %v3657 = vunpack.c.l.b16 %v2495
      %v3658 = vunpack.c.h.b16 %v2495
      %v3659 = vunpack.c.l.b16 %v2496
      %v3660 = vunpack.c.h.b16 %v2496
      %v3661 = vunpack.c.l.b16 %v2497
      %v3662 = vunpack.c.h.b16 %v2497
      %v3663 = vunpack.c.l.b16 %v2498
      %v3664 = vunpack.c.h.b16 %v2498
      %v3665 = vunpack.c.l.b16 %v2499
      %v3666 = vunpack.c.h.b16 %v2499
      %v3667 = vunpack.c.l.b16 %v2500
      %v3668 = vunpack.c.h.b16 %v2500
      %v3669 = vunpack.c.l.b16 %v2501
      %v3670 = vunpack.c.h.b16 %v2501
      %v3671 = vunpack.c.l.b16 %v2502
      %v3672 = vunpack.c.h.b16 %v2502
      %v3673 = vunpack.c.l.b16 %v2503
      %v3674 = vunpack.c.h.b16 %v2503
      %v3675 = vunpack.c.l.b16 %v2504
      %v3676 = vunpack.c.h.b16 %v2504
      %v3677 = vunpack.c.l.b16 %v2505
      %v3678 = vunpack.c.h.b16 %v2505
      %v3679 = vunpack.c.l.b16 %v2506
      %v3680 = vunpack.c.h.b16 %v2506
      %v3681 = vunpack.c.l.b16 %v2507
      %v3682 = vunpack.c.h.b16 %v2507
      %v3683 = vunpack.c.l.b16 %v2508
      %v3684 = vunpack.c.h.b16 %v2508
      %v3685 = vunpack.c.l.b16 %v2509
      %v3686 = vunpack.c.h.b16 %v2509
      %v3687 = vunpack.c.l.b16 %v2510
      %v3688 = vunpack.c.h.b16 %v2510
      %v3689 = vunpack.c.l.b16 %v2511
      %v3690 = vunpack.c.h.b16 %v2511
      %v3691 = vunpack.c.l.b16 %v2512
      %v3692 = vunpack.c.h.b16 %v2512
      %v3693 = vunpack.c.l.b16 %v2513
      %v3694 = vunpack.c.h.b16 %v2513
      %v3695 = vunpack.c.l.b16 %v2514
      %v3696 = vunpack.c.h.b16 %v2514
      %v3697 = vunpack.c.l.b16 %v2515
      %v3698 = vunpack.c.h.b16 %v2515
      %v3699 = vunpack.c.l.b16 %v2516
      %v3700 = vunpack.c.h.b16 %v2516
      %v3701 = vunpack.c.l.b16 %v2517
      %v3702 = vunpack.c.h.b16 %v2517
      %v3703 = vunpack.c.l.b16 %v2518
      %v3704 = vunpack.c.h.b16 %v2518
      %v3705 = vunpack.c.l.b16 %v2519
      %v3706 = vunpack.c.h.b16 %v2519
      %v3707 = vunpack.c.l.b16 %v2520
      %v3708 = vunpack.c.h.b16 %v2520
      %v3709 = vunpack.c.l.b16 %v2521
      %v3710 = vunpack.c.h.b16 %v2521
      %v3711 = vunpack.c.l.b16 %v2522
      %v3712 = vunpack.c.h.b16 %v2522
      %v3713 = vunpack.c.l.b16 %v2523
      %v3714 = vunpack.c.h.b16 %v2523
      %v3715 = vunpack.c.l.b16 %v2524
      %v3716 = vunpack.c.h.b16 %v2524
      %v3717 = vunpack.c.l.b16 %v2525
      %v3718 = vunpack.c.h.b16 %v2525
      %v3719 = vunpack.c.l.b16 %v2526
      %v3720 = vunpack.c.h.b16 %v2526
      %v3721 = vunpack.c.l.b16 %v2527
      %v3722 = vunpack.c.h.b16 %v2527
      %v3723 = vunpack.c.l.b16 %v2528
      %v3724 = vunpack.c.h.b16 %v2528
      %v3725 = vunpack.c.l.b16 %v2529
      %v3726 = vunpack.c.h.b16 %v2529
      %v3727 = vunpack.c.l.b16 %v2530
      %v3728 = vunpack.c.h.b16 %v2530
      %v3729 = vunpack.c.l.b16 %v2531
      %v3730 = vunpack.c.h.b16 %v2531
      %v3731 = vunpack.c.l.b16 %v2532
      %v3732 = vunpack.c.h.b16 %v2532
      %v3733 = vunpack.c.l.b16 %v2533
      %v3734 = vunpack.c.h.b16 %v2533
      %v3735 = vunpack.c.l.b16 %v2534
      %v3736 = vunpack.c.h.b16 %v2534
      %v3737 = vunpack.c.l.b16 %v2535
      %v3738 = vunpack.c.h.b16 %v2535
      %v3739 = vunpack.c.l.b16 %v2536
      %v3740 = vunpack.c.h.b16 %v2536
      %v3741 = vunpack.c.l.b16 %v2537
      %v3742 = vunpack.c.h.b16 %v2537
      %v3743 = vunpack.c.l.b16 %v2538
      %v3744 = vunpack.c.h.b16 %v2538
      %v3745 = vunpack.c.l.b16 %v2539
      %v3746 = vunpack.c.h.b16 %v2539
      %v3747 = vunpack.c.l.b16 %v2540
      %v3748 = vunpack.c.h.b16 %v2540
      %v3749 = vunpack.c.l.b16 %v2541
      %v3750 = vunpack.c.h.b16 %v2541
      %v3751 = vunpack.c.l.b16 %v2542
      %v3752 = vunpack.c.h.b16 %v2542
      %v3753 = vunpack.c.l.b16 %v2543
      %v3754 = vunpack.c.h.b16 %v2543
      %v3755 = vunpack.c.l.b16 %v2544
      %v3756 = vunpack.c.h.b16 %v2544
      %v3757 = vunpack.c.l.b16 %v2545
      %v3758 = vunpack.c.h.b16 %v2545
      %v3759 = vunpack.c.l.b16 %v2546
      %v3760 = vunpack.c.h.b16 %v2546
      %v3761 = vunpack.c.l.b16 %v2547
      %v3762 = vunpack.c.h.b16 %v2547
      %v3763 = vunpack.c.l.b16 %v2548
      %v3764 = vunpack.c.h.b16 %v2548
      %v3765 = vunpack.c.l.b16 %v2549
      %v3766 = vunpack.c.h.b16 %v2549
      %v3767 = vunpack.c.l.b16 %v2550
      %v3768 = vunpack.c.h.b16 %v2550
      %v3769 = vunpack.c.l.b16 %v2551
      %v3770 = vunpack.c.h.b16 %v2551
      %v3771 = vunpack.c.l.b16 %v2552
      %v3772 = vunpack.c.h.b16 %v2552
      %v3773 = vunpack.c.l.b16 %v2553
      %v3774 = vunpack.c.h.b16 %v2553
      %v3775 = vunpack.c.l.b16 %v2554
      %v3776 = vunpack.c.h.b16 %v2554
      %v3777 = vunpack.c.l.b16 %v2555
      %v3778 = vunpack.c.h.b16 %v2555
      %v3779 = vunpack.c.l.b16 %v2556
      %v3780 = vunpack.c.h.b16 %v2556
      %v3781 = vunpack.c.l.b16 %v2557
      %v3782 = vunpack.c.h.b16 %v2557
      %v3783 = vunpack.c.l.b16 %v2558
      %v3784 = vunpack.c.h.b16 %v2558
      %v3785 = vunpack.c.l.b16 %v2559
      %v3786 = vunpack.c.h.b16 %v2559
      %v3787 = vunpack.c.l.b16 %v2560
      %v3788 = vunpack.c.h.b16 %v2560
      %v3789 = vunpack.c.l.b16 %v2561
      %v3790 = vunpack.c.h.b16 %v2561
      %v3791 = vunpack.c.l.b16 %v2562
      %v3792 = vunpack.c.h.b16 %v2562
      %v3793 = vunpack.c.l.b16 %v2563
      %v3794 = vunpack.c.h.b16 %v2563
      %v3795 = vunpack.c.l.b16 %v2564
      %v3796 = vunpack.c.h.b16 %v2564
      %v3797 = vunpack.c.l.b16 %v2565
      %v3798 = vunpack.c.h.b16 %v2565
      %v3799 = vunpack.c.l.b16 %v2566
      %v3800 = vunpack.c.h.b16 %v2566
      %v3801 = vunpack.c.l.b16 %v2567
      %v3802 = vunpack.c.h.b16 %v2567
      %v3803 = vunpack.c.l.b16 %v2568
      %v3804 = vunpack.c.h.b16 %v2568
      %v3805 = vunpack.c.l.b16 %v2569
      %v3806 = vunpack.c.h.b16 %v2569
      %v3807 = vunpack.c.l.b16 %v2570
      %v3808 = vunpack.c.h.b16 %v2570
      %v3809 = vunpack.c.l.b16 %v2571
      %v3810 = vunpack.c.h.b16 %v2571
      %v3811 = vunpack.c.l.b16 %v2572
      %v3812 = vunpack.c.h.b16 %v2572
      %v3813 = vunpack.c.l.b16 %v2573
      %v3814 = vunpack.c.h.b16 %v2573
      %v3815 = vunpack.c.l.b16 %v2574
      %v3816 = vunpack.c.h.b16 %v2574
      %v3817 = vunpack.c.l.b16 %v2575
      %v3818 = vunpack.c.h.b16 %v2575
      %v3819 = vunpack.c.l.b16 %v2576
      %v3820 = vunpack.c.h.b16 %v2576
      %v3821 = vunpack.c.l.b16 %v2577
      %v3822 = vunpack.c.h.b16 %v2577
      %v3823 = vunpack.c.l.b16 %v2578
      %v3824 = vunpack.c.h.b16 %v2578
      %v3825 = vunpack.c.l.b16 %v2579
      %v3826 = vunpack.c.h.b16 %v2579
      %v3827 = vunpack.c.l.b16 %v2580
      %v3828 = vunpack.c.h.b16 %v2580
      %v3829 = vunpack.c.l.b16 %v2581
      %v3830 = vunpack.c.h.b16 %v2581
      %v3831 = vunpack.c.l.b16 %v2582
      %v3832 = vunpack.c.h.b16 %v2582
      %v3833 = vunpack.c.l.b16 %v2583
      %v3834 = vunpack.c.h.b16 %v2583
      %v3835 = vunpack.c.l.b16 %v2584
      %v3836 = vunpack.c.h.b16 %v2584
      %v3837 = vunpack.c.l.b16 %v2585
      %v3838 = vunpack.c.h.b16 %v2585
      %v3839 = vunpack.c.l.b16 %v2586
      %v3840 = vunpack.c.h.b16 %v2586
      %v3841 = vunpack.c.l.b16 %v2587
      %v3842 = vunpack.c.h.b16 %v2587
      %v3843 = vunpack.c.l.b16 %v2588
      %v3844 = vunpack.c.h.b16 %v2588
      %v3845 = vunpack.c.l.b16 %v2589
      %v3846 = vunpack.c.h.b16 %v2589
      %v3847 = vunpack.c.l.b16 %v2590
      %v3848 = vunpack.c.h.b16 %v2590
      %v3849 = vunpack.c.l.b16 %v2591
      %v3850 = vunpack.c.h.b16 %v2591
      %v3851 = vunpack.c.l.b16 %v2592
      %v3852 = vunpack.c.h.b16 %v2592
      %v3853 = vunpack.c.l.b16 %v2593
      %v3854 = vunpack.c.h.b16 %v2593
      %v3855 = vunpack.c.l.b16 %v2594
      %v3856 = vunpack.c.h.b16 %v2594
      %v3857 = vunpack.c.l.b16 %v2595
      %v3858 = vunpack.c.h.b16 %v2595
      %v3859 = vunpack.c.l.b16 %v2596
      %v3860 = vunpack.c.h.b16 %v2596
      %v3861 = vunpack.c.l.b16 %v2597
      %v3862 = vunpack.c.h.b16 %v2597
      %v3863 = vunpack.c.l.b16 %v2598
      %v3864 = vunpack.c.h.b16 %v2598
      %v3865 = vunpack.c.l.b16 %v2599
      %v3866 = vunpack.c.h.b16 %v2599
      %v3867 = vunpack.c.l.b16 %v2600
      %v3868 = vunpack.c.h.b16 %v2600
      %v3869 = vunpack.c.l.b16 %v2601
      %v3870 = vunpack.c.h.b16 %v2601
      %v3871 = vunpack.c.l.b16 %v2602
      %v3872 = vunpack.c.h.b16 %v2602
      %v3873 = vunpack.c.l.b16 %v2603
      %v3874 = vunpack.c.h.b16 %v2603
      %v3875 = vunpack.c.l.b16 %v2604
      %v3876 = vunpack.c.h.b16 %v2604
      %v3877 = vunpack.c.l.b16 %v2605
      %v3878 = vunpack.c.h.b16 %v2605
      %v3879 = vunpack.c.l.b16 %v2606
      %v3880 = vunpack.c.h.b16 %v2606
      %v3881 = vunpack.c.l.b16 %v2607
      %v3882 = vunpack.c.h.b16 %v2607
      %v3883 = vunpack.c.l.b16 %v2608
      %v3884 = vunpack.c.h.b16 %v2608
      %v3885 = vunpack.c.l.b16 %v2609
      %v3886 = vunpack.c.h.b16 %v2609
      %v3887 = vunpack.c.l.b16 %v2610
      %v3888 = vunpack.c.h.b16 %v2610
      %v3889 = vunpack.c.l.b16 %v2611
      %v3890 = vunpack.c.h.b16 %v2611
      %v3891 = vunpack.c.l.b16 %v2612
      %v3892 = vunpack.c.h.b16 %v2612
      %v3893 = vunpack.c.l.b16 %v2613
      %v3894 = vunpack.c.h.b16 %v2613
      %v3895 = vunpack.c.l.b16 %v2614
      %v3896 = vunpack.c.h.b16 %v2614
      %v3897 = vunpack.c.l.b16 %v2615
      %v3898 = vunpack.c.h.b16 %v2615
      %v3899 = vunpack.c.l.b16 %v2616
      %v3900 = vunpack.c.h.b16 %v2616
      %v3901 = vunpack.c.l.b16 %v2617
      %v3902 = vunpack.c.h.b16 %v2617
      %v3903 = vunpack.c.l.b16 %v2618
      %v3904 = vunpack.c.h.b16 %v2618
      %v3905 = vunpack.c.l.b16 %v2619
      %v3906 = vunpack.c.h.b16 %v2619
      %v3907 = vunpack.c.l.b16 %v2620
      %v3908 = vunpack.c.h.b16 %v2620
      %v3909 = vunpack.c.l.b16 %v2621
      %v3910 = vunpack.c.h.b16 %v2621
      %v3911 = vunpack.c.l.b16 %v2622
      %v3912 = vunpack.c.h.b16 %v2622
      %v3913 = vunpack.c.l.b16 %v2623
      %v3914 = vunpack.c.h.b16 %v2623
      %v3915 = vunpack.c.l.b16 %v2624
      %v3916 = vunpack.c.h.b16 %v2624
      %v3917 = vunpack.c.l.b16 %v2625
      %v3918 = vunpack.c.h.b16 %v2625
      %v3919 = vunpack.c.l.b16 %v2626
      %v3920 = vunpack.c.h.b16 %v2626
      %v3921 = vunpack.c.l.b16 %v2627
      %v3922 = vunpack.c.h.b16 %v2627
      %v3923 = vunpack.c.l.b16 %v2628
      %v3924 = vunpack.c.h.b16 %v2628
      %v3925 = vunpack.c.l.b16 %v2629
      %v3926 = vunpack.c.h.b16 %v2629
      %v3927 = vunpack.c.l.b16 %v2630
      %v3928 = vunpack.c.h.b16 %v2630
      %v3929 = vunpack.c.l.b16 %v2631
      %v3930 = vunpack.c.h.b16 %v2631
      %v3931 = vunpack.c.l.b16 %v2632
      %v3932 = vunpack.c.h.b16 %v2632
      %v3933 = vunpack.c.l.b16 %v2633
      %v3934 = vunpack.c.h.b16 %v2633
      %v3935 = vunpack.c.l.b16 %v2634
      %v3936 = vunpack.c.h.b16 %v2634
      %v3937 = vunpack.c.l.b16 %v2635
      %v3938 = vunpack.c.h.b16 %v2635
      %v3939 = vunpack.c.l.b16 %v2636
      %v3940 = vunpack.c.h.b16 %v2636
      %v3941 = vunpack.c.l.b16 %v2637
      %v3942 = vunpack.c.h.b16 %v2637
      %v3943 = vunpack.c.l.b16 %v2638
      %v3944 = vunpack.c.h.b16 %v2638
      %v3945 = vunpack.c.l.b16 %v2639
      %v3946 = vunpack.c.h.b16 %v2639
      %v3947 = vunpack.c.l.b16 %v2640
      %v3948 = vunpack.c.h.b16 %v2640
      %v3949 = vunpack.c.l.b16 %v2641
      %v3950 = vunpack.c.h.b16 %v2641
      %v3951 = vunpack.c.l.b16 %v2642
      %v3952 = vunpack.c.h.b16 %v2642
      %v3953 = vunpack.c.l.b16 %v2643
      %v3954 = vunpack.c.h.b16 %v2643
      %v3955 = vunpack.c.l.b16 %v2644
      %v3956 = vunpack.c.h.b16 %v2644
      %v3957 = vunpack.c.l.b16 %v2645
      %v3958 = vunpack.c.h.b16 %v2645
      %v3959 = vunpack.c.l.b16 %v2646
      %v3960 = vunpack.c.h.b16 %v2646
      %v3961 = vunpack.c.l.b16 %v2647
      %v3962 = vunpack.c.h.b16 %v2647
      %v3963 = vunpack.c.l.b16 %v2648
      %v3964 = vunpack.c.h.b16 %v2648
      %v3965 = vunpack.c.l.b16 %v2649
      %v3966 = vunpack.c.h.b16 %v2649
      %v3967 = vunpack.c.l.b16 %v2650
      %v3968 = vunpack.c.h.b16 %v2650
      %v3969 = vunpack.c.l.b16 %v2651
      %v3970 = vunpack.c.h.b16 %v2651
      %v3971 = vunpack.c.l.b16 %v2652
      %v3972 = vunpack.c.h.b16 %v2652
      %v3973 = vunpack.c.l.b16 %v2653
      %v3974 = vunpack.c.h.b16 %v2653
      %v3975 = vunpack.c.l.b16 %v2654
      %v3976 = vunpack.c.h.b16 %v2654
      %v3977 = vunpack.c.l.b16 %v2655
      %v3978 = vunpack.c.h.b16 %v2655
      %v3979 = vunpack.c.l.b16 %v2656
      %v3980 = vunpack.c.h.b16 %v2656
      %v3981 = vunpack.c.l.b16 %v2657
      %v3982 = vunpack.c.h.b16 %v2657
      %v3983 = vunpack.c.l.b16 %v2658
      %v3984 = vunpack.c.h.b16 %v2658
      %v3985 = vunpack.c.l.b16 %v2659
      %v3986 = vunpack.c.h.b16 %v2659
      %v3987 = vunpack.c.l.b16 %v2660
      %v3988 = vunpack.c.h.b16 %v2660
      %v3989 = vunpack.c.l.b16 %v2661
      %v3990 = vunpack.c.h.b16 %v2661
      %v3991 = vunpack.c.l.b16 %v2662
      %v3992 = vunpack.c.h.b16 %v2662
      %v3993 = vunpack.c.l.b16 %v2663
      %v3994 = vunpack.c.h.b16 %v2663
      %v3995 = vunpack.c.l.b16 %v2664
      %v3996 = vunpack.c.h.b16 %v2664
      %v3997 = vunpack.c.l.b16 %v2665
      %v3998 = vunpack.c.h.b16 %v2665
      %v3999 = vunpack.c.l.b16 %v2666
      %v4000 = vunpack.c.h.b16 %v2666
      %v4001 = vunpack.c.l.b16 %v2667
      %v4002 = vunpack.c.h.b16 %v2667
      %v4003 = vunpack.c.l.b16 %v2668
      %v4004 = vunpack.c.h.b16 %v2668
      %v4005 = vunpack.c.l.b16 %v2669
      %v4006 = vunpack.c.h.b16 %v2669
      %v4007 = vunpack.c.l.b16 %v2670
      %v4008 = vunpack.c.h.b16 %v2670
      %v4009 = vunpack.c.l.b16 %v2671
      %v4010 = vunpack.c.h.b16 %v2671
      %v4011 = vunpack.c.l.b16 %v2672
      %v4012 = vunpack.c.h.b16 %v2672
      %v4013 = vunpack.c.l.b16 %v2673
      %v4014 = vunpack.c.h.b16 %v2673
      %v4015 = vunpack.c.l.b16 %v2674
      %v4016 = vunpack.c.h.b16 %v2674
      %v4017 = vunpack.c.l.b16 %v2675
      %v4018 = vunpack.c.h.b16 %v2675
      %v4019 = vunpack.c.l.b16 %v2676
      %v4020 = vunpack.c.h.b16 %v2676
      %v4021 = vunpack.c.l.b16 %v2677
      %v4022 = vunpack.c.h.b16 %v2677
      %v4023 = vunpack.c.l.b16 %v2678
      %v4024 = vunpack.c.h.b16 %v2678
      %v4025 = vunpack.c.l.b16 %v2679
      %v4026 = vunpack.c.h.b16 %v2679
      %v4027 = vunpack.c.l.b16 %v2680
      %v4028 = vunpack.c.h.b16 %v2680
      %v4029 = vunpack.c.l.b16 %v2681
      %v4030 = vunpack.c.h.b16 %v2681
      %v4031 = vunpack.c.l.b16 %v2682
      %v4032 = vunpack.c.h.b16 %v2682
      %v4033 = vunpack.c.l.b16 %v2683
      %v4034 = vunpack.c.h.b16 %v2683
      %v4035 = vunpack.c.l.b16 %v2684
      %v4036 = vunpack.c.h.b16 %v2684
      %v4037 = vunpack.c.l.b16 %v2685
      %v4038 = vunpack.c.h.b16 %v2685
      %v4039 = vunpack.c.l.b16 %v2686
      %v4040 = vunpack.c.h.b16 %v2686
      %v4041 = vunpack.c.l.b16 %v2687
      %v4042 = vunpack.c.h.b16 %v2687
      %v4043 = vunpack.c.l.b16 %v2688
      %v4044 = vunpack.c.h.b16 %v2688
      %v4045 = vunpack.c.l.b16 %v2689
      %v4046 = vunpack.c.h.b16 %v2689
      %v4047 = vunpack.c.l.b16 %v2690
      %v4048 = vunpack.c.h.b16 %v2690
      %v4049 = vunpack.c.l.b16 %v2691
      %v4050 = vunpack.c.h.b16 %v2691
      %v4051 = vunpack.c.l.b16 %v2692
      %v4052 = vunpack.c.h.b16 %v2692
      %v4053 = vunpack.c.l.b16 %v2693
      %v4054 = vunpack.c.h.b16 %v2693
      %v4055 = vunpack.c.l.b16 %v2694
      %v4056 = vunpack.c.h.b16 %v2694
      %v4057 = vunpack.c.l.b16 %v2695
      %v4058 = vunpack.c.h.b16 %v2695
      %v4059 = vunpack.c.l.b16 %v2696
      %v4060 = vunpack.c.h.b16 %v2696
      %v4061 = vunpack.c.l.b16 %v2697
      %v4062 = vunpack.c.h.b16 %v2697
      %v4063 = vunpack.c.l.b16 %v2698
      %v4064 = vunpack.c.h.b16 %v2698
      %v4065 = vunpack.c.l.b16 %v2699
      %v4066 = vunpack.c.h.b16 %v2699
      %v4067 = vunpack.c.l.b16 %v2700
      %v4068 = vunpack.c.h.b16 %v2700
      %v4069 = vunpack.c.l.b16 %v2701
      %v4070 = vunpack.c.h.b16 %v2701
      %v4071 = vunpack.c.l.b16 %v2702
      %v4072 = vunpack.c.h.b16 %v2702
      %v4073 = vunpack.c.l.b16 %v2703
      %v4074 = vunpack.c.h.b16 %v2703
      %v4075 = vunpack.c.l.b16 %v2704
      %v4076 = vunpack.c.h.b16 %v2704
      %v4077 = vunpack.c.l.b16 %v2705
      %v4078 = vunpack.c.h.b16 %v2705
      %v4079 = vunpack.c.l.b16 %v2706
      %v4080 = vunpack.c.h.b16 %v2706
      %v4081 = vunpack.c.l.b16 %v2707
      %v4082 = vunpack.c.h.b16 %v2707
      %v4083 = vunpack.c.l.b16 %v2708
      %v4084 = vunpack.c.h.b16 %v2708
      %v4085 = vunpack.c.l.b16 %v2709
      %v4086 = vunpack.c.h.b16 %v2709
      %v4087 = vunpack.c.l.b16 %v2710
      %v4088 = vunpack.c.h.b16 %v2710
      %v4089 = vunpack.c.l.b16 %v2711
      %v4090 = vunpack.c.h.b16 %v2711
      %v4091 = vunpack.c.l.b16 %v2712
      %v4092 = vunpack.c.h.b16 %v2712
      %v4093 = vunpack.c.l.b16 %v2713
      %v4094 = vunpack.c.h.b16 %v2713
      %v4095 = vunpack.c.l.b16 %v2714
      %v4096 = vunpack.c.h.b16 %v2714
      %v4097 = vunpack.c.l.b16 %v2715
      %v4098 = vunpack.c.h.b16 %v2715
      %v4099 = vunpack.c.l.b16 %v2716
      %v4100 = vunpack.c.h.b16 %v2716
      %v4101 = vunpack.c.l.b16 %v2717
      %v4102 = vunpack.c.h.b16 %v2717
      %v4103 = vunpack.c.l.b16 %v2718
      %v4104 = vunpack.c.h.b16 %v2718
      %v4105 = vunpack.c.l.b16 %v2719
      %v4106 = vunpack.c.h.b16 %v2719
      %v4107 = vunpack.c.l.b16 %v2720
      %v4108 = vunpack.c.h.b16 %v2720
      %v4109 = vunpack.c.l.b16 %v2721
      %v4110 = vunpack.c.h.b16 %v2721
      %v4111 = vunpack.c.l.b16 %v2722
      %v4112 = vunpack.c.h.b16 %v2722
      %v4113 = vunpack.c.l.b16 %v2723
      %v4114 = vunpack.c.h.b16 %v2723
      %v4115 = vunpack.c.l.b16 %v2724
      %v4116 = vunpack.c.h.b16 %v2724
      %v4117 = vunpack.c.l.b16 %v2725
      %v4118 = vunpack.c.h.b16 %v2725
      %v4119 = vunpack.c.l.b16 %v2726
      %v4120 = vunpack.c.h.b16 %v2726
      %v4121 = vunpack.c.l.b16 %v2727
      %v4122 = vunpack.c.h.b16 %v2727
      %v4123 = vunpack.c.l.b16 %v2728
      %v4124 = vunpack.c.h.b16 %v2728
      %v4125 = vunpack.c.l.b16 %v2729
      %v4126 = vunpack.c.h.b16 %v2729
      %v4127 = vunpack.c.l.b16 %v2730
      %v4128 = vunpack.c.h.b16 %v2730
      %v4129 = vunpack.c.l.b16 %v2731
      %v4130 = vunpack.c.h.b16 %v2731
      %v4131 = vunpack.c.l.b16 %v2732
      %v4132 = vunpack.c.h.b16 %v2732
      %v4133 = vunpack.c.l.b16 %v2733
      %v4134 = vunpack.c.h.b16 %v2733
      %v4135 = vunpack.c.l.b16 %v2734
      %v4136 = vunpack.c.h.b16 %v2734
      %v4137 = vunpack.c.l.b16 %v2735
      %v4138 = vunpack.c.h.b16 %v2735
      %v4139 = vunpack.c.l.b16 %v2736
      %v4140 = vunpack.c.h.b16 %v2736
      %v4141 = vunpack.c.l.b16 %v2737
      %v4142 = vunpack.c.h.b16 %v2737
      %v4143 = vunpack.c.l.b16 %v2738
      %v4144 = vunpack.c.h.b16 %v2738
      %v4145 = vunpack.c.l.b16 %v2739
      %v4146 = vunpack.c.h.b16 %v2739
      %v4147 = vunpack.c.l.b16 %v2740
      %v4148 = vunpack.c.h.b16 %v2740
      %v4149 = vunpack.c.l.b16 %v2741
      %v4150 = vunpack.c.h.b16 %v2741
      %v4151 = vunpack.c.l.b16 %v2742
      %v4152 = vunpack.c.h.b16 %v2742
      %v4153 = vunpack.c.l.b16 %v2743
      %v4154 = vunpack.c.h.b16 %v2743
      %v4155 = vunpack.c.l.b16 %v2744
      %v4156 = vunpack.c.h.b16 %v2744
      %v4157 = vunpack.c.l.b16 %v2745
      %v4158 = vunpack.c.h.b16 %v2745
      %v4159 = vunpack.c.l.b16 %v2746
      %v4160 = vunpack.c.h.b16 %v2746
      %v4161 = vunpack.c.l.b16 %v2747
      %v4162 = vunpack.c.h.b16 %v2747
      %v4163 = vunpack.c.l.b16 %v2748
      %v4164 = vunpack.c.h.b16 %v2748
      %v4165 = vunpack.c.l.b16 %v2749
      %v4166 = vunpack.c.h.b16 %v2749
      %v4167 = vunpack.c.l.b16 %v2750
      %v4168 = vunpack.c.h.b16 %v2750
      %v4169 = vunpack.c.l.b16 %v2751
      %v4170 = vunpack.c.h.b16 %v2751
      %v4171 = vunpack.c.l.b16 %v2752
      %v4172 = vunpack.c.h.b16 %v2752
      %v4173 = vunpack.c.l.b16 %v2753
      %v4174 = vunpack.c.h.b16 %v2753
      %v4175 = vunpack.c.l.b16 %v2754
      %v4176 = vunpack.c.h.b16 %v2754
      %v4177 = vunpack.c.l.b16 %v2755
      %v4178 = vunpack.c.h.b16 %v2755
      %v4179 = vunpack.c.l.b16 %v2756
      %v4180 = vunpack.c.h.b16 %v2756
      %v4181 = vunpack.c.l.b16 %v2757
      %v4182 = vunpack.c.h.b16 %v2757
      %v4183 = vunpack.c.l.b16 %v2758
      %v4184 = vunpack.c.h.b16 %v2758
      %v4185 = vunpack.c.l.b16 %v2759
      %v4186 = vunpack.c.h.b16 %v2759
      %v4187 = vunpack.c.l.b16 %v2760
      %v4188 = vunpack.c.h.b16 %v2760
      %v4189 = vunpack.c.l.b16 %v2761
      %v4190 = vunpack.c.h.b16 %v2761
      %v4191 = vunpack.c.l.b16 %v2762
      %v4192 = vunpack.c.h.b16 %v2762
      %v4193 = vunpack.c.l.b16 %v2763
      %v4194 = vunpack.c.h.b16 %v2763
      %v4195 = vunpack.c.l.b16 %v2764
      %v4196 = vunpack.c.h.b16 %v2764
      %v4197 = vunpack.c.l.b16 %v2765
      %v4198 = vunpack.c.h.b16 %v2765
      %v4199 = vunpack.c.l.b16 %v2766
      %v4200 = vunpack.c.h.b16 %v2766
      %v4201 = vunpack.c.l.b16 %v2767
      %v4202 = vunpack.c.h.b16 %v2767
      %v4203 = vunpack.c.l.b16 %v2768
      %v4204 = vunpack.c.h.b16 %v2768
      %v4205 = vunpack.c.l.b16 %v2769
      %v4206 = vunpack.c.h.b16 %v2769
      %v4207 = vunpack.c.l.b16 %v2770
      %v4208 = vunpack.c.h.b16 %v2770
      %v4209 = vunpack.c.l.b16 %v2771
      %v4210 = vunpack.c.h.b16 %v2771
      %v4211 = vunpack.c.l.b16 %v2772
      %v4212 = vunpack.c.h.b16 %v2772
      %v4213 = vunpack.c.l.b16 %v2773
      %v4214 = vunpack.c.h.b16 %v2773
      %v4215 = vunpack.c.l.b16 %v2774
      %v4216 = vunpack.c.h.b16 %v2774
      %v4217 = vunpack.c.l.b16 %v2775
      %v4218 = vunpack.c.h.b16 %v2775
      %v4219 = vunpack.c.l.b16 %v2776
      %v4220 = vunpack.c.h.b16 %v2776
      %v4221 = vunpack.c.l.b16 %v2777
      %v4222 = vunpack.c.h.b16 %v2777
      %v4223 = vunpack.c.l.b16 %v2778
      %v4224 = vunpack.c.h.b16 %v2778
      %v4225 = vunpack.c.l.b16 %v2779
      %v4226 = vunpack.c.h.b16 %v2779
      %v4227 = vunpack.c.l.b16 %v2780
      %v4228 = vunpack.c.h.b16 %v2780
      %v4229 = vunpack.c.l.b16 %v2781
      %v4230 = vunpack.c.h.b16 %v2781
      %v4231 = vunpack.c.l.b16 %v2782
      %v4232 = vunpack.c.h.b16 %v2782
      %v4233 = vunpack.c.l.b16 %v2783
      %v4234 = vunpack.c.h.b16 %v2783
      %v4235 = vunpack.c.l.b16 %v2784
      %v4236 = vunpack.c.h.b16 %v2784
      %v4237 = vunpack.c.l.b16 %v2785
      %v4238 = vunpack.c.h.b16 %v2785
      %v4239 = vunpack.c.l.b16 %v2786
      %v4240 = vunpack.c.h.b16 %v2786
      %v4241 = vunpack.c.l.b16 %v2787
      %v4242 = vunpack.c.h.b16 %v2787
      %v4243 = vunpack.c.l.b16 %v2788
      %v4244 = vunpack.c.h.b16 %v2788
      %v4245 = vunpack.c.l.b16 %v2789
      %v4246 = vunpack.c.h.b16 %v2789
      %v4247 = vunpack.c.l.b16 %v2790
      %v4248 = vunpack.c.h.b16 %v2790
      %v4249 = vunpack.c.l.b16 %v2791
      %v4250 = vunpack.c.h.b16 %v2791
      %v4251 = vunpack.c.l.b16 %v2792
      %v4252 = vunpack.c.h.b16 %v2792
      %v4253 = vunpack.c.l.b16 %v2793
      %v4254 = vunpack.c.h.b16 %v2793
      %v4255 = vunpack.c.l.b16 %v2794
      %v4256 = vunpack.c.h.b16 %v2794
      %v4257 = vunpack.c.l.b16 %v2795
      %v4258 = vunpack.c.h.b16 %v2795
      %v4259 = vunpack.c.l.b16 %v2796
      %v4260 = vunpack.c.h.b16 %v2796
      %v4261 = vunpack.c.l.b16 %v2797
      %v4262 = vunpack.c.h.b16 %v2797
      %v4263 = vunpack.c.l.b16 %v2798
      %v4264 = vunpack.c.h.b16 %v2798
      %v4265 = vunpack.c.l.b16 %v2799
      %v4266 = vunpack.c.h.b16 %v2799
      %v4267 = vunpack.c.l.b16 %v2800
      %v4268 = vunpack.c.h.b16 %v2800
      %v4269 = vunpack.c.l.b16 %v2801
      %v4270 = vunpack.c.h.b16 %v2801
      %v4271 = vunpack.c.l.b16 %v2802
      %v4272 = vunpack.c.h.b16 %v2802
      %v4273 = vunpack.c.l.b16 %v2803
      %v4274 = vunpack.c.h.b16 %v2803
      %v4275 = vunpack.c.l.b16 %v2804
      %v4276 = vunpack.c.h.b16 %v2804
      %v4277 = vunpack.c.l.b16 %v2805
      %v4278 = vunpack.c.h.b16 %v2805
      %v4279 = vunpack.c.l.b16 %v2806
      %v4280 = vunpack.c.h.b16 %v2806
      %v4281 = vunpack.c.l.b16 %v2807
      %v4282 = vunpack.c.h.b16 %v2807
      %v4283 = vunpack.c.l.b16 %v2808
      %v4284 = vunpack.c.h.b16 %v2808
      %v4285 = vunpack.c.l.b16 %v2809
      %v4286 = vunpack.c.h.b16 %v2809
      %v4287 = vunpack.c.l.b16 %v2810
      %v4288 = vunpack.c.h.b16 %v2810
      %v4289 = vunpack.c.l.b16 %v2811
      %v4290 = vunpack.c.h.b16 %v2811
      %v4291 = vunpack.c.l.b16 %v2812
      %v4292 = vunpack.c.h.b16 %v2812
      %v4293 = vunpack.c.l.b16 %v2813
      %v4294 = vunpack.c.h.b16 %v2813
      %v4295 = vunpack.c.l.b16 %v2814
      %v4296 = vunpack.c.h.b16 %v2814
      %v4297 = vunpack.c.l.b16 %v2815
      %v4298 = vunpack.c.h.b16 %v2815
      %v4299 = vunpack.c.l.b16 %v2816
      %v4300 = vunpack.c.h.b16 %v2816
      %v4301 = vunpack.c.l.b16 %v2817
      %v4302 = vunpack.c.h.b16 %v2817
      %v4303 = vunpack.c.l.b16 %v2818
      %v4304 = vunpack.c.h.b16 %v2818
      %v4305 = vunpack.c.l.b16 %v2819
      %v4306 = vunpack.c.h.b16 %v2819
      %v4307 = vunpack.c.l.b16 %v2820
      %v4308 = vunpack.c.h.b16 %v2820
      %v4309 = vunpack.c.l.b16 %v2821
      %v4310 = vunpack.c.h.b16 %v2821
      %v4311 = vunpack.c.l.b16 %v2822
      %v4312 = vunpack.c.h.b16 %v2822
      %v4313 = vunpack.c.l.b16 %v2823
      %v4314 = vunpack.c.h.b16 %v2823
      %v4315 = vunpack.c.l.b16 %v2824
      %v4316 = vunpack.c.h.b16 %v2824
      %v4317 = vunpack.c.l.b16 %v2825
      %v4318 = vunpack.c.h.b16 %v2825
      %v4319 = vunpack.c.l.b16 %v2826
      %v4320 = vunpack.c.h.b16 %v2826
      %v4321 = vunpack.c.l.b16 %v2827
      %v4322 = vunpack.c.h.b16 %v2827
      %v4323 = vunpack.c.l.b16 %v2828
      %v4324 = vunpack.c.h.b16 %v2828
      %v4325 = vunpack.c.l.b16 %v2829
      %v4326 = vunpack.c.h.b16 %v2829
      %v4327 = vunpack.c.l.b16 %v2830
      %v4328 = vunpack.c.h.b16 %v2830
      %v4329 = vunpack.c.l.b16 %v2831
      %v4330 = vunpack.c.h.b16 %v2831
      %v4331 = vunpack.c.l.b16 %v2832
      %v4332 = vunpack.c.h.b16 %v2832
      %v4333 = vunpack.c.l.b16 %v2833
      %v4334 = vunpack.c.h.b16 %v2833
      %v4335 = vunpack.c.l.b16 %v2834
      %v4336 = vunpack.c.h.b16 %v2834
      %v4337 = vunpack.c.l.b16 %v2835
      %v4338 = vunpack.c.h.b16 %v2835
      %v4339 = vunpack.c.l.b16 %v2836
      %v4340 = vunpack.c.h.b16 %v2836
      %v4341 = vunpack.c.l.b16 %v2837
      %v4342 = vunpack.c.h.b16 %v2837
      %v4343 = vunpack.c.l.b16 %v2838
      %v4344 = vunpack.c.h.b16 %v2838
      %v4345 = vunpack.c.l.b16 %v2839
      %v4346 = vunpack.c.h.b16 %v2839
      %v4347 = vunpack.c.l.b16 %v2840
      %v4348 = vunpack.c.h.b16 %v2840
      %v4349 = vunpack.c.l.b16 %v2841
      %v4350 = vunpack.c.h.b16 %v2841
      %v4351 = vunpack.c.l.b16 %v2842
      %v4352 = vunpack.c.h.b16 %v2842
      %v4353 = vunpack.c.l.b16 %v2843
      %v4354 = vunpack.c.h.b16 %v2843
      %v4355 = vunpack.c.l.b16 %v2844
      %v4356 = vunpack.c.h.b16 %v2844
      %v4357 = vunpack.c.l.b16 %v2845
      %v4358 = vunpack.c.h.b16 %v2845
      %v4359 = vunpack.c.l.b16 %v2846
      %v4360 = vunpack.c.h.b16 %v2846
      %v4361 = vunpack.c.l.b16 %v2847
      %v4362 = vunpack.c.h.b16 %v2847
      %v4363 = vunpack.c.l.b16 %v2848
      %v4364 = vunpack.c.h.b16 %v2848
      %v4365 = vunpack.c.l.b16 %v2849
      %v4366 = vunpack.c.h.b16 %v2849
      %v4367 = vunpack.c.l.b16 %v2850
      %v4368 = vunpack.c.h.b16 %v2850
      %v4369 = vunpack.c.l.b16 %v2851
      %v4370 = vunpack.c.h.b16 %v2851
      %v4371 = vunpack.c.l.b16 %v2852
      %v4372 = vunpack.c.h.b16 %v2852
      %v4373 = vunpack.c.l.b16 %v2853
      %v4374 = vunpack.c.h.b16 %v2853
      %v4375 = vunpack.c.l.b16 %v2854
      %v4376 = vunpack.c.h.b16 %v2854
      %v4377 = vunpack.c.l.b16 %v2855
      %v4378 = vunpack.c.h.b16 %v2855
      %v4379 = vunpack.c.l.b16 %v2856
      %v4380 = vunpack.c.h.b16 %v2856
      %v4381 = vunpack.c.l.b16 %v2857
      %v4382 = vunpack.c.h.b16 %v2857
      %v4383 = vunpack.c.l.b16 %v2858
      %v4384 = vunpack.c.h.b16 %v2858
      %v4385 = vunpack.c.l.b16 %v2859
      %v4386 = vunpack.c.h.b16 %v2859
      %v4387 = vunpack.c.l.b16 %v2860
      %v4388 = vunpack.c.h.b16 %v2860
      %v4389 = vunpack.c.l.b16 %v2861
      %v4390 = vunpack.c.h.b16 %v2861
      %v4391 = vunpack.c.l.b16 %v2862
      %v4392 = vunpack.c.h.b16 %v2862
      %v4393 = vunpack.c.l.b16 %v2863
      %v4394 = vunpack.c.h.b16 %v2863
      %v4395 = vunpack.c.l.b16 %v2864
      %v4396 = vunpack.c.h.b16 %v2864
      %v4397 = vunpack.c.l.b16 %v2865
      %v4398 = vunpack.c.h.b16 %v2865
      %v4399 = vunpack.c.l.b16 %v2866
      %v4400 = vunpack.c.h.b16 %v2866
      %v4401 = vunpack.c.l.b16 %v2867
      %v4402 = vunpack.c.h.b16 %v2867
      %v4403 = vunpack.c.l.b16 %v2868
      %v4404 = vunpack.c.h.b16 %v2868
      %v4405 = vunpack.c.l.b16 %v2869
      %v4406 = vunpack.c.h.b16 %v2869
      %v4407 = vunpack.c.l.b16 %v2870
      %v4408 = vunpack.c.h.b16 %v2870
      %v4409 = vunpack.c.l.b16 %v2871
      %v4410 = vunpack.c.h.b16 %v2871
      %v4411 = vunpack.c.l.b16 %v2872
      %v4412 = vunpack.c.h.b16 %v2872
      %v4413 = vunpack.c.l.b16 %v2873
      %v4414 = vunpack.c.h.b16 %v2873
      %v4415 = vunpack.c.l.b16 %v2874
      %v4416 = vunpack.c.h.b16 %v2874
      %v4417 = vunpack.c.l.b16 %v2875
      %v4418 = vunpack.c.h.b16 %v2875
      %v4419 = vunpack.c.l.b16 %v2876
      %v4420 = vunpack.c.h.b16 %v2876
      %v4421 = vunpack.c.l.b16 %v2877
      %v4422 = vunpack.c.h.b16 %v2877
      %v4423 = vunpack.c.l.b16 %v2878
      %v4424 = vunpack.c.h.b16 %v2878
      %v4425 = vunpack.c.l.b16 %v2879
      %v4426 = vunpack.c.h.b16 %v2879
      %v4427 = vunpack.c.l.b16 %v2880
      %v4428 = vunpack.c.h.b16 %v2880
      %v4429 = vunpack.c.l.b16 %v2881
      %v4430 = vunpack.c.h.b16 %v2881
      %v4431 = vunpack.c.l.b16 %v2882
      %v4432 = vunpack.c.h.b16 %v2882
      %v4433 = vunpack.c.l.b16 %v2883
      %v4434 = vunpack.c.h.b16 %v2883
      %v4435 = vunpack.c.l.b16 %v2884
      %v4436 = vunpack.c.h.b16 %v2884
      %v4437 = vunpack.c.l.b16 %v2885
      %v4438 = vunpack.c.h.b16 %v2885
      %v4439 = vunpack.c.l.b16 %v2886
      %v4440 = vunpack.c.h.b16 %v2886
      %v4441 = vunpack.c.l.b16 %v2887
      %v4442 = vunpack.c.h.b16 %v2887
      %v4443 = vunpack.c.l.b16 %v2888
      %v4444 = vunpack.c.h.b16 %v2888
      %v4445 = vunpack.c.l.b16 %v2889
      %v4446 = vunpack.c.h.b16 %v2889
      %v4447 = vunpack.c.l.b16 %v2890
      %v4448 = vunpack.c.h.b16 %v2890
      %v4449 = vunpack.c.l.b16 %v2891
      %v4450 = vunpack.c.h.b16 %v2891
      %v4451 = vunpack.c.l.b16 %v2892
      %v4452 = vunpack.c.h.b16 %v2892
      %v4453 = vunpack.c.l.b16 %v2893
      %v4454 = vunpack.c.h.b16 %v2893
      %v4455 = vunpack.c.l.b16 %v2894
      %v4456 = vunpack.c.h.b16 %v2894
      %v4457 = vunpack.c.l.b16 %v2895
      %v4458 = vunpack.c.h.b16 %v2895
      %v4459 = vunpack.c.l.b16 %v2896
      %v4460 = vunpack.c.h.b16 %v2896
      %v4461 = vunpack.c.l.b16 %v2897
      %v4462 = vunpack.c.h.b16 %v2897
      %v4463 = vunpack.c.l.b16 %v2898
      %v4464 = vunpack.c.h.b16 %v2898
      %v4465 = vunpack.c.l.b16 %v2899
      %v4466 = vunpack.c.h.b16 %v2899
      %v4467 = vunpack.c.l.b16 %v2900
      %v4468 = vunpack.c.h.b16 %v2900
      %v4469 = vunpack.c.l.b16 %v2901
      %v4470 = vunpack.c.h.b16 %v2901
      %v4471 = vunpack.c.l.b16 %v2902
      %v4472 = vunpack.c.h.b16 %v2902
      %v4473 = vunpack.c.l.b16 %v2903
      %v4474 = vunpack.c.h.b16 %v2903
      %v4475 = vunpack.c.l.b16 %v2904
      %v4476 = vunpack.c.h.b16 %v2904
      %v4477 = vunpack.c.l.b16 %v2905
      %v4478 = vunpack.c.h.b16 %v2905
      %v4479 = vunpack.c.l.b16 %v2906
      %v4480 = vunpack.c.h.b16 %v2906
      %v4481 = vunpack.c.l.b16 %v2907
      %v4482 = vunpack.c.h.b16 %v2907
      %v4483 = vunpack.c.l.b16 %v2908
      %v4484 = vunpack.c.h.b16 %v2908
      %v4485 = vunpack.c.l.b16 %v2909
      %v4486 = vunpack.c.h.b16 %v2909
      %v4487 = vunpack.c.l.b16 %v2910
      %v4488 = vunpack.c.h.b16 %v2910
      %v4489 = vpack.c.b16 %v3473, %v3465
      %v4490 = vpack.c.b16 %v3474, %v3466
      %v4491 = vpack.c.b16 %v3475, %v3467
      %v4492 = vpack.c.b16 %v3476, %v3468
      %v4493 = vpack.c.b16 %v3477, %v3469
      %v4494 = vpack.c.b16 %v3478, %v3470
      %v4495 = vpack.c.b16 %v3479, %v3471
      %v4496 = vpack.c.b16 %v3480, %v3472
      %v4497 = vpack.c.b16 %v3489, %v3481
      %v4498 = vpack.c.b16 %v3490, %v3482
      %v4499 = vpack.c.b16 %v3491, %v3483
      %v4500 = vpack.c.b16 %v3492, %v3484
      %v4501 = vpack.c.b16 %v3493, %v3485
      %v4502 = vpack.c.b16 %v3494, %v3486
      %v4503 = vpack.c.b16 %v3495, %v3487
      %v4504 = vpack.c.b16 %v3496, %v3488
      %v4505 = vpack.c.b16 %v3505, %v3497
      %v4506 = vpack.c.b16 %v3506, %v3498
      %v4507 = vpack.c.b16 %v3507, %v3499
      %v4508 = vpack.c.b16 %v3508, %v3500
      %v4509 = vpack.c.b16 %v3509, %v3501
      %v4510 = vpack.c.b16 %v3510, %v3502
      %v4511 = vpack.c.b16 %v3511, %v3503
      %v4512 = vpack.c.b16 %v3512, %v3504
      %v4513 = vpack.c.b16 %v3521, %v3513
      %v4514 = vpack.c.b16 %v3522, %v3514
      %v4515 = vpack.c.b16 %v3523, %v3515
      %v4516 = vpack.c.b16 %v3524, %v3516
      %v4517 = vpack.c.b16 %v3525, %v3517
      %v4518 = vpack.c.b16 %v3526, %v3518
      %v4519 = vpack.c.b16 %v3527, %v3519
      %v4520 = vpack.c.b16 %v3528, %v3520
      %v4521 = vpack.c.b16 %v3537, %v3529
      %v4522 = vpack.c.b16 %v3538, %v3530
      %v4523 = vpack.c.b16 %v3539, %v3531
      %v4524 = vpack.c.b16 %v3540, %v3532
      %v4525 = vpack.c.b16 %v3541, %v3533
      %v4526 = vpack.c.b16 %v3542, %v3534
      %v4527 = vpack.c.b16 %v3543, %v3535
      %v4528 = vpack.c.b16 %v3544, %v3536
      %v4529 = vpack.c.b16 %v3553, %v3545
      %v4530 = vpack.c.b16 %v3554, %v3546
      %v4531 = vpack.c.b16 %v3555, %v3547
      %v4532 = vpack.c.b16 %v3556, %v3548
      %v4533 = vpack.c.b16 %v3557, %v3549
      %v4534 = vpack.c.b16 %v3558, %v3550
      %v4535 = vpack.c.b16 %v3559, %v3551
      %v4536 = vpack.c.b16 %v3560, %v3552
      %v4537 = vpack.c.b16 %v3569, %v3561
      %v4538 = vpack.c.b16 %v3570, %v3562
      %v4539 = vpack.c.b16 %v3571, %v3563
      %v4540 = vpack.c.b16 %v3572, %v3564
      %v4541 = vpack.c.b16 %v3573, %v3565
      %v4542 = vpack.c.b16 %v3574, %v3566
      %v4543 = vpack.c.b16 %v3575, %v3567
      %v4544 = vpack.c.b16 %v3576, %v3568
      %v4545 = vpack.c.b16 %v3585, %v3577
      %v4546 = vpack.c.b16 %v3586, %v3578
      %v4547 = vpack.c.b16 %v3587, %v3579
      %v4548 = vpack.c.b16 %v3588, %v3580
      %v4549 = vpack.c.b16 %v3589, %v3581
      %v4550 = vpack.c.b16 %v3590, %v3582
      %v4551 = vpack.c.b16 %v3591, %v3583
      %v4552 = vpack.c.b16 %v3592, %v3584
      %v4553 = vpack.c.b16 %v3601, %v3593
      %v4554 = vpack.c.b16 %v3602, %v3594
      %v4555 = vpack.c.b16 %v3603, %v3595
      %v4556 = vpack.c.b16 %v3604, %v3596
      %v4557 = vpack.c.b16 %v3605, %v3597
      %v4558 = vpack.c.b16 %v3606, %v3598
      %v4559 = vpack.c.b16 %v3607, %v3599
      %v4560 = vpack.c.b16 %v3608, %v3600
      %v4561 = vpack.c.b16 %v3617, %v3609
      %v4562 = vpack.c.b16 %v3618, %v3610
      %v4563 = vpack.c.b16 %v3619, %v3611
      %v4564 = vpack.c.b16 %v3620, %v3612
      %v4565 = vpack.c.b16 %v3621, %v3613
      %v4566 = vpack.c.b16 %v3622, %v3614
      %v4567 = vpack.c.b16 %v3623, %v3615
      %v4568 = vpack.c.b16 %v3624, %v3616
      %v4569 = vpack.c.b16 %v3633, %v3625
      %v4570 = vpack.c.b16 %v3634, %v3626
      %v4571 = vpack.c.b16 %v3635, %v3627
      %v4572 = vpack.c.b16 %v3636, %v3628
      %v4573 = vpack.c.b16 %v3637, %v3629
      %v4574 = vpack.c.b16 %v3638, %v3630
      %v4575 = vpack.c.b16 %v3639, %v3631
      %v4576 = vpack.c.b16 %v3640, %v3632
      %v4577 = vpack.c.b16 %v3649, %v3641
      %v4578 = vpack.c.b16 %v3650, %v3642
      %v4579 = vpack.c.b16 %v3651, %v3643
      %v4580 = vpack.c.b16 %v3652, %v3644
      %v4581 = vpack.c.b16 %v3653, %v3645
      %v4582 = vpack.c.b16 %v3654, %v3646
      %v4583 = vpack.c.b16 %v3655, %v3647
      %v4584 = vpack.c.b16 %v3656, %v3648
      %v4585 = vpack.c.b16 %v3665, %v3657
      %v4586 = vpack.c.b16 %v3666, %v3658
      %v4587 = vpack.c.b16 %v3667, %v3659
      %v4588 = vpack.c.b16 %v3668, %v3660
      %v4589 = vpack.c.b16 %v3669, %v3661
      %v4590 = vpack.c.b16 %v3670, %v3662
      %v4591 = vpack.c.b16 %v3671, %v3663
      %v4592 = vpack.c.b16 %v3672, %v3664
      %v4593 = vpack.c.b16 %v3681, %v3673
      %v4594 = vpack.c.b16 %v3682, %v3674
      %v4595 = vpack.c.b16 %v3683, %v3675
      %v4596 = vpack.c.b16 %v3684, %v3676
      %v4597 = vpack.c.b16 %v3685, %v3677
      %v4598 = vpack.c.b16 %v3686, %v3678
      %v4599 = vpack.c.b16 %v3687, %v3679
      %v4600 = vpack.c.b16 %v3688, %v3680
      %v4601 = vpack.c.b16 %v3697, %v3689
      %v4602 = vpack.c.b16 %v3698, %v3690
      %v4603 = vpack.c.b16 %v3699, %v3691
      %v4604 = vpack.c.b16 %v3700, %v3692
      %v4605 = vpack.c.b16 %v3701, %v3693
      %v4606 = vpack.c.b16 %v3702, %v3694
      %v4607 = vpack.c.b16 %v3703, %v3695
      %v4608 = vpack.c.b16 %v3704, %v3696
      %v4609 = vpack.c.b16 %v3713, %v3705
      %v4610 = vpack.c.b16 %v3714, %v3706
      %v4611 = vpack.c.b16 %v3715, %v3707
      %v4612 = vpack.c.b16 %v3716, %v3708
      %v4613 = vpack.c.b16 %v3717, %v3709
      %v4614 = vpack.c.b16 %v3718, %v3710
      %v4615 = vpack.c.b16 %v3719, %v3711
      %v4616 = vpack.c.b16 %v3720, %v3712
      %v4617 = vpack.c.b16 %v3729, %v3721
      %v4618 = vpack.c.b16 %v3730, %v3722
      %v4619 = vpack.c.b16 %v3731, %v3723
      %v4620 = vpack.c.b16 %v3732, %v3724
      %v4621 = vpack.c.b16 %v3733, %v3725
      %v4622 = vpack.c.b16 %v3734, %v3726
      %v4623 = vpack.c.b16 %v3735, %v3727
      %v4624 = vpack.c.b16 %v3736, %v3728
      %v4625 = vpack.c.b16 %v3745, %v3737
      %v4626 = vpack.c.b16 %v3746, %v3738
      %v4627 = vpack.c.b16 %v3747, %v3739
      %v4628 = vpack.c.b16 %v3748, %v3740
      %v4629 = vpack.c.b16 %v3749, %v3741
      %v4630 = vpack.c.b16 %v3750, %v3742
      %v4631 = vpack.c.b16 %v3751, %v3743
      %v4632 = vpack.c.b16 %v3752, %v3744
      %v4633 = vpack.c.b16 %v3761, %v3753
      %v4634 = vpack.c.b16 %v3762, %v3754
      %v4635 = vpack.c.b16 %v3763, %v3755
      %v4636 = vpack.c.b16 %v3764, %v3756
      %v4637 = vpack.c.b16 %v3765, %v3757
      %v4638 = vpack.c.b16 %v3766, %v3758
      %v4639 = vpack.c.b16 %v3767, %v3759
      %v4640 = vpack.c.b16 %v3768, %v3760
      %v4641 = vpack.c.b16 %v3777, %v3769
      %v4642 = vpack.c.b16 %v3778, %v3770
      %v4643 = vpack.c.b16 %v3779, %v3771
      %v4644 = vpack.c.b16 %v3780, %v3772
      %v4645 = vpack.c.b16 %v3781, %v3773
      %v4646 = vpack.c.b16 %v3782, %v3774
      %v4647 = vpack.c.b16 %v3783, %v3775
      %v4648 = vpack.c.b16 %v3784, %v3776
      %v4649 = vpack.c.b16 %v3793, %v3785
      %v4650 = vpack.c.b16 %v3794, %v3786
      %v4651 = vpack.c.b16 %v3795, %v3787
      %v4652 = vpack.c.b16 %v3796, %v3788
      %v4653 = vpack.c.b16 %v3797, %v3789
      %v4654 = vpack.c.b16 %v3798, %v3790
      %v4655 = vpack.c.b16 %v3799, %v3791
      %v4656 = vpack.c.b16 %v3800, %v3792
      %v4657 = vpack.c.b16 %v3809, %v3801
      %v4658 = vpack.c.b16 %v3810, %v3802
      %v4659 = vpack.c.b16 %v3811, %v3803
      %v4660 = vpack.c.b16 %v3812, %v3804
      %v4661 = vpack.c.b16 %v3813, %v3805
      %v4662 = vpack.c.b16 %v3814, %v3806
      %v4663 = vpack.c.b16 %v3815, %v3807
      %v4664 = vpack.c.b16 %v3816, %v3808
      %v4665 = vpack.c.b16 %v3825, %v3817
      %v4666 = vpack.c.b16 %v3826, %v3818
      %v4667 = vpack.c.b16 %v3827, %v3819
      %v4668 = vpack.c.b16 %v3828, %v3820
      %v4669 = vpack.c.b16 %v3829, %v3821
      %v4670 = vpack.c.b16 %v3830, %v3822
      %v4671 = vpack.c.b16 %v3831, %v3823
      %v4672 = vpack.c.b16 %v3832, %v3824
      %v4673 = vpack.c.b16 %v3841, %v3833
      %v4674 = vpack.c.b16 %v3842, %v3834
      %v4675 = vpack.c.b16 %v3843, %v3835
      %v4676 = vpack.c.b16 %v3844, %v3836
      %v4677 = vpack.c.b16 %v3845, %v3837
      %v4678 = vpack.c.b16 %v3846, %v3838
      %v4679 = vpack.c.b16 %v3847, %v3839
      %v4680 = vpack.c.b16 %v3848, %v3840
      %v4681 = vpack.c.b16 %v3857, %v3849
      %v4682 = vpack.c.b16 %v3858, %v3850
      %v4683 = vpack.c.b16 %v3859, %v3851
      %v4684 = vpack.c.b16 %v3860, %v3852
      %v4685 = vpack.c.b16 %v3861, %v3853
      %v4686 = vpack.c.b16 %v3862, %v3854
      %v4687 = vpack.c.b16 %v3863, %v3855
      %v4688 = vpack.c.b16 %v3864, %v3856
      %v4689 = vpack.c.b16 %v3873, %v3865
      %v4690 = vpack.c.b16 %v3874, %v3866
      %v4691 = vpack.c.b16 %v3875, %v3867
      %v4692 = vpack.c.b16 %v3876, %v3868
      %v4693 = vpack.c.b16 %v3877, %v3869
      %v4694 = vpack.c.b16 %v3878, %v3870
      %v4695 = vpack.c.b16 %v3879, %v3871
      %v4696 = vpack.c.b16 %v3880, %v3872
      %v4697 = vpack.c.b16 %v3889, %v3881
      %v4698 = vpack.c.b16 %v3890, %v3882
      %v4699 = vpack.c.b16 %v3891, %v3883
      %v4700 = vpack.c.b16 %v3892, %v3884
      %v4701 = vpack.c.b16 %v3893, %v3885
      %v4702 = vpack.c.b16 %v3894, %v3886
      %v4703 = vpack.c.b16 %v3895, %v3887
      %v4704 = vpack.c.b16 %v3896, %v3888
      %v4705 = vpack.c.b16 %v3905, %v3897
      %v4706 = vpack.c.b16 %v3906, %v3898
      %v4707 = vpack.c.b16 %v3907, %v3899
      %v4708 = vpack.c.b16 %v3908, %v3900
      %v4709 = vpack.c.b16 %v3909, %v3901
      %v4710 = vpack.c.b16 %v3910, %v3902
      %v4711 = vpack.c.b16 %v3911, %v3903
      %v4712 = vpack.c.b16 %v3912, %v3904
      %v4713 = vpack.c.b16 %v3921, %v3913
      %v4714 = vpack.c.b16 %v3922, %v3914
      %v4715 = vpack.c.b16 %v3923, %v3915
      %v4716 = vpack.c.b16 %v3924, %v3916
      %v4717 = vpack.c.b16 %v3925, %v3917
      %v4718 = vpack.c.b16 %v3926, %v3918
      %v4719 = vpack.c.b16 %v3927, %v3919
      %v4720 = vpack.c.b16 %v3928, %v3920
      %v4721 = vpack.c.b16 %v3937, %v3929
      %v4722 = vpack.c.b16 %v3938, %v3930
      %v4723 = vpack.c.b16 %v3939, %v3931
      %v4724 = vpack.c.b16 %v3940, %v3932
      %v4725 = vpack.c.b16 %v3941, %v3933
      %v4726 = vpack.c.b16 %v3942, %v3934
      %v4727 = vpack.c.b16 %v3943, %v3935
      %v4728 = vpack.c.b16 %v3944, %v3936
      %v4729 = vpack.c.b16 %v3953, %v3945
      %v4730 = vpack.c.b16 %v3954, %v3946
      %v4731 = vpack.c.b16 %v3955, %v3947
      %v4732 = vpack.c.b16 %v3956, %v3948
      %v4733 = vpack.c.b16 %v3957, %v3949
      %v4734 = vpack.c.b16 %v3958, %v3950
      %v4735 = vpack.c.b16 %v3959, %v3951
      %v4736 = vpack.c.b16 %v3960, %v3952
      %v4737 = vpack.c.b16 %v3969, %v3961
      %v4738 = vpack.c.b16 %v3970, %v3962
      %v4739 = vpack.c.b16 %v3971, %v3963
      %v4740 = vpack.c.b16 %v3972, %v3964
      %v4741 = vpack.c.b16 %v3973, %v3965
      %v4742 = vpack.c.b16 %v3974, %v3966
      %v4743 = vpack.c.b16 %v3975, %v3967
      %v4744 = vpack.c.b16 %v3976, %v3968
      %v4745 = vpack.c.b16 %v3985, %v3977
      %v4746 = vpack.c.b16 %v3986, %v3978
      %v4747 = vpack.c.b16 %v3987, %v3979
      %v4748 = vpack.c.b16 %v3988, %v3980
      %v4749 = vpack.c.b16 %v3989, %v3981
      %v4750 = vpack.c.b16 %v3990, %v3982
      %v4751 = vpack.c.b16 %v3991, %v3983
      %v4752 = vpack.c.b16 %v3992, %v3984
      %v4753 = vpack.c.b16 %v4001, %v3993
      %v4754 = vpack.c.b16 %v4002, %v3994
      %v4755 = vpack.c.b16 %v4003, %v3995
      %v4756 = vpack.c.b16 %v4004, %v3996
      %v4757 = vpack.c.b16 %v4005, %v3997
      %v4758 = vpack.c.b16 %v4006, %v3998
      %v4759 = vpack.c.b16 %v4007, %v3999
      %v4760 = vpack.c.b16 %v4008, %v4000
      %v4761 = vpack.c.b16 %v4017, %v4009
      %v4762 = vpack.c.b16 %v4018, %v4010
      %v4763 = vpack.c.b16 %v4019, %v4011
      %v4764 = vpack.c.b16 %v4020, %v4012
      %v4765 = vpack.c.b16 %v4021, %v4013
      %v4766 = vpack.c.b16 %v4022, %v4014
      %v4767 = vpack.c.b16 %v4023, %v4015
      %v4768 = vpack.c.b16 %v4024, %v4016
      %v4769 = vpack.c.b16 %v4033, %v4025
      %v4770 = vpack.c.b16 %v4034, %v4026
      %v4771 = vpack.c.b16 %v4035, %v4027
      %v4772 = vpack.c.b16 %v4036, %v4028
      %v4773 = vpack.c.b16 %v4037, %v4029
      %v4774 = vpack.c.b16 %v4038, %v4030
      %v4775 = vpack.c.b16 %v4039, %v4031
      %v4776 = vpack.c.b16 %v4040, %v4032
      %v4777 = vpack.c.b16 %v4049, %v4041
      %v4778 = vpack.c.b16 %v4050, %v4042
      %v4779 = vpack.c.b16 %v4051, %v4043
      %v4780 = vpack.c.b16 %v4052, %v4044
      %v4781 = vpack.c.b16 %v4053, %v4045
      %v4782 = vpack.c.b16 %v4054, %v4046
      %v4783 = vpack.c.b16 %v4055, %v4047
      %v4784 = vpack.c.b16 %v4056, %v4048
      %v4785 = vpack.c.b16 %v4065, %v4057
      %v4786 = vpack.c.b16 %v4066, %v4058
      %v4787 = vpack.c.b16 %v4067, %v4059
      %v4788 = vpack.c.b16 %v4068, %v4060
      %v4789 = vpack.c.b16 %v4069, %v4061
      %v4790 = vpack.c.b16 %v4070, %v4062
      %v4791 = vpack.c.b16 %v4071, %v4063
      %v4792 = vpack.c.b16 %v4072, %v4064
      %v4793 = vpack.c.b16 %v4081, %v4073
      %v4794 = vpack.c.b16 %v4082, %v4074
      %v4795 = vpack.c.b16 %v4083, %v4075
      %v4796 = vpack.c.b16 %v4084, %v4076
      %v4797 = vpack.c.b16 %v4085, %v4077
      %v4798 = vpack.c.b16 %v4086, %v4078
      %v4799 = vpack.c.b16 %v4087, %v4079
      %v4800 = vpack.c.b16 %v4088, %v4080
      %v4801 = vpack.c.b16 %v4097, %v4089
      %v4802 = vpack.c.b16 %v4098, %v4090
      %v4803 = vpack.c.b16 %v4099, %v4091
      %v4804 = vpack.c.b16 %v4100, %v4092
      %v4805 = vpack.c.b16 %v4101, %v4093
      %v4806 = vpack.c.b16 %v4102, %v4094
      %v4807 = vpack.c.b16 %v4103, %v4095
      %v4808 = vpack.c.b16 %v4104, %v4096
      %v4809 = vpack.c.b16 %v4113, %v4105
      %v4810 = vpack.c.b16 %v4114, %v4106
      %v4811 = vpack.c.b16 %v4115, %v4107
      %v4812 = vpack.c.b16 %v4116, %v4108
      %v4813 = vpack.c.b16 %v4117, %v4109
      %v4814 = vpack.c.b16 %v4118, %v4110
      %v4815 = vpack.c.b16 %v4119, %v4111
      %v4816 = vpack.c.b16 %v4120, %v4112
      %v4817 = vpack.c.b16 %v4129, %v4121
      %v4818 = vpack.c.b16 %v4130, %v4122
      %v4819 = vpack.c.b16 %v4131, %v4123
      %v4820 = vpack.c.b16 %v4132, %v4124
      %v4821 = vpack.c.b16 %v4133, %v4125
      %v4822 = vpack.c.b16 %v4134, %v4126
      %v4823 = vpack.c.b16 %v4135, %v4127
      %v4824 = vpack.c.b16 %v4136, %v4128
      %v4825 = vpack.c.b16 %v4145, %v4137
      %v4826 = vpack.c.b16 %v4146, %v4138
      %v4827 = vpack.c.b16 %v4147, %v4139
      %v4828 = vpack.c.b16 %v4148, %v4140
      %v4829 = vpack.c.b16 %v4149, %v4141
      %v4830 = vpack.c.b16 %v4150, %v4142
      %v4831 = vpack.c.b16 %v4151, %v4143
      %v4832 = vpack.c.b16 %v4152, %v4144
      %v4833 = vpack.c.b16 %v4161, %v4153
      %v4834 = vpack.c.b16 %v4162, %v4154
      %v4835 = vpack.c.b16 %v4163, %v4155
      %v4836 = vpack.c.b16 %v4164, %v4156
      %v4837 = vpack.c.b16 %v4165, %v4157
      %v4838 = vpack.c.b16 %v4166, %v4158
      %v4839 = vpack.c.b16 %v4167, %v4159
      %v4840 = vpack.c.b16 %v4168, %v4160
      %v4841 = vpack.c.b16 %v4177, %v4169
      %v4842 = vpack.c.b16 %v4178, %v4170
      %v4843 = vpack.c.b16 %v4179, %v4171
      %v4844 = vpack.c.b16 %v4180, %v4172
      %v4845 = vpack.c.b16 %v4181, %v4173
      %v4846 = vpack.c.b16 %v4182, %v4174
      %v4847 = vpack.c.b16 %v4183, %v4175
      %v4848 = vpack.c.b16 %v4184, %v4176
      %v4849 = vpack.c.b16 %v4193, %v4185
      %v4850 = vpack.c.b16 %v4194, %v4186
      %v4851 = vpack.c.b16 %v4195, %v4187
      %v4852 = vpack.c.b16 %v4196, %v4188
      %v4853 = vpack.c.b16 %v4197, %v4189
      %v4854 = vpack.c.b16 %v4198, %v4190
      %v4855 = vpack.c.b16 %v4199, %v4191
      %v4856 = vpack.c.b16 %v4200, %v4192
      %v4857 = vpack.c.b16 %v4209, %v4201
      %v4858 = vpack.c.b16 %v4210, %v4202
      %v4859 = vpack.c.b16 %v4211, %v4203
      %v4860 = vpack.c.b16 %v4212, %v4204
      %v4861 = vpack.c.b16 %v4213, %v4205
      %v4862 = vpack.c.b16 %v4214, %v4206
      %v4863 = vpack.c.b16 %v4215, %v4207
      %v4864 = vpack.c.b16 %v4216, %v4208
      %v4865 = vpack.c.b16 %v4225, %v4217
      %v4866 = vpack.c.b16 %v4226, %v4218
      %v4867 = vpack.c.b16 %v4227, %v4219
      %v4868 = vpack.c.b16 %v4228, %v4220
      %v4869 = vpack.c.b16 %v4229, %v4221
      %v4870 = vpack.c.b16 %v4230, %v4222
      %v4871 = vpack.c.b16 %v4231, %v4223
      %v4872 = vpack.c.b16 %v4232, %v4224
      %v4873 = vpack.c.b16 %v4241, %v4233
      %v4874 = vpack.c.b16 %v4242, %v4234
      %v4875 = vpack.c.b16 %v4243, %v4235
      %v4876 = vpack.c.b16 %v4244, %v4236
      %v4877 = vpack.c.b16 %v4245, %v4237
      %v4878 = vpack.c.b16 %v4246, %v4238
      %v4879 = vpack.c.b16 %v4247, %v4239
      %v4880 = vpack.c.b16 %v4248, %v4240
      %v4881 = vpack.c.b16 %v4257, %v4249
      %v4882 = vpack.c.b16 %v4258, %v4250
      %v4883 = vpack.c.b16 %v4259, %v4251
      %v4884 = vpack.c.b16 %v4260, %v4252
      %v4885 = vpack.c.b16 %v4261, %v4253
      %v4886 = vpack.c.b16 %v4262, %v4254
      %v4887 = vpack.c.b16 %v4263, %v4255
      %v4888 = vpack.c.b16 %v4264, %v4256
      %v4889 = vpack.c.b16 %v4273, %v4265
      %v4890 = vpack.c.b16 %v4274, %v4266
      %v4891 = vpack.c.b16 %v4275, %v4267
      %v4892 = vpack.c.b16 %v4276, %v4268
      %v4893 = vpack.c.b16 %v4277, %v4269
      %v4894 = vpack.c.b16 %v4278, %v4270
      %v4895 = vpack.c.b16 %v4279, %v4271
      %v4896 = vpack.c.b16 %v4280, %v4272
      %v4897 = vpack.c.b16 %v4289, %v4281
      %v4898 = vpack.c.b16 %v4290, %v4282
      %v4899 = vpack.c.b16 %v4291, %v4283
      %v4900 = vpack.c.b16 %v4292, %v4284
      %v4901 = vpack.c.b16 %v4293, %v4285
      %v4902 = vpack.c.b16 %v4294, %v4286
      %v4903 = vpack.c.b16 %v4295, %v4287
      %v4904 = vpack.c.b16 %v4296, %v4288
      %v4905 = vpack.c.b16 %v4305, %v4297
      %v4906 = vpack.c.b16 %v4306, %v4298
      %v4907 = vpack.c.b16 %v4307, %v4299
      %v4908 = vpack.c.b16 %v4308, %v4300
      %v4909 = vpack.c.b16 %v4309, %v4301
      %v4910 = vpack.c.b16 %v4310, %v4302
      %v4911 = vpack.c.b16 %v4311, %v4303
      %v4912 = vpack.c.b16 %v4312, %v4304
      %v4913 = vpack.c.b16 %v4321, %v4313
      %v4914 = vpack.c.b16 %v4322, %v4314
      %v4915 = vpack.c.b16 %v4323, %v4315
      %v4916 = vpack.c.b16 %v4324, %v4316
      %v4917 = vpack.c.b16 %v4325, %v4317
      %v4918 = vpack.c.b16 %v4326, %v4318
      %v4919 = vpack.c.b16 %v4327, %v4319
      %v4920 = vpack.c.b16 %v4328, %v4320
      %v4921 = vpack.c.b16 %v4337, %v4329
      %v4922 = vpack.c.b16 %v4338, %v4330
      %v4923 = vpack.c.b16 %v4339, %v4331
      %v4924 = vpack.c.b16 %v4340, %v4332
      %v4925 = vpack.c.b16 %v4341, %v4333
      %v4926 = vpack.c.b16 %v4342, %v4334
      %v4927 = vpack.c.b16 %v4343, %v4335
      %v4928 = vpack.c.b16 %v4344, %v4336
      %v4929 = vpack.c.b16 %v4353, %v4345
      %v4930 = vpack.c.b16 %v4354, %v4346
      %v4931 = vpack.c.b16 %v4355, %v4347
      %v4932 = vpack.c.b16 %v4356, %v4348
      %v4933 = vpack.c.b16 %v4357, %v4349
      %v4934 = vpack.c.b16 %v4358, %v4350
      %v4935 = vpack.c.b16 %v4359, %v4351
      %v4936 = vpack.c.b16 %v4360, %v4352
      %v4937 = vpack.c.b16 %v4369, %v4361
      %v4938 = vpack.c.b16 %v4370, %v4362
      %v4939 = vpack.c.b16 %v4371, %v4363
      %v4940 = vpack.c.b16 %v4372, %v4364
      %v4941 = vpack.c.b16 %v4373, %v4365
      %v4942 = vpack.c.b16 %v4374, %v4366
      %v4943 = vpack.c.b16 %v4375, %v4367
      %v4944 = vpack.c.b16 %v4376, %v4368
      %v4945 = vpack.c.b16 %v4385, %v4377
      %v4946 = vpack.c.b16 %v4386, %v4378
      %v4947 = vpack.c.b16 %v4387, %v4379
      %v4948 = vpack.c.b16 %v4388, %v4380
      %v4949 = vpack.c.b16 %v4389, %v4381
      %v4950 = vpack.c.b16 %v4390, %v4382
      %v4951 = vpack.c.b16 %v4391, %v4383
      %v4952 = vpack.c.b16 %v4392, %v4384
      %v4953 = vpack.c.b16 %v4401, %v4393
      %v4954 = vpack.c.b16 %v4402, %v4394
      %v4955 = vpack.c.b16 %v4403, %v4395
      %v4956 = vpack.c.b16 %v4404, %v4396
      %v4957 = vpack.c.b16 %v4405, %v4397
      %v4958 = vpack.c.b16 %v4406, %v4398
      %v4959 = vpack.c.b16 %v4407, %v4399
      %v4960 = vpack.c.b16 %v4408, %v4400
      %v4961 = vpack.c.b16 %v4417, %v4409
      %v4962 = vpack.c.b16 %v4418, %v4410
      %v4963 = vpack.c.b16 %v4419, %v4411
      %v4964 = vpack.c.b16 %v4420, %v4412
      %v4965 = vpack.c.b16 %v4421, %v4413
      %v4966 = vpack.c.b16 %v4422, %v4414
      %v4967 = vpack.c.b16 %v4423, %v4415
      %v4968 = vpack.c.b16 %v4424, %v4416
      %v4969 = vpack.c.b16 %v4433, %v4425
      %v4970 = vpack.c.b16 %v4434, %v4426
      %v4971 = vpack.c.b16 %v4435, %v4427
      %v4972 = vpack.c.b16 %v4436, %v4428
      %v4973 = vpack.c.b16 %v4437, %v4429
      %v4974 = vpack.c.b16 %v4438, %v4430
      %v4975 = vpack.c.b16 %v4439, %v4431
      %v4976 = vpack.c.b16 %v4440, %v4432
      %v4977 = vpack.c.b16 %v4449, %v4441
      %v4978 = vpack.c.b16 %v4450, %v4442
      %v4979 = vpack.c.b16 %v4451, %v4443
      %v4980 = vpack.c.b16 %v4452, %v4444
      %v4981 = vpack.c.b16 %v4453, %v4445
      %v4982 = vpack.c.b16 %v4454, %v4446
      %v4983 = vpack.c.b16 %v4455, %v4447
      %v4984 = vpack.c.b16 %v4456, %v4448
      %v4985 = vpack.c.b16 %v4465, %v4457
      %v4986 = vpack.c.b16 %v4466, %v4458
      %v4987 = vpack.c.b16 %v4467, %v4459
      %v4988 = vpack.c.b16 %v4468, %v4460
      %v4989 = vpack.c.b16 %v4469, %v4461
      %v4990 = vpack.c.b16 %v4470, %v4462
      %v4991 = vpack.c.b16 %v4471, %v4463
      %v4992 = vpack.c.b16 %v4472, %v4464
      %v4993 = vpack.c.b16 %v4481, %v4473
      %v4994 = vpack.c.b16 %v4482, %v4474
      %v4995 = vpack.c.b16 %v4483, %v4475
      %v4996 = vpack.c.b16 %v4484, %v4476
      %v4997 = vpack.c.b16 %v4485, %v4477
      %v4998 = vpack.c.b16 %v4486, %v4478
      %v4999 = vpack.c.b16 %v4487, %v4479
      %v5000 = vpack.c.b16 %v4488, %v4480
      %5513 = vmatprep.subr.bf16.mxu0 %v4490
      %5514 = vmatpush1.bf16.msra.mxu0 %v4489
      %5515 = vmatprep.subr.bf16.mxu0 %v4498
      %5516 = vmatpush1.bf16.msra.mxu0 %v4497
      %5517 = vmatprep.subr.bf16.mxu0 %v4506
      %5518 = vmatpush1.bf16.msra.mxu0 %v4505
      %5519 = vmatprep.subr.bf16.mxu0 %v4514
      %5520 = vmatpush1.bf16.msra.mxu0 %v4513
      %5521 = vmatprep.subr.bf16.mxu0 %v4522
      %5522 = vmatpush1.bf16.msra.mxu0 %v4521
      %5523 = vmatprep.subr.bf16.mxu0 %v4530
      %5524 = vmatpush1.bf16.msra.mxu0 %v4529
      %5525 = vmatprep.subr.bf16.mxu0 %v4538
      %5526 = vmatpush1.bf16.msra.mxu0 %v4537
      %5527 = vmatprep.subr.bf16.mxu0 %v4546
      %5528 = vmatpush1.bf16.msra.mxu0 %v4545
      %5529 = vmatprep.subr.bf16.mxu0 %v4554
      %5530 = vmatpush1.bf16.msra.mxu0 %v4553
      %5531 = vmatprep.subr.bf16.mxu0 %v4562
      %5532 = vmatpush1.bf16.msra.mxu0 %v4561
      %5533 = vmatprep.subr.bf16.mxu0 %v4570
      %5534 = vmatpush1.bf16.msra.mxu0 %v4569
      %5535 = vmatprep.subr.bf16.mxu0 %v4578
      %5536 = vmatpush1.bf16.msra.mxu0 %v4577
      %5537 = vmatprep.subr.bf16.mxu0 %v4586
      %5538 = vmatpush1.bf16.msra.mxu0 %v4585
      %5539 = vmatprep.subr.bf16.mxu0 %v4594
      %5540 = vmatpush1.bf16.msra.mxu0 %v4593
      %5541 = vmatprep.subr.bf16.mxu0 %v4602
      %5542 = vmatpush1.bf16.msra.mxu0 %v4601
      %5543 = vmatprep.subr.bf16.mxu0 %v4610
      %5544 = vmatpush1.bf16.msra.mxu0 %v4609
      %5545 = vmatprep.mubr.bf16.mxu0 %v2392
      %5546 = vmatmul.mubr.bf16.gmra.mrb[0].mxu0 %v2391
      %v5547 = vpop.f32.mrb[0].mxu0
      %v5548 = vadd.f32 %v2916, %v5547
      %v5549 = vpop.f32.mrb[0].mxu0
      %v5550 = vadd.f32 %v2920, %v5549
      %v5551 = vpop.f32.mrb[0].mxu0
      %v5552 = vadd.f32 %v2916, %v5551
      %v5553 = vpop.f32.mrb[0].mxu0
      %v5554 = vadd.f32 %v2920, %v5553
      %5555 = vdwg.mxu0
      %5556 = vmatprep.subr.bf16.mxu0 %v4618
      %5557 = vmatpush1.bf16.msra.mxu0 %v4617
      %5558 = vmatprep.subr.bf16.mxu0 %v4626
      %5559 = vmatpush1.bf16.msra.mxu0 %v4625
      %5560 = vmatprep.subr.bf16.mxu0 %v4634
      %5561 = vmatpush1.bf16.msra.mxu0 %v4633
      %5562 = vmatprep.subr.bf16.mxu0 %v4642
      %5563 = vmatpush1.bf16.msra.mxu0 %v4641
      %5564 = vmatprep.subr.bf16.mxu0 %v4650
      %5565 = vmatpush1.bf16.msra.mxu0 %v4649
      %5566 = vmatprep.subr.bf16.mxu0 %v4658
      %5567 = vmatpush1.bf16.msra.mxu0 %v4657
      %5568 = vmatprep.subr.bf16.mxu0 %v4666
      %5569 = vmatpush1.bf16.msra.mxu0 %v4665
      %5570 = vmatprep.subr.bf16.mxu0 %v4674
      %5571 = vmatpush1.bf16.msra.mxu0 %v4673
      %5572 = vmatprep.subr.bf16.mxu0 %v4682
      %5573 = vmatpush1.bf16.msra.mxu0 %v4681
      %5574 = vmatprep.subr.bf16.mxu0 %v4690
      %5575 = vmatpush1.bf16.msra.mxu0 %v4689
      %5576 = vmatprep.subr.bf16.mxu0 %v4698
      %5577 = vmatpush1.bf16.msra.mxu0 %v4697
      %5578 = vmatprep.subr.bf16.mxu0 %v4706
      %5579 = vmatpush1.bf16.msra.mxu0 %v4705
      %5580 = vmatprep.subr.bf16.mxu0 %v4714
      %5581 = vmatpush1.bf16.msra.mxu0 %v4713
      %5582 = vmatprep.subr.bf16.mxu0 %v4722
      %5583 = vmatpush1.bf16.msra.mxu0 %v4721
      %5584 = vmatprep.subr.bf16.mxu0 %v4730
      %5585 = vmatpush1.bf16.msra.mxu0 %v4729
      %5586 = vmatprep.subr.bf16.mxu0 %v4738
      %5587 = vmatpush1.bf16.msra.mxu0 %v4737
      %5588 = vmatprep.mubr.bf16.mxu0 %v2394
      %5589 = vmatmul.mubr.bf16.gmra.mrb[0].mxu0 %v2393
      %v5590 = vpop.f32.mrb[0].mxu0
      %v5591 = vadd.f32 %v5548, %v5590
      %v5592 = vpop.f32.mrb[0].mxu0
      %v5593 = vadd.f32 %v5550, %v5592
      %v5594 = vpop.f32.mrb[0].mxu0
      %v5595 = vadd.f32 %v5552, %v5594
      %v5596 = vpop.f32.mrb[0].mxu0
      %v5597 = vadd.f32 %v5554, %v5596
      %5598 = vdwg.mxu0
      %5599 = vmatprep.subr.bf16.mxu0 %v4746
      %5600 = vmatpush1.bf16.msra.mxu0 %v4745
      %5601 = vmatprep.subr.bf16.mxu0 %v4754
      %5602 = vmatpush1.bf16.msra.mxu0 %v4753
      %5603 = vmatprep.subr.bf16.mxu0 %v4762
      %5604 = vmatpush1.bf16.msra.mxu0 %v4761
      %5605 = vmatprep.subr.bf16.mxu0 %v4770
      %5606 = vmatpush1.bf16.msra.mxu0 %v4769
      %5607 = vmatprep.subr.bf16.mxu0 %v4778
      %5608 = vmatpush1.bf16.msra.mxu0 %v4777
      %5609 = vmatprep.subr.bf16.mxu0 %v4786
      %5610 = vmatpush1.bf16.msra.mxu0 %v4785
      %5611 = vmatprep.subr.bf16.mxu0 %v4794
      %5612 = vmatpush1.bf16.msra.mxu0 %v4793
      %5613 = vmatprep.subr.bf16.mxu0 %v4802
      %5614 = vmatpush1.bf16.msra.mxu0 %v4801
      %5615 = vmatprep.subr.bf16.mxu0 %v4810
      %5616 = vmatpush1.bf16.msra.mxu0 %v4809
      %5617 = vmatprep.subr.bf16.mxu0 %v4818
      %5618 = vmatpush1.bf16.msra.mxu0 %v4817
      %5619 = vmatprep.subr.bf16.mxu0 %v4826
      %5620 = vmatpush1.bf16.msra.mxu0 %v4825
      %5621 = vmatprep.subr.bf16.mxu0 %v4834
      %5622 = vmatpush1.bf16.msra.mxu0 %v4833
      %5623 = vmatprep.subr.bf16.mxu0 %v4842
      %5624 = vmatpush1.bf16.msra.mxu0 %v4841
      %5625 = vmatprep.subr.bf16.mxu0 %v4850
      %5626 = vmatpush1.bf16.msra.mxu0 %v4849
      %5627 = vmatprep.subr.bf16.mxu0 %v4858
      %5628 = vmatpush1.bf16.msra.mxu0 %v4857
      %5629 = vmatprep.subr.bf16.mxu0 %v4866
      %5630 = vmatpush1.bf16.msra.mxu0 %v4865
      %5631 = vmatprep.mubr.bf16.mxu0 %v2396
      %5632 = vmatmul.mubr.bf16.gmra.mrb[0].mxu0 %v2395
      %v5633 = vpop.f32.mrb[0].mxu0
      %v5634 = vadd.f32 %v5591, %v5633
      %v5635 = vpop.f32.mrb[0].mxu0
      %v5636 = vadd.f32 %v5593, %v5635
      %v5637 = vpop.f32.mrb[0].mxu0
      %v5638 = vadd.f32 %v5595, %v5637
      %v5639 = vpop.f32.mrb[0].mxu0
      %v5640 = vadd.f32 %v5597, %v5639
      %5641 = vdwg.mxu0
      %5642 = vmatprep.subr.bf16.mxu0 %v4874
      %5643 = vmatpush1.bf16.msra.mxu0 %v4873
      %5644 = vmatprep.subr.bf16.mxu0 %v4882
      %5645 = vmatpush1.bf16.msra.mxu0 %v4881
      %5646 = vmatprep.subr.bf16.mxu0 %v4890
      %5647 = vmatpush1.bf16.msra.mxu0 %v4889
      %5648 = vmatprep.subr.bf16.mxu0 %v4898
      %5649 = vmatpush1.bf16.msra.mxu0 %v4897
      %5650 = vmatprep.subr.bf16.mxu0 %v4906
      %5651 = vmatpush1.bf16.msra.mxu0 %v4905
      %5652 = vmatprep.subr.bf16.mxu0 %v4914
      %5653 = vmatpush1.bf16.msra.mxu0 %v4913
      %5654 = vmatprep.subr.bf16.mxu0 %v4922
      %5655 = vmatpush1.bf16.msra.mxu0 %v4921
      %5656 = vmatprep.subr.bf16.mxu0 %v4930
      %5657 = vmatpush1.bf16.msra.mxu0 %v4929
      %5658 = vmatprep.subr.bf16.mxu0 %v4938
      %5659 = vmatpush1.bf16.msra.mxu0 %v4937
      %5660 = vmatprep.subr.bf16.mxu0 %v4946
      %5661 = vmatpush1.bf16.msra.mxu0 %v4945
      %5662 = vmatprep.subr.bf16.mxu0 %v4954
      %5663 = vmatpush1.bf16.msra.mxu0 %v4953
      %5664 = vmatprep.subr.bf16.mxu0 %v4962
      %5665 = vmatpush1.bf16.msra.mxu0 %v4961
      %5666 = vmatprep.subr.bf16.mxu0 %v4970
      %5667 = vmatpush1.bf16.msra.mxu0 %v4969
      %5668 = vmatprep.subr.bf16.mxu0 %v4978
      %5669 = vmatpush1.bf16.msra.mxu0 %v4977
      %5670 = vmatprep.subr.bf16.mxu0 %v4986
      %5671 = vmatpush1.bf16.msra.mxu0 %v4985
      %5672 = vmatprep.subr.bf16.mxu0 %v4994
      %5673 = vmatpush1.bf16.msra.mxu0 %v4993
      %5674 = vmatprep.mubr.bf16.mxu0 %v2398
      %5675 = vmatmul.mubr.bf16.gmra.mrb[0].mxu0 %v2397
      %v5676 = vpop.f32.mrb[0].mxu0
      %v5677 = vadd.f32 %v5634, %v5676
      %v5678 = vpop.f32.mrb[0].mxu0
      %v5679 = vadd.f32 %v5636, %v5678
      %v5680 = vpop.f32.mrb[0].mxu0
      %v5681 = vadd.f32 %v5638, %v5680
      %v5682 = vpop.f32.mrb[0].mxu0
      %v5683 = vadd.f32 %v5640, %v5682
      %5684 = vdwg.mxu0
      %5685 = vmatprep.subr.bf16.mxu0 %v4492
      %5686 = vmatpush1.bf16.msra.mxu0 %v4491
      %5687 = vmatprep.subr.bf16.mxu0 %v4500
      %5688 = vmatpush1.bf16.msra.mxu0 %v4499
      %5689 = vmatprep.subr.bf16.mxu0 %v4508
      %5690 = vmatpush1.bf16.msra.mxu0 %v4507
      %5691 = vmatprep.subr.bf16.mxu0 %v4516
      %5692 = vmatpush1.bf16.msra.mxu0 %v4515
      %5693 = vmatprep.subr.bf16.mxu0 %v4524
      %5694 = vmatpush1.bf16.msra.mxu0 %v4523
      %5695 = vmatprep.subr.bf16.mxu0 %v4532
      %5696 = vmatpush1.bf16.msra.mxu0 %v4531
      %5697 = vmatprep.subr.bf16.mxu0 %v4540
      %5698 = vmatpush1.bf16.msra.mxu0 %v4539
      %5699 = vmatprep.subr.bf16.mxu0 %v4548
      %5700 = vmatpush1.bf16.msra.mxu0 %v4547
      %5701 = vmatprep.subr.bf16.mxu0 %v4556
      %5702 = vmatpush1.bf16.msra.mxu0 %v4555
      %5703 = vmatprep.subr.bf16.mxu0 %v4564
      %5704 = vmatpush1.bf16.msra.mxu0 %v4563
      %5705 = vmatprep.subr.bf16.mxu0 %v4572
      %5706 = vmatpush1.bf16.msra.mxu0 %v4571
      %5707 = vmatprep.subr.bf16.mxu0 %v4580
      %5708 = vmatpush1.bf16.msra.mxu0 %v4579
      %5709 = vmatprep.subr.bf16.mxu0 %v4588
      %5710 = vmatpush1.bf16.msra.mxu0 %v4587
      %5711 = vmatprep.subr.bf16.mxu0 %v4596
      %5712 = vmatpush1.bf16.msra.mxu0 %v4595
      %5713 = vmatprep.subr.bf16.mxu0 %v4604
      %5714 = vmatpush1.bf16.msra.mxu0 %v4603
      %5715 = vmatprep.subr.bf16.mxu0 %v4612
      %5716 = vmatpush1.bf16.msra.mxu0 %v4611
      %5717 = vmatprep.mubr.bf16.mxu0 %v2392
      %5718 = vmatmul.mubr.bf16.gmra.mrb[0].mxu0 %v2391
      %v5719 = vpop.f32.mrb[0].mxu0
      %v5720 = vadd.f32 %v2924, %v5719
      %v5721 = vpop.f32.mrb[0].mxu0
      %v5722 = vadd.f32 %v2928, %v5721
      %v5723 = vpop.f32.mrb[0].mxu0
      %v5724 = vadd.f32 %v2924, %v5723
      %v5725 = vpop.f32.mrb[0].mxu0
      %v5726 = vadd.f32 %v2928, %v5725
      %5727 = vdwg.mxu0
      %5728 = vmatprep.subr.bf16.mxu0 %v4620
      %5729 = vmatpush1.bf16.msra.mxu0 %v4619
      %5730 = vmatprep.subr.bf16.mxu0 %v4628
      %5731 = vmatpush1.bf16.msra.mxu0 %v4627
      %5732 = vmatprep.subr.bf16.mxu0 %v4636
      %5733 = vmatpush1.bf16.msra.mxu0 %v4635
      %5734 = vmatprep.subr.bf16.mxu0 %v4644
      %5735 = vmatpush1.bf16.msra.mxu0 %v4643
      %5736 = vmatprep.subr.bf16.mxu0 %v4652
      %5737 = vmatpush1.bf16.msra.mxu0 %v4651
      %5738 = vmatprep.subr.bf16.mxu0 %v4660
      %5739 = vmatpush1.bf16.msra.mxu0 %v4659
      %5740 = vmatprep.subr.bf16.mxu0 %v4668
      %5741 = vmatpush1.bf16.msra.mxu0 %v4667
      %5742 = vmatprep.subr.bf16.mxu0 %v4676
      %5743 = vmatpush1.bf16.msra.mxu0 %v4675
      %5744 = vmatprep.subr.bf16.mxu0 %v4684
      %5745 = vmatpush1.bf16.msra.mxu0 %v4683
      %5746 = vmatprep.subr.bf16.mxu0 %v4692
      %5747 = vmatpush1.bf16.msra.mxu0 %v4691
      %5748 = vmatprep.subr.bf16.mxu0 %v4700
      %5749 = vmatpush1.bf16.msra.mxu0 %v4699
      %5750 = vmatprep.subr.bf16.mxu0 %v4708
      %5751 = vmatpush1.bf16.msra.mxu0 %v4707
      %5752 = vmatprep.subr.bf16.mxu0 %v4716
      %5753 = vmatpush1.bf16.msra.mxu0 %v4715
      %5754 = vmatprep.subr.bf16.mxu0 %v4724
      %5755 = vmatpush1.bf16.msra.mxu0 %v4723
      %5756 = vmatprep.subr.bf16.mxu0 %v4732
      %5757 = vmatpush1.bf16.msra.mxu0 %v4731
      %5758 = vmatprep.subr.bf16.mxu0 %v4740
      %5759 = vmatpush1.bf16.msra.mxu0 %v4739
      %5760 = vmatprep.mubr.bf16.mxu0 %v2394
      %5761 = vmatmul.mubr.bf16.gmra.mrb[0].mxu0 %v2393
      %v5762 = vpop.f32.mrb[0].mxu0
      %v5763 = vadd.f32 %v5720, %v5762
      %v5764 = vpop.f32.mrb[0].mxu0
      %v5765 = vadd.f32 %v5722, %v5764
      %v5766 = vpop.f32.mrb[0].mxu0
      %v5767 = vadd.f32 %v5724, %v5766
      %v5768 = vpop.f32.mrb[0].mxu0
      %v5769 = vadd.f32 %v5726, %v5768
      %5770 = vdwg.mxu0
      %5771 = vmatprep.subr.bf16.mxu0 %v4748
      %5772 = vmatpush1.bf16.msra.mxu0 %v4747
      %5773 = vmatprep.subr.bf16.mxu0 %v4756
      %5774 = vmatpush1.bf16.msra.mxu0 %v4755
      %5775 = vmatprep.subr.bf16.mxu0 %v4764
      %5776 = vmatpush1.bf16.msra.mxu0 %v4763
      %5777 = vmatprep.subr.bf16.mxu0 %v4772
      %5778 = vmatpush1.bf16.msra.mxu0 %v4771
      %5779 = vmatprep.subr.bf16.mxu0 %v4780
      %5780 = vmatpush1.bf16.msra.mxu0 %v4779
      %5781 = vmatprep.subr.bf16.mxu0 %v4788
      %5782 = vmatpush1.bf16.msra.mxu0 %v4787
      %5783 = vmatprep.subr.bf16.mxu0 %v4796
      %5784 = vmatpush1.bf16.msra.mxu0 %v4795
      %5785 = vmatprep.subr.bf16.mxu0 %v4804
      %5786 = vmatpush1.bf16.msra.mxu0 %v4803
      %5787 = vmatprep.subr.bf16.mxu0 %v4812
      %5788 = vmatpush1.bf16.msra.mxu0 %v4811
      %5789 = vmatprep.subr.bf16.mxu0 %v4820
      %5790 = vmatpush1.bf16.msra.mxu0 %v4819
      %5791 = vmatprep.subr.bf16.mxu0 %v4828
      %5792 = vmatpush1.bf16.msra.mxu0 %v4827
      %5793 = vmatprep.subr.bf16.mxu0 %v4836
      %5794 = vmatpush1.bf16.msra.mxu0 %v4835
      %5795 = vmatprep.subr.bf16.mxu0 %v4844
      %5796 = vmatpush1.bf16.msra.mxu0 %v4843
      %5797 = vmatprep.subr.bf16.mxu0 %v4852
      %5798 = vmatpush1.bf16.msra.mxu0 %v4851
      %5799 = vmatprep.subr.bf16.mxu0 %v4860
      %5800 = vmatpush1.bf16.msra.mxu0 %v4859
      %5801 = vmatprep.subr.bf16.mxu0 %v4868
      %5802 = vmatpush1.bf16.msra.mxu0 %v4867
      %5803 = vmatprep.mubr.bf16.mxu0 %v2396
      %5804 = vmatmul.mubr.bf16.gmra.mrb[0].mxu0 %v2395
      %v5805 = vpop.f32.mrb[0].mxu0
      %v5806 = vadd.f32 %v5763, %v5805
      %v5807 = vpop.f32.mrb[0].mxu0
      %v5808 = vadd.f32 %v5765, %v5807
      %v5809 = vpop.f32.mrb[0].mxu0
      %v5810 = vadd.f32 %v5767, %v5809
      %v5811 = vpop.f32.mrb[0].mxu0
      %v5812 = vadd.f32 %v5769, %v5811
      %5813 = vdwg.mxu0
      %5814 = vmatprep.subr.bf16.mxu0 %v4876
      %5815 = vmatpush1.bf16.msra.mxu0 %v4875
      %5816 = vmatprep.subr.bf16.mxu0 %v4884
      %5817 = vmatpush1.bf16.msra.mxu0 %v4883
      %5818 = vmatprep.subr.bf16.mxu0 %v4892
      %5819 = vmatpush1.bf16.msra.mxu0 %v4891
      %5820 = vmatprep.subr.bf16.mxu0 %v4900
      %5821 = vmatpush1.bf16.msra.mxu0 %v4899
      %5822 = vmatprep.subr.bf16.mxu0 %v4908
      %5823 = vmatpush1.bf16.msra.mxu0 %v4907
      %5824 = vmatprep.subr.bf16.mxu0 %v4916
      %5825 = vmatpush1.bf16.msra.mxu0 %v4915
      %5826 = vmatprep.subr.bf16.mxu0 %v4924
      %5827 = vmatpush1.bf16.msra.mxu0 %v4923
      %5828 = vmatprep.subr.bf16.mxu0 %v4932
      %5829 = vmatpush1.bf16.msra.mxu0 %v4931
      %5830 = vmatprep.subr.bf16.mxu0 %v4940
      %5831 = vmatpush1.bf16.msra.mxu0 %v4939
      %5832 = vmatprep.subr.bf16.mxu0 %v4948
      %5833 = vmatpush1.bf16.msra.mxu0 %v4947
      %5834 = vmatprep.subr.bf16.mxu0 %v4956
      %5835 = vmatpush1.bf16.msra.mxu0 %v4955
      %5836 = vmatprep.subr.bf16.mxu0 %v4964
      %5837 = vmatpush1.bf16.msra.mxu0 %v4963
      %5838 = vmatprep.subr.bf16.mxu0 %v4972
      %5839 = vmatpush1.bf16.msra.mxu0 %v4971
      %5840 = vmatprep.subr.bf16.mxu0 %v4980
      %5841 = vmatpush1.bf16.msra.mxu0 %v4979
      %5842 = vmatprep.subr.bf16.mxu0 %v4988
      %5843 = vmatpush1.bf16.msra.mxu0 %v4987
      %5844 = vmatprep.subr.bf16.mxu0 %v4996
      %5845 = vmatpush1.bf16.msra.mxu0 %v4995
      %5846 = vmatprep.mubr.bf16.mxu0 %v2398
      %5847 = vmatmul.mubr.bf16.gmra.mrb[0].mxu0 %v2397
      %v5848 = vpop.f32.mrb[0].mxu0
      %v5849 = vadd.f32 %v5806, %v5848
      %v5850 = vpop.f32.mrb[0].mxu0
      %v5851 = vadd.f32 %v5808, %v5850
      %v5852 = vpop.f32.mrb[0].mxu0
      %v5853 = vadd.f32 %v5810, %v5852
      %v5854 = vpop.f32.mrb[0].mxu0
      %v5855 = vadd.f32 %v5812, %v5854
      %5856 = vdwg.mxu0
      %5857 = vmatprep.subr.bf16.mxu0 %v4494
      %5858 = vmatpush1.bf16.msra.mxu0 %v4493
      %5859 = vmatprep.subr.bf16.mxu0 %v4502
      %5860 = vmatpush1.bf16.msra.mxu0 %v4501
      %5861 = vmatprep.subr.bf16.mxu0 %v4510
      %5862 = vmatpush1.bf16.msra.mxu0 %v4509
      %5863 = vmatprep.subr.bf16.mxu0 %v4518
      %5864 = vmatpush1.bf16.msra.mxu0 %v4517
      %5865 = vmatprep.subr.bf16.mxu0 %v4526
      %5866 = vmatpush1.bf16.msra.mxu0 %v4525
      %5867 = vmatprep.subr.bf16.mxu0 %v4534
      %5868 = vmatpush1.bf16.msra.mxu0 %v4533
      %5869 = vmatprep.subr.bf16.mxu0 %v4542
      %5870 = vmatpush1.bf16.msra.mxu0 %v4541
      %5871 = vmatprep.subr.bf16.mxu0 %v4550
      %5872 = vmatpush1.bf16.msra.mxu0 %v4549
      %5873 = vmatprep.subr.bf16.mxu0 %v4558
      %5874 = vmatpush1.bf16.msra.mxu0 %v4557
      %5875 = vmatprep.subr.bf16.mxu0 %v4566
      %5876 = vmatpush1.bf16.msra.mxu0 %v4565
      %5877 = vmatprep.subr.bf16.mxu0 %v4574
      %5878 = vmatpush1.bf16.msra.mxu0 %v4573
      %5879 = vmatprep.subr.bf16.mxu0 %v4582
      %5880 = vmatpush1.bf16.msra.mxu0 %v4581
      %5881 = vmatprep.subr.bf16.mxu0 %v4590
      %5882 = vmatpush1.bf16.msra.mxu0 %v4589
      %5883 = vmatprep.subr.bf16.mxu0 %v4598
      %5884 = vmatpush1.bf16.msra.mxu0 %v4597
      %5885 = vmatprep.subr.bf16.mxu0 %v4606
      %5886 = vmatpush1.bf16.msra.mxu0 %v4605
      %5887 = vmatprep.subr.bf16.mxu0 %v4614
      %5888 = vmatpush1.bf16.msra.mxu0 %v4613
      %5889 = vmatprep.mubr.bf16.mxu0 %v2392
      %5890 = vmatmul.mubr.bf16.gmra.mrb[0].mxu0 %v2391
      %v5891 = vpop.f32.mrb[0].mxu0
      %v5892 = vadd.f32 %v2932, %v5891
      %v5893 = vpop.f32.mrb[0].mxu0
      %v5894 = vadd.f32 %v2936, %v5893
      %v5895 = vpop.f32.mrb[0].mxu0
      %v5896 = vadd.f32 %v2932, %v5895
      %v5897 = vpop.f32.mrb[0].mxu0
      %v5898 = vadd.f32 %v2936, %v5897
      %5899 = vdwg.mxu0
      %5900 = vmatprep.subr.bf16.mxu0 %v4622
      %5901 = vmatpush1.bf16.msra.mxu0 %v4621
      %5902 = vmatprep.subr.bf16.mxu0 %v4630
      %5903 = vmatpush1.bf16.msra.mxu0 %v4629
      %5904 = vmatprep.subr.bf16.mxu0 %v4638
      %5905 = vmatpush1.bf16.msra.mxu0 %v4637
      %5906 = vmatprep.subr.bf16.mxu0 %v4646
      %5907 = vmatpush1.bf16.msra.mxu0 %v4645
      %5908 = vmatprep.subr.bf16.mxu0 %v4654
      %5909 = vmatpush1.bf16.msra.mxu0 %v4653
      %5910 = vmatprep.subr.bf16.mxu0 %v4662
      %5911 = vmatpush1.bf16.msra.mxu0 %v4661
      %5912 = vmatprep.subr.bf16.mxu0 %v4670
      %5913 = vmatpush1.bf16.msra.mxu0 %v4669
      %5914 = vmatprep.subr.bf16.mxu0 %v4678
      %5915 = vmatpush1.bf16.msra.mxu0 %v4677
      %5916 = vmatprep.subr.bf16.mxu0 %v4686
      %5917 = vmatpush1.bf16.msra.mxu0 %v4685
      %5918 = vmatprep.subr.bf16.mxu0 %v4694
      %5919 = vmatpush1.bf16.msra.mxu0 %v4693
      %5920 = vmatprep.subr.bf16.mxu0 %v4702
      %5921 = vmatpush1.bf16.msra.mxu0 %v4701
      %5922 = vmatprep.subr.bf16.mxu0 %v4710
      %5923 = vmatpush1.bf16.msra.mxu0 %v4709
      %5924 = vmatprep.subr.bf16.mxu0 %v4718
      %5925 = vmatpush1.bf16.msra.mxu0 %v4717
      %5926 = vmatprep.subr.bf16.mxu0 %v4726
      %5927 = vmatpush1.bf16.msra.mxu0 %v4725
      %5928 = vmatprep.subr.bf16.mxu0 %v4734
      %5929 = vmatpush1.bf16.msra.mxu0 %v4733
      %5930 = vmatprep.subr.bf16.mxu0 %v4742
      %5931 = vmatpush1.bf16.msra.mxu0 %v4741
      %5932 = vmatprep.mubr.bf16.mxu0 %v2394
      %5933 = vmatmul.mubr.bf16.gmra.mrb[0].mxu0 %v2393
      %v5934 = vpop.f32.mrb[0].mxu0
      %v5935 = vadd.f32 %v5892, %v5934
      %v5936 = vpop.f32.mrb[0].mxu0
      %v5937 = vadd.f32 %v5894, %v5936
      %v5938 = vpop.f32.mrb[0].mxu0
      %v5939 = vadd.f32 %v5896, %v5938
      %v5940 = vpop.f32.mrb[0].mxu0
      %v5941 = vadd.f32 %v5898, %v5940
      %5942 = vdwg.mxu0
      %5943 = vmatprep.subr.bf16.mxu0 %v4750
      %5944 = vmatpush1.bf16.msra.mxu0 %v4749
      %5945 = vmatprep.subr.bf16.mxu0 %v4758
      %5946 = vmatpush1.bf16.msra.mxu0 %v4757
      %5947 = vmatprep.subr.bf16.mxu0 %v4766
      %5948 = vmatpush1.bf16.msra.mxu0 %v4765
      %5949 = vmatprep.subr.bf16.mxu0 %v4774
      %5950 = vmatpush1.bf16.msra.mxu0 %v4773
      %5951 = vmatprep.subr.bf16.mxu0 %v4782
      %5952 = vmatpush1.bf16.msra.mxu0 %v4781
      %5953 = vmatprep.subr.bf16.mxu0 %v4790
      %5954 = vmatpush1.bf16.msra.mxu0 %v4789
      %5955 = vmatprep.subr.bf16.mxu0 %v4798
      %5956 = vmatpush1.bf16.msra.mxu0 %v4797
      %5957 = vmatprep.subr.bf16.mxu0 %v4806
      %5958 = vmatpush1.bf16.msra.mxu0 %v4805
      %5959 = vmatprep.subr.bf16.mxu0 %v4814
      %5960 = vmatpush1.bf16.msra.mxu0 %v4813
      %5961 = vmatprep.subr.bf16.mxu0 %v4822
      %5962 = vmatpush1.bf16.msra.mxu0 %v4821
      %5963 = vmatprep.subr.bf16.mxu0 %v4830
      %5964 = vmatpush1.bf16.msra.mxu0 %v4829
      %5965 = vmatprep.subr.bf16.mxu0 %v4838
      %5966 = vmatpush1.bf16.msra.mxu0 %v4837
      %5967 = vmatprep.subr.bf16.mxu0 %v4846
      %5968 = vmatpush1.bf16.msra.mxu0 %v4845
      %5969 = vmatprep.subr.bf16.mxu0 %v4854
      %5970 = vmatpush1.bf16.msra.mxu0 %v4853
      %5971 = vmatprep.subr.bf16.mxu0 %v4862
      %5972 = vmatpush1.bf16.msra.mxu0 %v4861
      %5973 = vmatprep.subr.bf16.mxu0 %v4870
      %5974 = vmatpush1.bf16.msra.mxu0 %v4869
      %5975 = vmatprep.mubr.bf16.mxu0 %v2396
      %5976 = vmatmul.mubr.bf16.gmra.mrb[0].mxu0 %v2395
      %v5977 = vpop.f32.mrb[0].mxu0
      %v5978 = vadd.f32 %v5935, %v5977
      %v5979 = vpop.f32.mrb[0].mxu0
      %v5980 = vadd.f32 %v5937, %v5979
      %v5981 = vpop.f32.mrb[0].mxu0
      %v5982 = vadd.f32 %v5939, %v5981
      %v5983 = vpop.f32.mrb[0].mxu0
      %v5984 = vadd.f32 %v5941, %v5983
      %5985 = vdwg.mxu0
      %5986 = vmatprep.subr.bf16.mxu0 %v4878
      %5987 = vmatpush1.bf16.msra.mxu0 %v4877
      %5988 = vmatprep.subr.bf16.mxu0 %v4886
      %5989 = vmatpush1.bf16.msra.mxu0 %v4885
      %5990 = vmatprep.subr.bf16.mxu0 %v4894
      %5991 = vmatpush1.bf16.msra.mxu0 %v4893
      %5992 = vmatprep.subr.bf16.mxu0 %v4902
      %5993 = vmatpush1.bf16.msra.mxu0 %v4901
      %5994 = vmatprep.subr.bf16.mxu0 %v4910
      %5995 = vmatpush1.bf16.msra.mxu0 %v4909
      %5996 = vmatprep.subr.bf16.mxu0 %v4918
      %5997 = vmatpush1.bf16.msra.mxu0 %v4917
      %5998 = vmatprep.subr.bf16.mxu0 %v4926
      %5999 = vmatpush1.bf16.msra.mxu0 %v4925
      %6000 = vmatprep.subr.bf16.mxu0 %v4934
      %6001 = vmatpush1.bf16.msra.mxu0 %v4933
      %6002 = vmatprep.subr.bf16.mxu0 %v4942
      %6003 = vmatpush1.bf16.msra.mxu0 %v4941
      %6004 = vmatprep.subr.bf16.mxu0 %v4950
      %6005 = vmatpush1.bf16.msra.mxu0 %v4949
      %6006 = vmatprep.subr.bf16.mxu0 %v4958
      %6007 = vmatpush1.bf16.msra.mxu0 %v4957
      %6008 = vmatprep.subr.bf16.mxu0 %v4966
      %6009 = vmatpush1.bf16.msra.mxu0 %v4965
      %6010 = vmatprep.subr.bf16.mxu0 %v4974
      %6011 = vmatpush1.bf16.msra.mxu0 %v4973
      %6012 = vmatprep.subr.bf16.mxu0 %v4982
      %6013 = vmatpush1.bf16.msra.mxu0 %v4981
      %6014 = vmatprep.subr.bf16.mxu0 %v4990
      %6015 = vmatpush1.bf16.msra.mxu0 %v4989
      %6016 = vmatprep.subr.bf16.mxu0 %v4998
      %6017 = vmatpush1.bf16.msra.mxu0 %v4997
      %6018 = vmatprep.mubr.bf16.mxu0 %v2398
      %6019 = vmatmul.mubr.bf16.gmra.mrb[0].mxu0 %v2397
      %v6020 = vpop.f32.mrb[0].mxu0
      %v6021 = vadd.f32 %v5978, %v6020
      %v6022 = vpop.f32.mrb[0].mxu0
      %v6023 = vadd.f32 %v5980, %v6022
      %v6024 = vpop.f32.mrb[0].mxu0
      %v6025 = vadd.f32 %v5982, %v6024
      %v6026 = vpop.f32.mrb[0].mxu0
      %v6027 = vadd.f32 %v5984, %v6026
      %6028 = vdwg.mxu0
      %6029 = vmatprep.subr.bf16.mxu0 %v4496
      %6030 = vmatpush1.bf16.msra.mxu0 %v4495
      %6031 = vmatprep.subr.bf16.mxu0 %v4504
      %6032 = vmatpush1.bf16.msra.mxu0 %v4503
      %6033 = vmatprep.subr.bf16.mxu0 %v4512
      %6034 = vmatpush1.bf16.msra.mxu0 %v4511
      %6035 = vmatprep.subr.bf16.mxu0 %v4520
      %6036 = vmatpush1.bf16.msra.mxu0 %v4519
      %6037 = vmatprep.subr.bf16.mxu0 %v4528
      %6038 = vmatpush1.bf16.msra.mxu0 %v4527
      %6039 = vmatprep.subr.bf16.mxu0 %v4536
      %6040 = vmatpush1.bf16.msra.mxu0 %v4535
      %6041 = vmatprep.subr.bf16.mxu0 %v4544
      %6042 = vmatpush1.bf16.msra.mxu0 %v4543
      %6043 = vmatprep.subr.bf16.mxu0 %v4552
      %6044 = vmatpush1.bf16.msra.mxu0 %v4551
      %6045 = vmatprep.subr.bf16.mxu0 %v4560
      %6046 = vmatpush1.bf16.msra.mxu0 %v4559
      %6047 = vmatprep.subr.bf16.mxu0 %v4568
      %6048 = vmatpush1.bf16.msra.mxu0 %v4567
      %6049 = vmatprep.subr.bf16.mxu0 %v4576
      %6050 = vmatpush1.bf16.msra.mxu0 %v4575
      %6051 = vmatprep.subr.bf16.mxu0 %v4584
      %6052 = vmatpush1.bf16.msra.mxu0 %v4583
      %6053 = vmatprep.subr.bf16.mxu0 %v4592
      %6054 = vmatpush1.bf16.msra.mxu0 %v4591
      %6055 = vmatprep.subr.bf16.mxu0 %v4600
      %6056 = vmatpush1.bf16.msra.mxu0 %v4599
      %6057 = vmatprep.subr.bf16.mxu0 %v4608
      %6058 = vmatpush1.bf16.msra.mxu0 %v4607
      %6059 = vmatprep.subr.bf16.mxu0 %v4616
      %6060 = vmatpush1.bf16.msra.mxu0 %v4615
      %6061 = vmatprep.mubr.bf16.mxu0 %v2392
      %6062 = vmatmul.mubr.bf16.gmra.mrb[0].mxu0 %v2391
      %v6063 = vpop.f32.mrb[0].mxu0
      %v6064 = vadd.f32 %v2940, %v6063
      %v6065 = vpop.f32.mrb[0].mxu0
      %v6066 = vadd.f32 %v2944, %v6065
      %v6067 = vpop.f32.mrb[0].mxu0
      %v6068 = vadd.f32 %v2940, %v6067
      %v6069 = vpop.f32.mrb[0].mxu0
      %v6070 = vadd.f32 %v2944, %v6069
      %6071 = vdwg.mxu0
      %6072 = vmatprep.subr.bf16.mxu0 %v4624
      %6073 = vmatpush1.bf16.msra.mxu0 %v4623
      %6074 = vmatprep.subr.bf16.mxu0 %v4632
      %6075 = vmatpush1.bf16.msra.mxu0 %v4631
      %6076 = vmatprep.subr.bf16.mxu0 %v4640
      %6077 = vmatpush1.bf16.msra.mxu0 %v4639
      %6078 = vmatprep.subr.bf16.mxu0 %v4648
      %6079 = vmatpush1.bf16.msra.mxu0 %v4647
      %6080 = vmatprep.subr.bf16.mxu0 %v4656
      %6081 = vmatpush1.bf16.msra.mxu0 %v4655
      %6082 = vmatprep.subr.bf16.mxu0 %v4664
      %6083 = vmatpush1.bf16.msra.mxu0 %v4663
      %6084 = vmatprep.subr.bf16.mxu0 %v4672
      %6085 = vmatpush1.bf16.msra.mxu0 %v4671
      %6086 = vmatprep.subr.bf16.mxu0 %v4680
      %6087 = vmatpush1.bf16.msra.mxu0 %v4679
      %6088 = vmatprep.subr.bf16.mxu0 %v4688
      %6089 = vmatpush1.bf16.msra.mxu0 %v4687
      %6090 = vmatprep.subr.bf16.mxu0 %v4696
      %6091 = vmatpush1.bf16.msra.mxu0 %v4695
      %6092 = vmatprep.subr.bf16.mxu0 %v4704
      %6093 = vmatpush1.bf16.msra.mxu0 %v4703
      %6094 = vmatprep.subr.bf16.mxu0 %v4712
      %6095 = vmatpush1.bf16.msra.mxu0 %v4711
      %6096 = vmatprep.subr.bf16.mxu0 %v4720
      %6097 = vmatpush1.bf16.msra.mxu0 %v4719
      %6098 = vmatprep.subr.bf16.mxu0 %v4728
      %6099 = vmatpush1.bf16.msra.mxu0 %v4727
      %6100 = vmatprep.subr.bf16.mxu0 %v4736
      %6101 = vmatpush1.bf16.msra.mxu0 %v4735
      %6102 = vmatprep.subr.bf16.mxu0 %v4744
      %6103 = vmatpush1.bf16.msra.mxu0 %v4743
      %6104 = vmatprep.mubr.bf16.mxu0 %v2394
      %6105 = vmatmul.mubr.bf16.gmra.mrb[0].mxu0 %v2393
      %v6106 = vpop.f32.mrb[0].mxu0
      %v6107 = vadd.f32 %v6064, %v6106
      %v6108 = vpop.f32.mrb[0].mxu0
      %v6109 = vadd.f32 %v6066, %v6108
      %v6110 = vpop.f32.mrb[0].mxu0
      %v6111 = vadd.f32 %v6068, %v6110
      %v6112 = vpop.f32.mrb[0].mxu0
      %v6113 = vadd.f32 %v6070, %v6112
      %6114 = vdwg.mxu0
      %6115 = vmatprep.subr.bf16.mxu0 %v4752
      %6116 = vmatpush1.bf16.msra.mxu0 %v4751
      %6117 = vmatprep.subr.bf16.mxu0 %v4760
      %6118 = vmatpush1.bf16.msra.mxu0 %v4759
      %6119 = vmatprep.subr.bf16.mxu0 %v4768
      %6120 = vmatpush1.bf16.msra.mxu0 %v4767
      %6121 = vmatprep.subr.bf16.mxu0 %v4776
      %6122 = vmatpush1.bf16.msra.mxu0 %v4775
      %6123 = vmatprep.subr.bf16.mxu0 %v4784
      %6124 = vmatpush1.bf16.msra.mxu0 %v4783
      %6125 = vmatprep.subr.bf16.mxu0 %v4792
      %6126 = vmatpush1.bf16.msra.mxu0 %v4791
      %6127 = vmatprep.subr.bf16.mxu0 %v4800
      %6128 = vmatpush1.bf16.msra.mxu0 %v4799
      %6129 = vmatprep.subr.bf16.mxu0 %v4808
      %6130 = vmatpush1.bf16.msra.mxu0 %v4807
      %6131 = vmatprep.subr.bf16.mxu0 %v4816
      %6132 = vmatpush1.bf16.msra.mxu0 %v4815
      %6133 = vmatprep.subr.bf16.mxu0 %v4824
      %6134 = vmatpush1.bf16.msra.mxu0 %v4823
      %6135 = vmatprep.subr.bf16.mxu0 %v4832
      %6136 = vmatpush1.bf16.msra.mxu0 %v4831
      %6137 = vmatprep.subr.bf16.mxu0 %v4840
      %6138 = vmatpush1.bf16.msra.mxu0 %v4839
      %6139 = vmatprep.subr.bf16.mxu0 %v4848
      %6140 = vmatpush1.bf16.msra.mxu0 %v4847
      %6141 = vmatprep.subr.bf16.mxu0 %v4856
      %6142 = vmatpush1.bf16.msra.mxu0 %v4855
      %6143 = vmatprep.subr.bf16.mxu0 %v4864
      %6144 = vmatpush1.bf16.msra.mxu0 %v4863
      %6145 = vmatprep.subr.bf16.mxu0 %v4872
      %6146 = vmatpush1.bf16.msra.mxu0 %v4871
      %6147 = vmatprep.mubr.bf16.mxu0 %v2396
      %6148 = vmatmul.mubr.bf16.gmra.mrb[0].mxu0 %v2395
      %v6149 = vpop.f32.mrb[0].mxu0
      %v6150 = vadd.f32 %v6107, %v6149
      %v6151 = vpop.f32.mrb[0].mxu0
      %v6152 = vadd.f32 %v6109, %v6151
      %v6153 = vpop.f32.mrb[0].mxu0
      %v6154 = vadd.f32 %v6111, %v6153
      %v6155 = vpop.f32.mrb[0].mxu0
      %v6156 = vadd.f32 %v6113, %v6155
      %6157 = vdwg.mxu0
      %6158 = vmatprep.subr.bf16.mxu0 %v4880
      %6159 = vmatpush1.bf16.msra.mxu0 %v4879
      %6160 = vmatprep.subr.bf16.mxu0 %v4888
      %6161 = vmatpush1.bf16.msra.mxu0 %v4887
      %6162 = vmatprep.subr.bf16.mxu0 %v4896
      %6163 = vmatpush1.bf16.msra.mxu0 %v4895
      %6164 = vmatprep.subr.bf16.mxu0 %v4904
      %6165 = vmatpush1.bf16.msra.mxu0 %v4903
      %6166 = vmatprep.subr.bf16.mxu0 %v4912
      %6167 = vmatpush1.bf16.msra.mxu0 %v4911
      %6168 = vmatprep.subr.bf16.mxu0 %v4920
      %6169 = vmatpush1.bf16.msra.mxu0 %v4919
      %6170 = vmatprep.subr.bf16.mxu0 %v4928
      %6171 = vmatpush1.bf16.msra.mxu0 %v4927
      %6172 = vmatprep.subr.bf16.mxu0 %v4936
      %6173 = vmatpush1.bf16.msra.mxu0 %v4935
      %6174 = vmatprep.subr.bf16.mxu0 %v4944
      %6175 = vmatpush1.bf16.msra.mxu0 %v4943
      %6176 = vmatprep.subr.bf16.mxu0 %v4952
      %6177 = vmatpush1.bf16.msra.mxu0 %v4951
      %6178 = vmatprep.subr.bf16.mxu0 %v4960
      %6179 = vmatpush1.bf16.msra.mxu0 %v4959
      %6180 = vmatprep.subr.bf16.mxu0 %v4968
      %6181 = vmatpush1.bf16.msra.mxu0 %v4967
      %6182 = vmatprep.subr.bf16.mxu0 %v4976
      %6183 = vmatpush1.bf16.msra.mxu0 %v4975
      %6184 = vmatprep.subr.bf16.mxu0 %v4984
      %6185 = vmatpush1.bf16.msra.mxu0 %v4983
      %6186 = vmatprep.subr.bf16.mxu0 %v4992
      %6187 = vmatpush1.bf16.msra.mxu0 %v4991
      %6188 = vmatprep.subr.bf16.mxu0 %v5000
      %6189 = vmatpush1.bf16.msra.mxu0 %v4999
      %6190 = vmatprep.mubr.bf16.mxu0 %v2398
      %6191 = vmatmul.mubr.bf16.gmra.mrb[0].mxu0 %v2397
      %v6192 = vpop.f32.mrb[0].mxu0
      %v6193 = vadd.f32 %v6150, %v6192
      %v6194 = vpop.f32.mrb[0].mxu0
      %v6195 = vadd.f32 %v6152, %v6194
      %v6196 = vpop.f32.mrb[0].mxu0
      %v6197 = vadd.f32 %v6154, %v6196
      %v6198 = vpop.f32.mrb[0].mxu0
      %v6199 = vadd.f32 %v6156, %v6198
      %6200 = vdwg.mxu0
      %v6201 = vmul.f32 %v5677, 0.5
      %v6202 = vmul.f32 %v5679, 0.5
      %v6203 = vmul.f32 %v5849, 0.5
      %v6204 = vmul.f32 %v5851, 0.5
      %v6205 = vmul.f32 %v6021, 0.5
      %v6206 = vmul.f32 %v6023, 0.5
      %v6207 = vmul.f32 %v6193, 0.5
      %v6208 = vmul.f32 %v6195, 0.5
      %v6209 = vmul.f32 %v5681, 0.5
      %v6210 = vmul.f32 %v5683, 0.5
      %v6211 = vmul.f32 %v5853, 0.5
      %v6212 = vmul.f32 %v5855, 0.5
      %v6213 = vmul.f32 %v6025, 0.5
      %v6214 = vmul.f32 %v6027, 0.5
      %v6215 = vmul.f32 %v6197, 0.5
      %v6216 = vmul.f32 %v6199, 0.5
      %v6217 = vtanh.pop %v6201
      %v6218 = vtanh.pop %v6202
      %v6219 = vtanh.pop %v6203
      %v6220 = vtanh.pop %v6204
      %v6221 = vtanh.pop %v6205
      %v6222 = vtanh.pop %v6206
      %v6223 = vtanh.pop %v6207
      %v6224 = vtanh.pop %v6208
      %v6225 = vtanh.pop %v6209
      %v6226 = vtanh.pop %v6210
      %v6227 = vtanh.pop %v6211
      %v6228 = vtanh.pop %v6212
      %v6229 = vtanh.pop %v6213
      %v6230 = vtanh.pop %v6214
      %v6231 = vtanh.pop %v6215
      %v6232 = vtanh.pop %v6216
      %v6233 = vadd.f32 %v6217, 1.0
      %v6234 = vadd.f32 %v6218, 1.0
      %v6235 = vadd.f32 %v6219, 1.0
      %v6236 = vadd.f32 %v6220, 1.0
      %v6237 = vadd.f32 %v6221, 1.0
      %v6238 = vadd.f32 %v6222, 1.0
      %v6239 = vadd.f32 %v6223, 1.0
      %v6240 = vadd.f32 %v6224, 1.0
      %v6241 = vadd.f32 %v6225, 1.0
      %v6242 = vadd.f32 %v6226, 1.0
      %v6243 = vadd.f32 %v6227, 1.0
      %v6244 = vadd.f32 %v6228, 1.0
      %v6245 = vadd.f32 %v6229, 1.0
      %v6246 = vadd.f32 %v6230, 1.0
      %v6247 = vadd.f32 %v6231, 1.0
      %v6248 = vadd.f32 %v6232, 1.0
      %v6249 = vmul.f32 %v6233, 0.5
      %v6250 = vmul.f32 %v6234, 0.5
      %v6251 = vmul.f32 %v6235, 0.5
      %v6252 = vmul.f32 %v6236, 0.5
      %v6253 = vmul.f32 %v6237, 0.5
      %v6254 = vmul.f32 %v6238, 0.5
      %v6255 = vmul.f32 %v6239, 0.5
      %v6256 = vmul.f32 %v6240, 0.5
      %v6257 = vmul.f32 %v6241, 0.5
      %v6258 = vmul.f32 %v6242, 0.5
      %v6259 = vmul.f32 %v6243, 0.5
      %v6260 = vmul.f32 %v6244, 0.5
      %v6261 = vmul.f32 %v6245, 0.5
      %v6262 = vmul.f32 %v6246, 0.5
      %v6263 = vmul.f32 %v6247, 0.5
      %v6264 = vmul.f32 %v6248, 0.5
      %v6265 = vpack.c.bf16 %v6257, %v6249
      %v6266 = vpack.c.bf16 %v6258, %v6250
      %v6267 = vpack.c.bf16 %v6259, %v6251
      %v6268 = vpack.c.bf16 %v6260, %v6252
      %v6269 = vpack.c.bf16 %v6261, %v6253
      %v6270 = vpack.c.bf16 %v6262, %v6254
      %v6271 = vpack.c.bf16 %v6263, %v6255
      %v6272 = vpack.c.bf16 %v6264, %v6256
      %v6273 = vld [vmem:[%s5] sm:$0xff]
      %v6274 = vld [vmem:[%s5 + $0x8] sm:$0xff]
      %v6275 = vld [vmem:[%s5 + $0x10] sm:$0xff]
      %v6276 = vld [vmem:[%s5 + $0x18] sm:$0xff]
      %v6277 = vld [vmem:[%s5 + $0x20] sm:$0xff]
      %v6278 = vld [vmem:[%s5 + $0x28] sm:$0xff]
      %v6279 = vld [vmem:[%s5 + $0x30] sm:$0xff]
      %v6280 = vld [vmem:[%s5 + $0x38] sm:$0xff]
      %v6281 = vld [vmem:[%s5 + $0x40] sm:$0xff]
      %v6282 = vld [vmem:[%s5 + $0x48] sm:$0xff]
      %v6283 = vld [vmem:[%s5 + $0x50] sm:$0xff]
      %v6284 = vld [vmem:[%s5 + $0x58] sm:$0xff]
      %v6285 = vld [vmem:[%s5 + $0x60] sm:$0xff]
      %v6286 = vld [vmem:[%s5 + $0x68] sm:$0xff]
      %v6287 = vld [vmem:[%s5 + $0x70] sm:$0xff]
      %v6288 = vld [vmem:[%s5 + $0x78] sm:$0xff]
      %v6289 = vld [vmem:[%s5 + $0x80] sm:$0xff]
      %v6290 = vld [vmem:[%s5 + $0x88] sm:$0xff]
      %v6291 = vld [vmem:[%s5 + $0x90] sm:$0xff]
      %v6292 = vld [vmem:[%s5 + $0x98] sm:$0xff]
      %v6293 = vld [vmem:[%s5 + $0xa0] sm:$0xff]
      %v6294 = vld [vmem:[%s5 + $0xa8] sm:$0xff]
      %v6295 = vld [vmem:[%s5 + $0xb0] sm:$0xff]
      %v6296 = vld [vmem:[%s5 + $0xb8] sm:$0xff]
      %v6297 = vld [vmem:[%s5 + $0xc0] sm:$0xff]
      %v6298 = vld [vmem:[%s5 + $0xc8] sm:$0xff]
      %v6299 = vld [vmem:[%s5 + $0xd0] sm:$0xff]
      %v6300 = vld [vmem:[%s5 + $0xd8] sm:$0xff]
      %v6301 = vld [vmem:[%s5 + $0xe0] sm:$0xff]
      %v6302 = vld [vmem:[%s5 + $0xe8] sm:$0xff]
      %v6303 = vld [vmem:[%s5 + $0xf0] sm:$0xff]
      %v6304 = vld [vmem:[%s5 + $0xf8] sm:$0xff]
      %v6305 = vld [vmem:[%s5 + $0x100] sm:$0xff]
      %v6306 = vld [vmem:[%s5 + $0x108] sm:$0xff]
      %v6307 = vld [vmem:[%s5 + $0x110] sm:$0xff]
      %v6308 = vld [vmem:[%s5 + $0x118] sm:$0xff]
      %v6309 = vld [vmem:[%s5 + $0x120] sm:$0xff]
      %v6310 = vld [vmem:[%s5 + $0x128] sm:$0xff]
      %v6311 = vld [vmem:[%s5 + $0x130] sm:$0xff]
      %v6312 = vld [vmem:[%s5 + $0x138] sm:$0xff]
      %v6313 = vld [vmem:[%s5 + $0x140] sm:$0xff]
      %v6314 = vld [vmem:[%s5 + $0x148] sm:$0xff]
      %v6315 = vld [vmem:[%s5 + $0x150] sm:$0xff]
      %v6316 = vld [vmem:[%s5 + $0x158] sm:$0xff]
      %v6317 = vld [vmem:[%s5 + $0x160] sm:$0xff]
      %v6318 = vld [vmem:[%s5 + $0x168] sm:$0xff]
      %v6319 = vld [vmem:[%s5 + $0x170] sm:$0xff]
      %v6320 = vld [vmem:[%s5 + $0x178] sm:$0xff]
      %v6321 = vld [vmem:[%s5 + $0x180] sm:$0xff]
      %v6322 = vld [vmem:[%s5 + $0x188] sm:$0xff]
      %v6323 = vld [vmem:[%s5 + $0x190] sm:$0xff]
      %v6324 = vld [vmem:[%s5 + $0x198] sm:$0xff]
      %v6325 = vld [vmem:[%s5 + $0x1a0] sm:$0xff]
      %v6326 = vld [vmem:[%s5 + $0x1a8] sm:$0xff]
      %v6327 = vld [vmem:[%s5 + $0x1b0] sm:$0xff]
      %v6328 = vld [vmem:[%s5 + $0x1b8] sm:$0xff]
      %v6329 = vld [vmem:[%s5 + $0x1c0] sm:$0xff]
      %v6330 = vld [vmem:[%s5 + $0x1c8] sm:$0xff]
      %v6331 = vld [vmem:[%s5 + $0x1d0] sm:$0xff]
      %v6332 = vld [vmem:[%s5 + $0x1d8] sm:$0xff]
      %v6333 = vld [vmem:[%s5 + $0x1e0] sm:$0xff]
      %v6334 = vld [vmem:[%s5 + $0x1e8] sm:$0xff]
      %v6335 = vld [vmem:[%s5 + $0x1f0] sm:$0xff]
      %v6336 = vld [vmem:[%s5 + $0x1f8] sm:$0xff]
      %v6337 = vld [vmem:[%s5 + $0x200] sm:$0xff]
      %v6338 = vld [vmem:[%s5 + $0x208] sm:$0xff]
      %v6339 = vld [vmem:[%s5 + $0x210] sm:$0xff]
      %v6340 = vld [vmem:[%s5 + $0x218] sm:$0xff]
      %v6341 = vld [vmem:[%s5 + $0x220] sm:$0xff]
      %v6342 = vld [vmem:[%s5 + $0x228] sm:$0xff]
      %v6343 = vld [vmem:[%s5 + $0x230] sm:$0xff]
      %v6344 = vld [vmem:[%s5 + $0x238] sm:$0xff]
      %v6345 = vld [vmem:[%s5 + $0x240] sm:$0xff]
      %v6346 = vld [vmem:[%s5 + $0x248] sm:$0xff]
      %v6347 = vld [vmem:[%s5 + $0x250] sm:$0xff]
      %v6348 = vld [vmem:[%s5 + $0x258] sm:$0xff]
      %v6349 = vld [vmem:[%s5 + $0x260] sm:$0xff]
      %v6350 = vld [vmem:[%s5 + $0x268] sm:$0xff]
      %v6351 = vld [vmem:[%s5 + $0x270] sm:$0xff]
      %v6352 = vld [vmem:[%s5 + $0x278] sm:$0xff]
      %v6353 = vld [vmem:[%s5 + $0x280] sm:$0xff]
      %v6354 = vld [vmem:[%s5 + $0x288] sm:$0xff]
      %v6355 = vld [vmem:[%s5 + $0x290] sm:$0xff]
      %v6356 = vld [vmem:[%s5 + $0x298] sm:$0xff]
      %v6357 = vld [vmem:[%s5 + $0x2a0] sm:$0xff]
      %v6358 = vld [vmem:[%s5 + $0x2a8] sm:$0xff]
      %v6359 = vld [vmem:[%s5 + $0x2b0] sm:$0xff]
      %v6360 = vld [vmem:[%s5 + $0x2b8] sm:$0xff]
      %v6361 = vld [vmem:[%s5 + $0x2c0] sm:$0xff]
      %v6362 = vld [vmem:[%s5 + $0x2c8] sm:$0xff]
      %v6363 = vld [vmem:[%s5 + $0x2d0] sm:$0xff]
      %v6364 = vld [vmem:[%s5 + $0x2d8] sm:$0xff]
      %v6365 = vld [vmem:[%s5 + $0x2e0] sm:$0xff]
      %v6366 = vld [vmem:[%s5 + $0x2e8] sm:$0xff]
      %v6367 = vld [vmem:[%s5 + $0x2f0] sm:$0xff]
      %v6368 = vld [vmem:[%s5 + $0x2f8] sm:$0xff]
      %v6369 = vld [vmem:[%s5 + $0x300] sm:$0xff]
      %v6370 = vld [vmem:[%s5 + $0x308] sm:$0xff]
      %v6371 = vld [vmem:[%s5 + $0x310] sm:$0xff]
      %v6372 = vld [vmem:[%s5 + $0x318] sm:$0xff]
      %v6373 = vld [vmem:[%s5 + $0x320] sm:$0xff]
      %v6374 = vld [vmem:[%s5 + $0x328] sm:$0xff]
      %v6375 = vld [vmem:[%s5 + $0x330] sm:$0xff]
      %v6376 = vld [vmem:[%s5 + $0x338] sm:$0xff]
      %v6377 = vld [vmem:[%s5 + $0x340] sm:$0xff]
      %v6378 = vld [vmem:[%s5 + $0x348] sm:$0xff]
      %v6379 = vld [vmem:[%s5 + $0x350] sm:$0xff]
      %v6380 = vld [vmem:[%s5 + $0x358] sm:$0xff]
      %v6381 = vld [vmem:[%s5 + $0x360] sm:$0xff]
      %v6382 = vld [vmem:[%s5 + $0x368] sm:$0xff]
      %v6383 = vld [vmem:[%s5 + $0x370] sm:$0xff]
      %v6384 = vld [vmem:[%s5 + $0x378] sm:$0xff]
      %v6385 = vld [vmem:[%s5 + $0x380] sm:$0xff]
      %v6386 = vld [vmem:[%s5 + $0x388] sm:$0xff]
      %v6387 = vld [vmem:[%s5 + $0x390] sm:$0xff]
      %v6388 = vld [vmem:[%s5 + $0x398] sm:$0xff]
      %v6389 = vld [vmem:[%s5 + $0x3a0] sm:$0xff]
      %v6390 = vld [vmem:[%s5 + $0x3a8] sm:$0xff]
      %v6391 = vld [vmem:[%s5 + $0x3b0] sm:$0xff]
      %v6392 = vld [vmem:[%s5 + $0x3b8] sm:$0xff]
      %v6393 = vld [vmem:[%s5 + $0x3c0] sm:$0xff]
      %v6394 = vld [vmem:[%s5 + $0x3c8] sm:$0xff]
      %v6395 = vld [vmem:[%s5 + $0x3d0] sm:$0xff]
      %v6396 = vld [vmem:[%s5 + $0x3d8] sm:$0xff]
      %v6397 = vld [vmem:[%s5 + $0x3e0] sm:$0xff]
      %v6398 = vld [vmem:[%s5 + $0x3e8] sm:$0xff]
      %v6399 = vld [vmem:[%s5 + $0x3f0] sm:$0xff]
      %v6400 = vld [vmem:[%s5 + $0x3f8] sm:$0xff]
      %v6401 = vld [vmem:[%s5 + $0x400] sm:$0xff]
      %v6402 = vld [vmem:[%s5 + $0x408] sm:$0xff]
      %v6403 = vld [vmem:[%s5 + $0x410] sm:$0xff]
      %v6404 = vld [vmem:[%s5 + $0x418] sm:$0xff]
      %v6405 = vld [vmem:[%s5 + $0x420] sm:$0xff]
      %v6406 = vld [vmem:[%s5 + $0x428] sm:$0xff]
      %v6407 = vld [vmem:[%s5 + $0x430] sm:$0xff]
      %v6408 = vld [vmem:[%s5 + $0x438] sm:$0xff]
      %v6409 = vld [vmem:[%s5 + $0x440] sm:$0xff]
      %v6410 = vld [vmem:[%s5 + $0x448] sm:$0xff]
      %v6411 = vld [vmem:[%s5 + $0x450] sm:$0xff]
      %v6412 = vld [vmem:[%s5 + $0x458] sm:$0xff]
      %v6413 = vld [vmem:[%s5 + $0x460] sm:$0xff]
      %v6414 = vld [vmem:[%s5 + $0x468] sm:$0xff]
      %v6415 = vld [vmem:[%s5 + $0x470] sm:$0xff]
      %v6416 = vld [vmem:[%s5 + $0x478] sm:$0xff]
      %v6417 = vld [vmem:[%s5 + $0x480] sm:$0xff]
      %v6418 = vld [vmem:[%s5 + $0x488] sm:$0xff]
      %v6419 = vld [vmem:[%s5 + $0x490] sm:$0xff]
      %v6420 = vld [vmem:[%s5 + $0x498] sm:$0xff]
      %v6421 = vld [vmem:[%s5 + $0x4a0] sm:$0xff]
      %v6422 = vld [vmem:[%s5 + $0x4a8] sm:$0xff]
      %v6423 = vld [vmem:[%s5 + $0x4b0] sm:$0xff]
      %v6424 = vld [vmem:[%s5 + $0x4b8] sm:$0xff]
      %v6425 = vld [vmem:[%s5 + $0x4c0] sm:$0xff]
      %v6426 = vld [vmem:[%s5 + $0x4c8] sm:$0xff]
      %v6427 = vld [vmem:[%s5 + $0x4d0] sm:$0xff]
      %v6428 = vld [vmem:[%s5 + $0x4d8] sm:$0xff]
      %v6429 = vld [vmem:[%s5 + $0x4e0] sm:$0xff]
      %v6430 = vld [vmem:[%s5 + $0x4e8] sm:$0xff]
      %v6431 = vld [vmem:[%s5 + $0x4f0] sm:$0xff]
      %v6432 = vld [vmem:[%s5 + $0x4f8] sm:$0xff]
      %v6433 = vld [vmem:[%s5 + $0x500] sm:$0xff]
      %v6434 = vld [vmem:[%s5 + $0x508] sm:$0xff]
      %v6435 = vld [vmem:[%s5 + $0x510] sm:$0xff]
      %v6436 = vld [vmem:[%s5 + $0x518] sm:$0xff]
      %v6437 = vld [vmem:[%s5 + $0x520] sm:$0xff]
      %v6438 = vld [vmem:[%s5 + $0x528] sm:$0xff]
      %v6439 = vld [vmem:[%s5 + $0x530] sm:$0xff]
      %v6440 = vld [vmem:[%s5 + $0x538] sm:$0xff]
      %v6441 = vld [vmem:[%s5 + $0x540] sm:$0xff]
      %v6442 = vld [vmem:[%s5 + $0x548] sm:$0xff]
      %v6443 = vld [vmem:[%s5 + $0x550] sm:$0xff]
      %v6444 = vld [vmem:[%s5 + $0x558] sm:$0xff]
      %v6445 = vld [vmem:[%s5 + $0x560] sm:$0xff]
      %v6446 = vld [vmem:[%s5 + $0x568] sm:$0xff]
      %v6447 = vld [vmem:[%s5 + $0x570] sm:$0xff]
      %v6448 = vld [vmem:[%s5 + $0x578] sm:$0xff]
      %v6449 = vld [vmem:[%s5 + $0x580] sm:$0xff]
      %v6450 = vld [vmem:[%s5 + $0x588] sm:$0xff]
      %v6451 = vld [vmem:[%s5 + $0x590] sm:$0xff]
      %v6452 = vld [vmem:[%s5 + $0x598] sm:$0xff]
      %v6453 = vld [vmem:[%s5 + $0x5a0] sm:$0xff]
      %v6454 = vld [vmem:[%s5 + $0x5a8] sm:$0xff]
      %v6455 = vld [vmem:[%s5 + $0x5b0] sm:$0xff]
      %v6456 = vld [vmem:[%s5 + $0x5b8] sm:$0xff]
      %v6457 = vld [vmem:[%s5 + $0x5c0] sm:$0xff]
      %v6458 = vld [vmem:[%s5 + $0x5c8] sm:$0xff]
      %v6459 = vld [vmem:[%s5 + $0x5d0] sm:$0xff]
      %v6460 = vld [vmem:[%s5 + $0x5d8] sm:$0xff]
      %v6461 = vld [vmem:[%s5 + $0x5e0] sm:$0xff]
      %v6462 = vld [vmem:[%s5 + $0x5e8] sm:$0xff]
      %v6463 = vld [vmem:[%s5 + $0x5f0] sm:$0xff]
      %v6464 = vld [vmem:[%s5 + $0x5f8] sm:$0xff]
      %v6465 = vld [vmem:[%s5 + $0x600] sm:$0xff]
      %v6466 = vld [vmem:[%s5 + $0x608] sm:$0xff]
      %v6467 = vld [vmem:[%s5 + $0x610] sm:$0xff]
      %v6468 = vld [vmem:[%s5 + $0x618] sm:$0xff]
      %v6469 = vld [vmem:[%s5 + $0x620] sm:$0xff]
      %v6470 = vld [vmem:[%s5 + $0x628] sm:$0xff]
      %v6471 = vld [vmem:[%s5 + $0x630] sm:$0xff]
      %v6472 = vld [vmem:[%s5 + $0x638] sm:$0xff]
      %v6473 = vld [vmem:[%s5 + $0x640] sm:$0xff]
      %v6474 = vld [vmem:[%s5 + $0x648] sm:$0xff]
      %v6475 = vld [vmem:[%s5 + $0x650] sm:$0xff]
      %v6476 = vld [vmem:[%s5 + $0x658] sm:$0xff]
      %v6477 = vld [vmem:[%s5 + $0x660] sm:$0xff]
      %v6478 = vld [vmem:[%s5 + $0x668] sm:$0xff]
      %v6479 = vld [vmem:[%s5 + $0x670] sm:$0xff]
      %v6480 = vld [vmem:[%s5 + $0x678] sm:$0xff]
      %v6481 = vld [vmem:[%s5 + $0x680] sm:$0xff]
      %v6482 = vld [vmem:[%s5 + $0x688] sm:$0xff]
      %v6483 = vld [vmem:[%s5 + $0x690] sm:$0xff]
      %v6484 = vld [vmem:[%s5 + $0x698] sm:$0xff]
      %v6485 = vld [vmem:[%s5 + $0x6a0] sm:$0xff]
      %v6486 = vld [vmem:[%s5 + $0x6a8] sm:$0xff]
      %v6487 = vld [vmem:[%s5 + $0x6b0] sm:$0xff]
      %v6488 = vld [vmem:[%s5 + $0x6b8] sm:$0xff]
      %v6489 = vld [vmem:[%s5 + $0x6c0] sm:$0xff]
      %v6490 = vld [vmem:[%s5 + $0x6c8] sm:$0xff]
      %v6491 = vld [vmem:[%s5 + $0x6d0] sm:$0xff]
      %v6492 = vld [vmem:[%s5 + $0x6d8] sm:$0xff]
      %v6493 = vld [vmem:[%s5 + $0x6e0] sm:$0xff]
      %v6494 = vld [vmem:[%s5 + $0x6e8] sm:$0xff]
      %v6495 = vld [vmem:[%s5 + $0x6f0] sm:$0xff]
      %v6496 = vld [vmem:[%s5 + $0x6f8] sm:$0xff]
      %v6497 = vld [vmem:[%s5 + $0x700] sm:$0xff]
      %v6498 = vld [vmem:[%s5 + $0x708] sm:$0xff]
      %v6499 = vld [vmem:[%s5 + $0x710] sm:$0xff]
      %v6500 = vld [vmem:[%s5 + $0x718] sm:$0xff]
      %v6501 = vld [vmem:[%s5 + $0x720] sm:$0xff]
      %v6502 = vld [vmem:[%s5 + $0x728] sm:$0xff]
      %v6503 = vld [vmem:[%s5 + $0x730] sm:$0xff]
      %v6504 = vld [vmem:[%s5 + $0x738] sm:$0xff]
      %v6505 = vld [vmem:[%s5 + $0x740] sm:$0xff]
      %v6506 = vld [vmem:[%s5 + $0x748] sm:$0xff]
      %v6507 = vld [vmem:[%s5 + $0x750] sm:$0xff]
      %v6508 = vld [vmem:[%s5 + $0x758] sm:$0xff]
      %v6509 = vld [vmem:[%s5 + $0x760] sm:$0xff]
      %v6510 = vld [vmem:[%s5 + $0x768] sm:$0xff]
      %v6511 = vld [vmem:[%s5 + $0x770] sm:$0xff]
      %v6512 = vld [vmem:[%s5 + $0x778] sm:$0xff]
      %v6513 = vld [vmem:[%s5 + $0x780] sm:$0xff]
      %v6514 = vld [vmem:[%s5 + $0x788] sm:$0xff]
      %v6515 = vld [vmem:[%s5 + $0x790] sm:$0xff]
      %v6516 = vld [vmem:[%s5 + $0x798] sm:$0xff]
      %v6517 = vld [vmem:[%s5 + $0x7a0] sm:$0xff]
      %v6518 = vld [vmem:[%s5 + $0x7a8] sm:$0xff]
      %v6519 = vld [vmem:[%s5 + $0x7b0] sm:$0xff]
      %v6520 = vld [vmem:[%s5 + $0x7b8] sm:$0xff]
      %v6521 = vld [vmem:[%s5 + $0x7c0] sm:$0xff]
      %v6522 = vld [vmem:[%s5 + $0x7c8] sm:$0xff]
      %v6523 = vld [vmem:[%s5 + $0x7d0] sm:$0xff]
      %v6524 = vld [vmem:[%s5 + $0x7d8] sm:$0xff]
      %v6525 = vld [vmem:[%s5 + $0x7e0] sm:$0xff]
      %v6526 = vld [vmem:[%s5 + $0x7e8] sm:$0xff]
      %v6527 = vld [vmem:[%s5 + $0x7f0] sm:$0xff]
      %v6528 = vld [vmem:[%s5 + $0x7f8] sm:$0xff]
      %v6529 = vld [vmem:[%s5 + $0x800] sm:$0xff]
      %v6530 = vld [vmem:[%s5 + $0x808] sm:$0xff]
      %v6531 = vld [vmem:[%s5 + $0x810] sm:$0xff]
      %v6532 = vld [vmem:[%s5 + $0x818] sm:$0xff]
      %v6533 = vld [vmem:[%s5 + $0x820] sm:$0xff]
      %v6534 = vld [vmem:[%s5 + $0x828] sm:$0xff]
      %v6535 = vld [vmem:[%s5 + $0x830] sm:$0xff]
      %v6536 = vld [vmem:[%s5 + $0x838] sm:$0xff]
      %v6537 = vld [vmem:[%s5 + $0x840] sm:$0xff]
      %v6538 = vld [vmem:[%s5 + $0x848] sm:$0xff]
      %v6539 = vld [vmem:[%s5 + $0x850] sm:$0xff]
      %v6540 = vld [vmem:[%s5 + $0x858] sm:$0xff]
      %v6541 = vld [vmem:[%s5 + $0x860] sm:$0xff]
      %v6542 = vld [vmem:[%s5 + $0x868] sm:$0xff]
      %v6543 = vld [vmem:[%s5 + $0x870] sm:$0xff]
      %v6544 = vld [vmem:[%s5 + $0x878] sm:$0xff]
      %v6545 = vld [vmem:[%s5 + $0x880] sm:$0xff]
      %v6546 = vld [vmem:[%s5 + $0x888] sm:$0xff]
      %v6547 = vld [vmem:[%s5 + $0x890] sm:$0xff]
      %v6548 = vld [vmem:[%s5 + $0x898] sm:$0xff]
      %v6549 = vld [vmem:[%s5 + $0x8a0] sm:$0xff]
      %v6550 = vld [vmem:[%s5 + $0x8a8] sm:$0xff]
      %v6551 = vld [vmem:[%s5 + $0x8b0] sm:$0xff]
      %v6552 = vld [vmem:[%s5 + $0x8b8] sm:$0xff]
      %v6553 = vld [vmem:[%s5 + $0x8c0] sm:$0xff]
      %v6554 = vld [vmem:[%s5 + $0x8c8] sm:$0xff]
      %v6555 = vld [vmem:[%s5 + $0x8d0] sm:$0xff]
      %v6556 = vld [vmem:[%s5 + $0x8d8] sm:$0xff]
      %v6557 = vld [vmem:[%s5 + $0x8e0] sm:$0xff]
      %v6558 = vld [vmem:[%s5 + $0x8e8] sm:$0xff]
      %v6559 = vld [vmem:[%s5 + $0x8f0] sm:$0xff]
      %v6560 = vld [vmem:[%s5 + $0x8f8] sm:$0xff]
      %v6561 = vld [vmem:[%s5 + $0x900] sm:$0xff]
      %v6562 = vld [vmem:[%s5 + $0x908] sm:$0xff]
      %v6563 = vld [vmem:[%s5 + $0x910] sm:$0xff]
      %v6564 = vld [vmem:[%s5 + $0x918] sm:$0xff]
      %v6565 = vld [vmem:[%s5 + $0x920] sm:$0xff]
      %v6566 = vld [vmem:[%s5 + $0x928] sm:$0xff]
      %v6567 = vld [vmem:[%s5 + $0x930] sm:$0xff]
      %v6568 = vld [vmem:[%s5 + $0x938] sm:$0xff]
      %v6569 = vld [vmem:[%s5 + $0x940] sm:$0xff]
      %v6570 = vld [vmem:[%s5 + $0x948] sm:$0xff]
      %v6571 = vld [vmem:[%s5 + $0x950] sm:$0xff]
      %v6572 = vld [vmem:[%s5 + $0x958] sm:$0xff]
      %v6573 = vld [vmem:[%s5 + $0x960] sm:$0xff]
      %v6574 = vld [vmem:[%s5 + $0x968] sm:$0xff]
      %v6575 = vld [vmem:[%s5 + $0x970] sm:$0xff]
      %v6576 = vld [vmem:[%s5 + $0x978] sm:$0xff]
      %v6577 = vld [vmem:[%s5 + $0x980] sm:$0xff]
      %v6578 = vld [vmem:[%s5 + $0x988] sm:$0xff]
      %v6579 = vld [vmem:[%s5 + $0x990] sm:$0xff]
      %v6580 = vld [vmem:[%s5 + $0x998] sm:$0xff]
      %v6581 = vld [vmem:[%s5 + $0x9a0] sm:$0xff]
      %v6582 = vld [vmem:[%s5 + $0x9a8] sm:$0xff]
      %v6583 = vld [vmem:[%s5 + $0x9b0] sm:$0xff]
      %v6584 = vld [vmem:[%s5 + $0x9b8] sm:$0xff]
      %v6585 = vld [vmem:[%s5 + $0x9c0] sm:$0xff]
      %v6586 = vld [vmem:[%s5 + $0x9c8] sm:$0xff]
      %v6587 = vld [vmem:[%s5 + $0x9d0] sm:$0xff]
      %v6588 = vld [vmem:[%s5 + $0x9d8] sm:$0xff]
      %v6589 = vld [vmem:[%s5 + $0x9e0] sm:$0xff]
      %v6590 = vld [vmem:[%s5 + $0x9e8] sm:$0xff]
      %v6591 = vld [vmem:[%s5 + $0x9f0] sm:$0xff]
      %v6592 = vld [vmem:[%s5 + $0x9f8] sm:$0xff]
      %v6593 = vld [vmem:[%s5 + $0xa00] sm:$0xff]
      %v6594 = vld [vmem:[%s5 + $0xa08] sm:$0xff]
      %v6595 = vld [vmem:[%s5 + $0xa10] sm:$0xff]
      %v6596 = vld [vmem:[%s5 + $0xa18] sm:$0xff]
      %v6597 = vld [vmem:[%s5 + $0xa20] sm:$0xff]
      %v6598 = vld [vmem:[%s5 + $0xa28] sm:$0xff]
      %v6599 = vld [vmem:[%s5 + $0xa30] sm:$0xff]
      %v6600 = vld [vmem:[%s5 + $0xa38] sm:$0xff]
      %v6601 = vld [vmem:[%s5 + $0xa40] sm:$0xff]
      %v6602 = vld [vmem:[%s5 + $0xa48] sm:$0xff]
      %v6603 = vld [vmem:[%s5 + $0xa50] sm:$0xff]
      %v6604 = vld [vmem:[%s5 + $0xa58] sm:$0xff]
      %v6605 = vld [vmem:[%s5 + $0xa60] sm:$0xff]
      %v6606 = vld [vmem:[%s5 + $0xa68] sm:$0xff]
      %v6607 = vld [vmem:[%s5 + $0xa70] sm:$0xff]
      %v6608 = vld [vmem:[%s5 + $0xa78] sm:$0xff]
      %v6609 = vld [vmem:[%s5 + $0xa80] sm:$0xff]
      %v6610 = vld [vmem:[%s5 + $0xa88] sm:$0xff]
      %v6611 = vld [vmem:[%s5 + $0xa90] sm:$0xff]
      %v6612 = vld [vmem:[%s5 + $0xa98] sm:$0xff]
      %v6613 = vld [vmem:[%s5 + $0xaa0] sm:$0xff]
      %v6614 = vld [vmem:[%s5 + $0xaa8] sm:$0xff]
      %v6615 = vld [vmem:[%s5 + $0xab0] sm:$0xff]
      %v6616 = vld [vmem:[%s5 + $0xab8] sm:$0xff]
      %v6617 = vld [vmem:[%s5 + $0xac0] sm:$0xff]
      %v6618 = vld [vmem:[%s5 + $0xac8] sm:$0xff]
      %v6619 = vld [vmem:[%s5 + $0xad0] sm:$0xff]
      %v6620 = vld [vmem:[%s5 + $0xad8] sm:$0xff]
      %v6621 = vld [vmem:[%s5 + $0xae0] sm:$0xff]
      %v6622 = vld [vmem:[%s5 + $0xae8] sm:$0xff]
      %v6623 = vld [vmem:[%s5 + $0xaf0] sm:$0xff]
      %v6624 = vld [vmem:[%s5 + $0xaf8] sm:$0xff]
      %v6625 = vld [vmem:[%s5 + $0xb00] sm:$0xff]
      %v6626 = vld [vmem:[%s5 + $0xb08] sm:$0xff]
      %v6627 = vld [vmem:[%s5 + $0xb10] sm:$0xff]
      %v6628 = vld [vmem:[%s5 + $0xb18] sm:$0xff]
      %v6629 = vld [vmem:[%s5 + $0xb20] sm:$0xff]
      %v6630 = vld [vmem:[%s5 + $0xb28] sm:$0xff]
      %v6631 = vld [vmem:[%s5 + $0xb30] sm:$0xff]
      %v6632 = vld [vmem:[%s5 + $0xb38] sm:$0xff]
      %v6633 = vld [vmem:[%s5 + $0xb40] sm:$0xff]
      %v6634 = vld [vmem:[%s5 + $0xb48] sm:$0xff]
      %v6635 = vld [vmem:[%s5 + $0xb50] sm:$0xff]
      %v6636 = vld [vmem:[%s5 + $0xb58] sm:$0xff]
      %v6637 = vld [vmem:[%s5 + $0xb60] sm:$0xff]
      %v6638 = vld [vmem:[%s5 + $0xb68] sm:$0xff]
      %v6639 = vld [vmem:[%s5 + $0xb70] sm:$0xff]
      %v6640 = vld [vmem:[%s5 + $0xb78] sm:$0xff]
      %v6641 = vld [vmem:[%s5 + $0xb80] sm:$0xff]
      %v6642 = vld [vmem:[%s5 + $0xb88] sm:$0xff]
      %v6643 = vld [vmem:[%s5 + $0xb90] sm:$0xff]
      %v6644 = vld [vmem:[%s5 + $0xb98] sm:$0xff]
      %v6645 = vld [vmem:[%s5 + $0xba0] sm:$0xff]
      %v6646 = vld [vmem:[%s5 + $0xba8] sm:$0xff]
      %v6647 = vld [vmem:[%s5 + $0xbb0] sm:$0xff]
      %v6648 = vld [vmem:[%s5 + $0xbb8] sm:$0xff]
      %v6649 = vld [vmem:[%s5 + $0xbc0] sm:$0xff]
      %v6650 = vld [vmem:[%s5 + $0xbc8] sm:$0xff]
      %v6651 = vld [vmem:[%s5 + $0xbd0] sm:$0xff]
      %v6652 = vld [vmem:[%s5 + $0xbd8] sm:$0xff]
      %v6653 = vld [vmem:[%s5 + $0xbe0] sm:$0xff]
      %v6654 = vld [vmem:[%s5 + $0xbe8] sm:$0xff]
      %v6655 = vld [vmem:[%s5 + $0xbf0] sm:$0xff]
      %v6656 = vld [vmem:[%s5 + $0xbf8] sm:$0xff]
      %v6657 = vld [vmem:[%s5 + $0xc00] sm:$0xff]
      %v6658 = vld [vmem:[%s5 + $0xc08] sm:$0xff]
      %v6659 = vld [vmem:[%s5 + $0xc10] sm:$0xff]
      %v6660 = vld [vmem:[%s5 + $0xc18] sm:$0xff]
      %v6661 = vld [vmem:[%s5 + $0xc20] sm:$0xff]
      %v6662 = vld [vmem:[%s5 + $0xc28] sm:$0xff]
      %v6663 = vld [vmem:[%s5 + $0xc30] sm:$0xff]
      %v6664 = vld [vmem:[%s5 + $0xc38] sm:$0xff]
      %v6665 = vld [vmem:[%s5 + $0xc40] sm:$0xff]
      %v6666 = vld [vmem:[%s5 + $0xc48] sm:$0xff]
      %v6667 = vld [vmem:[%s5 + $0xc50] sm:$0xff]
      %v6668 = vld [vmem:[%s5 + $0xc58] sm:$0xff]
      %v6669 = vld [vmem:[%s5 + $0xc60] sm:$0xff]
      %v6670 = vld [vmem:[%s5 + $0xc68] sm:$0xff]
      %v6671 = vld [vmem:[%s5 + $0xc70] sm:$0xff]
      %v6672 = vld [vmem:[%s5 + $0xc78] sm:$0xff]
      %v6673 = vld [vmem:[%s5 + $0xc80] sm:$0xff]
      %v6674 = vld [vmem:[%s5 + $0xc88] sm:$0xff]
      %v6675 = vld [vmem:[%s5 + $0xc90] sm:$0xff]
      %v6676 = vld [vmem:[%s5 + $0xc98] sm:$0xff]
      %v6677 = vld [vmem:[%s5 + $0xca0] sm:$0xff]
      %v6678 = vld [vmem:[%s5 + $0xca8] sm:$0xff]
      %v6679 = vld [vmem:[%s5 + $0xcb0] sm:$0xff]
      %v6680 = vld [vmem:[%s5 + $0xcb8] sm:$0xff]
      %v6681 = vld [vmem:[%s5 + $0xcc0] sm:$0xff]
      %v6682 = vld [vmem:[%s5 + $0xcc8] sm:$0xff]
      %v6683 = vld [vmem:[%s5 + $0xcd0] sm:$0xff]
      %v6684 = vld [vmem:[%s5 + $0xcd8] sm:$0xff]
      %v6685 = vld [vmem:[%s5 + $0xce0] sm:$0xff]
      %v6686 = vld [vmem:[%s5 + $0xce8] sm:$0xff]
      %v6687 = vld [vmem:[%s5 + $0xcf0] sm:$0xff]
      %v6688 = vld [vmem:[%s5 + $0xcf8] sm:$0xff]
      %v6689 = vld [vmem:[%s5 + $0xd00] sm:$0xff]
      %v6690 = vld [vmem:[%s5 + $0xd08] sm:$0xff]
      %v6691 = vld [vmem:[%s5 + $0xd10] sm:$0xff]
      %v6692 = vld [vmem:[%s5 + $0xd18] sm:$0xff]
      %v6693 = vld [vmem:[%s5 + $0xd20] sm:$0xff]
      %v6694 = vld [vmem:[%s5 + $0xd28] sm:$0xff]
      %v6695 = vld [vmem:[%s5 + $0xd30] sm:$0xff]
      %v6696 = vld [vmem:[%s5 + $0xd38] sm:$0xff]
      %v6697 = vld [vmem:[%s5 + $0xd40] sm:$0xff]
      %v6698 = vld [vmem:[%s5 + $0xd48] sm:$0xff]
      %v6699 = vld [vmem:[%s5 + $0xd50] sm:$0xff]
      %v6700 = vld [vmem:[%s5 + $0xd58] sm:$0xff]
      %v6701 = vld [vmem:[%s5 + $0xd60] sm:$0xff]
      %v6702 = vld [vmem:[%s5 + $0xd68] sm:$0xff]
      %v6703 = vld [vmem:[%s5 + $0xd70] sm:$0xff]
      %v6704 = vld [vmem:[%s5 + $0xd78] sm:$0xff]
      %v6705 = vld [vmem:[%s5 + $0xd80] sm:$0xff]
      %v6706 = vld [vmem:[%s5 + $0xd88] sm:$0xff]
      %v6707 = vld [vmem:[%s5 + $0xd90] sm:$0xff]
      %v6708 = vld [vmem:[%s5 + $0xd98] sm:$0xff]
      %v6709 = vld [vmem:[%s5 + $0xda0] sm:$0xff]
      %v6710 = vld [vmem:[%s5 + $0xda8] sm:$0xff]
      %v6711 = vld [vmem:[%s5 + $0xdb0] sm:$0xff]
      %v6712 = vld [vmem:[%s5 + $0xdb8] sm:$0xff]
      %v6713 = vld [vmem:[%s5 + $0xdc0] sm:$0xff]
      %v6714 = vld [vmem:[%s5 + $0xdc8] sm:$0xff]
      %v6715 = vld [vmem:[%s5 + $0xdd0] sm:$0xff]
      %v6716 = vld [vmem:[%s5 + $0xdd8] sm:$0xff]
      %v6717 = vld [vmem:[%s5 + $0xde0] sm:$0xff]
      %v6718 = vld [vmem:[%s5 + $0xde8] sm:$0xff]
      %v6719 = vld [vmem:[%s5 + $0xdf0] sm:$0xff]
      %v6720 = vld [vmem:[%s5 + $0xdf8] sm:$0xff]
      %v6721 = vld [vmem:[%s5 + $0xe00] sm:$0xff]
      %v6722 = vld [vmem:[%s5 + $0xe08] sm:$0xff]
      %v6723 = vld [vmem:[%s5 + $0xe10] sm:$0xff]
      %v6724 = vld [vmem:[%s5 + $0xe18] sm:$0xff]
      %v6725 = vld [vmem:[%s5 + $0xe20] sm:$0xff]
      %v6726 = vld [vmem:[%s5 + $0xe28] sm:$0xff]
      %v6727 = vld [vmem:[%s5 + $0xe30] sm:$0xff]
      %v6728 = vld [vmem:[%s5 + $0xe38] sm:$0xff]
      %v6729 = vld [vmem:[%s5 + $0xe40] sm:$0xff]
      %v6730 = vld [vmem:[%s5 + $0xe48] sm:$0xff]
      %v6731 = vld [vmem:[%s5 + $0xe50] sm:$0xff]
      %v6732 = vld [vmem:[%s5 + $0xe58] sm:$0xff]
      %v6733 = vld [vmem:[%s5 + $0xe60] sm:$0xff]
      %v6734 = vld [vmem:[%s5 + $0xe68] sm:$0xff]
      %v6735 = vld [vmem:[%s5 + $0xe70] sm:$0xff]
      %v6736 = vld [vmem:[%s5 + $0xe78] sm:$0xff]
      %v6737 = vld [vmem:[%s5 + $0xe80] sm:$0xff]
      %v6738 = vld [vmem:[%s5 + $0xe88] sm:$0xff]
      %v6739 = vld [vmem:[%s5 + $0xe90] sm:$0xff]
      %v6740 = vld [vmem:[%s5 + $0xe98] sm:$0xff]
      %v6741 = vld [vmem:[%s5 + $0xea0] sm:$0xff]
      %v6742 = vld [vmem:[%s5 + $0xea8] sm:$0xff]
      %v6743 = vld [vmem:[%s5 + $0xeb0] sm:$0xff]
      %v6744 = vld [vmem:[%s5 + $0xeb8] sm:$0xff]
      %v6745 = vld [vmem:[%s5 + $0xec0] sm:$0xff]
      %v6746 = vld [vmem:[%s5 + $0xec8] sm:$0xff]
      %v6747 = vld [vmem:[%s5 + $0xed0] sm:$0xff]
      %v6748 = vld [vmem:[%s5 + $0xed8] sm:$0xff]
      %v6749 = vld [vmem:[%s5 + $0xee0] sm:$0xff]
      %v6750 = vld [vmem:[%s5 + $0xee8] sm:$0xff]
      %v6751 = vld [vmem:[%s5 + $0xef0] sm:$0xff]
      %v6752 = vld [vmem:[%s5 + $0xef8] sm:$0xff]
      %v6753 = vld [vmem:[%s5 + $0xf00] sm:$0xff]
      %v6754 = vld [vmem:[%s5 + $0xf08] sm:$0xff]
      %v6755 = vld [vmem:[%s5 + $0xf10] sm:$0xff]
      %v6756 = vld [vmem:[%s5 + $0xf18] sm:$0xff]
      %v6757 = vld [vmem:[%s5 + $0xf20] sm:$0xff]
      %v6758 = vld [vmem:[%s5 + $0xf28] sm:$0xff]
      %v6759 = vld [vmem:[%s5 + $0xf30] sm:$0xff]
      %v6760 = vld [vmem:[%s5 + $0xf38] sm:$0xff]
      %v6761 = vld [vmem:[%s5 + $0xf40] sm:$0xff]
      %v6762 = vld [vmem:[%s5 + $0xf48] sm:$0xff]
      %v6763 = vld [vmem:[%s5 + $0xf50] sm:$0xff]
      %v6764 = vld [vmem:[%s5 + $0xf58] sm:$0xff]
      %v6765 = vld [vmem:[%s5 + $0xf60] sm:$0xff]
      %v6766 = vld [vmem:[%s5 + $0xf68] sm:$0xff]
      %v6767 = vld [vmem:[%s5 + $0xf70] sm:$0xff]
      %v6768 = vld [vmem:[%s5 + $0xf78] sm:$0xff]
      %v6769 = vld [vmem:[%s5 + $0xf80] sm:$0xff]
      %v6770 = vld [vmem:[%s5 + $0xf88] sm:$0xff]
      %v6771 = vld [vmem:[%s5 + $0xf90] sm:$0xff]
      %v6772 = vld [vmem:[%s5 + $0xf98] sm:$0xff]
      %v6773 = vld [vmem:[%s5 + $0xfa0] sm:$0xff]
      %v6774 = vld [vmem:[%s5 + $0xfa8] sm:$0xff]
      %v6775 = vld [vmem:[%s5 + $0xfb0] sm:$0xff]
      %v6776 = vld [vmem:[%s5 + $0xfb8] sm:$0xff]
      %v6777 = vld [vmem:[%s5 + $0xfc0] sm:$0xff]
      %v6778 = vld [vmem:[%s5 + $0xfc8] sm:$0xff]
      %v6779 = vld [vmem:[%s5 + $0xfd0] sm:$0xff]
      %v6780 = vld [vmem:[%s5 + $0xfd8] sm:$0xff]
      %v6781 = vld [vmem:[%s5 + $0xfe0] sm:$0xff]
      %v6782 = vld [vmem:[%s5 + $0xfe8] sm:$0xff]
      %v6783 = vld [vmem:[%s5 + $0xff0] sm:$0xff]
      %v6784 = vld [vmem:[%s5 + $0xff8] sm:$0xff]
      %v6785 = vld [vmem:[%s6] sm:$0xff]
      %v6787 = vlaneseq
      %v6788 = vshrl.u32 %v6787, 7
      %v6789 = vsub.s32 0, %v6788
      %v6790 = vrot.slane %v6785, %v6789
      %v6791 = vlaneseq
      %v6792 = vshrl.u32 %v6791, 7
      %v6793 = vsub.s32 1, %v6792
      %v6794 = vrot.slane %v6785, %v6793
      %v6795 = vlaneseq
      %v6796 = vshrl.u32 %v6795, 7
      %v6797 = vsub.s32 2, %v6796
      %v6798 = vrot.slane %v6785, %v6797
      %v6799 = vlaneseq
      %v6800 = vshrl.u32 %v6799, 7
      %v6801 = vsub.s32 3, %v6800
      %v6802 = vrot.slane %v6785, %v6801
      %v6803 = vlaneseq
      %v6804 = vshrl.u32 %v6803, 7
      %v6805 = vsub.s32 4, %v6804
      %v6806 = vrot.slane %v6785, %v6805
      %v6807 = vlaneseq
      %v6808 = vshrl.u32 %v6807, 7
      %v6809 = vsub.s32 5, %v6808
      %v6810 = vrot.slane %v6785, %v6809
      %v6811 = vlaneseq
      %v6812 = vshrl.u32 %v6811, 7
      %v6813 = vsub.s32 6, %v6812
      %v6814 = vrot.slane %v6785, %v6813
      %v6815 = vlaneseq
      %v6816 = vshrl.u32 %v6815, 7
      %v6817 = vsub.s32 7, %v6816
      %v6818 = vrot.slane %v6785, %v6817
      %v7339 = vunpack.c.l.b16 %v6273
      %v7340 = vunpack.c.h.b16 %v6273
      %v7341 = vunpack.c.l.b16 %v6274
      %v7342 = vunpack.c.h.b16 %v6274
      %v7343 = vunpack.c.l.b16 %v6275
      %v7344 = vunpack.c.h.b16 %v6275
      %v7345 = vunpack.c.l.b16 %v6276
      %v7346 = vunpack.c.h.b16 %v6276
      %v7347 = vunpack.c.l.b16 %v6277
      %v7348 = vunpack.c.h.b16 %v6277
      %v7349 = vunpack.c.l.b16 %v6278
      %v7350 = vunpack.c.h.b16 %v6278
      %v7351 = vunpack.c.l.b16 %v6279
      %v7352 = vunpack.c.h.b16 %v6279
      %v7353 = vunpack.c.l.b16 %v6280
      %v7354 = vunpack.c.h.b16 %v6280
      %v7355 = vunpack.c.l.b16 %v6281
      %v7356 = vunpack.c.h.b16 %v6281
      %v7357 = vunpack.c.l.b16 %v6282
      %v7358 = vunpack.c.h.b16 %v6282
      %v7359 = vunpack.c.l.b16 %v6283
      %v7360 = vunpack.c.h.b16 %v6283
      %v7361 = vunpack.c.l.b16 %v6284
      %v7362 = vunpack.c.h.b16 %v6284
      %v7363 = vunpack.c.l.b16 %v6285
      %v7364 = vunpack.c.h.b16 %v6285
      %v7365 = vunpack.c.l.b16 %v6286
      %v7366 = vunpack.c.h.b16 %v6286
      %v7367 = vunpack.c.l.b16 %v6287
      %v7368 = vunpack.c.h.b16 %v6287
      %v7369 = vunpack.c.l.b16 %v6288
      %v7370 = vunpack.c.h.b16 %v6288
      %v7371 = vunpack.c.l.b16 %v6289
      %v7372 = vunpack.c.h.b16 %v6289
      %v7373 = vunpack.c.l.b16 %v6290
      %v7374 = vunpack.c.h.b16 %v6290
      %v7375 = vunpack.c.l.b16 %v6291
      %v7376 = vunpack.c.h.b16 %v6291
      %v7377 = vunpack.c.l.b16 %v6292
      %v7378 = vunpack.c.h.b16 %v6292
      %v7379 = vunpack.c.l.b16 %v6293
      %v7380 = vunpack.c.h.b16 %v6293
      %v7381 = vunpack.c.l.b16 %v6294
      %v7382 = vunpack.c.h.b16 %v6294
      %v7383 = vunpack.c.l.b16 %v6295
      %v7384 = vunpack.c.h.b16 %v6295
      %v7385 = vunpack.c.l.b16 %v6296
      %v7386 = vunpack.c.h.b16 %v6296
      %v7387 = vunpack.c.l.b16 %v6297
      %v7388 = vunpack.c.h.b16 %v6297
      %v7389 = vunpack.c.l.b16 %v6298
      %v7390 = vunpack.c.h.b16 %v6298
      %v7391 = vunpack.c.l.b16 %v6299
      %v7392 = vunpack.c.h.b16 %v6299
      %v7393 = vunpack.c.l.b16 %v6300
      %v7394 = vunpack.c.h.b16 %v6300
      %v7395 = vunpack.c.l.b16 %v6301
      %v7396 = vunpack.c.h.b16 %v6301
      %v7397 = vunpack.c.l.b16 %v6302
      %v7398 = vunpack.c.h.b16 %v6302
      %v7399 = vunpack.c.l.b16 %v6303
      %v7400 = vunpack.c.h.b16 %v6303
      %v7401 = vunpack.c.l.b16 %v6304
      %v7402 = vunpack.c.h.b16 %v6304
      %v7403 = vunpack.c.l.b16 %v6305
      %v7404 = vunpack.c.h.b16 %v6305
      %v7405 = vunpack.c.l.b16 %v6306
      %v7406 = vunpack.c.h.b16 %v6306
      %v7407 = vunpack.c.l.b16 %v6307
      %v7408 = vunpack.c.h.b16 %v6307
      %v7409 = vunpack.c.l.b16 %v6308
      %v7410 = vunpack.c.h.b16 %v6308
      %v7411 = vunpack.c.l.b16 %v6309
      %v7412 = vunpack.c.h.b16 %v6309
      %v7413 = vunpack.c.l.b16 %v6310
      %v7414 = vunpack.c.h.b16 %v6310
      %v7415 = vunpack.c.l.b16 %v6311
      %v7416 = vunpack.c.h.b16 %v6311
      %v7417 = vunpack.c.l.b16 %v6312
      %v7418 = vunpack.c.h.b16 %v6312
      %v7419 = vunpack.c.l.b16 %v6313
      %v7420 = vunpack.c.h.b16 %v6313
      %v7421 = vunpack.c.l.b16 %v6314
      %v7422 = vunpack.c.h.b16 %v6314
      %v7423 = vunpack.c.l.b16 %v6315
      %v7424 = vunpack.c.h.b16 %v6315
      %v7425 = vunpack.c.l.b16 %v6316
      %v7426 = vunpack.c.h.b16 %v6316
      %v7427 = vunpack.c.l.b16 %v6317
      %v7428 = vunpack.c.h.b16 %v6317
      %v7429 = vunpack.c.l.b16 %v6318
      %v7430 = vunpack.c.h.b16 %v6318
      %v7431 = vunpack.c.l.b16 %v6319
      %v7432 = vunpack.c.h.b16 %v6319
      %v7433 = vunpack.c.l.b16 %v6320
      %v7434 = vunpack.c.h.b16 %v6320
      %v7435 = vunpack.c.l.b16 %v6321
      %v7436 = vunpack.c.h.b16 %v6321
      %v7437 = vunpack.c.l.b16 %v6322
      %v7438 = vunpack.c.h.b16 %v6322
      %v7439 = vunpack.c.l.b16 %v6323
      %v7440 = vunpack.c.h.b16 %v6323
      %v7441 = vunpack.c.l.b16 %v6324
      %v7442 = vunpack.c.h.b16 %v6324
      %v7443 = vunpack.c.l.b16 %v6325
      %v7444 = vunpack.c.h.b16 %v6325
      %v7445 = vunpack.c.l.b16 %v6326
      %v7446 = vunpack.c.h.b16 %v6326
      %v7447 = vunpack.c.l.b16 %v6327
      %v7448 = vunpack.c.h.b16 %v6327
      %v7449 = vunpack.c.l.b16 %v6328
      %v7450 = vunpack.c.h.b16 %v6328
      %v7451 = vunpack.c.l.b16 %v6329
      %v7452 = vunpack.c.h.b16 %v6329
      %v7453 = vunpack.c.l.b16 %v6330
      %v7454 = vunpack.c.h.b16 %v6330
      %v7455 = vunpack.c.l.b16 %v6331
      %v7456 = vunpack.c.h.b16 %v6331
      %v7457 = vunpack.c.l.b16 %v6332
      %v7458 = vunpack.c.h.b16 %v6332
      %v7459 = vunpack.c.l.b16 %v6333
      %v7460 = vunpack.c.h.b16 %v6333
      %v7461 = vunpack.c.l.b16 %v6334
      %v7462 = vunpack.c.h.b16 %v6334
      %v7463 = vunpack.c.l.b16 %v6335
      %v7464 = vunpack.c.h.b16 %v6335
      %v7465 = vunpack.c.l.b16 %v6336
      %v7466 = vunpack.c.h.b16 %v6336
      %v7467 = vunpack.c.l.b16 %v6337
      %v7468 = vunpack.c.h.b16 %v6337
      %v7469 = vunpack.c.l.b16 %v6338
      %v7470 = vunpack.c.h.b16 %v6338
      %v7471 = vunpack.c.l.b16 %v6339
      %v7472 = vunpack.c.h.b16 %v6339
      %v7473 = vunpack.c.l.b16 %v6340
      %v7474 = vunpack.c.h.b16 %v6340
      %v7475 = vunpack.c.l.b16 %v6341
      %v7476 = vunpack.c.h.b16 %v6341
      %v7477 = vunpack.c.l.b16 %v6342
      %v7478 = vunpack.c.h.b16 %v6342
      %v7479 = vunpack.c.l.b16 %v6343
      %v7480 = vunpack.c.h.b16 %v6343
      %v7481 = vunpack.c.l.b16 %v6344
      %v7482 = vunpack.c.h.b16 %v6344
      %v7483 = vunpack.c.l.b16 %v6345
      %v7484 = vunpack.c.h.b16 %v6345
      %v7485 = vunpack.c.l.b16 %v6346
      %v7486 = vunpack.c.h.b16 %v6346
      %v7487 = vunpack.c.l.b16 %v6347
      %v7488 = vunpack.c.h.b16 %v6347
      %v7489 = vunpack.c.l.b16 %v6348
      %v7490 = vunpack.c.h.b16 %v6348
      %v7491 = vunpack.c.l.b16 %v6349
      %v7492 = vunpack.c.h.b16 %v6349
      %v7493 = vunpack.c.l.b16 %v6350
      %v7494 = vunpack.c.h.b16 %v6350
      %v7495 = vunpack.c.l.b16 %v6351
      %v7496 = vunpack.c.h.b16 %v6351
      %v7497 = vunpack.c.l.b16 %v6352
      %v7498 = vunpack.c.h.b16 %v6352
      %v7499 = vunpack.c.l.b16 %v6353
      %v7500 = vunpack.c.h.b16 %v6353
      %v7501 = vunpack.c.l.b16 %v6354
      %v7502 = vunpack.c.h.b16 %v6354
      %v7503 = vunpack.c.l.b16 %v6355
      %v7504 = vunpack.c.h.b16 %v6355
      %v7505 = vunpack.c.l.b16 %v6356
      %v7506 = vunpack.c.h.b16 %v6356
      %v7507 = vunpack.c.l.b16 %v6357
      %v7508 = vunpack.c.h.b16 %v6357
      %v7509 = vunpack.c.l.b16 %v6358
      %v7510 = vunpack.c.h.b16 %v6358
      %v7511 = vunpack.c.l.b16 %v6359
      %v7512 = vunpack.c.h.b16 %v6359
      %v7513 = vunpack.c.l.b16 %v6360
      %v7514 = vunpack.c.h.b16 %v6360
      %v7515 = vunpack.c.l.b16 %v6361
      %v7516 = vunpack.c.h.b16 %v6361
      %v7517 = vunpack.c.l.b16 %v6362
      %v7518 = vunpack.c.h.b16 %v6362
      %v7519 = vunpack.c.l.b16 %v6363
      %v7520 = vunpack.c.h.b16 %v6363
      %v7521 = vunpack.c.l.b16 %v6364
      %v7522 = vunpack.c.h.b16 %v6364
      %v7523 = vunpack.c.l.b16 %v6365
      %v7524 = vunpack.c.h.b16 %v6365
      %v7525 = vunpack.c.l.b16 %v6366
      %v7526 = vunpack.c.h.b16 %v6366
      %v7527 = vunpack.c.l.b16 %v6367
      %v7528 = vunpack.c.h.b16 %v6367
      %v7529 = vunpack.c.l.b16 %v6368
      %v7530 = vunpack.c.h.b16 %v6368
      %v7531 = vunpack.c.l.b16 %v6369
      %v7532 = vunpack.c.h.b16 %v6369
      %v7533 = vunpack.c.l.b16 %v6370
      %v7534 = vunpack.c.h.b16 %v6370
      %v7535 = vunpack.c.l.b16 %v6371
      %v7536 = vunpack.c.h.b16 %v6371
      %v7537 = vunpack.c.l.b16 %v6372
      %v7538 = vunpack.c.h.b16 %v6372
      %v7539 = vunpack.c.l.b16 %v6373
      %v7540 = vunpack.c.h.b16 %v6373
      %v7541 = vunpack.c.l.b16 %v6374
      %v7542 = vunpack.c.h.b16 %v6374
      %v7543 = vunpack.c.l.b16 %v6375
      %v7544 = vunpack.c.h.b16 %v6375
      %v7545 = vunpack.c.l.b16 %v6376
      %v7546 = vunpack.c.h.b16 %v6376
      %v7547 = vunpack.c.l.b16 %v6377
      %v7548 = vunpack.c.h.b16 %v6377
      %v7549 = vunpack.c.l.b16 %v6378
      %v7550 = vunpack.c.h.b16 %v6378
      %v7551 = vunpack.c.l.b16 %v6379
      %v7552 = vunpack.c.h.b16 %v6379
      %v7553 = vunpack.c.l.b16 %v6380
      %v7554 = vunpack.c.h.b16 %v6380
      %v7555 = vunpack.c.l.b16 %v6381
      %v7556 = vunpack.c.h.b16 %v6381
      %v7557 = vunpack.c.l.b16 %v6382
      %v7558 = vunpack.c.h.b16 %v6382
      %v7559 = vunpack.c.l.b16 %v6383
      %v7560 = vunpack.c.h.b16 %v6383
      %v7561 = vunpack.c.l.b16 %v6384
      %v7562 = vunpack.c.h.b16 %v6384
      %v7563 = vunpack.c.l.b16 %v6385
      %v7564 = vunpack.c.h.b16 %v6385
      %v7565 = vunpack.c.l.b16 %v6386
      %v7566 = vunpack.c.h.b16 %v6386
      %v7567 = vunpack.c.l.b16 %v6387
      %v7568 = vunpack.c.h.b16 %v6387
      %v7569 = vunpack.c.l.b16 %v6388
      %v7570 = vunpack.c.h.b16 %v6388
      %v7571 = vunpack.c.l.b16 %v6389
      %v7572 = vunpack.c.h.b16 %v6389
      %v7573 = vunpack.c.l.b16 %v6390
      %v7574 = vunpack.c.h.b16 %v6390
      %v7575 = vunpack.c.l.b16 %v6391
      %v7576 = vunpack.c.h.b16 %v6391
      %v7577 = vunpack.c.l.b16 %v6392
      %v7578 = vunpack.c.h.b16 %v6392
      %v7579 = vunpack.c.l.b16 %v6393
      %v7580 = vunpack.c.h.b16 %v6393
      %v7581 = vunpack.c.l.b16 %v6394
      %v7582 = vunpack.c.h.b16 %v6394
      %v7583 = vunpack.c.l.b16 %v6395
      %v7584 = vunpack.c.h.b16 %v6395
      %v7585 = vunpack.c.l.b16 %v6396
      %v7586 = vunpack.c.h.b16 %v6396
      %v7587 = vunpack.c.l.b16 %v6397
      %v7588 = vunpack.c.h.b16 %v6397
      %v7589 = vunpack.c.l.b16 %v6398
      %v7590 = vunpack.c.h.b16 %v6398
      %v7591 = vunpack.c.l.b16 %v6399
      %v7592 = vunpack.c.h.b16 %v6399
      %v7593 = vunpack.c.l.b16 %v6400
      %v7594 = vunpack.c.h.b16 %v6400
      %v7595 = vunpack.c.l.b16 %v6401
      %v7596 = vunpack.c.h.b16 %v6401
      %v7597 = vunpack.c.l.b16 %v6402
      %v7598 = vunpack.c.h.b16 %v6402
      %v7599 = vunpack.c.l.b16 %v6403
      %v7600 = vunpack.c.h.b16 %v6403
      %v7601 = vunpack.c.l.b16 %v6404
      %v7602 = vunpack.c.h.b16 %v6404
      %v7603 = vunpack.c.l.b16 %v6405
      %v7604 = vunpack.c.h.b16 %v6405
      %v7605 = vunpack.c.l.b16 %v6406
      %v7606 = vunpack.c.h.b16 %v6406
      %v7607 = vunpack.c.l.b16 %v6407
      %v7608 = vunpack.c.h.b16 %v6407
      %v7609 = vunpack.c.l.b16 %v6408
      %v7610 = vunpack.c.h.b16 %v6408
      %v7611 = vunpack.c.l.b16 %v6409
      %v7612 = vunpack.c.h.b16 %v6409
      %v7613 = vunpack.c.l.b16 %v6410
      %v7614 = vunpack.c.h.b16 %v6410
      %v7615 = vunpack.c.l.b16 %v6411
      %v7616 = vunpack.c.h.b16 %v6411
      %v7617 = vunpack.c.l.b16 %v6412
      %v7618 = vunpack.c.h.b16 %v6412
      %v7619 = vunpack.c.l.b16 %v6413
      %v7620 = vunpack.c.h.b16 %v6413
      %v7621 = vunpack.c.l.b16 %v6414
      %v7622 = vunpack.c.h.b16 %v6414
      %v7623 = vunpack.c.l.b16 %v6415
      %v7624 = vunpack.c.h.b16 %v6415
      %v7625 = vunpack.c.l.b16 %v6416
      %v7626 = vunpack.c.h.b16 %v6416
      %v7627 = vunpack.c.l.b16 %v6417
      %v7628 = vunpack.c.h.b16 %v6417
      %v7629 = vunpack.c.l.b16 %v6418
      %v7630 = vunpack.c.h.b16 %v6418
      %v7631 = vunpack.c.l.b16 %v6419
      %v7632 = vunpack.c.h.b16 %v6419
      %v7633 = vunpack.c.l.b16 %v6420
      %v7634 = vunpack.c.h.b16 %v6420
      %v7635 = vunpack.c.l.b16 %v6421
      %v7636 = vunpack.c.h.b16 %v6421
      %v7637 = vunpack.c.l.b16 %v6422
      %v7638 = vunpack.c.h.b16 %v6422
      %v7639 = vunpack.c.l.b16 %v6423
      %v7640 = vunpack.c.h.b16 %v6423
      %v7641 = vunpack.c.l.b16 %v6424
      %v7642 = vunpack.c.h.b16 %v6424
      %v7643 = vunpack.c.l.b16 %v6425
      %v7644 = vunpack.c.h.b16 %v6425
      %v7645 = vunpack.c.l.b16 %v6426
      %v7646 = vunpack.c.h.b16 %v6426
      %v7647 = vunpack.c.l.b16 %v6427
      %v7648 = vunpack.c.h.b16 %v6427
      %v7649 = vunpack.c.l.b16 %v6428
      %v7650 = vunpack.c.h.b16 %v6428
      %v7651 = vunpack.c.l.b16 %v6429
      %v7652 = vunpack.c.h.b16 %v6429
      %v7653 = vunpack.c.l.b16 %v6430
      %v7654 = vunpack.c.h.b16 %v6430
      %v7655 = vunpack.c.l.b16 %v6431
      %v7656 = vunpack.c.h.b16 %v6431
      %v7657 = vunpack.c.l.b16 %v6432
      %v7658 = vunpack.c.h.b16 %v6432
      %v7659 = vunpack.c.l.b16 %v6433
      %v7660 = vunpack.c.h.b16 %v6433
      %v7661 = vunpack.c.l.b16 %v6434
      %v7662 = vunpack.c.h.b16 %v6434
      %v7663 = vunpack.c.l.b16 %v6435
      %v7664 = vunpack.c.h.b16 %v6435
      %v7665 = vunpack.c.l.b16 %v6436
      %v7666 = vunpack.c.h.b16 %v6436
      %v7667 = vunpack.c.l.b16 %v6437
      %v7668 = vunpack.c.h.b16 %v6437
      %v7669 = vunpack.c.l.b16 %v6438
      %v7670 = vunpack.c.h.b16 %v6438
      %v7671 = vunpack.c.l.b16 %v6439
      %v7672 = vunpack.c.h.b16 %v6439
      %v7673 = vunpack.c.l.b16 %v6440
      %v7674 = vunpack.c.h.b16 %v6440
      %v7675 = vunpack.c.l.b16 %v6441
      %v7676 = vunpack.c.h.b16 %v6441
      %v7677 = vunpack.c.l.b16 %v6442
      %v7678 = vunpack.c.h.b16 %v6442
      %v7679 = vunpack.c.l.b16 %v6443
      %v7680 = vunpack.c.h.b16 %v6443
      %v7681 = vunpack.c.l.b16 %v6444
      %v7682 = vunpack.c.h.b16 %v6444
      %v7683 = vunpack.c.l.b16 %v6445
      %v7684 = vunpack.c.h.b16 %v6445
      %v7685 = vunpack.c.l.b16 %v6446
      %v7686 = vunpack.c.h.b16 %v6446
      %v7687 = vunpack.c.l.b16 %v6447
      %v7688 = vunpack.c.h.b16 %v6447
      %v7689 = vunpack.c.l.b16 %v6448
      %v7690 = vunpack.c.h.b16 %v6448
      %v7691 = vunpack.c.l.b16 %v6449
      %v7692 = vunpack.c.h.b16 %v6449
      %v7693 = vunpack.c.l.b16 %v6450
      %v7694 = vunpack.c.h.b16 %v6450
      %v7695 = vunpack.c.l.b16 %v6451
      %v7696 = vunpack.c.h.b16 %v6451
      %v7697 = vunpack.c.l.b16 %v6452
      %v7698 = vunpack.c.h.b16 %v6452
      %v7699 = vunpack.c.l.b16 %v6453
      %v7700 = vunpack.c.h.b16 %v6453
      %v7701 = vunpack.c.l.b16 %v6454
      %v7702 = vunpack.c.h.b16 %v6454
      %v7703 = vunpack.c.l.b16 %v6455
      %v7704 = vunpack.c.h.b16 %v6455
      %v7705 = vunpack.c.l.b16 %v6456
      %v7706 = vunpack.c.h.b16 %v6456
      %v7707 = vunpack.c.l.b16 %v6457
      %v7708 = vunpack.c.h.b16 %v6457
      %v7709 = vunpack.c.l.b16 %v6458
      %v7710 = vunpack.c.h.b16 %v6458
      %v7711 = vunpack.c.l.b16 %v6459
      %v7712 = vunpack.c.h.b16 %v6459
      %v7713 = vunpack.c.l.b16 %v6460
      %v7714 = vunpack.c.h.b16 %v6460
      %v7715 = vunpack.c.l.b16 %v6461
      %v7716 = vunpack.c.h.b16 %v6461
      %v7717 = vunpack.c.l.b16 %v6462
      %v7718 = vunpack.c.h.b16 %v6462
      %v7719 = vunpack.c.l.b16 %v6463
      %v7720 = vunpack.c.h.b16 %v6463
      %v7721 = vunpack.c.l.b16 %v6464
      %v7722 = vunpack.c.h.b16 %v6464
      %v7723 = vunpack.c.l.b16 %v6465
      %v7724 = vunpack.c.h.b16 %v6465
      %v7725 = vunpack.c.l.b16 %v6466
      %v7726 = vunpack.c.h.b16 %v6466
      %v7727 = vunpack.c.l.b16 %v6467
      %v7728 = vunpack.c.h.b16 %v6467
      %v7729 = vunpack.c.l.b16 %v6468
      %v7730 = vunpack.c.h.b16 %v6468
      %v7731 = vunpack.c.l.b16 %v6469
      %v7732 = vunpack.c.h.b16 %v6469
      %v7733 = vunpack.c.l.b16 %v6470
      %v7734 = vunpack.c.h.b16 %v6470
      %v7735 = vunpack.c.l.b16 %v6471
      %v7736 = vunpack.c.h.b16 %v6471
      %v7737 = vunpack.c.l.b16 %v6472
      %v7738 = vunpack.c.h.b16 %v6472
      %v7739 = vunpack.c.l.b16 %v6473
      %v7740 = vunpack.c.h.b16 %v6473
      %v7741 = vunpack.c.l.b16 %v6474
      %v7742 = vunpack.c.h.b16 %v6474
      %v7743 = vunpack.c.l.b16 %v6475
      %v7744 = vunpack.c.h.b16 %v6475
      %v7745 = vunpack.c.l.b16 %v6476
      %v7746 = vunpack.c.h.b16 %v6476
      %v7747 = vunpack.c.l.b16 %v6477
      %v7748 = vunpack.c.h.b16 %v6477
      %v7749 = vunpack.c.l.b16 %v6478
      %v7750 = vunpack.c.h.b16 %v6478
      %v7751 = vunpack.c.l.b16 %v6479
      %v7752 = vunpack.c.h.b16 %v6479
      %v7753 = vunpack.c.l.b16 %v6480
      %v7754 = vunpack.c.h.b16 %v6480
      %v7755 = vunpack.c.l.b16 %v6481
      %v7756 = vunpack.c.h.b16 %v6481
      %v7757 = vunpack.c.l.b16 %v6482
      %v7758 = vunpack.c.h.b16 %v6482
      %v7759 = vunpack.c.l.b16 %v6483
      %v7760 = vunpack.c.h.b16 %v6483
      %v7761 = vunpack.c.l.b16 %v6484
      %v7762 = vunpack.c.h.b16 %v6484
      %v7763 = vunpack.c.l.b16 %v6485
      %v7764 = vunpack.c.h.b16 %v6485
      %v7765 = vunpack.c.l.b16 %v6486
      %v7766 = vunpack.c.h.b16 %v6486
      %v7767 = vunpack.c.l.b16 %v6487
      %v7768 = vunpack.c.h.b16 %v6487
      %v7769 = vunpack.c.l.b16 %v6488
      %v7770 = vunpack.c.h.b16 %v6488
      %v7771 = vunpack.c.l.b16 %v6489
      %v7772 = vunpack.c.h.b16 %v6489
      %v7773 = vunpack.c.l.b16 %v6490
      %v7774 = vunpack.c.h.b16 %v6490
      %v7775 = vunpack.c.l.b16 %v6491
      %v7776 = vunpack.c.h.b16 %v6491
      %v7777 = vunpack.c.l.b16 %v6492
      %v7778 = vunpack.c.h.b16 %v6492
      %v7779 = vunpack.c.l.b16 %v6493
      %v7780 = vunpack.c.h.b16 %v6493
      %v7781 = vunpack.c.l.b16 %v6494
      %v7782 = vunpack.c.h.b16 %v6494
      %v7783 = vunpack.c.l.b16 %v6495
      %v7784 = vunpack.c.h.b16 %v6495
      %v7785 = vunpack.c.l.b16 %v6496
      %v7786 = vunpack.c.h.b16 %v6496
      %v7787 = vunpack.c.l.b16 %v6497
      %v7788 = vunpack.c.h.b16 %v6497
      %v7789 = vunpack.c.l.b16 %v6498
      %v7790 = vunpack.c.h.b16 %v6498
      %v7791 = vunpack.c.l.b16 %v6499
      %v7792 = vunpack.c.h.b16 %v6499
      %v7793 = vunpack.c.l.b16 %v6500
      %v7794 = vunpack.c.h.b16 %v6500
      %v7795 = vunpack.c.l.b16 %v6501
      %v7796 = vunpack.c.h.b16 %v6501
      %v7797 = vunpack.c.l.b16 %v6502
      %v7798 = vunpack.c.h.b16 %v6502
      %v7799 = vunpack.c.l.b16 %v6503
      %v7800 = vunpack.c.h.b16 %v6503
      %v7801 = vunpack.c.l.b16 %v6504
      %v7802 = vunpack.c.h.b16 %v6504
      %v7803 = vunpack.c.l.b16 %v6505
      %v7804 = vunpack.c.h.b16 %v6505
      %v7805 = vunpack.c.l.b16 %v6506
      %v7806 = vunpack.c.h.b16 %v6506
      %v7807 = vunpack.c.l.b16 %v6507
      %v7808 = vunpack.c.h.b16 %v6507
      %v7809 = vunpack.c.l.b16 %v6508
      %v7810 = vunpack.c.h.b16 %v6508
      %v7811 = vunpack.c.l.b16 %v6509
      %v7812 = vunpack.c.h.b16 %v6509
      %v7813 = vunpack.c.l.b16 %v6510
      %v7814 = vunpack.c.h.b16 %v6510
      %v7815 = vunpack.c.l.b16 %v6511
      %v7816 = vunpack.c.h.b16 %v6511
      %v7817 = vunpack.c.l.b16 %v6512
      %v7818 = vunpack.c.h.b16 %v6512
      %v7819 = vunpack.c.l.b16 %v6513
      %v7820 = vunpack.c.h.b16 %v6513
      %v7821 = vunpack.c.l.b16 %v6514
      %v7822 = vunpack.c.h.b16 %v6514
      %v7823 = vunpack.c.l.b16 %v6515
      %v7824 = vunpack.c.h.b16 %v6515
      %v7825 = vunpack.c.l.b16 %v6516
      %v7826 = vunpack.c.h.b16 %v6516
      %v7827 = vunpack.c.l.b16 %v6517
      %v7828 = vunpack.c.h.b16 %v6517
      %v7829 = vunpack.c.l.b16 %v6518
      %v7830 = vunpack.c.h.b16 %v6518
      %v7831 = vunpack.c.l.b16 %v6519
      %v7832 = vunpack.c.h.b16 %v6519
      %v7833 = vunpack.c.l.b16 %v6520
      %v7834 = vunpack.c.h.b16 %v6520
      %v7835 = vunpack.c.l.b16 %v6521
      %v7836 = vunpack.c.h.b16 %v6521
      %v7837 = vunpack.c.l.b16 %v6522
      %v7838 = vunpack.c.h.b16 %v6522
      %v7839 = vunpack.c.l.b16 %v6523
      %v7840 = vunpack.c.h.b16 %v6523
      %v7841 = vunpack.c.l.b16 %v6524
      %v7842 = vunpack.c.h.b16 %v6524
      %v7843 = vunpack.c.l.b16 %v6525
      %v7844 = vunpack.c.h.b16 %v6525
      %v7845 = vunpack.c.l.b16 %v6526
      %v7846 = vunpack.c.h.b16 %v6526
      %v7847 = vunpack.c.l.b16 %v6527
      %v7848 = vunpack.c.h.b16 %v6527
      %v7849 = vunpack.c.l.b16 %v6528
      %v7850 = vunpack.c.h.b16 %v6528
      %v7851 = vunpack.c.l.b16 %v6529
      %v7852 = vunpack.c.h.b16 %v6529
      %v7853 = vunpack.c.l.b16 %v6530
      %v7854 = vunpack.c.h.b16 %v6530
      %v7855 = vunpack.c.l.b16 %v6531
      %v7856 = vunpack.c.h.b16 %v6531
      %v7857 = vunpack.c.l.b16 %v6532
      %v7858 = vunpack.c.h.b16 %v6532
      %v7859 = vunpack.c.l.b16 %v6533
      %v7860 = vunpack.c.h.b16 %v6533
      %v7861 = vunpack.c.l.b16 %v6534
      %v7862 = vunpack.c.h.b16 %v6534
      %v7863 = vunpack.c.l.b16 %v6535
      %v7864 = vunpack.c.h.b16 %v6535
      %v7865 = vunpack.c.l.b16 %v6536
      %v7866 = vunpack.c.h.b16 %v6536
      %v7867 = vunpack.c.l.b16 %v6537
      %v7868 = vunpack.c.h.b16 %v6537
      %v7869 = vunpack.c.l.b16 %v6538
      %v7870 = vunpack.c.h.b16 %v6538
      %v7871 = vunpack.c.l.b16 %v6539
      %v7872 = vunpack.c.h.b16 %v6539
      %v7873 = vunpack.c.l.b16 %v6540
      %v7874 = vunpack.c.h.b16 %v6540
      %v7875 = vunpack.c.l.b16 %v6541
      %v7876 = vunpack.c.h.b16 %v6541
      %v7877 = vunpack.c.l.b16 %v6542
      %v7878 = vunpack.c.h.b16 %v6542
      %v7879 = vunpack.c.l.b16 %v6543
      %v7880 = vunpack.c.h.b16 %v6543
      %v7881 = vunpack.c.l.b16 %v6544
      %v7882 = vunpack.c.h.b16 %v6544
      %v7883 = vunpack.c.l.b16 %v6545
      %v7884 = vunpack.c.h.b16 %v6545
      %v7885 = vunpack.c.l.b16 %v6546
      %v7886 = vunpack.c.h.b16 %v6546
      %v7887 = vunpack.c.l.b16 %v6547
      %v7888 = vunpack.c.h.b16 %v6547
      %v7889 = vunpack.c.l.b16 %v6548
      %v7890 = vunpack.c.h.b16 %v6548
      %v7891 = vunpack.c.l.b16 %v6549
      %v7892 = vunpack.c.h.b16 %v6549
      %v7893 = vunpack.c.l.b16 %v6550
      %v7894 = vunpack.c.h.b16 %v6550
      %v7895 = vunpack.c.l.b16 %v6551
      %v7896 = vunpack.c.h.b16 %v6551
      %v7897 = vunpack.c.l.b16 %v6552
      %v7898 = vunpack.c.h.b16 %v6552
      %v7899 = vunpack.c.l.b16 %v6553
      %v7900 = vunpack.c.h.b16 %v6553
      %v7901 = vunpack.c.l.b16 %v6554
      %v7902 = vunpack.c.h.b16 %v6554
      %v7903 = vunpack.c.l.b16 %v6555
      %v7904 = vunpack.c.h.b16 %v6555
      %v7905 = vunpack.c.l.b16 %v6556
      %v7906 = vunpack.c.h.b16 %v6556
      %v7907 = vunpack.c.l.b16 %v6557
      %v7908 = vunpack.c.h.b16 %v6557
      %v7909 = vunpack.c.l.b16 %v6558
      %v7910 = vunpack.c.h.b16 %v6558
      %v7911 = vunpack.c.l.b16 %v6559
      %v7912 = vunpack.c.h.b16 %v6559
      %v7913 = vunpack.c.l.b16 %v6560
      %v7914 = vunpack.c.h.b16 %v6560
      %v7915 = vunpack.c.l.b16 %v6561
      %v7916 = vunpack.c.h.b16 %v6561
      %v7917 = vunpack.c.l.b16 %v6562
      %v7918 = vunpack.c.h.b16 %v6562
      %v7919 = vunpack.c.l.b16 %v6563
      %v7920 = vunpack.c.h.b16 %v6563
      %v7921 = vunpack.c.l.b16 %v6564
      %v7922 = vunpack.c.h.b16 %v6564
      %v7923 = vunpack.c.l.b16 %v6565
      %v7924 = vunpack.c.h.b16 %v6565
      %v7925 = vunpack.c.l.b16 %v6566
      %v7926 = vunpack.c.h.b16 %v6566
      %v7927 = vunpack.c.l.b16 %v6567
      %v7928 = vunpack.c.h.b16 %v6567
      %v7929 = vunpack.c.l.b16 %v6568
      %v7930 = vunpack.c.h.b16 %v6568
      %v7931 = vunpack.c.l.b16 %v6569
      %v7932 = vunpack.c.h.b16 %v6569
      %v7933 = vunpack.c.l.b16 %v6570
      %v7934 = vunpack.c.h.b16 %v6570
      %v7935 = vunpack.c.l.b16 %v6571
      %v7936 = vunpack.c.h.b16 %v6571
      %v7937 = vunpack.c.l.b16 %v6572
      %v7938 = vunpack.c.h.b16 %v6572
      %v7939 = vunpack.c.l.b16 %v6573
      %v7940 = vunpack.c.h.b16 %v6573
      %v7941 = vunpack.c.l.b16 %v6574
      %v7942 = vunpack.c.h.b16 %v6574
      %v7943 = vunpack.c.l.b16 %v6575
      %v7944 = vunpack.c.h.b16 %v6575
      %v7945 = vunpack.c.l.b16 %v6576
      %v7946 = vunpack.c.h.b16 %v6576
      %v7947 = vunpack.c.l.b16 %v6577
      %v7948 = vunpack.c.h.b16 %v6577
      %v7949 = vunpack.c.l.b16 %v6578
      %v7950 = vunpack.c.h.b16 %v6578
      %v7951 = vunpack.c.l.b16 %v6579
      %v7952 = vunpack.c.h.b16 %v6579
      %v7953 = vunpack.c.l.b16 %v6580
      %v7954 = vunpack.c.h.b16 %v6580
      %v7955 = vunpack.c.l.b16 %v6581
      %v7956 = vunpack.c.h.b16 %v6581
      %v7957 = vunpack.c.l.b16 %v6582
      %v7958 = vunpack.c.h.b16 %v6582
      %v7959 = vunpack.c.l.b16 %v6583
      %v7960 = vunpack.c.h.b16 %v6583
      %v7961 = vunpack.c.l.b16 %v6584
      %v7962 = vunpack.c.h.b16 %v6584
      %v7963 = vunpack.c.l.b16 %v6585
      %v7964 = vunpack.c.h.b16 %v6585
      %v7965 = vunpack.c.l.b16 %v6586
      %v7966 = vunpack.c.h.b16 %v6586
      %v7967 = vunpack.c.l.b16 %v6587
      %v7968 = vunpack.c.h.b16 %v6587
      %v7969 = vunpack.c.l.b16 %v6588
      %v7970 = vunpack.c.h.b16 %v6588
      %v7971 = vunpack.c.l.b16 %v6589
      %v7972 = vunpack.c.h.b16 %v6589
      %v7973 = vunpack.c.l.b16 %v6590
      %v7974 = vunpack.c.h.b16 %v6590
      %v7975 = vunpack.c.l.b16 %v6591
      %v7976 = vunpack.c.h.b16 %v6591
      %v7977 = vunpack.c.l.b16 %v6592
      %v7978 = vunpack.c.h.b16 %v6592
      %v7979 = vunpack.c.l.b16 %v6593
      %v7980 = vunpack.c.h.b16 %v6593
      %v7981 = vunpack.c.l.b16 %v6594
      %v7982 = vunpack.c.h.b16 %v6594
      %v7983 = vunpack.c.l.b16 %v6595
      %v7984 = vunpack.c.h.b16 %v6595
      %v7985 = vunpack.c.l.b16 %v6596
      %v7986 = vunpack.c.h.b16 %v6596
      %v7987 = vunpack.c.l.b16 %v6597
      %v7988 = vunpack.c.h.b16 %v6597
      %v7989 = vunpack.c.l.b16 %v6598
      %v7990 = vunpack.c.h.b16 %v6598
      %v7991 = vunpack.c.l.b16 %v6599
      %v7992 = vunpack.c.h.b16 %v6599
      %v7993 = vunpack.c.l.b16 %v6600
      %v7994 = vunpack.c.h.b16 %v6600
      %v7995 = vunpack.c.l.b16 %v6601
      %v7996 = vunpack.c.h.b16 %v6601
      %v7997 = vunpack.c.l.b16 %v6602
      %v7998 = vunpack.c.h.b16 %v6602
      %v7999 = vunpack.c.l.b16 %v6603
      %v8000 = vunpack.c.h.b16 %v6603
      %v8001 = vunpack.c.l.b16 %v6604
      %v8002 = vunpack.c.h.b16 %v6604
      %v8003 = vunpack.c.l.b16 %v6605
      %v8004 = vunpack.c.h.b16 %v6605
      %v8005 = vunpack.c.l.b16 %v6606
      %v8006 = vunpack.c.h.b16 %v6606
      %v8007 = vunpack.c.l.b16 %v6607
      %v8008 = vunpack.c.h.b16 %v6607
      %v8009 = vunpack.c.l.b16 %v6608
      %v8010 = vunpack.c.h.b16 %v6608
      %v8011 = vunpack.c.l.b16 %v6609
      %v8012 = vunpack.c.h.b16 %v6609
      %v8013 = vunpack.c.l.b16 %v6610
      %v8014 = vunpack.c.h.b16 %v6610
      %v8015 = vunpack.c.l.b16 %v6611
      %v8016 = vunpack.c.h.b16 %v6611
      %v8017 = vunpack.c.l.b16 %v6612
      %v8018 = vunpack.c.h.b16 %v6612
      %v8019 = vunpack.c.l.b16 %v6613
      %v8020 = vunpack.c.h.b16 %v6613
      %v8021 = vunpack.c.l.b16 %v6614
      %v8022 = vunpack.c.h.b16 %v6614
      %v8023 = vunpack.c.l.b16 %v6615
      %v8024 = vunpack.c.h.b16 %v6615
      %v8025 = vunpack.c.l.b16 %v6616
      %v8026 = vunpack.c.h.b16 %v6616
      %v8027 = vunpack.c.l.b16 %v6617
      %v8028 = vunpack.c.h.b16 %v6617
      %v8029 = vunpack.c.l.b16 %v6618
      %v8030 = vunpack.c.h.b16 %v6618
      %v8031 = vunpack.c.l.b16 %v6619
      %v8032 = vunpack.c.h.b16 %v6619
      %v8033 = vunpack.c.l.b16 %v6620
      %v8034 = vunpack.c.h.b16 %v6620
      %v8035 = vunpack.c.l.b16 %v6621
      %v8036 = vunpack.c.h.b16 %v6621
      %v8037 = vunpack.c.l.b16 %v6622
      %v8038 = vunpack.c.h.b16 %v6622
      %v8039 = vunpack.c.l.b16 %v6623
      %v8040 = vunpack.c.h.b16 %v6623
      %v8041 = vunpack.c.l.b16 %v6624
      %v8042 = vunpack.c.h.b16 %v6624
      %v8043 = vunpack.c.l.b16 %v6625
      %v8044 = vunpack.c.h.b16 %v6625
      %v8045 = vunpack.c.l.b16 %v6626
      %v8046 = vunpack.c.h.b16 %v6626
      %v8047 = vunpack.c.l.b16 %v6627
      %v8048 = vunpack.c.h.b16 %v6627
      %v8049 = vunpack.c.l.b16 %v6628
      %v8050 = vunpack.c.h.b16 %v6628
      %v8051 = vunpack.c.l.b16 %v6629
      %v8052 = vunpack.c.h.b16 %v6629
      %v8053 = vunpack.c.l.b16 %v6630
      %v8054 = vunpack.c.h.b16 %v6630
      %v8055 = vunpack.c.l.b16 %v6631
      %v8056 = vunpack.c.h.b16 %v6631
      %v8057 = vunpack.c.l.b16 %v6632
      %v8058 = vunpack.c.h.b16 %v6632
      %v8059 = vunpack.c.l.b16 %v6633
      %v8060 = vunpack.c.h.b16 %v6633
      %v8061 = vunpack.c.l.b16 %v6634
      %v8062 = vunpack.c.h.b16 %v6634
      %v8063 = vunpack.c.l.b16 %v6635
      %v8064 = vunpack.c.h.b16 %v6635
      %v8065 = vunpack.c.l.b16 %v6636
      %v8066 = vunpack.c.h.b16 %v6636
      %v8067 = vunpack.c.l.b16 %v6637
      %v8068 = vunpack.c.h.b16 %v6637
      %v8069 = vunpack.c.l.b16 %v6638
      %v8070 = vunpack.c.h.b16 %v6638
      %v8071 = vunpack.c.l.b16 %v6639
      %v8072 = vunpack.c.h.b16 %v6639
      %v8073 = vunpack.c.l.b16 %v6640
      %v8074 = vunpack.c.h.b16 %v6640
      %v8075 = vunpack.c.l.b16 %v6641
      %v8076 = vunpack.c.h.b16 %v6641
      %v8077 = vunpack.c.l.b16 %v6642
      %v8078 = vunpack.c.h.b16 %v6642
      %v8079 = vunpack.c.l.b16 %v6643
      %v8080 = vunpack.c.h.b16 %v6643
      %v8081 = vunpack.c.l.b16 %v6644
      %v8082 = vunpack.c.h.b16 %v6644
      %v8083 = vunpack.c.l.b16 %v6645
      %v8084 = vunpack.c.h.b16 %v6645
      %v8085 = vunpack.c.l.b16 %v6646
      %v8086 = vunpack.c.h.b16 %v6646
      %v8087 = vunpack.c.l.b16 %v6647
      %v8088 = vunpack.c.h.b16 %v6647
      %v8089 = vunpack.c.l.b16 %v6648
      %v8090 = vunpack.c.h.b16 %v6648
      %v8091 = vunpack.c.l.b16 %v6649
      %v8092 = vunpack.c.h.b16 %v6649
      %v8093 = vunpack.c.l.b16 %v6650
      %v8094 = vunpack.c.h.b16 %v6650
      %v8095 = vunpack.c.l.b16 %v6651
      %v8096 = vunpack.c.h.b16 %v6651
      %v8097 = vunpack.c.l.b16 %v6652
      %v8098 = vunpack.c.h.b16 %v6652
      %v8099 = vunpack.c.l.b16 %v6653
      %v8100 = vunpack.c.h.b16 %v6653
      %v8101 = vunpack.c.l.b16 %v6654
      %v8102 = vunpack.c.h.b16 %v6654
      %v8103 = vunpack.c.l.b16 %v6655
      %v8104 = vunpack.c.h.b16 %v6655
      %v8105 = vunpack.c.l.b16 %v6656
      %v8106 = vunpack.c.h.b16 %v6656
      %v8107 = vunpack.c.l.b16 %v6657
      %v8108 = vunpack.c.h.b16 %v6657
      %v8109 = vunpack.c.l.b16 %v6658
      %v8110 = vunpack.c.h.b16 %v6658
      %v8111 = vunpack.c.l.b16 %v6659
      %v8112 = vunpack.c.h.b16 %v6659
      %v8113 = vunpack.c.l.b16 %v6660
      %v8114 = vunpack.c.h.b16 %v6660
      %v8115 = vunpack.c.l.b16 %v6661
      %v8116 = vunpack.c.h.b16 %v6661
      %v8117 = vunpack.c.l.b16 %v6662
      %v8118 = vunpack.c.h.b16 %v6662
      %v8119 = vunpack.c.l.b16 %v6663
      %v8120 = vunpack.c.h.b16 %v6663
      %v8121 = vunpack.c.l.b16 %v6664
      %v8122 = vunpack.c.h.b16 %v6664
      %v8123 = vunpack.c.l.b16 %v6665
      %v8124 = vunpack.c.h.b16 %v6665
      %v8125 = vunpack.c.l.b16 %v6666
      %v8126 = vunpack.c.h.b16 %v6666
      %v8127 = vunpack.c.l.b16 %v6667
      %v8128 = vunpack.c.h.b16 %v6667
      %v8129 = vunpack.c.l.b16 %v6668
      %v8130 = vunpack.c.h.b16 %v6668
      %v8131 = vunpack.c.l.b16 %v6669
      %v8132 = vunpack.c.h.b16 %v6669
      %v8133 = vunpack.c.l.b16 %v6670
      %v8134 = vunpack.c.h.b16 %v6670
      %v8135 = vunpack.c.l.b16 %v6671
      %v8136 = vunpack.c.h.b16 %v6671
      %v8137 = vunpack.c.l.b16 %v6672
      %v8138 = vunpack.c.h.b16 %v6672
      %v8139 = vunpack.c.l.b16 %v6673
      %v8140 = vunpack.c.h.b16 %v6673
      %v8141 = vunpack.c.l.b16 %v6674
      %v8142 = vunpack.c.h.b16 %v6674
      %v8143 = vunpack.c.l.b16 %v6675
      %v8144 = vunpack.c.h.b16 %v6675
      %v8145 = vunpack.c.l.b16 %v6676
      %v8146 = vunpack.c.h.b16 %v6676
      %v8147 = vunpack.c.l.b16 %v6677
      %v8148 = vunpack.c.h.b16 %v6677
      %v8149 = vunpack.c.l.b16 %v6678
      %v8150 = vunpack.c.h.b16 %v6678
      %v8151 = vunpack.c.l.b16 %v6679
      %v8152 = vunpack.c.h.b16 %v6679
      %v8153 = vunpack.c.l.b16 %v6680
      %v8154 = vunpack.c.h.b16 %v6680
      %v8155 = vunpack.c.l.b16 %v6681
      %v8156 = vunpack.c.h.b16 %v6681
      %v8157 = vunpack.c.l.b16 %v6682
      %v8158 = vunpack.c.h.b16 %v6682
      %v8159 = vunpack.c.l.b16 %v6683
      %v8160 = vunpack.c.h.b16 %v6683
      %v8161 = vunpack.c.l.b16 %v6684
      %v8162 = vunpack.c.h.b16 %v6684
      %v8163 = vunpack.c.l.b16 %v6685
      %v8164 = vunpack.c.h.b16 %v6685
      %v8165 = vunpack.c.l.b16 %v6686
      %v8166 = vunpack.c.h.b16 %v6686
      %v8167 = vunpack.c.l.b16 %v6687
      %v8168 = vunpack.c.h.b16 %v6687
      %v8169 = vunpack.c.l.b16 %v6688
      %v8170 = vunpack.c.h.b16 %v6688
      %v8171 = vunpack.c.l.b16 %v6689
      %v8172 = vunpack.c.h.b16 %v6689
      %v8173 = vunpack.c.l.b16 %v6690
      %v8174 = vunpack.c.h.b16 %v6690
      %v8175 = vunpack.c.l.b16 %v6691
      %v8176 = vunpack.c.h.b16 %v6691
      %v8177 = vunpack.c.l.b16 %v6692
      %v8178 = vunpack.c.h.b16 %v6692
      %v8179 = vunpack.c.l.b16 %v6693
      %v8180 = vunpack.c.h.b16 %v6693
      %v8181 = vunpack.c.l.b16 %v6694
      %v8182 = vunpack.c.h.b16 %v6694
      %v8183 = vunpack.c.l.b16 %v6695
      %v8184 = vunpack.c.h.b16 %v6695
      %v8185 = vunpack.c.l.b16 %v6696
      %v8186 = vunpack.c.h.b16 %v6696
      %v8187 = vunpack.c.l.b16 %v6697
      %v8188 = vunpack.c.h.b16 %v6697
      %v8189 = vunpack.c.l.b16 %v6698
      %v8190 = vunpack.c.h.b16 %v6698
      %v8191 = vunpack.c.l.b16 %v6699
      %v8192 = vunpack.c.h.b16 %v6699
      %v8193 = vunpack.c.l.b16 %v6700
      %v8194 = vunpack.c.h.b16 %v6700
      %v8195 = vunpack.c.l.b16 %v6701
      %v8196 = vunpack.c.h.b16 %v6701
      %v8197 = vunpack.c.l.b16 %v6702
      %v8198 = vunpack.c.h.b16 %v6702
      %v8199 = vunpack.c.l.b16 %v6703
      %v8200 = vunpack.c.h.b16 %v6703
      %v8201 = vunpack.c.l.b16 %v6704
      %v8202 = vunpack.c.h.b16 %v6704
      %v8203 = vunpack.c.l.b16 %v6705
      %v8204 = vunpack.c.h.b16 %v6705
      %v8205 = vunpack.c.l.b16 %v6706
      %v8206 = vunpack.c.h.b16 %v6706
      %v8207 = vunpack.c.l.b16 %v6707
      %v8208 = vunpack.c.h.b16 %v6707
      %v8209 = vunpack.c.l.b16 %v6708
      %v8210 = vunpack.c.h.b16 %v6708
      %v8211 = vunpack.c.l.b16 %v6709
      %v8212 = vunpack.c.h.b16 %v6709
      %v8213 = vunpack.c.l.b16 %v6710
      %v8214 = vunpack.c.h.b16 %v6710
      %v8215 = vunpack.c.l.b16 %v6711
      %v8216 = vunpack.c.h.b16 %v6711
      %v8217 = vunpack.c.l.b16 %v6712
      %v8218 = vunpack.c.h.b16 %v6712
      %v8219 = vunpack.c.l.b16 %v6713
      %v8220 = vunpack.c.h.b16 %v6713
      %v8221 = vunpack.c.l.b16 %v6714
      %v8222 = vunpack.c.h.b16 %v6714
      %v8223 = vunpack.c.l.b16 %v6715
      %v8224 = vunpack.c.h.b16 %v6715
      %v8225 = vunpack.c.l.b16 %v6716
      %v8226 = vunpack.c.h.b16 %v6716
      %v8227 = vunpack.c.l.b16 %v6717
      %v8228 = vunpack.c.h.b16 %v6717
      %v8229 = vunpack.c.l.b16 %v6718
      %v8230 = vunpack.c.h.b16 %v6718
      %v8231 = vunpack.c.l.b16 %v6719
      %v8232 = vunpack.c.h.b16 %v6719
      %v8233 = vunpack.c.l.b16 %v6720
      %v8234 = vunpack.c.h.b16 %v6720
      %v8235 = vunpack.c.l.b16 %v6721
      %v8236 = vunpack.c.h.b16 %v6721
      %v8237 = vunpack.c.l.b16 %v6722
      %v8238 = vunpack.c.h.b16 %v6722
      %v8239 = vunpack.c.l.b16 %v6723
      %v8240 = vunpack.c.h.b16 %v6723
      %v8241 = vunpack.c.l.b16 %v6724
      %v8242 = vunpack.c.h.b16 %v6724
      %v8243 = vunpack.c.l.b16 %v6725
      %v8244 = vunpack.c.h.b16 %v6725
      %v8245 = vunpack.c.l.b16 %v6726
      %v8246 = vunpack.c.h.b16 %v6726
      %v8247 = vunpack.c.l.b16 %v6727
      %v8248 = vunpack.c.h.b16 %v6727
      %v8249 = vunpack.c.l.b16 %v6728
      %v8250 = vunpack.c.h.b16 %v6728
      %v8251 = vunpack.c.l.b16 %v6729
      %v8252 = vunpack.c.h.b16 %v6729
      %v8253 = vunpack.c.l.b16 %v6730
      %v8254 = vunpack.c.h.b16 %v6730
      %v8255 = vunpack.c.l.b16 %v6731
      %v8256 = vunpack.c.h.b16 %v6731
      %v8257 = vunpack.c.l.b16 %v6732
      %v8258 = vunpack.c.h.b16 %v6732
      %v8259 = vunpack.c.l.b16 %v6733
      %v8260 = vunpack.c.h.b16 %v6733
      %v8261 = vunpack.c.l.b16 %v6734
      %v8262 = vunpack.c.h.b16 %v6734
      %v8263 = vunpack.c.l.b16 %v6735
      %v8264 = vunpack.c.h.b16 %v6735
      %v8265 = vunpack.c.l.b16 %v6736
      %v8266 = vunpack.c.h.b16 %v6736
      %v8267 = vunpack.c.l.b16 %v6737
      %v8268 = vunpack.c.h.b16 %v6737
      %v8269 = vunpack.c.l.b16 %v6738
      %v8270 = vunpack.c.h.b16 %v6738
      %v8271 = vunpack.c.l.b16 %v6739
      %v8272 = vunpack.c.h.b16 %v6739
      %v8273 = vunpack.c.l.b16 %v6740
      %v8274 = vunpack.c.h.b16 %v6740
      %v8275 = vunpack.c.l.b16 %v6741
      %v8276 = vunpack.c.h.b16 %v6741
      %v8277 = vunpack.c.l.b16 %v6742
      %v8278 = vunpack.c.h.b16 %v6742
      %v8279 = vunpack.c.l.b16 %v6743
      %v8280 = vunpack.c.h.b16 %v6743
      %v8281 = vunpack.c.l.b16 %v6744
      %v8282 = vunpack.c.h.b16 %v6744
      %v8283 = vunpack.c.l.b16 %v6745
      %v8284 = vunpack.c.h.b16 %v6745
      %v8285 = vunpack.c.l.b16 %v6746
      %v8286 = vunpack.c.h.b16 %v6746
      %v8287 = vunpack.c.l.b16 %v6747
      %v8288 = vunpack.c.h.b16 %v6747
      %v8289 = vunpack.c.l.b16 %v6748
      %v8290 = vunpack.c.h.b16 %v6748
      %v8291 = vunpack.c.l.b16 %v6749
      %v8292 = vunpack.c.h.b16 %v6749
      %v8293 = vunpack.c.l.b16 %v6750
      %v8294 = vunpack.c.h.b16 %v6750
      %v8295 = vunpack.c.l.b16 %v6751
      %v8296 = vunpack.c.h.b16 %v6751
      %v8297 = vunpack.c.l.b16 %v6752
      %v8298 = vunpack.c.h.b16 %v6752
      %v8299 = vunpack.c.l.b16 %v6753
      %v8300 = vunpack.c.h.b16 %v6753
      %v8301 = vunpack.c.l.b16 %v6754
      %v8302 = vunpack.c.h.b16 %v6754
      %v8303 = vunpack.c.l.b16 %v6755
      %v8304 = vunpack.c.h.b16 %v6755
      %v8305 = vunpack.c.l.b16 %v6756
      %v8306 = vunpack.c.h.b16 %v6756
      %v8307 = vunpack.c.l.b16 %v6757
      %v8308 = vunpack.c.h.b16 %v6757
      %v8309 = vunpack.c.l.b16 %v6758
      %v8310 = vunpack.c.h.b16 %v6758
      %v8311 = vunpack.c.l.b16 %v6759
      %v8312 = vunpack.c.h.b16 %v6759
      %v8313 = vunpack.c.l.b16 %v6760
      %v8314 = vunpack.c.h.b16 %v6760
      %v8315 = vunpack.c.l.b16 %v6761
      %v8316 = vunpack.c.h.b16 %v6761
      %v8317 = vunpack.c.l.b16 %v6762
      %v8318 = vunpack.c.h.b16 %v6762
      %v8319 = vunpack.c.l.b16 %v6763
      %v8320 = vunpack.c.h.b16 %v6763
      %v8321 = vunpack.c.l.b16 %v6764
      %v8322 = vunpack.c.h.b16 %v6764
      %v8323 = vunpack.c.l.b16 %v6765
      %v8324 = vunpack.c.h.b16 %v6765
      %v8325 = vunpack.c.l.b16 %v6766
      %v8326 = vunpack.c.h.b16 %v6766
      %v8327 = vunpack.c.l.b16 %v6767
      %v8328 = vunpack.c.h.b16 %v6767
      %v8329 = vunpack.c.l.b16 %v6768
      %v8330 = vunpack.c.h.b16 %v6768
      %v8331 = vunpack.c.l.b16 %v6769
      %v8332 = vunpack.c.h.b16 %v6769
      %v8333 = vunpack.c.l.b16 %v6770
      %v8334 = vunpack.c.h.b16 %v6770
      %v8335 = vunpack.c.l.b16 %v6771
      %v8336 = vunpack.c.h.b16 %v6771
      %v8337 = vunpack.c.l.b16 %v6772
      %v8338 = vunpack.c.h.b16 %v6772
      %v8339 = vunpack.c.l.b16 %v6773
      %v8340 = vunpack.c.h.b16 %v6773
      %v8341 = vunpack.c.l.b16 %v6774
      %v8342 = vunpack.c.h.b16 %v6774
      %v8343 = vunpack.c.l.b16 %v6775
      %v8344 = vunpack.c.h.b16 %v6775
      %v8345 = vunpack.c.l.b16 %v6776
      %v8346 = vunpack.c.h.b16 %v6776
      %v8347 = vunpack.c.l.b16 %v6777
      %v8348 = vunpack.c.h.b16 %v6777
      %v8349 = vunpack.c.l.b16 %v6778
      %v8350 = vunpack.c.h.b16 %v6778
      %v8351 = vunpack.c.l.b16 %v6779
      %v8352 = vunpack.c.h.b16 %v6779
      %v8353 = vunpack.c.l.b16 %v6780
      %v8354 = vunpack.c.h.b16 %v6780
      %v8355 = vunpack.c.l.b16 %v6781
      %v8356 = vunpack.c.h.b16 %v6781
      %v8357 = vunpack.c.l.b16 %v6782
      %v8358 = vunpack.c.h.b16 %v6782
      %v8359 = vunpack.c.l.b16 %v6783
      %v8360 = vunpack.c.h.b16 %v6783
      %v8361 = vunpack.c.l.b16 %v6784
      %v8362 = vunpack.c.h.b16 %v6784
      %v8363 = vpack.c.b16 %v7347, %v7339
      %v8364 = vpack.c.b16 %v7348, %v7340
      %v8365 = vpack.c.b16 %v7349, %v7341
      %v8366 = vpack.c.b16 %v7350, %v7342
      %v8367 = vpack.c.b16 %v7351, %v7343
      %v8368 = vpack.c.b16 %v7352, %v7344
      %v8369 = vpack.c.b16 %v7353, %v7345
      %v8370 = vpack.c.b16 %v7354, %v7346
      %v8371 = vpack.c.b16 %v7363, %v7355
      %v8372 = vpack.c.b16 %v7364, %v7356
      %v8373 = vpack.c.b16 %v7365, %v7357
      %v8374 = vpack.c.b16 %v7366, %v7358
      %v8375 = vpack.c.b16 %v7367, %v7359
      %v8376 = vpack.c.b16 %v7368, %v7360
      %v8377 = vpack.c.b16 %v7369, %v7361
      %v8378 = vpack.c.b16 %v7370, %v7362
      %v8379 = vpack.c.b16 %v7379, %v7371
      %v8380 = vpack.c.b16 %v7380, %v7372
      %v8381 = vpack.c.b16 %v7381, %v7373
      %v8382 = vpack.c.b16 %v7382, %v7374
      %v8383 = vpack.c.b16 %v7383, %v7375
      %v8384 = vpack.c.b16 %v7384, %v7376
      %v8385 = vpack.c.b16 %v7385, %v7377
      %v8386 = vpack.c.b16 %v7386, %v7378
      %v8387 = vpack.c.b16 %v7395, %v7387
      %v8388 = vpack.c.b16 %v7396, %v7388
      %v8389 = vpack.c.b16 %v7397, %v7389
      %v8390 = vpack.c.b16 %v7398, %v7390
      %v8391 = vpack.c.b16 %v7399, %v7391
      %v8392 = vpack.c.b16 %v7400, %v7392
      %v8393 = vpack.c.b16 %v7401, %v7393
      %v8394 = vpack.c.b16 %v7402, %v7394
      %v8395 = vpack.c.b16 %v7411, %v7403
      %v8396 = vpack.c.b16 %v7412, %v7404
      %v8397 = vpack.c.b16 %v7413, %v7405
      %v8398 = vpack.c.b16 %v7414, %v7406
      %v8399 = vpack.c.b16 %v7415, %v7407
      %v8400 = vpack.c.b16 %v7416, %v7408
      %v8401 = vpack.c.b16 %v7417, %v7409
      %v8402 = vpack.c.b16 %v7418, %v7410
      %v8403 = vpack.c.b16 %v7427, %v7419
      %v8404 = vpack.c.b16 %v7428, %v7420
      %v8405 = vpack.c.b16 %v7429, %v7421
      %v8406 = vpack.c.b16 %v7430, %v7422
      %v8407 = vpack.c.b16 %v7431, %v7423
      %v8408 = vpack.c.b16 %v7432, %v7424
      %v8409 = vpack.c.b16 %v7433, %v7425
      %v8410 = vpack.c.b16 %v7434, %v7426
      %v8411 = vpack.c.b16 %v7443, %v7435
      %v8412 = vpack.c.b16 %v7444, %v7436
      %v8413 = vpack.c.b16 %v7445, %v7437
      %v8414 = vpack.c.b16 %v7446, %v7438
      %v8415 = vpack.c.b16 %v7447, %v7439
      %v8416 = vpack.c.b16 %v7448, %v7440
      %v8417 = vpack.c.b16 %v7449, %v7441
      %v8418 = vpack.c.b16 %v7450, %v7442
      %v8419 = vpack.c.b16 %v7459, %v7451
      %v8420 = vpack.c.b16 %v7460, %v7452
      %v8421 = vpack.c.b16 %v7461, %v7453
      %v8422 = vpack.c.b16 %v7462, %v7454
      %v8423 = vpack.c.b16 %v7463, %v7455
      %v8424 = vpack.c.b16 %v7464, %v7456
      %v8425 = vpack.c.b16 %v7465, %v7457
      %v8426 = vpack.c.b16 %v7466, %v7458
      %v8427 = vpack.c.b16 %v7475, %v7467
      %v8428 = vpack.c.b16 %v7476, %v7468
      %v8429 = vpack.c.b16 %v7477, %v7469
      %v8430 = vpack.c.b16 %v7478, %v7470
      %v8431 = vpack.c.b16 %v7479, %v7471
      %v8432 = vpack.c.b16 %v7480, %v7472
      %v8433 = vpack.c.b16 %v7481, %v7473
      %v8434 = vpack.c.b16 %v7482, %v7474
      %v8435 = vpack.c.b16 %v7491, %v7483
      %v8436 = vpack.c.b16 %v7492, %v7484
      %v8437 = vpack.c.b16 %v7493, %v7485
      %v8438 = vpack.c.b16 %v7494, %v7486
      %v8439 = vpack.c.b16 %v7495, %v7487
      %v8440 = vpack.c.b16 %v7496, %v7488
      %v8441 = vpack.c.b16 %v7497, %v7489
      %v8442 = vpack.c.b16 %v7498, %v7490
      %v8443 = vpack.c.b16 %v7507, %v7499
      %v8444 = vpack.c.b16 %v7508, %v7500
      %v8445 = vpack.c.b16 %v7509, %v7501
      %v8446 = vpack.c.b16 %v7510, %v7502
      %v8447 = vpack.c.b16 %v7511, %v7503
      %v8448 = vpack.c.b16 %v7512, %v7504
      %v8449 = vpack.c.b16 %v7513, %v7505
      %v8450 = vpack.c.b16 %v7514, %v7506
      %v8451 = vpack.c.b16 %v7523, %v7515
      %v8452 = vpack.c.b16 %v7524, %v7516
      %v8453 = vpack.c.b16 %v7525, %v7517
      %v8454 = vpack.c.b16 %v7526, %v7518
      %v8455 = vpack.c.b16 %v7527, %v7519
      %v8456 = vpack.c.b16 %v7528, %v7520
      %v8457 = vpack.c.b16 %v7529, %v7521
      %v8458 = vpack.c.b16 %v7530, %v7522
      %v8459 = vpack.c.b16 %v7539, %v7531
      %v8460 = vpack.c.b16 %v7540, %v7532
      %v8461 = vpack.c.b16 %v7541, %v7533
      %v8462 = vpack.c.b16 %v7542, %v7534
      %v8463 = vpack.c.b16 %v7543, %v7535
      %v8464 = vpack.c.b16 %v7544, %v7536
      %v8465 = vpack.c.b16 %v7545, %v7537
      %v8466 = vpack.c.b16 %v7546, %v7538
      %v8467 = vpack.c.b16 %v7555, %v7547
      %v8468 = vpack.c.b16 %v7556, %v7548
      %v8469 = vpack.c.b16 %v7557, %v7549
      %v8470 = vpack.c.b16 %v7558, %v7550
      %v8471 = vpack.c.b16 %v7559, %v7551
      %v8472 = vpack.c.b16 %v7560, %v7552
      %v8473 = vpack.c.b16 %v7561, %v7553
      %v8474 = vpack.c.b16 %v7562, %v7554
      %v8475 = vpack.c.b16 %v7571, %v7563
      %v8476 = vpack.c.b16 %v7572, %v7564
      %v8477 = vpack.c.b16 %v7573, %v7565
      %v8478 = vpack.c.b16 %v7574, %v7566
      %v8479 = vpack.c.b16 %v7575, %v7567
      %v8480 = vpack.c.b16 %v7576, %v7568
      %v8481 = vpack.c.b16 %v7577, %v7569
      %v8482 = vpack.c.b16 %v7578, %v7570
      %v8483 = vpack.c.b16 %v7587, %v7579
      %v8484 = vpack.c.b16 %v7588, %v7580
      %v8485 = vpack.c.b16 %v7589, %v7581
      %v8486 = vpack.c.b16 %v7590, %v7582
      %v8487 = vpack.c.b16 %v7591, %v7583
      %v8488 = vpack.c.b16 %v7592, %v7584
      %v8489 = vpack.c.b16 %v7593, %v7585
      %v8490 = vpack.c.b16 %v7594, %v7586
      %v8491 = vpack.c.b16 %v7603, %v7595
      %v8492 = vpack.c.b16 %v7604, %v7596
      %v8493 = vpack.c.b16 %v7605, %v7597
      %v8494 = vpack.c.b16 %v7606, %v7598
      %v8495 = vpack.c.b16 %v7607, %v7599
      %v8496 = vpack.c.b16 %v7608, %v7600
      %v8497 = vpack.c.b16 %v7609, %v7601
      %v8498 = vpack.c.b16 %v7610, %v7602
      %v8499 = vpack.c.b16 %v7619, %v7611
      %v8500 = vpack.c.b16 %v7620, %v7612
      %v8501 = vpack.c.b16 %v7621, %v7613
      %v8502 = vpack.c.b16 %v7622, %v7614
      %v8503 = vpack.c.b16 %v7623, %v7615
      %v8504 = vpack.c.b16 %v7624, %v7616
      %v8505 = vpack.c.b16 %v7625, %v7617
      %v8506 = vpack.c.b16 %v7626, %v7618
      %v8507 = vpack.c.b16 %v7635, %v7627
      %v8508 = vpack.c.b16 %v7636, %v7628
      %v8509 = vpack.c.b16 %v7637, %v7629
      %v8510 = vpack.c.b16 %v7638, %v7630
      %v8511 = vpack.c.b16 %v7639, %v7631
      %v8512 = vpack.c.b16 %v7640, %v7632
      %v8513 = vpack.c.b16 %v7641, %v7633
      %v8514 = vpack.c.b16 %v7642, %v7634
      %v8515 = vpack.c.b16 %v7651, %v7643
      %v8516 = vpack.c.b16 %v7652, %v7644
      %v8517 = vpack.c.b16 %v7653, %v7645
      %v8518 = vpack.c.b16 %v7654, %v7646
      %v8519 = vpack.c.b16 %v7655, %v7647
      %v8520 = vpack.c.b16 %v7656, %v7648
      %v8521 = vpack.c.b16 %v7657, %v7649
      %v8522 = vpack.c.b16 %v7658, %v7650
      %v8523 = vpack.c.b16 %v7667, %v7659
      %v8524 = vpack.c.b16 %v7668, %v7660
      %v8525 = vpack.c.b16 %v7669, %v7661
      %v8526 = vpack.c.b16 %v7670, %v7662
      %v8527 = vpack.c.b16 %v7671, %v7663
      %v8528 = vpack.c.b16 %v7672, %v7664
      %v8529 = vpack.c.b16 %v7673, %v7665
      %v8530 = vpack.c.b16 %v7674, %v7666
      %v8531 = vpack.c.b16 %v7683, %v7675
      %v8532 = vpack.c.b16 %v7684, %v7676
      %v8533 = vpack.c.b16 %v7685, %v7677
      %v8534 = vpack.c.b16 %v7686, %v7678
      %v8535 = vpack.c.b16 %v7687, %v7679
      %v8536 = vpack.c.b16 %v7688, %v7680
      %v8537 = vpack.c.b16 %v7689, %v7681
      %v8538 = vpack.c.b16 %v7690, %v7682
      %v8539 = vpack.c.b16 %v7699, %v7691
      %v8540 = vpack.c.b16 %v7700, %v7692
      %v8541 = vpack.c.b16 %v7701, %v7693
      %v8542 = vpack.c.b16 %v7702, %v7694
      %v8543 = vpack.c.b16 %v7703, %v7695
      %v8544 = vpack.c.b16 %v7704, %v7696
      %v8545 = vpack.c.b16 %v7705, %v7697
      %v8546 = vpack.c.b16 %v7706, %v7698
      %v8547 = vpack.c.b16 %v7715, %v7707
      %v8548 = vpack.c.b16 %v7716, %v7708
      %v8549 = vpack.c.b16 %v7717, %v7709
      %v8550 = vpack.c.b16 %v7718, %v7710
      %v8551 = vpack.c.b16 %v7719, %v7711
      %v8552 = vpack.c.b16 %v7720, %v7712
      %v8553 = vpack.c.b16 %v7721, %v7713
      %v8554 = vpack.c.b16 %v7722, %v7714
      %v8555 = vpack.c.b16 %v7731, %v7723
      %v8556 = vpack.c.b16 %v7732, %v7724
      %v8557 = vpack.c.b16 %v7733, %v7725
      %v8558 = vpack.c.b16 %v7734, %v7726
      %v8559 = vpack.c.b16 %v7735, %v7727
      %v8560 = vpack.c.b16 %v7736, %v7728
      %v8561 = vpack.c.b16 %v7737, %v7729
      %v8562 = vpack.c.b16 %v7738, %v7730
      %v8563 = vpack.c.b16 %v7747, %v7739
      %v8564 = vpack.c.b16 %v7748, %v7740
      %v8565 = vpack.c.b16 %v7749, %v7741
      %v8566 = vpack.c.b16 %v7750, %v7742
      %v8567 = vpack.c.b16 %v7751, %v7743
      %v8568 = vpack.c.b16 %v7752, %v7744
      %v8569 = vpack.c.b16 %v7753, %v7745
      %v8570 = vpack.c.b16 %v7754, %v7746
      %v8571 = vpack.c.b16 %v7763, %v7755
      %v8572 = vpack.c.b16 %v7764, %v7756
      %v8573 = vpack.c.b16 %v7765, %v7757
      %v8574 = vpack.c.b16 %v7766, %v7758
      %v8575 = vpack.c.b16 %v7767, %v7759
      %v8576 = vpack.c.b16 %v7768, %v7760
      %v8577 = vpack.c.b16 %v7769, %v7761
      %v8578 = vpack.c.b16 %v7770, %v7762
      %v8579 = vpack.c.b16 %v7779, %v7771
      %v8580 = vpack.c.b16 %v7780, %v7772
      %v8581 = vpack.c.b16 %v7781, %v7773
      %v8582 = vpack.c.b16 %v7782, %v7774
      %v8583 = vpack.c.b16 %v7783, %v7775
      %v8584 = vpack.c.b16 %v7784, %v7776
      %v8585 = vpack.c.b16 %v7785, %v7777
      %v8586 = vpack.c.b16 %v7786, %v7778
      %v8587 = vpack.c.b16 %v7795, %v7787
      %v8588 = vpack.c.b16 %v7796, %v7788
      %v8589 = vpack.c.b16 %v7797, %v7789
      %v8590 = vpack.c.b16 %v7798, %v7790
      %v8591 = vpack.c.b16 %v7799, %v7791
      %v8592 = vpack.c.b16 %v7800, %v7792
      %v8593 = vpack.c.b16 %v7801, %v7793
      %v8594 = vpack.c.b16 %v7802, %v7794
      %v8595 = vpack.c.b16 %v7811, %v7803
      %v8596 = vpack.c.b16 %v7812, %v7804
      %v8597 = vpack.c.b16 %v7813, %v7805
      %v8598 = vpack.c.b16 %v7814, %v7806
      %v8599 = vpack.c.b16 %v7815, %v7807
      %v8600 = vpack.c.b16 %v7816, %v7808
      %v8601 = vpack.c.b16 %v7817, %v7809
      %v8602 = vpack.c.b16 %v7818, %v7810
      %v8603 = vpack.c.b16 %v7827, %v7819
      %v8604 = vpack.c.b16 %v7828, %v7820
      %v8605 = vpack.c.b16 %v7829, %v7821
      %v8606 = vpack.c.b16 %v7830, %v7822
      %v8607 = vpack.c.b16 %v7831, %v7823
      %v8608 = vpack.c.b16 %v7832, %v7824
      %v8609 = vpack.c.b16 %v7833, %v7825
      %v8610 = vpack.c.b16 %v7834, %v7826
      %v8611 = vpack.c.b16 %v7843, %v7835
      %v8612 = vpack.c.b16 %v7844, %v7836
      %v8613 = vpack.c.b16 %v7845, %v7837
      %v8614 = vpack.c.b16 %v7846, %v7838
      %v8615 = vpack.c.b16 %v7847, %v7839
      %v8616 = vpack.c.b16 %v7848, %v7840
      %v8617 = vpack.c.b16 %v7849, %v7841
      %v8618 = vpack.c.b16 %v7850, %v7842
      %v8619 = vpack.c.b16 %v7859, %v7851
      %v8620 = vpack.c.b16 %v7860, %v7852
      %v8621 = vpack.c.b16 %v7861, %v7853
      %v8622 = vpack.c.b16 %v7862, %v7854
      %v8623 = vpack.c.b16 %v7863, %v7855
      %v8624 = vpack.c.b16 %v7864, %v7856
      %v8625 = vpack.c.b16 %v7865, %v7857
      %v8626 = vpack.c.b16 %v7866, %v7858
      %v8627 = vpack.c.b16 %v7875, %v7867
      %v8628 = vpack.c.b16 %v7876, %v7868
      %v8629 = vpack.c.b16 %v7877, %v7869
      %v8630 = vpack.c.b16 %v7878, %v7870
      %v8631 = vpack.c.b16 %v7879, %v7871
      %v8632 = vpack.c.b16 %v7880, %v7872
      %v8633 = vpack.c.b16 %v7881, %v7873
      %v8634 = vpack.c.b16 %v7882, %v7874
      %v8635 = vpack.c.b16 %v7891, %v7883
      %v8636 = vpack.c.b16 %v7892, %v7884
      %v8637 = vpack.c.b16 %v7893, %v7885
      %v8638 = vpack.c.b16 %v7894, %v7886
      %v8639 = vpack.c.b16 %v7895, %v7887
      %v8640 = vpack.c.b16 %v7896, %v7888
      %v8641 = vpack.c.b16 %v7897, %v7889
      %v8642 = vpack.c.b16 %v7898, %v7890
      %v8643 = vpack.c.b16 %v7907, %v7899
      %v8644 = vpack.c.b16 %v7908, %v7900
      %v8645 = vpack.c.b16 %v7909, %v7901
      %v8646 = vpack.c.b16 %v7910, %v7902
      %v8647 = vpack.c.b16 %v7911, %v7903
      %v8648 = vpack.c.b16 %v7912, %v7904
      %v8649 = vpack.c.b16 %v7913, %v7905
      %v8650 = vpack.c.b16 %v7914, %v7906
      %v8651 = vpack.c.b16 %v7923, %v7915
      %v8652 = vpack.c.b16 %v7924, %v7916
      %v8653 = vpack.c.b16 %v7925, %v7917
      %v8654 = vpack.c.b16 %v7926, %v7918
      %v8655 = vpack.c.b16 %v7927, %v7919
      %v8656 = vpack.c.b16 %v7928, %v7920
      %v8657 = vpack.c.b16 %v7929, %v7921
      %v8658 = vpack.c.b16 %v7930, %v7922
      %v8659 = vpack.c.b16 %v7939, %v7931
      %v8660 = vpack.c.b16 %v7940, %v7932
      %v8661 = vpack.c.b16 %v7941, %v7933
      %v8662 = vpack.c.b16 %v7942, %v7934
      %v8663 = vpack.c.b16 %v7943, %v7935
      %v8664 = vpack.c.b16 %v7944, %v7936
      %v8665 = vpack.c.b16 %v7945, %v7937
      %v8666 = vpack.c.b16 %v7946, %v7938
      %v8667 = vpack.c.b16 %v7955, %v7947
      %v8668 = vpack.c.b16 %v7956, %v7948
      %v8669 = vpack.c.b16 %v7957, %v7949
      %v8670 = vpack.c.b16 %v7958, %v7950
      %v8671 = vpack.c.b16 %v7959, %v7951
      %v8672 = vpack.c.b16 %v7960, %v7952
      %v8673 = vpack.c.b16 %v7961, %v7953
      %v8674 = vpack.c.b16 %v7962, %v7954
      %v8675 = vpack.c.b16 %v7971, %v7963
      %v8676 = vpack.c.b16 %v7972, %v7964
      %v8677 = vpack.c.b16 %v7973, %v7965
      %v8678 = vpack.c.b16 %v7974, %v7966
      %v8679 = vpack.c.b16 %v7975, %v7967
      %v8680 = vpack.c.b16 %v7976, %v7968
      %v8681 = vpack.c.b16 %v7977, %v7969
      %v8682 = vpack.c.b16 %v7978, %v7970
      %v8683 = vpack.c.b16 %v7987, %v7979
      %v8684 = vpack.c.b16 %v7988, %v7980
      %v8685 = vpack.c.b16 %v7989, %v7981
      %v8686 = vpack.c.b16 %v7990, %v7982
      %v8687 = vpack.c.b16 %v7991, %v7983
      %v8688 = vpack.c.b16 %v7992, %v7984
      %v8689 = vpack.c.b16 %v7993, %v7985
      %v8690 = vpack.c.b16 %v7994, %v7986
      %v8691 = vpack.c.b16 %v8003, %v7995
      %v8692 = vpack.c.b16 %v8004, %v7996
      %v8693 = vpack.c.b16 %v8005, %v7997
      %v8694 = vpack.c.b16 %v8006, %v7998
      %v8695 = vpack.c.b16 %v8007, %v7999
      %v8696 = vpack.c.b16 %v8008, %v8000
      %v8697 = vpack.c.b16 %v8009, %v8001
      %v8698 = vpack.c.b16 %v8010, %v8002
      %v8699 = vpack.c.b16 %v8019, %v8011
      %v8700 = vpack.c.b16 %v8020, %v8012
      %v8701 = vpack.c.b16 %v8021, %v8013
      %v8702 = vpack.c.b16 %v8022, %v8014
      %v8703 = vpack.c.b16 %v8023, %v8015
      %v8704 = vpack.c.b16 %v8024, %v8016
      %v8705 = vpack.c.b16 %v8025, %v8017
      %v8706 = vpack.c.b16 %v8026, %v8018
      %v8707 = vpack.c.b16 %v8035, %v8027
      %v8708 = vpack.c.b16 %v8036, %v8028
      %v8709 = vpack.c.b16 %v8037, %v8029
      %v8710 = vpack.c.b16 %v8038, %v8030
      %v8711 = vpack.c.b16 %v8039, %v8031
      %v8712 = vpack.c.b16 %v8040, %v8032
      %v8713 = vpack.c.b16 %v8041, %v8033
      %v8714 = vpack.c.b16 %v8042, %v8034
      %v8715 = vpack.c.b16 %v8051, %v8043
      %v8716 = vpack.c.b16 %v8052, %v8044
      %v8717 = vpack.c.b16 %v8053, %v8045
      %v8718 = vpack.c.b16 %v8054, %v8046
      %v8719 = vpack.c.b16 %v8055, %v8047
      %v8720 = vpack.c.b16 %v8056, %v8048
      %v8721 = vpack.c.b16 %v8057, %v8049
      %v8722 = vpack.c.b16 %v8058, %v8050
      %v8723 = vpack.c.b16 %v8067, %v8059
      %v8724 = vpack.c.b16 %v8068, %v8060
      %v8725 = vpack.c.b16 %v8069, %v8061
      %v8726 = vpack.c.b16 %v8070, %v8062
      %v8727 = vpack.c.b16 %v8071, %v8063
      %v8728 = vpack.c.b16 %v8072, %v8064
      %v8729 = vpack.c.b16 %v8073, %v8065
      %v8730 = vpack.c.b16 %v8074, %v8066
      %v8731 = vpack.c.b16 %v8083, %v8075
      %v8732 = vpack.c.b16 %v8084, %v8076
      %v8733 = vpack.c.b16 %v8085, %v8077
      %v8734 = vpack.c.b16 %v8086, %v8078
      %v8735 = vpack.c.b16 %v8087, %v8079
      %v8736 = vpack.c.b16 %v8088, %v8080
      %v8737 = vpack.c.b16 %v8089, %v8081
      %v8738 = vpack.c.b16 %v8090, %v8082
      %v8739 = vpack.c.b16 %v8099, %v8091
      %v8740 = vpack.c.b16 %v8100, %v8092
      %v8741 = vpack.c.b16 %v8101, %v8093
      %v8742 = vpack.c.b16 %v8102, %v8094
      %v8743 = vpack.c.b16 %v8103, %v8095
      %v8744 = vpack.c.b16 %v8104, %v8096
      %v8745 = vpack.c.b16 %v8105, %v8097
      %v8746 = vpack.c.b16 %v8106, %v8098
      %v8747 = vpack.c.b16 %v8115, %v8107
      %v8748 = vpack.c.b16 %v8116, %v8108
      %v8749 = vpack.c.b16 %v8117, %v8109
      %v8750 = vpack.c.b16 %v8118, %v8110
      %v8751 = vpack.c.b16 %v8119, %v8111
      %v8752 = vpack.c.b16 %v8120, %v8112
      %v8753 = vpack.c.b16 %v8121, %v8113
      %v8754 = vpack.c.b16 %v8122, %v8114
      %v8755 = vpack.c.b16 %v8131, %v8123
      %v8756 = vpack.c.b16 %v8132, %v8124
      %v8757 = vpack.c.b16 %v8133, %v8125
      %v8758 = vpack.c.b16 %v8134, %v8126
      %v8759 = vpack.c.b16 %v8135, %v8127
      %v8760 = vpack.c.b16 %v8136, %v8128
      %v8761 = vpack.c.b16 %v8137, %v8129
      %v8762 = vpack.c.b16 %v8138, %v8130
      %v8763 = vpack.c.b16 %v8147, %v8139
      %v8764 = vpack.c.b16 %v8148, %v8140
      %v8765 = vpack.c.b16 %v8149, %v8141
      %v8766 = vpack.c.b16 %v8150, %v8142
      %v8767 = vpack.c.b16 %v8151, %v8143
      %v8768 = vpack.c.b16 %v8152, %v8144
      %v8769 = vpack.c.b16 %v8153, %v8145
      %v8770 = vpack.c.b16 %v8154, %v8146
      %v8771 = vpack.c.b16 %v8163, %v8155
      %v8772 = vpack.c.b16 %v8164, %v8156
      %v8773 = vpack.c.b16 %v8165, %v8157
      %v8774 = vpack.c.b16 %v8166, %v8158
      %v8775 = vpack.c.b16 %v8167, %v8159
      %v8776 = vpack.c.b16 %v8168, %v8160
      %v8777 = vpack.c.b16 %v8169, %v8161
      %v8778 = vpack.c.b16 %v8170, %v8162
      %v8779 = vpack.c.b16 %v8179, %v8171
      %v8780 = vpack.c.b16 %v8180, %v8172
      %v8781 = vpack.c.b16 %v8181, %v8173
      %v8782 = vpack.c.b16 %v8182, %v8174
      %v8783 = vpack.c.b16 %v8183, %v8175
      %v8784 = vpack.c.b16 %v8184, %v8176
      %v8785 = vpack.c.b16 %v8185, %v8177
      %v8786 = vpack.c.b16 %v8186, %v8178
      %v8787 = vpack.c.b16 %v8195, %v8187
      %v8788 = vpack.c.b16 %v8196, %v8188
      %v8789 = vpack.c.b16 %v8197, %v8189
      %v8790 = vpack.c.b16 %v8198, %v8190
      %v8791 = vpack.c.b16 %v8199, %v8191
      %v8792 = vpack.c.b16 %v8200, %v8192
      %v8793 = vpack.c.b16 %v8201, %v8193
      %v8794 = vpack.c.b16 %v8202, %v8194
      %v8795 = vpack.c.b16 %v8211, %v8203
      %v8796 = vpack.c.b16 %v8212, %v8204
      %v8797 = vpack.c.b16 %v8213, %v8205
      %v8798 = vpack.c.b16 %v8214, %v8206
      %v8799 = vpack.c.b16 %v8215, %v8207
      %v8800 = vpack.c.b16 %v8216, %v8208
      %v8801 = vpack.c.b16 %v8217, %v8209
      %v8802 = vpack.c.b16 %v8218, %v8210
      %v8803 = vpack.c.b16 %v8227, %v8219
      %v8804 = vpack.c.b16 %v8228, %v8220
      %v8805 = vpack.c.b16 %v8229, %v8221
      %v8806 = vpack.c.b16 %v8230, %v8222
      %v8807 = vpack.c.b16 %v8231, %v8223
      %v8808 = vpack.c.b16 %v8232, %v8224
      %v8809 = vpack.c.b16 %v8233, %v8225
      %v8810 = vpack.c.b16 %v8234, %v8226
      %v8811 = vpack.c.b16 %v8243, %v8235
      %v8812 = vpack.c.b16 %v8244, %v8236
      %v8813 = vpack.c.b16 %v8245, %v8237
      %v8814 = vpack.c.b16 %v8246, %v8238
      %v8815 = vpack.c.b16 %v8247, %v8239
      %v8816 = vpack.c.b16 %v8248, %v8240
      %v8817 = vpack.c.b16 %v8249, %v8241
      %v8818 = vpack.c.b16 %v8250, %v8242
      %v8819 = vpack.c.b16 %v8259, %v8251
      %v8820 = vpack.c.b16 %v8260, %v8252
      %v8821 = vpack.c.b16 %v8261, %v8253
      %v8822 = vpack.c.b16 %v8262, %v8254
      %v8823 = vpack.c.b16 %v8263, %v8255
      %v8824 = vpack.c.b16 %v8264, %v8256
      %v8825 = vpack.c.b16 %v8265, %v8257
      %v8826 = vpack.c.b16 %v8266, %v8258
      %v8827 = vpack.c.b16 %v8275, %v8267
      %v8828 = vpack.c.b16 %v8276, %v8268
      %v8829 = vpack.c.b16 %v8277, %v8269
      %v8830 = vpack.c.b16 %v8278, %v8270
      %v8831 = vpack.c.b16 %v8279, %v8271
      %v8832 = vpack.c.b16 %v8280, %v8272
      %v8833 = vpack.c.b16 %v8281, %v8273
      %v8834 = vpack.c.b16 %v8282, %v8274
      %v8835 = vpack.c.b16 %v8291, %v8283
      %v8836 = vpack.c.b16 %v8292, %v8284
      %v8837 = vpack.c.b16 %v8293, %v8285
      %v8838 = vpack.c.b16 %v8294, %v8286
      %v8839 = vpack.c.b16 %v8295, %v8287
      %v8840 = vpack.c.b16 %v8296, %v8288
      %v8841 = vpack.c.b16 %v8297, %v8289
      %v8842 = vpack.c.b16 %v8298, %v8290
      %v8843 = vpack.c.b16 %v8307, %v8299
      %v8844 = vpack.c.b16 %v8308, %v8300
      %v8845 = vpack.c.b16 %v8309, %v8301
      %v8846 = vpack.c.b16 %v8310, %v8302
      %v8847 = vpack.c.b16 %v8311, %v8303
      %v8848 = vpack.c.b16 %v8312, %v8304
      %v8849 = vpack.c.b16 %v8313, %v8305
      %v8850 = vpack.c.b16 %v8314, %v8306
      %v8851 = vpack.c.b16 %v8323, %v8315
      %v8852 = vpack.c.b16 %v8324, %v8316
      %v8853 = vpack.c.b16 %v8325, %v8317
      %v8854 = vpack.c.b16 %v8326, %v8318
      %v8855 = vpack.c.b16 %v8327, %v8319
      %v8856 = vpack.c.b16 %v8328, %v8320
      %v8857 = vpack.c.b16 %v8329, %v8321
      %v8858 = vpack.c.b16 %v8330, %v8322
      %v8859 = vpack.c.b16 %v8339, %v8331
      %v8860 = vpack.c.b16 %v8340, %v8332
      %v8861 = vpack.c.b16 %v8341, %v8333
      %v8862 = vpack.c.b16 %v8342, %v8334
      %v8863 = vpack.c.b16 %v8343, %v8335
      %v8864 = vpack.c.b16 %v8344, %v8336
      %v8865 = vpack.c.b16 %v8345, %v8337
      %v8866 = vpack.c.b16 %v8346, %v8338
      %v8867 = vpack.c.b16 %v8355, %v8347
      %v8868 = vpack.c.b16 %v8356, %v8348
      %v8869 = vpack.c.b16 %v8357, %v8349
      %v8870 = vpack.c.b16 %v8358, %v8350
      %v8871 = vpack.c.b16 %v8359, %v8351
      %v8872 = vpack.c.b16 %v8360, %v8352
      %v8873 = vpack.c.b16 %v8361, %v8353
      %v8874 = vpack.c.b16 %v8362, %v8354
      %9387 = vmatprep.subr.bf16.mxu0 %v8364
      %9388 = vmatpush1.bf16.msra.mxu0 %v8363
      %9389 = vmatprep.subr.bf16.mxu0 %v8372
      %9390 = vmatpush1.bf16.msra.mxu0 %v8371
      %9391 = vmatprep.subr.bf16.mxu0 %v8380
      %9392 = vmatpush1.bf16.msra.mxu0 %v8379
      %9393 = vmatprep.subr.bf16.mxu0 %v8388
      %9394 = vmatpush1.bf16.msra.mxu0 %v8387
      %9395 = vmatprep.subr.bf16.mxu0 %v8396
      %9396 = vmatpush1.bf16.msra.mxu0 %v8395
      %9397 = vmatprep.subr.bf16.mxu0 %v8404
      %9398 = vmatpush1.bf16.msra.mxu0 %v8403
      %9399 = vmatprep.subr.bf16.mxu0 %v8412
      %9400 = vmatpush1.bf16.msra.mxu0 %v8411
      %9401 = vmatprep.subr.bf16.mxu0 %v8420
      %9402 = vmatpush1.bf16.msra.mxu0 %v8419
      %9403 = vmatprep.subr.bf16.mxu0 %v8428
      %9404 = vmatpush1.bf16.msra.mxu0 %v8427
      %9405 = vmatprep.subr.bf16.mxu0 %v8436
      %9406 = vmatpush1.bf16.msra.mxu0 %v8435
      %9407 = vmatprep.subr.bf16.mxu0 %v8444
      %9408 = vmatpush1.bf16.msra.mxu0 %v8443
      %9409 = vmatprep.subr.bf16.mxu0 %v8452
      %9410 = vmatpush1.bf16.msra.mxu0 %v8451
      %9411 = vmatprep.subr.bf16.mxu0 %v8460
      %9412 = vmatpush1.bf16.msra.mxu0 %v8459
      %9413 = vmatprep.subr.bf16.mxu0 %v8468
      %9414 = vmatpush1.bf16.msra.mxu0 %v8467
      %9415 = vmatprep.subr.bf16.mxu0 %v8476
      %9416 = vmatpush1.bf16.msra.mxu0 %v8475
      %9417 = vmatprep.subr.bf16.mxu0 %v8484
      %9418 = vmatpush1.bf16.msra.mxu0 %v8483
      %9419 = vmatprep.mubr.bf16.mxu0 %v6266
      %9420 = vmatmul.mubr.bf16.gmra.mrb[0].mxu0 %v6265
      %v9421 = vpop.f32.mrb[0].mxu0
      %v9422 = vadd.f32 %v6790, %v9421
      %v9423 = vpop.f32.mrb[0].mxu0
      %v9424 = vadd.f32 %v6794, %v9423
      %v9425 = vpop.f32.mrb[0].mxu0
      %v9426 = vadd.f32 %v6790, %v9425
      %v9427 = vpop.f32.mrb[0].mxu0
      %v9428 = vadd.f32 %v6794, %v9427
      %9429 = vdwg.mxu0
      %9430 = vmatprep.subr.bf16.mxu0 %v8492
      %9431 = vmatpush1.bf16.msra.mxu0 %v8491
      %9432 = vmatprep.subr.bf16.mxu0 %v8500
      %9433 = vmatpush1.bf16.msra.mxu0 %v8499
      %9434 = vmatprep.subr.bf16.mxu0 %v8508
      %9435 = vmatpush1.bf16.msra.mxu0 %v8507
      %9436 = vmatprep.subr.bf16.mxu0 %v8516
      %9437 = vmatpush1.bf16.msra.mxu0 %v8515
      %9438 = vmatprep.subr.bf16.mxu0 %v8524
      %9439 = vmatpush1.bf16.msra.mxu0 %v8523
      %9440 = vmatprep.subr.bf16.mxu0 %v8532
      %9441 = vmatpush1.bf16.msra.mxu0 %v8531
      %9442 = vmatprep.subr.bf16.mxu0 %v8540
      %9443 = vmatpush1.bf16.msra.mxu0 %v8539
      %9444 = vmatprep.subr.bf16.mxu0 %v8548
      %9445 = vmatpush1.bf16.msra.mxu0 %v8547
      %9446 = vmatprep.subr.bf16.mxu0 %v8556
      %9447 = vmatpush1.bf16.msra.mxu0 %v8555
      %9448 = vmatprep.subr.bf16.mxu0 %v8564
      %9449 = vmatpush1.bf16.msra.mxu0 %v8563
      %9450 = vmatprep.subr.bf16.mxu0 %v8572
      %9451 = vmatpush1.bf16.msra.mxu0 %v8571
      %9452 = vmatprep.subr.bf16.mxu0 %v8580
      %9453 = vmatpush1.bf16.msra.mxu0 %v8579
      %9454 = vmatprep.subr.bf16.mxu0 %v8588
      %9455 = vmatpush1.bf16.msra.mxu0 %v8587
      %9456 = vmatprep.subr.bf16.mxu0 %v8596
      %9457 = vmatpush1.bf16.msra.mxu0 %v8595
      %9458 = vmatprep.subr.bf16.mxu0 %v8604
      %9459 = vmatpush1.bf16.msra.mxu0 %v8603
      %9460 = vmatprep.subr.bf16.mxu0 %v8612
      %9461 = vmatpush1.bf16.msra.mxu0 %v8611
      %9462 = vmatprep.mubr.bf16.mxu0 %v6268
      %9463 = vmatmul.mubr.bf16.gmra.mrb[0].mxu0 %v6267
      %v9464 = vpop.f32.mrb[0].mxu0
      %v9465 = vadd.f32 %v9422, %v9464
      %v9466 = vpop.f32.mrb[0].mxu0
      %v9467 = vadd.f32 %v9424, %v9466
      %v9468 = vpop.f32.mrb[0].mxu0
      %v9469 = vadd.f32 %v9426, %v9468
      %v9470 = vpop.f32.mrb[0].mxu0
      %v9471 = vadd.f32 %v9428, %v9470
      %9472 = vdwg.mxu0
      %9473 = vmatprep.subr.bf16.mxu0 %v8620
      %9474 = vmatpush1.bf16.msra.mxu0 %v8619
      %9475 = vmatprep.subr.bf16.mxu0 %v8628
      %9476 = vmatpush1.bf16.msra.mxu0 %v8627
      %9477 = vmatprep.subr.bf16.mxu0 %v8636
      %9478 = vmatpush1.bf16.msra.mxu0 %v8635
      %9479 = vmatprep.subr.bf16.mxu0 %v8644
      %9480 = vmatpush1.bf16.msra.mxu0 %v8643
      %9481 = vmatprep.subr.bf16.mxu0 %v8652
      %9482 = vmatpush1.bf16.msra.mxu0 %v8651
      %9483 = vmatprep.subr.bf16.mxu0 %v8660
      %9484 = vmatpush1.bf16.msra.mxu0 %v8659
      %9485 = vmatprep.subr.bf16.mxu0 %v8668
      %9486 = vmatpush1.bf16.msra.mxu0 %v8667
      %9487 = vmatprep.subr.bf16.mxu0 %v8676
      %9488 = vmatpush1.bf16.msra.mxu0 %v8675
      %9489 = vmatprep.subr.bf16.mxu0 %v8684
      %9490 = vmatpush1.bf16.msra.mxu0 %v8683
      %9491 = vmatprep.subr.bf16.mxu0 %v8692
      %9492 = vmatpush1.bf16.msra.mxu0 %v8691
      %9493 = vmatprep.subr.bf16.mxu0 %v8700
      %9494 = vmatpush1.bf16.msra.mxu0 %v8699
      %9495 = vmatprep.subr.bf16.mxu0 %v8708
      %9496 = vmatpush1.bf16.msra.mxu0 %v8707
      %9497 = vmatprep.subr.bf16.mxu0 %v8716
      %9498 = vmatpush1.bf16.msra.mxu0 %v8715
      %9499 = vmatprep.subr.bf16.mxu0 %v8724
      %9500 = vmatpush1.bf16.msra.mxu0 %v8723
      %9501 = vmatprep.subr.bf16.mxu0 %v8732
      %9502 = vmatpush1.bf16.msra.mxu0 %v8731
      %9503 = vmatprep.subr.bf16.mxu0 %v8740
      %9504 = vmatpush1.bf16.msra.mxu0 %v8739
      %9505 = vmatprep.mubr.bf16.mxu0 %v6270
      %9506 = vmatmul.mubr.bf16.gmra.mrb[0].mxu0 %v6269
      %v9507 = vpop.f32.mrb[0].mxu0
      %v9508 = vadd.f32 %v9465, %v9507
      %v9509 = vpop.f32.mrb[0].mxu0
      %v9510 = vadd.f32 %v9467, %v9509
      %v9511 = vpop.f32.mrb[0].mxu0
      %v9512 = vadd.f32 %v9469, %v9511
      %v9513 = vpop.f32.mrb[0].mxu0
      %v9514 = vadd.f32 %v9471, %v9513
      %9515 = vdwg.mxu0
      %9516 = vmatprep.subr.bf16.mxu0 %v8748
      %9517 = vmatpush1.bf16.msra.mxu0 %v8747
      %9518 = vmatprep.subr.bf16.mxu0 %v8756
      %9519 = vmatpush1.bf16.msra.mxu0 %v8755
      %9520 = vmatprep.subr.bf16.mxu0 %v8764
      %9521 = vmatpush1.bf16.msra.mxu0 %v8763
      %9522 = vmatprep.subr.bf16.mxu0 %v8772
      %9523 = vmatpush1.bf16.msra.mxu0 %v8771
      %9524 = vmatprep.subr.bf16.mxu0 %v8780
      %9525 = vmatpush1.bf16.msra.mxu0 %v8779
      %9526 = vmatprep.subr.bf16.mxu0 %v8788
      %9527 = vmatpush1.bf16.msra.mxu0 %v8787
      %9528 = vmatprep.subr.bf16.mxu0 %v8796
      %9529 = vmatpush1.bf16.msra.mxu0 %v8795
      %9530 = vmatprep.subr.bf16.mxu0 %v8804
      %9531 = vmatpush1.bf16.msra.mxu0 %v8803
      %9532 = vmatprep.subr.bf16.mxu0 %v8812
      %9533 = vmatpush1.bf16.msra.mxu0 %v8811
      %9534 = vmatprep.subr.bf16.mxu0 %v8820
      %9535 = vmatpush1.bf16.msra.mxu0 %v8819
      %9536 = vmatprep.subr.bf16.mxu0 %v8828
      %9537 = vmatpush1.bf16.msra.mxu0 %v8827
      %9538 = vmatprep.subr.bf16.mxu0 %v8836
      %9539 = vmatpush1.bf16.msra.mxu0 %v8835
      %9540 = vmatprep.subr.bf16.mxu0 %v8844
      %9541 = vmatpush1.bf16.msra.mxu0 %v8843
      %9542 = vmatprep.subr.bf16.mxu0 %v8852
      %9543 = vmatpush1.bf16.msra.mxu0 %v8851
      %9544 = vmatprep.subr.bf16.mxu0 %v8860
      %9545 = vmatpush1.bf16.msra.mxu0 %v8859
      %9546 = vmatprep.subr.bf16.mxu0 %v8868
      %9547 = vmatpush1.bf16.msra.mxu0 %v8867
      %9548 = vmatprep.mubr.bf16.mxu0 %v6272
      %9549 = vmatmul.mubr.bf16.gmra.mrb[0].mxu0 %v6271
      %v9550 = vpop.f32.mrb[0].mxu0
      %v9551 = vadd.f32 %v9508, %v9550
      %v9552 = vpop.f32.mrb[0].mxu0
      %v9553 = vadd.f32 %v9510, %v9552
      %v9554 = vpop.f32.mrb[0].mxu0
      %v9555 = vadd.f32 %v9512, %v9554
      %v9556 = vpop.f32.mrb[0].mxu0
      %v9557 = vadd.f32 %v9514, %v9556
      %9558 = vdwg.mxu0
      %9559 = vmatprep.subr.bf16.mxu0 %v8366
      %9560 = vmatpush1.bf16.msra.mxu0 %v8365
      %9561 = vmatprep.subr.bf16.mxu0 %v8374
      %9562 = vmatpush1.bf16.msra.mxu0 %v8373
      %9563 = vmatprep.subr.bf16.mxu0 %v8382
      %9564 = vmatpush1.bf16.msra.mxu0 %v8381
      %9565 = vmatprep.subr.bf16.mxu0 %v8390
      %9566 = vmatpush1.bf16.msra.mxu0 %v8389
      %9567 = vmatprep.subr.bf16.mxu0 %v8398
      %9568 = vmatpush1.bf16.msra.mxu0 %v8397
      %9569 = vmatprep.subr.bf16.mxu0 %v8406
      %9570 = vmatpush1.bf16.msra.mxu0 %v8405
      %9571 = vmatprep.subr.bf16.mxu0 %v8414
      %9572 = vmatpush1.bf16.msra.mxu0 %v8413
      %9573 = vmatprep.subr.bf16.mxu0 %v8422
      %9574 = vmatpush1.bf16.msra.mxu0 %v8421
      %9575 = vmatprep.subr.bf16.mxu0 %v8430
      %9576 = vmatpush1.bf16.msra.mxu0 %v8429
      %9577 = vmatprep.subr.bf16.mxu0 %v8438
      %9578 = vmatpush1.bf16.msra.mxu0 %v8437
      %9579 = vmatprep.subr.bf16.mxu0 %v8446
      %9580 = vmatpush1.bf16.msra.mxu0 %v8445
      %9581 = vmatprep.subr.bf16.mxu0 %v8454
      %9582 = vmatpush1.bf16.msra.mxu0 %v8453
      %9583 = vmatprep.subr.bf16.mxu0 %v8462
      %9584 = vmatpush1.bf16.msra.mxu0 %v8461
      %9585 = vmatprep.subr.bf16.mxu0 %v8470
      %9586 = vmatpush1.bf16.msra.mxu0 %v8469
      %9587 = vmatprep.subr.bf16.mxu0 %v8478
      %9588 = vmatpush1.bf16.msra.mxu0 %v8477
      %9589 = vmatprep.subr.bf16.mxu0 %v8486
      %9590 = vmatpush1.bf16.msra.mxu0 %v8485
      %9591 = vmatprep.mubr.bf16.mxu0 %v6266
      %9592 = vmatmul.mubr.bf16.gmra.mrb[0].mxu0 %v6265
      %v9593 = vpop.f32.mrb[0].mxu0
      %v9594 = vadd.f32 %v6798, %v9593
      %v9595 = vpop.f32.mrb[0].mxu0
      %v9596 = vadd.f32 %v6802, %v9595
      %v9597 = vpop.f32.mrb[0].mxu0
      %v9598 = vadd.f32 %v6798, %v9597
      %v9599 = vpop.f32.mrb[0].mxu0
      %v9600 = vadd.f32 %v6802, %v9599
      %9601 = vdwg.mxu0
      %9602 = vmatprep.subr.bf16.mxu0 %v8494
      %9603 = vmatpush1.bf16.msra.mxu0 %v8493
      %9604 = vmatprep.subr.bf16.mxu0 %v8502
      %9605 = vmatpush1.bf16.msra.mxu0 %v8501
      %9606 = vmatprep.subr.bf16.mxu0 %v8510
      %9607 = vmatpush1.bf16.msra.mxu0 %v8509
      %9608 = vmatprep.subr.bf16.mxu0 %v8518
      %9609 = vmatpush1.bf16.msra.mxu0 %v8517
      %9610 = vmatprep.subr.bf16.mxu0 %v8526
      %9611 = vmatpush1.bf16.msra.mxu0 %v8525
      %9612 = vmatprep.subr.bf16.mxu0 %v8534
      %9613 = vmatpush1.bf16.msra.mxu0 %v8533
      %9614 = vmatprep.subr.bf16.mxu0 %v8542
      %9615 = vmatpush1.bf16.msra.mxu0 %v8541
      %9616 = vmatprep.subr.bf16.mxu0 %v8550
      %9617 = vmatpush1.bf16.msra.mxu0 %v8549
      %9618 = vmatprep.subr.bf16.mxu0 %v8558
      %9619 = vmatpush1.bf16.msra.mxu0 %v8557
      %9620 = vmatprep.subr.bf16.mxu0 %v8566
      %9621 = vmatpush1.bf16.msra.mxu0 %v8565
      %9622 = vmatprep.subr.bf16.mxu0 %v8574
      %9623 = vmatpush1.bf16.msra.mxu0 %v8573
      %9624 = vmatprep.subr.bf16.mxu0 %v8582
      %9625 = vmatpush1.bf16.msra.mxu0 %v8581
      %9626 = vmatprep.subr.bf16.mxu0 %v8590
      %9627 = vmatpush1.bf16.msra.mxu0 %v8589
      %9628 = vmatprep.subr.bf16.mxu0 %v8598
      %9629 = vmatpush1.bf16.msra.mxu0 %v8597
      %9630 = vmatprep.subr.bf16.mxu0 %v8606
      %9631 = vmatpush1.bf16.msra.mxu0 %v8605
      %9632 = vmatprep.subr.bf16.mxu0 %v8614
      %9633 = vmatpush1.bf16.msra.mxu0 %v8613
      %9634 = vmatprep.mubr.bf16.mxu0 %v6268
      %9635 = vmatmul.mubr.bf16.gmra.mrb[0].mxu0 %v6267
      %v9636 = vpop.f32.mrb[0].mxu0
      %v9637 = vadd.f32 %v9594, %v9636
      %v9638 = vpop.f32.mrb[0].mxu0
      %v9639 = vadd.f32 %v9596, %v9638
      %v9640 = vpop.f32.mrb[0].mxu0
      %v9641 = vadd.f32 %v9598, %v9640
      %v9642 = vpop.f32.mrb[0].mxu0
      %v9643 = vadd.f32 %v9600, %v9642
      %9644 = vdwg.mxu0
      %9645 = vmatprep.subr.bf16.mxu0 %v8622
      %9646 = vmatpush1.bf16.msra.mxu0 %v8621
      %9647 = vmatprep.subr.bf16.mxu0 %v8630
      %9648 = vmatpush1.bf16.msra.mxu0 %v8629
      %9649 = vmatprep.subr.bf16.mxu0 %v8638
      %9650 = vmatpush1.bf16.msra.mxu0 %v8637
      %9651 = vmatprep.subr.bf16.mxu0 %v8646
      %9652 = vmatpush1.bf16.msra.mxu0 %v8645
      %9653 = vmatprep.subr.bf16.mxu0 %v8654
      %9654 = vmatpush1.bf16.msra.mxu0 %v8653
      %9655 = vmatprep.subr.bf16.mxu0 %v8662
      %9656 = vmatpush1.bf16.msra.mxu0 %v8661
      %9657 = vmatprep.subr.bf16.mxu0 %v8670
      %9658 = vmatpush1.bf16.msra.mxu0 %v8669
      %9659 = vmatprep.subr.bf16.mxu0 %v8678
      %9660 = vmatpush1.bf16.msra.mxu0 %v8677
      %9661 = vmatprep.subr.bf16.mxu0 %v8686
      %9662 = vmatpush1.bf16.msra.mxu0 %v8685
      %9663 = vmatprep.subr.bf16.mxu0 %v8694
      %9664 = vmatpush1.bf16.msra.mxu0 %v8693
      %9665 = vmatprep.subr.bf16.mxu0 %v8702
      %9666 = vmatpush1.bf16.msra.mxu0 %v8701
      %9667 = vmatprep.subr.bf16.mxu0 %v8710
      %9668 = vmatpush1.bf16.msra.mxu0 %v8709
      %9669 = vmatprep.subr.bf16.mxu0 %v8718
      %9670 = vmatpush1.bf16.msra.mxu0 %v8717
      %9671 = vmatprep.subr.bf16.mxu0 %v8726
      %9672 = vmatpush1.bf16.msra.mxu0 %v8725
      %9673 = vmatprep.subr.bf16.mxu0 %v8734
      %9674 = vmatpush1.bf16.msra.mxu0 %v8733
      %9675 = vmatprep.subr.bf16.mxu0 %v8742
      %9676 = vmatpush1.bf16.msra.mxu0 %v8741
      %9677 = vmatprep.mubr.bf16.mxu0 %v6270
      %9678 = vmatmul.mubr.bf16.gmra.mrb[0].mxu0 %v6269
      %v9679 = vpop.f32.mrb[0].mxu0
      %v9680 = vadd.f32 %v9637, %v9679
      %v9681 = vpop.f32.mrb[0].mxu0
      %v9682 = vadd.f32 %v9639, %v9681
      %v9683 = vpop.f32.mrb[0].mxu0
      %v9684 = vadd.f32 %v9641, %v9683
      %v9685 = vpop.f32.mrb[0].mxu0
      %v9686 = vadd.f32 %v9643, %v9685
      %9687 = vdwg.mxu0
      %9688 = vmatprep.subr.bf16.mxu0 %v8750
      %9689 = vmatpush1.bf16.msra.mxu0 %v8749
      %9690 = vmatprep.subr.bf16.mxu0 %v8758
      %9691 = vmatpush1.bf16.msra.mxu0 %v8757
      %9692 = vmatprep.subr.bf16.mxu0 %v8766
      %9693 = vmatpush1.bf16.msra.mxu0 %v8765
      %9694 = vmatprep.subr.bf16.mxu0 %v8774
      %9695 = vmatpush1.bf16.msra.mxu0 %v8773
      %9696 = vmatprep.subr.bf16.mxu0 %v8782
      %9697 = vmatpush1.bf16.msra.mxu0 %v8781
      %9698 = vmatprep.subr.bf16.mxu0 %v8790
      %9699 = vmatpush1.bf16.msra.mxu0 %v8789
      %9700 = vmatprep.subr.bf16.mxu0 %v8798
      %9701 = vmatpush1.bf16.msra.mxu0 %v8797
      %9702 = vmatprep.subr.bf16.mxu0 %v8806
      %9703 = vmatpush1.bf16.msra.mxu0 %v8805
      %9704 = vmatprep.subr.bf16.mxu0 %v8814
      %9705 = vmatpush1.bf16.msra.mxu0 %v8813
      %9706 = vmatprep.subr.bf16.mxu0 %v8822
      %9707 = vmatpush1.bf16.msra.mxu0 %v8821
      %9708 = vmatprep.subr.bf16.mxu0 %v8830
      %9709 = vmatpush1.bf16.msra.mxu0 %v8829
      %9710 = vmatprep.subr.bf16.mxu0 %v8838
      %9711 = vmatpush1.bf16.msra.mxu0 %v8837
      %9712 = vmatprep.subr.bf16.mxu0 %v8846
      %9713 = vmatpush1.bf16.msra.mxu0 %v8845
      %9714 = vmatprep.subr.bf16.mxu0 %v8854
      %9715 = vmatpush1.bf16.msra.mxu0 %v8853
      %9716 = vmatprep.subr.bf16.mxu0 %v8862
      %9717 = vmatpush1.bf16.msra.mxu0 %v8861
      %9718 = vmatprep.subr.bf16.mxu0 %v8870
      %9719 = vmatpush1.bf16.msra.mxu0 %v8869
      %9720 = vmatprep.mubr.bf16.mxu0 %v6272
      %9721 = vmatmul.mubr.bf16.gmra.mrb[0].mxu0 %v6271
      %v9722 = vpop.f32.mrb[0].mxu0
      %v9723 = vadd.f32 %v9680, %v9722
      %v9724 = vpop.f32.mrb[0].mxu0
      %v9725 = vadd.f32 %v9682, %v9724
      %v9726 = vpop.f32.mrb[0].mxu0
      %v9727 = vadd.f32 %v9684, %v9726
      %v9728 = vpop.f32.mrb[0].mxu0
      %v9729 = vadd.f32 %v9686, %v9728
      %9730 = vdwg.mxu0
      %9731 = vmatprep.subr.bf16.mxu0 %v8368
      %9732 = vmatpush1.bf16.msra.mxu0 %v8367
      %9733 = vmatprep.subr.bf16.mxu0 %v8376
      %9734 = vmatpush1.bf16.msra.mxu0 %v8375
      %9735 = vmatprep.subr.bf16.mxu0 %v8384
      %9736 = vmatpush1.bf16.msra.mxu0 %v8383
      %9737 = vmatprep.subr.bf16.mxu0 %v8392
      %9738 = vmatpush1.bf16.msra.mxu0 %v8391
      %9739 = vmatprep.subr.bf16.mxu0 %v8400
      %9740 = vmatpush1.bf16.msra.mxu0 %v8399
      %9741 = vmatprep.subr.bf16.mxu0 %v8408
      %9742 = vmatpush1.bf16.msra.mxu0 %v8407
      %9743 = vmatprep.subr.bf16.mxu0 %v8416
      %9744 = vmatpush1.bf16.msra.mxu0 %v8415
      %9745 = vmatprep.subr.bf16.mxu0 %v8424
      %9746 = vmatpush1.bf16.msra.mxu0 %v8423
      %9747 = vmatprep.subr.bf16.mxu0 %v8432
      %9748 = vmatpush1.bf16.msra.mxu0 %v8431
      %9749 = vmatprep.subr.bf16.mxu0 %v8440
      %9750 = vmatpush1.bf16.msra.mxu0 %v8439
      %9751 = vmatprep.subr.bf16.mxu0 %v8448
      %9752 = vmatpush1.bf16.msra.mxu0 %v8447
      %9753 = vmatprep.subr.bf16.mxu0 %v8456
      %9754 = vmatpush1.bf16.msra.mxu0 %v8455
      %9755 = vmatprep.subr.bf16.mxu0 %v8464
      %9756 = vmatpush1.bf16.msra.mxu0 %v8463
      %9757 = vmatprep.subr.bf16.mxu0 %v8472
      %9758 = vmatpush1.bf16.msra.mxu0 %v8471
      %9759 = vmatprep.subr.bf16.mxu0 %v8480
      %9760 = vmatpush1.bf16.msra.mxu0 %v8479
      %9761 = vmatprep.subr.bf16.mxu0 %v8488
      %9762 = vmatpush1.bf16.msra.mxu0 %v8487
      %9763 = vmatprep.mubr.bf16.mxu0 %v6266
      %9764 = vmatmul.mubr.bf16.gmra.mrb[0].mxu0 %v6265
      %v9765 = vpop.f32.mrb[0].mxu0
      %v9766 = vadd.f32 %v6806, %v9765
      %v9767 = vpop.f32.mrb[0].mxu0
      %v9768 = vadd.f32 %v6810, %v9767
      %v9769 = vpop.f32.mrb[0].mxu0
      %v9770 = vadd.f32 %v6806, %v9769
      %v9771 = vpop.f32.mrb[0].mxu0
      %v9772 = vadd.f32 %v6810, %v9771
      %9773 = vdwg.mxu0
      %9774 = vmatprep.subr.bf16.mxu0 %v8496
      %9775 = vmatpush1.bf16.msra.mxu0 %v8495
      %9776 = vmatprep.subr.bf16.mxu0 %v8504
      %9777 = vmatpush1.bf16.msra.mxu0 %v8503
      %9778 = vmatprep.subr.bf16.mxu0 %v8512
      %9779 = vmatpush1.bf16.msra.mxu0 %v8511
      %9780 = vmatprep.subr.bf16.mxu0 %v8520
      %9781 = vmatpush1.bf16.msra.mxu0 %v8519
      %9782 = vmatprep.subr.bf16.mxu0 %v8528
      %9783 = vmatpush1.bf16.msra.mxu0 %v8527
      %9784 = vmatprep.subr.bf16.mxu0 %v8536
      %9785 = vmatpush1.bf16.msra.mxu0 %v8535
      %9786 = vmatprep.subr.bf16.mxu0 %v8544
      %9787 = vmatpush1.bf16.msra.mxu0 %v8543
      %9788 = vmatprep.subr.bf16.mxu0 %v8552
      %9789 = vmatpush1.bf16.msra.mxu0 %v8551
      %9790 = vmatprep.subr.bf16.mxu0 %v8560
      %9791 = vmatpush1.bf16.msra.mxu0 %v8559
      %9792 = vmatprep.subr.bf16.mxu0 %v8568
      %9793 = vmatpush1.bf16.msra.mxu0 %v8567
      %9794 = vmatprep.subr.bf16.mxu0 %v8576
      %9795 = vmatpush1.bf16.msra.mxu0 %v8575
      %9796 = vmatprep.subr.bf16.mxu0 %v8584
      %9797 = vmatpush1.bf16.msra.mxu0 %v8583
      %9798 = vmatprep.subr.bf16.mxu0 %v8592
      %9799 = vmatpush1.bf16.msra.mxu0 %v8591
      %9800 = vmatprep.subr.bf16.mxu0 %v8600
      %9801 = vmatpush1.bf16.msra.mxu0 %v8599
      %9802 = vmatprep.subr.bf16.mxu0 %v8608
      %9803 = vmatpush1.bf16.msra.mxu0 %v8607
      %9804 = vmatprep.subr.bf16.mxu0 %v8616
      %9805 = vmatpush1.bf16.msra.mxu0 %v8615
      %9806 = vmatprep.mubr.bf16.mxu0 %v6268
      %9807 = vmatmul.mubr.bf16.gmra.mrb[0].mxu0 %v6267
      %v9808 = vpop.f32.mrb[0].mxu0
      %v9809 = vadd.f32 %v9766, %v9808
      %v9810 = vpop.f32.mrb[0].mxu0
      %v9811 = vadd.f32 %v9768, %v9810
      %v9812 = vpop.f32.mrb[0].mxu0
      %v9813 = vadd.f32 %v9770, %v9812
      %v9814 = vpop.f32.mrb[0].mxu0
      %v9815 = vadd.f32 %v9772, %v9814
      %9816 = vdwg.mxu0
      %9817 = vmatprep.subr.bf16.mxu0 %v8624
      %9818 = vmatpush1.bf16.msra.mxu0 %v8623
      %9819 = vmatprep.subr.bf16.mxu0 %v8632
      %9820 = vmatpush1.bf16.msra.mxu0 %v8631
      %9821 = vmatprep.subr.bf16.mxu0 %v8640
      %9822 = vmatpush1.bf16.msra.mxu0 %v8639
      %9823 = vmatprep.subr.bf16.mxu0 %v8648
      %9824 = vmatpush1.bf16.msra.mxu0 %v8647
      %9825 = vmatprep.subr.bf16.mxu0 %v8656
      %9826 = vmatpush1.bf16.msra.mxu0 %v8655
      %9827 = vmatprep.subr.bf16.mxu0 %v8664
      %9828 = vmatpush1.bf16.msra.mxu0 %v8663
      %9829 = vmatprep.subr.bf16.mxu0 %v8672
      %9830 = vmatpush1.bf16.msra.mxu0 %v8671
      %9831 = vmatprep.subr.bf16.mxu0 %v8680
      %9832 = vmatpush1.bf16.msra.mxu0 %v8679
      %9833 = vmatprep.subr.bf16.mxu0 %v8688
      %9834 = vmatpush1.bf16.msra.mxu0 %v8687
      %9835 = vmatprep.subr.bf16.mxu0 %v8696
      %9836 = vmatpush1.bf16.msra.mxu0 %v8695
      %9837 = vmatprep.subr.bf16.mxu0 %v8704
      %9838 = vmatpush1.bf16.msra.mxu0 %v8703
      %9839 = vmatprep.subr.bf16.mxu0 %v8712
      %9840 = vmatpush1.bf16.msra.mxu0 %v8711
      %9841 = vmatprep.subr.bf16.mxu0 %v8720
      %9842 = vmatpush1.bf16.msra.mxu0 %v8719
      %9843 = vmatprep.subr.bf16.mxu0 %v8728
      %9844 = vmatpush1.bf16.msra.mxu0 %v8727
      %9845 = vmatprep.subr.bf16.mxu0 %v8736
      %9846 = vmatpush1.bf16.msra.mxu0 %v8735
      %9847 = vmatprep.subr.bf16.mxu0 %v8744
      %9848 = vmatpush1.bf16.msra.mxu0 %v8743
      %9849 = vmatprep.mubr.bf16.mxu0 %v6270
      %9850 = vmatmul.mubr.bf16.gmra.mrb[0].mxu0 %v6269
      %v9851 = vpop.f32.mrb[0].mxu0
      %v9852 = vadd.f32 %v9809, %v9851
      %v9853 = vpop.f32.mrb[0].mxu0
      %v9854 = vadd.f32 %v9811, %v9853
      %v9855 = vpop.f32.mrb[0].mxu0
      %v9856 = vadd.f32 %v9813, %v9855
      %v9857 = vpop.f32.mrb[0].mxu0
      %v9858 = vadd.f32 %v9815, %v9857
      %9859 = vdwg.mxu0
      %9860 = vmatprep.subr.bf16.mxu0 %v8752
      %9861 = vmatpush1.bf16.msra.mxu0 %v8751
      %9862 = vmatprep.subr.bf16.mxu0 %v8760
      %9863 = vmatpush1.bf16.msra.mxu0 %v8759
      %9864 = vmatprep.subr.bf16.mxu0 %v8768
      %9865 = vmatpush1.bf16.msra.mxu0 %v8767
      %9866 = vmatprep.subr.bf16.mxu0 %v8776
      %9867 = vmatpush1.bf16.msra.mxu0 %v8775
      %9868 = vmatprep.subr.bf16.mxu0 %v8784
      %9869 = vmatpush1.bf16.msra.mxu0 %v8783
      %9870 = vmatprep.subr.bf16.mxu0 %v8792
      %9871 = vmatpush1.bf16.msra.mxu0 %v8791
      %9872 = vmatprep.subr.bf16.mxu0 %v8800
      %9873 = vmatpush1.bf16.msra.mxu0 %v8799
      %9874 = vmatprep.subr.bf16.mxu0 %v8808
      %9875 = vmatpush1.bf16.msra.mxu0 %v8807
      %9876 = vmatprep.subr.bf16.mxu0 %v8816
      %9877 = vmatpush1.bf16.msra.mxu0 %v8815
      %9878 = vmatprep.subr.bf16.mxu0 %v8824
      %9879 = vmatpush1.bf16.msra.mxu0 %v8823
      %9880 = vmatprep.subr.bf16.mxu0 %v8832
      %9881 = vmatpush1.bf16.msra.mxu0 %v8831
      %9882 = vmatprep.subr.bf16.mxu0 %v8840
      %9883 = vmatpush1.bf16.msra.mxu0 %v8839
      %9884 = vmatprep.subr.bf16.mxu0 %v8848
      %9885 = vmatpush1.bf16.msra.mxu0 %v8847
      %9886 = vmatprep.subr.bf16.mxu0 %v8856
      %9887 = vmatpush1.bf16.msra.mxu0 %v8855
      %9888 = vmatprep.subr.bf16.mxu0 %v8864
      %9889 = vmatpush1.bf16.msra.mxu0 %v8863
      %9890 = vmatprep.subr.bf16.mxu0 %v8872
      %9891 = vmatpush1.bf16.msra.mxu0 %v8871
      %9892 = vmatprep.mubr.bf16.mxu0 %v6272
      %9893 = vmatmul.mubr.bf16.gmra.mrb[0].mxu0 %v6271
      %v9894 = vpop.f32.mrb[0].mxu0
      %v9895 = vadd.f32 %v9852, %v9894
      %v9896 = vpop.f32.mrb[0].mxu0
      %v9897 = vadd.f32 %v9854, %v9896
      %v9898 = vpop.f32.mrb[0].mxu0
      %v9899 = vadd.f32 %v9856, %v9898
      %v9900 = vpop.f32.mrb[0].mxu0
      %v9901 = vadd.f32 %v9858, %v9900
      %9902 = vdwg.mxu0
      %9903 = vmatprep.subr.bf16.mxu0 %v8370
      %9904 = vmatpush1.bf16.msra.mxu0 %v8369
      %9905 = vmatprep.subr.bf16.mxu0 %v8378
      %9906 = vmatpush1.bf16.msra.mxu0 %v8377
      %9907 = vmatprep.subr.bf16.mxu0 %v8386
      %9908 = vmatpush1.bf16.msra.mxu0 %v8385
      %9909 = vmatprep.subr.bf16.mxu0 %v8394
      %9910 = vmatpush1.bf16.msra.mxu0 %v8393
      %9911 = vmatprep.subr.bf16.mxu0 %v8402
      %9912 = vmatpush1.bf16.msra.mxu0 %v8401
      %9913 = vmatprep.subr.bf16.mxu0 %v8410
      %9914 = vmatpush1.bf16.msra.mxu0 %v8409
      %9915 = vmatprep.subr.bf16.mxu0 %v8418
      %9916 = vmatpush1.bf16.msra.mxu0 %v8417
      %9917 = vmatprep.subr.bf16.mxu0 %v8426
      %9918 = vmatpush1.bf16.msra.mxu0 %v8425
      %9919 = vmatprep.subr.bf16.mxu0 %v8434
      %9920 = vmatpush1.bf16.msra.mxu0 %v8433
      %9921 = vmatprep.subr.bf16.mxu0 %v8442
      %9922 = vmatpush1.bf16.msra.mxu0 %v8441
      %9923 = vmatprep.subr.bf16.mxu0 %v8450
      %9924 = vmatpush1.bf16.msra.mxu0 %v8449
      %9925 = vmatprep.subr.bf16.mxu0 %v8458
      %9926 = vmatpush1.bf16.msra.mxu0 %v8457
      %9927 = vmatprep.subr.bf16.mxu0 %v8466
      %9928 = vmatpush1.bf16.msra.mxu0 %v8465
      %9929 = vmatprep.subr.bf16.mxu0 %v8474
      %9930 = vmatpush1.bf16.msra.mxu0 %v8473
      %9931 = vmatprep.subr.bf16.mxu0 %v8482
      %9932 = vmatpush1.bf16.msra.mxu0 %v8481
      %9933 = vmatprep.subr.bf16.mxu0 %v8490
      %9934 = vmatpush1.bf16.msra.mxu0 %v8489
      %9935 = vmatprep.mubr.bf16.mxu0 %v6266
      %9936 = vmatmul.mubr.bf16.gmra.mrb[0].mxu0 %v6265
      %v9937 = vpop.f32.mrb[0].mxu0
      %v9938 = vadd.f32 %v6814, %v9937
      %v9939 = vpop.f32.mrb[0].mxu0
      %v9940 = vadd.f32 %v6818, %v9939
      %v9941 = vpop.f32.mrb[0].mxu0
      %v9942 = vadd.f32 %v6814, %v9941
      %v9943 = vpop.f32.mrb[0].mxu0
      %v9944 = vadd.f32 %v6818, %v9943
      %9945 = vdwg.mxu0
      %9946 = vmatprep.subr.bf16.mxu0 %v8498
      %9947 = vmatpush1.bf16.msra.mxu0 %v8497
      %9948 = vmatprep.subr.bf16.mxu0 %v8506
      %9949 = vmatpush1.bf16.msra.mxu0 %v8505
      %9950 = vmatprep.subr.bf16.mxu0 %v8514
      %9951 = vmatpush1.bf16.msra.mxu0 %v8513
      %9952 = vmatprep.subr.bf16.mxu0 %v8522
      %9953 = vmatpush1.bf16.msra.mxu0 %v8521
      %9954 = vmatprep.subr.bf16.mxu0 %v8530
      %9955 = vmatpush1.bf16.msra.mxu0 %v8529
      %9956 = vmatprep.subr.bf16.mxu0 %v8538
      %9957 = vmatpush1.bf16.msra.mxu0 %v8537
      %9958 = vmatprep.subr.bf16.mxu0 %v8546
      %9959 = vmatpush1.bf16.msra.mxu0 %v8545
      %9960 = vmatprep.subr.bf16.mxu0 %v8554
      %9961 = vmatpush1.bf16.msra.mxu0 %v8553
      %9962 = vmatprep.subr.bf16.mxu0 %v8562
      %9963 = vmatpush1.bf16.msra.mxu0 %v8561
      %9964 = vmatprep.subr.bf16.mxu0 %v8570
      %9965 = vmatpush1.bf16.msra.mxu0 %v8569
      %9966 = vmatprep.subr.bf16.mxu0 %v8578
      %9967 = vmatpush1.bf16.msra.mxu0 %v8577
      %9968 = vmatprep.subr.bf16.mxu0 %v8586
      %9969 = vmatpush1.bf16.msra.mxu0 %v8585
      %9970 = vmatprep.subr.bf16.mxu0 %v8594
      %9971 = vmatpush1.bf16.msra.mxu0 %v8593
      %9972 = vmatprep.subr.bf16.mxu0 %v8602
      %9973 = vmatpush1.bf16.msra.mxu0 %v8601
      %9974 = vmatprep.subr.bf16.mxu0 %v8610
      %9975 = vmatpush1.bf16.msra.mxu0 %v8609
      %9976 = vmatprep.subr.bf16.mxu0 %v8618
      %9977 = vmatpush1.bf16.msra.mxu0 %v8617
      %9978 = vmatprep.mubr.bf16.mxu0 %v6268
      %9979 = vmatmul.mubr.bf16.gmra.mrb[0].mxu0 %v6267
      %v9980 = vpop.f32.mrb[0].mxu0
      %v9981 = vadd.f32 %v9938, %v9980
      %v9982 = vpop.f32.mrb[0].mxu0
      %v9983 = vadd.f32 %v9940, %v9982
      %v9984 = vpop.f32.mrb[0].mxu0
      %v9985 = vadd.f32 %v9942, %v9984
      %v9986 = vpop.f32.mrb[0].mxu0
      %v9987 = vadd.f32 %v9944, %v9986
      %9988 = vdwg.mxu0
      %9989 = vmatprep.subr.bf16.mxu0 %v8626
      %9990 = vmatpush1.bf16.msra.mxu0 %v8625
      %9991 = vmatprep.subr.bf16.mxu0 %v8634
      %9992 = vmatpush1.bf16.msra.mxu0 %v8633
      %9993 = vmatprep.subr.bf16.mxu0 %v8642
      %9994 = vmatpush1.bf16.msra.mxu0 %v8641
      %9995 = vmatprep.subr.bf16.mxu0 %v8650
      %9996 = vmatpush1.bf16.msra.mxu0 %v8649
      %9997 = vmatprep.subr.bf16.mxu0 %v8658
      %9998 = vmatpush1.bf16.msra.mxu0 %v8657
      %9999 = vmatprep.subr.bf16.mxu0 %v8666
      %10000 = vmatpush1.bf16.msra.mxu0 %v8665
      %10001 = vmatprep.subr.bf16.mxu0 %v8674
      %10002 = vmatpush1.bf16.msra.mxu0 %v8673
      %10003 = vmatprep.subr.bf16.mxu0 %v8682
      %10004 = vmatpush1.bf16.msra.mxu0 %v8681
      %10005 = vmatprep.subr.bf16.mxu0 %v8690
      %10006 = vmatpush1.bf16.msra.mxu0 %v8689
      %10007 = vmatprep.subr.bf16.mxu0 %v8698
      %10008 = vmatpush1.bf16.msra.mxu0 %v8697
      %10009 = vmatprep.subr.bf16.mxu0 %v8706
      %10010 = vmatpush1.bf16.msra.mxu0 %v8705
      %10011 = vmatprep.subr.bf16.mxu0 %v8714
      %10012 = vmatpush1.bf16.msra.mxu0 %v8713
      %10013 = vmatprep.subr.bf16.mxu0 %v8722
      %10014 = vmatpush1.bf16.msra.mxu0 %v8721
      %10015 = vmatprep.subr.bf16.mxu0 %v8730
      %10016 = vmatpush1.bf16.msra.mxu0 %v8729
      %10017 = vmatprep.subr.bf16.mxu0 %v8738
      %10018 = vmatpush1.bf16.msra.mxu0 %v8737
      %10019 = vmatprep.subr.bf16.mxu0 %v8746
      %10020 = vmatpush1.bf16.msra.mxu0 %v8745
      %10021 = vmatprep.mubr.bf16.mxu0 %v6270
      %10022 = vmatmul.mubr.bf16.gmra.mrb[0].mxu0 %v6269
      %v10023 = vpop.f32.mrb[0].mxu0
      %v10024 = vadd.f32 %v9981, %v10023
      %v10025 = vpop.f32.mrb[0].mxu0
      %v10026 = vadd.f32 %v9983, %v10025
      %v10027 = vpop.f32.mrb[0].mxu0
      %v10028 = vadd.f32 %v9985, %v10027
      %v10029 = vpop.f32.mrb[0].mxu0
      %v10030 = vadd.f32 %v9987, %v10029
      %10031 = vdwg.mxu0
      %10032 = vmatprep.subr.bf16.mxu0 %v8754
      %10033 = vmatpush1.bf16.msra.mxu0 %v8753
      %10034 = vmatprep.subr.bf16.mxu0 %v8762
      %10035 = vmatpush1.bf16.msra.mxu0 %v8761
      %10036 = vmatprep.subr.bf16.mxu0 %v8770
      %10037 = vmatpush1.bf16.msra.mxu0 %v8769
      %10038 = vmatprep.subr.bf16.mxu0 %v8778
      %10039 = vmatpush1.bf16.msra.mxu0 %v8777
      %10040 = vmatprep.subr.bf16.mxu0 %v8786
      %10041 = vmatpush1.bf16.msra.mxu0 %v8785
      %10042 = vmatprep.subr.bf16.mxu0 %v8794
      %10043 = vmatpush1.bf16.msra.mxu0 %v8793
      %10044 = vmatprep.subr.bf16.mxu0 %v8802
      %10045 = vmatpush1.bf16.msra.mxu0 %v8801
      %10046 = vmatprep.subr.bf16.mxu0 %v8810
      %10047 = vmatpush1.bf16.msra.mxu0 %v8809
      %10048 = vmatprep.subr.bf16.mxu0 %v8818
      %10049 = vmatpush1.bf16.msra.mxu0 %v8817
      %10050 = vmatprep.subr.bf16.mxu0 %v8826
      %10051 = vmatpush1.bf16.msra.mxu0 %v8825
      %10052 = vmatprep.subr.bf16.mxu0 %v8834
      %10053 = vmatpush1.bf16.msra.mxu0 %v8833
      %10054 = vmatprep.subr.bf16.mxu0 %v8842
      %10055 = vmatpush1.bf16.msra.mxu0 %v8841
      %10056 = vmatprep.subr.bf16.mxu0 %v8850
      %10057 = vmatpush1.bf16.msra.mxu0 %v8849
      %10058 = vmatprep.subr.bf16.mxu0 %v8858
      %10059 = vmatpush1.bf16.msra.mxu0 %v8857
      %10060 = vmatprep.subr.bf16.mxu0 %v8866
      %10061 = vmatpush1.bf16.msra.mxu0 %v8865
      %10062 = vmatprep.subr.bf16.mxu0 %v8874
      %10063 = vmatpush1.bf16.msra.mxu0 %v8873
      %10064 = vmatprep.mubr.bf16.mxu0 %v6272
      %10065 = vmatmul.mubr.bf16.gmra.mrb[0].mxu0 %v6271
      %v10066 = vpop.f32.mrb[0].mxu0
      %v10067 = vadd.f32 %v10024, %v10066
      %v10068 = vpop.f32.mrb[0].mxu0
      %v10069 = vadd.f32 %v10026, %v10068
      %v10070 = vpop.f32.mrb[0].mxu0
      %v10071 = vadd.f32 %v10028, %v10070
      %v10072 = vpop.f32.mrb[0].mxu0
      %v10073 = vadd.f32 %v10030, %v10072
      %10074 = vdwg.mxu0
      %v10075 = vmul.f32 %v9551, 0.5
      %v10076 = vmul.f32 %v9553, 0.5
      %v10077 = vmul.f32 %v9723, 0.5
      %v10078 = vmul.f32 %v9725, 0.5
      %v10079 = vmul.f32 %v9895, 0.5
      %v10080 = vmul.f32 %v9897, 0.5
      %v10081 = vmul.f32 %v10067, 0.5
      %v10082 = vmul.f32 %v10069, 0.5
      %v10083 = vmul.f32 %v9555, 0.5
      %v10084 = vmul.f32 %v9557, 0.5
      %v10085 = vmul.f32 %v9727, 0.5
      %v10086 = vmul.f32 %v9729, 0.5
      %v10087 = vmul.f32 %v9899, 0.5
      %v10088 = vmul.f32 %v9901, 0.5
      %v10089 = vmul.f32 %v10071, 0.5
      %v10090 = vmul.f32 %v10073, 0.5
      %v10091 = vtanh.pop %v10075
      %v10092 = vtanh.pop %v10076
      %v10093 = vtanh.pop %v10077
      %v10094 = vtanh.pop %v10078
      %v10095 = vtanh.pop %v10079
      %v10096 = vtanh.pop %v10080
      %v10097 = vtanh.pop %v10081
      %v10098 = vtanh.pop %v10082
      %v10099 = vtanh.pop %v10083
      %v10100 = vtanh.pop %v10084
      %v10101 = vtanh.pop %v10085
      %v10102 = vtanh.pop %v10086
      %v10103 = vtanh.pop %v10087
      %v10104 = vtanh.pop %v10088
      %v10105 = vtanh.pop %v10089
      %v10106 = vtanh.pop %v10090
      %v10107 = vadd.f32 %v10091, 1.0
      %v10108 = vadd.f32 %v10092, 1.0
      %v10109 = vadd.f32 %v10093, 1.0
      %v10110 = vadd.f32 %v10094, 1.0
      %v10111 = vadd.f32 %v10095, 1.0
      %v10112 = vadd.f32 %v10096, 1.0
      %v10113 = vadd.f32 %v10097, 1.0
      %v10114 = vadd.f32 %v10098, 1.0
      %v10115 = vadd.f32 %v10099, 1.0
      %v10116 = vadd.f32 %v10100, 1.0
      %v10117 = vadd.f32 %v10101, 1.0
      %v10118 = vadd.f32 %v10102, 1.0
      %v10119 = vadd.f32 %v10103, 1.0
      %v10120 = vadd.f32 %v10104, 1.0
      %v10121 = vadd.f32 %v10105, 1.0
      %v10122 = vadd.f32 %v10106, 1.0
      %v10123 = vmul.f32 %v10107, 0.5
      %v10124 = vmul.f32 %v10108, 0.5
      %v10125 = vmul.f32 %v10109, 0.5
      %v10126 = vmul.f32 %v10110, 0.5
      %v10127 = vmul.f32 %v10111, 0.5
      %v10128 = vmul.f32 %v10112, 0.5
      %v10129 = vmul.f32 %v10113, 0.5
      %v10130 = vmul.f32 %v10114, 0.5
      %v10131 = vmul.f32 %v10115, 0.5
      %v10132 = vmul.f32 %v10116, 0.5
      %v10133 = vmul.f32 %v10117, 0.5
      %v10134 = vmul.f32 %v10118, 0.5
      %v10135 = vmul.f32 %v10119, 0.5
      %v10136 = vmul.f32 %v10120, 0.5
      %v10137 = vmul.f32 %v10121, 0.5
      %v10138 = vmul.f32 %v10122, 0.5
      %v10139 = vpack.c.bf16 %v10131, %v10123
      %v10140 = vpack.c.bf16 %v10132, %v10124
      %v10141 = vpack.c.bf16 %v10133, %v10125
      %v10142 = vpack.c.bf16 %v10134, %v10126
      %v10143 = vpack.c.bf16 %v10135, %v10127
      %v10144 = vpack.c.bf16 %v10136, %v10128
      %v10145 = vpack.c.bf16 %v10137, %v10129
      %v10146 = vpack.c.bf16 %v10138, %v10130
      %v10147 = vld [vmem:[%s7] sm:$0xff]
      %v10148 = vld [vmem:[%s7 + $0x8] sm:$0xff]
      %v10149 = vld [vmem:[%s7 + $0x10] sm:$0xff]
      %v10150 = vld [vmem:[%s7 + $0x18] sm:$0xff]
      %v10151 = vld [vmem:[%s7 + $0x20] sm:$0xff]
      %v10152 = vld [vmem:[%s7 + $0x28] sm:$0xff]
      %v10153 = vld [vmem:[%s7 + $0x30] sm:$0xff]
      %v10154 = vld [vmem:[%s7 + $0x38] sm:$0xff]
      %v10155 = vld [vmem:[%s7 + $0x40] sm:$0xff]
      %v10156 = vld [vmem:[%s7 + $0x48] sm:$0xff]
      %v10157 = vld [vmem:[%s7 + $0x50] sm:$0xff]
      %v10158 = vld [vmem:[%s7 + $0x58] sm:$0xff]
      %v10159 = vld [vmem:[%s7 + $0x60] sm:$0xff]
      %v10160 = vld [vmem:[%s7 + $0x68] sm:$0xff]
      %v10161 = vld [vmem:[%s7 + $0x70] sm:$0xff]
      %v10162 = vld [vmem:[%s7 + $0x78] sm:$0xff]
      %v10163 = vld [vmem:[%s7 + $0x80] sm:$0xff]
      %v10164 = vld [vmem:[%s7 + $0x88] sm:$0xff]
      %v10165 = vld [vmem:[%s7 + $0x90] sm:$0xff]
      %v10166 = vld [vmem:[%s7 + $0x98] sm:$0xff]
      %v10167 = vld [vmem:[%s7 + $0xa0] sm:$0xff]
      %v10168 = vld [vmem:[%s7 + $0xa8] sm:$0xff]
      %v10169 = vld [vmem:[%s7 + $0xb0] sm:$0xff]
      %v10170 = vld [vmem:[%s7 + $0xb8] sm:$0xff]
      %v10171 = vld [vmem:[%s7 + $0xc0] sm:$0xff]
      %v10172 = vld [vmem:[%s7 + $0xc8] sm:$0xff]
      %v10173 = vld [vmem:[%s7 + $0xd0] sm:$0xff]
      %v10174 = vld [vmem:[%s7 + $0xd8] sm:$0xff]
      %v10175 = vld [vmem:[%s7 + $0xe0] sm:$0xff]
      %v10176 = vld [vmem:[%s7 + $0xe8] sm:$0xff]
      %v10177 = vld [vmem:[%s7 + $0xf0] sm:$0xff]
      %v10178 = vld [vmem:[%s7 + $0xf8] sm:$0xff]
      %v10179 = vld [vmem:[%s7 + $0x100] sm:$0xff]
      %v10180 = vld [vmem:[%s7 + $0x108] sm:$0xff]
      %v10181 = vld [vmem:[%s7 + $0x110] sm:$0xff]
      %v10182 = vld [vmem:[%s7 + $0x118] sm:$0xff]
      %v10183 = vld [vmem:[%s7 + $0x120] sm:$0xff]
      %v10184 = vld [vmem:[%s7 + $0x128] sm:$0xff]
      %v10185 = vld [vmem:[%s7 + $0x130] sm:$0xff]
      %v10186 = vld [vmem:[%s7 + $0x138] sm:$0xff]
      %v10187 = vld [vmem:[%s7 + $0x140] sm:$0xff]
      %v10188 = vld [vmem:[%s7 + $0x148] sm:$0xff]
      %v10189 = vld [vmem:[%s7 + $0x150] sm:$0xff]
      %v10190 = vld [vmem:[%s7 + $0x158] sm:$0xff]
      %v10191 = vld [vmem:[%s7 + $0x160] sm:$0xff]
      %v10192 = vld [vmem:[%s7 + $0x168] sm:$0xff]
      %v10193 = vld [vmem:[%s7 + $0x170] sm:$0xff]
      %v10194 = vld [vmem:[%s7 + $0x178] sm:$0xff]
      %v10195 = vld [vmem:[%s7 + $0x180] sm:$0xff]
      %v10196 = vld [vmem:[%s7 + $0x188] sm:$0xff]
      %v10197 = vld [vmem:[%s7 + $0x190] sm:$0xff]
      %v10198 = vld [vmem:[%s7 + $0x198] sm:$0xff]
      %v10199 = vld [vmem:[%s7 + $0x1a0] sm:$0xff]
      %v10200 = vld [vmem:[%s7 + $0x1a8] sm:$0xff]
      %v10201 = vld [vmem:[%s7 + $0x1b0] sm:$0xff]
      %v10202 = vld [vmem:[%s7 + $0x1b8] sm:$0xff]
      %v10203 = vld [vmem:[%s7 + $0x1c0] sm:$0xff]
      %v10204 = vld [vmem:[%s7 + $0x1c8] sm:$0xff]
      %v10205 = vld [vmem:[%s7 + $0x1d0] sm:$0xff]
      %v10206 = vld [vmem:[%s7 + $0x1d8] sm:$0xff]
      %v10207 = vld [vmem:[%s7 + $0x1e0] sm:$0xff]
      %v10208 = vld [vmem:[%s7 + $0x1e8] sm:$0xff]
      %v10209 = vld [vmem:[%s7 + $0x1f0] sm:$0xff]
      %v10210 = vld [vmem:[%s7 + $0x1f8] sm:$0xff]
      %v10211 = vld [vmem:[%s7 + $0x200] sm:$0xff]
      %v10212 = vld [vmem:[%s7 + $0x208] sm:$0xff]
      %v10213 = vld [vmem:[%s7 + $0x210] sm:$0xff]
      %v10214 = vld [vmem:[%s7 + $0x218] sm:$0xff]
      %v10215 = vld [vmem:[%s7 + $0x220] sm:$0xff]
      %v10216 = vld [vmem:[%s7 + $0x228] sm:$0xff]
      %v10217 = vld [vmem:[%s7 + $0x230] sm:$0xff]
      %v10218 = vld [vmem:[%s7 + $0x238] sm:$0xff]
      %v10219 = vld [vmem:[%s7 + $0x240] sm:$0xff]
      %v10220 = vld [vmem:[%s7 + $0x248] sm:$0xff]
      %v10221 = vld [vmem:[%s7 + $0x250] sm:$0xff]
      %v10222 = vld [vmem:[%s7 + $0x258] sm:$0xff]
      %v10223 = vld [vmem:[%s7 + $0x260] sm:$0xff]
      %v10224 = vld [vmem:[%s7 + $0x268] sm:$0xff]
      %v10225 = vld [vmem:[%s7 + $0x270] sm:$0xff]
      %v10226 = vld [vmem:[%s7 + $0x278] sm:$0xff]
      %v10227 = vld [vmem:[%s7 + $0x280] sm:$0xff]
      %v10228 = vld [vmem:[%s7 + $0x288] sm:$0xff]
      %v10229 = vld [vmem:[%s7 + $0x290] sm:$0xff]
      %v10230 = vld [vmem:[%s7 + $0x298] sm:$0xff]
      %v10231 = vld [vmem:[%s7 + $0x2a0] sm:$0xff]
      %v10232 = vld [vmem:[%s7 + $0x2a8] sm:$0xff]
      %v10233 = vld [vmem:[%s7 + $0x2b0] sm:$0xff]
      %v10234 = vld [vmem:[%s7 + $0x2b8] sm:$0xff]
      %v10235 = vld [vmem:[%s7 + $0x2c0] sm:$0xff]
      %v10236 = vld [vmem:[%s7 + $0x2c8] sm:$0xff]
      %v10237 = vld [vmem:[%s7 + $0x2d0] sm:$0xff]
      %v10238 = vld [vmem:[%s7 + $0x2d8] sm:$0xff]
      %v10239 = vld [vmem:[%s7 + $0x2e0] sm:$0xff]
      %v10240 = vld [vmem:[%s7 + $0x2e8] sm:$0xff]
      %v10241 = vld [vmem:[%s7 + $0x2f0] sm:$0xff]
      %v10242 = vld [vmem:[%s7 + $0x2f8] sm:$0xff]
      %v10243 = vld [vmem:[%s7 + $0x300] sm:$0xff]
      %v10244 = vld [vmem:[%s7 + $0x308] sm:$0xff]
      %v10245 = vld [vmem:[%s7 + $0x310] sm:$0xff]
      %v10246 = vld [vmem:[%s7 + $0x318] sm:$0xff]
      %v10247 = vld [vmem:[%s7 + $0x320] sm:$0xff]
      %v10248 = vld [vmem:[%s7 + $0x328] sm:$0xff]
      %v10249 = vld [vmem:[%s7 + $0x330] sm:$0xff]
      %v10250 = vld [vmem:[%s7 + $0x338] sm:$0xff]
      %v10251 = vld [vmem:[%s7 + $0x340] sm:$0xff]
      %v10252 = vld [vmem:[%s7 + $0x348] sm:$0xff]
      %v10253 = vld [vmem:[%s7 + $0x350] sm:$0xff]
      %v10254 = vld [vmem:[%s7 + $0x358] sm:$0xff]
      %v10255 = vld [vmem:[%s7 + $0x360] sm:$0xff]
      %v10256 = vld [vmem:[%s7 + $0x368] sm:$0xff]
      %v10257 = vld [vmem:[%s7 + $0x370] sm:$0xff]
      %v10258 = vld [vmem:[%s7 + $0x378] sm:$0xff]
      %v10259 = vld [vmem:[%s7 + $0x380] sm:$0xff]
      %v10260 = vld [vmem:[%s7 + $0x388] sm:$0xff]
      %v10261 = vld [vmem:[%s7 + $0x390] sm:$0xff]
      %v10262 = vld [vmem:[%s7 + $0x398] sm:$0xff]
      %v10263 = vld [vmem:[%s7 + $0x3a0] sm:$0xff]
      %v10264 = vld [vmem:[%s7 + $0x3a8] sm:$0xff]
      %v10265 = vld [vmem:[%s7 + $0x3b0] sm:$0xff]
      %v10266 = vld [vmem:[%s7 + $0x3b8] sm:$0xff]
      %v10267 = vld [vmem:[%s7 + $0x3c0] sm:$0xff]
      %v10268 = vld [vmem:[%s7 + $0x3c8] sm:$0xff]
      %v10269 = vld [vmem:[%s7 + $0x3d0] sm:$0xff]
      %v10270 = vld [vmem:[%s7 + $0x3d8] sm:$0xff]
      %v10271 = vld [vmem:[%s7 + $0x3e0] sm:$0xff]
      %v10272 = vld [vmem:[%s7 + $0x3e8] sm:$0xff]
      %v10273 = vld [vmem:[%s7 + $0x3f0] sm:$0xff]
      %v10274 = vld [vmem:[%s7 + $0x3f8] sm:$0xff]
      %v10275 = vld [vmem:[%s8] sm:$0x3]
      %v10277 = vlaneseq
      %v10278 = vshrl.u32 %v10277, 7
      %v10279 = vsub.s32 0, %v10278
      %v10280 = vrot.slane %v10275, %v10279
      %v10281 = vlaneseq
      %v10282 = vshrl.u32 %v10281, 7
      %v10283 = vsub.s32 1, %v10282
      %v10284 = vrot.slane %v10275, %v10283
      %v10415 = vunpack.c.l.b16 %v10147
      %v10416 = vunpack.c.h.b16 %v10147
      %v10417 = vunpack.c.l.b16 %v10148
      %v10418 = vunpack.c.h.b16 %v10148
      %v10419 = vunpack.c.l.b16 %v10149
      %v10420 = vunpack.c.h.b16 %v10149
      %v10421 = vunpack.c.l.b16 %v10150
      %v10422 = vunpack.c.h.b16 %v10150
      %v10423 = vunpack.c.l.b16 %v10151
      %v10424 = vunpack.c.h.b16 %v10151
      %v10425 = vunpack.c.l.b16 %v10152
      %v10426 = vunpack.c.h.b16 %v10152
      %v10427 = vunpack.c.l.b16 %v10153
      %v10428 = vunpack.c.h.b16 %v10153
      %v10429 = vunpack.c.l.b16 %v10154
      %v10430 = vunpack.c.h.b16 %v10154
      %v10431 = vunpack.c.l.b16 %v10155
      %v10432 = vunpack.c.h.b16 %v10155
      %v10433 = vunpack.c.l.b16 %v10156
      %v10434 = vunpack.c.h.b16 %v10156
      %v10435 = vunpack.c.l.b16 %v10157
      %v10436 = vunpack.c.h.b16 %v10157
      %v10437 = vunpack.c.l.b16 %v10158
      %v10438 = vunpack.c.h.b16 %v10158
      %v10439 = vunpack.c.l.b16 %v10159
      %v10440 = vunpack.c.h.b16 %v10159
      %v10441 = vunpack.c.l.b16 %v10160
      %v10442 = vunpack.c.h.b16 %v10160
      %v10443 = vunpack.c.l.b16 %v10161
      %v10444 = vunpack.c.h.b16 %v10161
      %v10445 = vunpack.c.l.b16 %v10162
      %v10446 = vunpack.c.h.b16 %v10162
      %v10447 = vunpack.c.l.b16 %v10163
      %v10448 = vunpack.c.h.b16 %v10163
      %v10449 = vunpack.c.l.b16 %v10164
      %v10450 = vunpack.c.h.b16 %v10164
      %v10451 = vunpack.c.l.b16 %v10165
      %v10452 = vunpack.c.h.b16 %v10165
      %v10453 = vunpack.c.l.b16 %v10166
      %v10454 = vunpack.c.h.b16 %v10166
      %v10455 = vunpack.c.l.b16 %v10167
      %v10456 = vunpack.c.h.b16 %v10167
      %v10457 = vunpack.c.l.b16 %v10168
      %v10458 = vunpack.c.h.b16 %v10168
      %v10459 = vunpack.c.l.b16 %v10169
      %v10460 = vunpack.c.h.b16 %v10169
      %v10461 = vunpack.c.l.b16 %v10170
      %v10462 = vunpack.c.h.b16 %v10170
      %v10463 = vunpack.c.l.b16 %v10171
      %v10464 = vunpack.c.h.b16 %v10171
      %v10465 = vunpack.c.l.b16 %v10172
      %v10466 = vunpack.c.h.b16 %v10172
      %v10467 = vunpack.c.l.b16 %v10173
      %v10468 = vunpack.c.h.b16 %v10173
      %v10469 = vunpack.c.l.b16 %v10174
      %v10470 = vunpack.c.h.b16 %v10174
      %v10471 = vunpack.c.l.b16 %v10175
      %v10472 = vunpack.c.h.b16 %v10175
      %v10473 = vunpack.c.l.b16 %v10176
      %v10474 = vunpack.c.h.b16 %v10176
      %v10475 = vunpack.c.l.b16 %v10177
      %v10476 = vunpack.c.h.b16 %v10177
      %v10477 = vunpack.c.l.b16 %v10178
      %v10478 = vunpack.c.h.b16 %v10178
      %v10479 = vunpack.c.l.b16 %v10179
      %v10480 = vunpack.c.h.b16 %v10179
      %v10481 = vunpack.c.l.b16 %v10180
      %v10482 = vunpack.c.h.b16 %v10180
      %v10483 = vunpack.c.l.b16 %v10181
      %v10484 = vunpack.c.h.b16 %v10181
      %v10485 = vunpack.c.l.b16 %v10182
      %v10486 = vunpack.c.h.b16 %v10182
      %v10487 = vunpack.c.l.b16 %v10183
      %v10488 = vunpack.c.h.b16 %v10183
      %v10489 = vunpack.c.l.b16 %v10184
      %v10490 = vunpack.c.h.b16 %v10184
      %v10491 = vunpack.c.l.b16 %v10185
      %v10492 = vunpack.c.h.b16 %v10185
      %v10493 = vunpack.c.l.b16 %v10186
      %v10494 = vunpack.c.h.b16 %v10186
      %v10495 = vunpack.c.l.b16 %v10187
      %v10496 = vunpack.c.h.b16 %v10187
      %v10497 = vunpack.c.l.b16 %v10188
      %v10498 = vunpack.c.h.b16 %v10188
      %v10499 = vunpack.c.l.b16 %v10189
      %v10500 = vunpack.c.h.b16 %v10189
      %v10501 = vunpack.c.l.b16 %v10190
      %v10502 = vunpack.c.h.b16 %v10190
      %v10503 = vunpack.c.l.b16 %v10191
      %v10504 = vunpack.c.h.b16 %v10191
      %v10505 = vunpack.c.l.b16 %v10192
      %v10506 = vunpack.c.h.b16 %v10192
      %v10507 = vunpack.c.l.b16 %v10193
      %v10508 = vunpack.c.h.b16 %v10193
      %v10509 = vunpack.c.l.b16 %v10194
      %v10510 = vunpack.c.h.b16 %v10194
      %v10511 = vunpack.c.l.b16 %v10195
      %v10512 = vunpack.c.h.b16 %v10195
      %v10513 = vunpack.c.l.b16 %v10196
      %v10514 = vunpack.c.h.b16 %v10196
      %v10515 = vunpack.c.l.b16 %v10197
      %v10516 = vunpack.c.h.b16 %v10197
      %v10517 = vunpack.c.l.b16 %v10198
      %v10518 = vunpack.c.h.b16 %v10198
      %v10519 = vunpack.c.l.b16 %v10199
      %v10520 = vunpack.c.h.b16 %v10199
      %v10521 = vunpack.c.l.b16 %v10200
      %v10522 = vunpack.c.h.b16 %v10200
      %v10523 = vunpack.c.l.b16 %v10201
      %v10524 = vunpack.c.h.b16 %v10201
      %v10525 = vunpack.c.l.b16 %v10202
      %v10526 = vunpack.c.h.b16 %v10202
      %v10527 = vunpack.c.l.b16 %v10203
      %v10528 = vunpack.c.h.b16 %v10203
      %v10529 = vunpack.c.l.b16 %v10204
      %v10530 = vunpack.c.h.b16 %v10204
      %v10531 = vunpack.c.l.b16 %v10205
      %v10532 = vunpack.c.h.b16 %v10205
      %v10533 = vunpack.c.l.b16 %v10206
      %v10534 = vunpack.c.h.b16 %v10206
      %v10535 = vunpack.c.l.b16 %v10207
      %v10536 = vunpack.c.h.b16 %v10207
      %v10537 = vunpack.c.l.b16 %v10208
      %v10538 = vunpack.c.h.b16 %v10208
      %v10539 = vunpack.c.l.b16 %v10209
      %v10540 = vunpack.c.h.b16 %v10209
      %v10541 = vunpack.c.l.b16 %v10210
      %v10542 = vunpack.c.h.b16 %v10210
      %v10543 = vunpack.c.l.b16 %v10211
      %v10544 = vunpack.c.h.b16 %v10211
      %v10545 = vunpack.c.l.b16 %v10212
      %v10546 = vunpack.c.h.b16 %v10212
      %v10547 = vunpack.c.l.b16 %v10213
      %v10548 = vunpack.c.h.b16 %v10213
      %v10549 = vunpack.c.l.b16 %v10214
      %v10550 = vunpack.c.h.b16 %v10214
      %v10551 = vunpack.c.l.b16 %v10215
      %v10552 = vunpack.c.h.b16 %v10215
      %v10553 = vunpack.c.l.b16 %v10216
      %v10554 = vunpack.c.h.b16 %v10216
      %v10555 = vunpack.c.l.b16 %v10217
      %v10556 = vunpack.c.h.b16 %v10217
      %v10557 = vunpack.c.l.b16 %v10218
      %v10558 = vunpack.c.h.b16 %v10218
      %v10559 = vunpack.c.l.b16 %v10219
      %v10560 = vunpack.c.h.b16 %v10219
      %v10561 = vunpack.c.l.b16 %v10220
      %v10562 = vunpack.c.h.b16 %v10220
      %v10563 = vunpack.c.l.b16 %v10221
      %v10564 = vunpack.c.h.b16 %v10221
      %v10565 = vunpack.c.l.b16 %v10222
      %v10566 = vunpack.c.h.b16 %v10222
      %v10567 = vunpack.c.l.b16 %v10223
      %v10568 = vunpack.c.h.b16 %v10223
      %v10569 = vunpack.c.l.b16 %v10224
      %v10570 = vunpack.c.h.b16 %v10224
      %v10571 = vunpack.c.l.b16 %v10225
      %v10572 = vunpack.c.h.b16 %v10225
      %v10573 = vunpack.c.l.b16 %v10226
      %v10574 = vunpack.c.h.b16 %v10226
      %v10575 = vunpack.c.l.b16 %v10227
      %v10576 = vunpack.c.h.b16 %v10227
      %v10577 = vunpack.c.l.b16 %v10228
      %v10578 = vunpack.c.h.b16 %v10228
      %v10579 = vunpack.c.l.b16 %v10229
      %v10580 = vunpack.c.h.b16 %v10229
      %v10581 = vunpack.c.l.b16 %v10230
      %v10582 = vunpack.c.h.b16 %v10230
      %v10583 = vunpack.c.l.b16 %v10231
      %v10584 = vunpack.c.h.b16 %v10231
      %v10585 = vunpack.c.l.b16 %v10232
      %v10586 = vunpack.c.h.b16 %v10232
      %v10587 = vunpack.c.l.b16 %v10233
      %v10588 = vunpack.c.h.b16 %v10233
      %v10589 = vunpack.c.l.b16 %v10234
      %v10590 = vunpack.c.h.b16 %v10234
      %v10591 = vunpack.c.l.b16 %v10235
      %v10592 = vunpack.c.h.b16 %v10235
      %v10593 = vunpack.c.l.b16 %v10236
      %v10594 = vunpack.c.h.b16 %v10236
      %v10595 = vunpack.c.l.b16 %v10237
      %v10596 = vunpack.c.h.b16 %v10237
      %v10597 = vunpack.c.l.b16 %v10238
      %v10598 = vunpack.c.h.b16 %v10238
      %v10599 = vunpack.c.l.b16 %v10239
      %v10600 = vunpack.c.h.b16 %v10239
      %v10601 = vunpack.c.l.b16 %v10240
      %v10602 = vunpack.c.h.b16 %v10240
      %v10603 = vunpack.c.l.b16 %v10241
      %v10604 = vunpack.c.h.b16 %v10241
      %v10605 = vunpack.c.l.b16 %v10242
      %v10606 = vunpack.c.h.b16 %v10242
      %v10607 = vunpack.c.l.b16 %v10243
      %v10608 = vunpack.c.h.b16 %v10243
      %v10609 = vunpack.c.l.b16 %v10244
      %v10610 = vunpack.c.h.b16 %v10244
      %v10611 = vunpack.c.l.b16 %v10245
      %v10612 = vunpack.c.h.b16 %v10245
      %v10613 = vunpack.c.l.b16 %v10246
      %v10614 = vunpack.c.h.b16 %v10246
      %v10615 = vunpack.c.l.b16 %v10247
      %v10616 = vunpack.c.h.b16 %v10247
      %v10617 = vunpack.c.l.b16 %v10248
      %v10618 = vunpack.c.h.b16 %v10248
      %v10619 = vunpack.c.l.b16 %v10249
      %v10620 = vunpack.c.h.b16 %v10249
      %v10621 = vunpack.c.l.b16 %v10250
      %v10622 = vunpack.c.h.b16 %v10250
      %v10623 = vunpack.c.l.b16 %v10251
      %v10624 = vunpack.c.h.b16 %v10251
      %v10625 = vunpack.c.l.b16 %v10252
      %v10626 = vunpack.c.h.b16 %v10252
      %v10627 = vunpack.c.l.b16 %v10253
      %v10628 = vunpack.c.h.b16 %v10253
      %v10629 = vunpack.c.l.b16 %v10254
      %v10630 = vunpack.c.h.b16 %v10254
      %v10631 = vunpack.c.l.b16 %v10255
      %v10632 = vunpack.c.h.b16 %v10255
      %v10633 = vunpack.c.l.b16 %v10256
      %v10634 = vunpack.c.h.b16 %v10256
      %v10635 = vunpack.c.l.b16 %v10257
      %v10636 = vunpack.c.h.b16 %v10257
      %v10637 = vunpack.c.l.b16 %v10258
      %v10638 = vunpack.c.h.b16 %v10258
      %v10639 = vunpack.c.l.b16 %v10259
      %v10640 = vunpack.c.h.b16 %v10259
      %v10641 = vunpack.c.l.b16 %v10260
      %v10642 = vunpack.c.h.b16 %v10260
      %v10643 = vunpack.c.l.b16 %v10261
      %v10644 = vunpack.c.h.b16 %v10261
      %v10645 = vunpack.c.l.b16 %v10262
      %v10646 = vunpack.c.h.b16 %v10262
      %v10647 = vunpack.c.l.b16 %v10263
      %v10648 = vunpack.c.h.b16 %v10263
      %v10649 = vunpack.c.l.b16 %v10264
      %v10650 = vunpack.c.h.b16 %v10264
      %v10651 = vunpack.c.l.b16 %v10265
      %v10652 = vunpack.c.h.b16 %v10265
      %v10653 = vunpack.c.l.b16 %v10266
      %v10654 = vunpack.c.h.b16 %v10266
      %v10655 = vunpack.c.l.b16 %v10267
      %v10656 = vunpack.c.h.b16 %v10267
      %v10657 = vunpack.c.l.b16 %v10268
      %v10658 = vunpack.c.h.b16 %v10268
      %v10659 = vunpack.c.l.b16 %v10269
      %v10660 = vunpack.c.h.b16 %v10269
      %v10661 = vunpack.c.l.b16 %v10270
      %v10662 = vunpack.c.h.b16 %v10270
      %v10663 = vunpack.c.l.b16 %v10271
      %v10664 = vunpack.c.h.b16 %v10271
      %v10665 = vunpack.c.l.b16 %v10272
      %v10666 = vunpack.c.h.b16 %v10272
      %v10667 = vunpack.c.l.b16 %v10273
      %v10668 = vunpack.c.h.b16 %v10273
      %v10669 = vunpack.c.l.b16 %v10274
      %v10670 = vunpack.c.h.b16 %v10274
      %v10671 = vpack.c.b16 %v10417, %v10415
      %v10672 = vpack.c.b16 %v10418, %v10416
      %v10673 = vpack.c.b16 %v10421, %v10419
      %v10674 = vpack.c.b16 %v10422, %v10420
      %v10675 = vpack.c.b16 %v10425, %v10423
      %v10676 = vpack.c.b16 %v10426, %v10424
      %v10677 = vpack.c.b16 %v10429, %v10427
      %v10678 = vpack.c.b16 %v10430, %v10428
      %v10679 = vpack.c.b16 %v10433, %v10431
      %v10680 = vpack.c.b16 %v10434, %v10432
      %v10681 = vpack.c.b16 %v10437, %v10435
      %v10682 = vpack.c.b16 %v10438, %v10436
      %v10683 = vpack.c.b16 %v10441, %v10439
      %v10684 = vpack.c.b16 %v10442, %v10440
      %v10685 = vpack.c.b16 %v10445, %v10443
      %v10686 = vpack.c.b16 %v10446, %v10444
      %v10687 = vpack.c.b16 %v10449, %v10447
      %v10688 = vpack.c.b16 %v10450, %v10448
      %v10689 = vpack.c.b16 %v10453, %v10451
      %v10690 = vpack.c.b16 %v10454, %v10452
      %v10691 = vpack.c.b16 %v10457, %v10455
      %v10692 = vpack.c.b16 %v10458, %v10456
      %v10693 = vpack.c.b16 %v10461, %v10459
      %v10694 = vpack.c.b16 %v10462, %v10460
      %v10695 = vpack.c.b16 %v10465, %v10463
      %v10696 = vpack.c.b16 %v10466, %v10464
      %v10697 = vpack.c.b16 %v10469, %v10467
      %v10698 = vpack.c.b16 %v10470, %v10468
      %v10699 = vpack.c.b16 %v10473, %v10471
      %v10700 = vpack.c.b16 %v10474, %v10472
      %v10701 = vpack.c.b16 %v10477, %v10475
      %v10702 = vpack.c.b16 %v10478, %v10476
      %v10703 = vpack.c.b16 %v10481, %v10479
      %v10704 = vpack.c.b16 %v10482, %v10480
      %v10705 = vpack.c.b16 %v10485, %v10483
      %v10706 = vpack.c.b16 %v10486, %v10484
      %v10707 = vpack.c.b16 %v10489, %v10487
      %v10708 = vpack.c.b16 %v10490, %v10488
      %v10709 = vpack.c.b16 %v10493, %v10491
      %v10710 = vpack.c.b16 %v10494, %v10492
      %v10711 = vpack.c.b16 %v10497, %v10495
      %v10712 = vpack.c.b16 %v10498, %v10496
      %v10713 = vpack.c.b16 %v10501, %v10499
      %v10714 = vpack.c.b16 %v10502, %v10500
      %v10715 = vpack.c.b16 %v10505, %v10503
      %v10716 = vpack.c.b16 %v10506, %v10504
      %v10717 = vpack.c.b16 %v10509, %v10507
      %v10718 = vpack.c.b16 %v10510, %v10508
      %v10719 = vpack.c.b16 %v10513, %v10511
      %v10720 = vpack.c.b16 %v10514, %v10512
      %v10721 = vpack.c.b16 %v10517, %v10515
      %v10722 = vpack.c.b16 %v10518, %v10516
      %v10723 = vpack.c.b16 %v10521, %v10519
      %v10724 = vpack.c.b16 %v10522, %v10520
      %v10725 = vpack.c.b16 %v10525, %v10523
      %v10726 = vpack.c.b16 %v10526, %v10524
      %v10727 = vpack.c.b16 %v10529, %v10527
      %v10728 = vpack.c.b16 %v10530, %v10528
      %v10729 = vpack.c.b16 %v10533, %v10531
      %v10730 = vpack.c.b16 %v10534, %v10532
      %v10731 = vpack.c.b16 %v10537, %v10535
      %v10732 = vpack.c.b16 %v10538, %v10536
      %v10733 = vpack.c.b16 %v10541, %v10539
      %v10734 = vpack.c.b16 %v10542, %v10540
      %v10735 = vpack.c.b16 %v10545, %v10543
      %v10736 = vpack.c.b16 %v10546, %v10544
      %v10737 = vpack.c.b16 %v10549, %v10547
      %v10738 = vpack.c.b16 %v10550, %v10548
      %v10739 = vpack.c.b16 %v10553, %v10551
      %v10740 = vpack.c.b16 %v10554, %v10552
      %v10741 = vpack.c.b16 %v10557, %v10555
      %v10742 = vpack.c.b16 %v10558, %v10556
      %v10743 = vpack.c.b16 %v10561, %v10559
      %v10744 = vpack.c.b16 %v10562, %v10560
      %v10745 = vpack.c.b16 %v10565, %v10563
      %v10746 = vpack.c.b16 %v10566, %v10564
      %v10747 = vpack.c.b16 %v10569, %v10567
      %v10748 = vpack.c.b16 %v10570, %v10568
      %v10749 = vpack.c.b16 %v10573, %v10571
      %v10750 = vpack.c.b16 %v10574, %v10572
      %v10751 = vpack.c.b16 %v10577, %v10575
      %v10752 = vpack.c.b16 %v10578, %v10576
      %v10753 = vpack.c.b16 %v10581, %v10579
      %v10754 = vpack.c.b16 %v10582, %v10580
      %v10755 = vpack.c.b16 %v10585, %v10583
      %v10756 = vpack.c.b16 %v10586, %v10584
      %v10757 = vpack.c.b16 %v10589, %v10587
      %v10758 = vpack.c.b16 %v10590, %v10588
      %v10759 = vpack.c.b16 %v10593, %v10591
      %v10760 = vpack.c.b16 %v10594, %v10592
      %v10761 = vpack.c.b16 %v10597, %v10595
      %v10762 = vpack.c.b16 %v10598, %v10596
      %v10763 = vpack.c.b16 %v10601, %v10599
      %v10764 = vpack.c.b16 %v10602, %v10600
      %v10765 = vpack.c.b16 %v10605, %v10603
      %v10766 = vpack.c.b16 %v10606, %v10604
      %v10767 = vpack.c.b16 %v10609, %v10607
      %v10768 = vpack.c.b16 %v10610, %v10608
      %v10769 = vpack.c.b16 %v10613, %v10611
      %v10770 = vpack.c.b16 %v10614, %v10612
      %v10771 = vpack.c.b16 %v10617, %v10615
      %v10772 = vpack.c.b16 %v10618, %v10616
      %v10773 = vpack.c.b16 %v10621, %v10619
      %v10774 = vpack.c.b16 %v10622, %v10620
      %v10775 = vpack.c.b16 %v10625, %v10623
      %v10776 = vpack.c.b16 %v10626, %v10624
      %v10777 = vpack.c.b16 %v10629, %v10627
      %v10778 = vpack.c.b16 %v10630, %v10628
      %v10779 = vpack.c.b16 %v10633, %v10631
      %v10780 = vpack.c.b16 %v10634, %v10632
      %v10781 = vpack.c.b16 %v10637, %v10635
      %v10782 = vpack.c.b16 %v10638, %v10636
      %v10783 = vpack.c.b16 %v10641, %v10639
      %v10784 = vpack.c.b16 %v10642, %v10640
      %v10785 = vpack.c.b16 %v10645, %v10643
      %v10786 = vpack.c.b16 %v10646, %v10644
      %v10787 = vpack.c.b16 %v10649, %v10647
      %v10788 = vpack.c.b16 %v10650, %v10648
      %v10789 = vpack.c.b16 %v10653, %v10651
      %v10790 = vpack.c.b16 %v10654, %v10652
      %v10791 = vpack.c.b16 %v10657, %v10655
      %v10792 = vpack.c.b16 %v10658, %v10656
      %v10793 = vpack.c.b16 %v10661, %v10659
      %v10794 = vpack.c.b16 %v10662, %v10660
      %v10795 = vpack.c.b16 %v10665, %v10663
      %v10796 = vpack.c.b16 %v10666, %v10664
      %v10797 = vpack.c.b16 %v10669, %v10667
      %v10798 = vpack.c.b16 %v10670, %v10668
      %10927 = vmatprep.subr.bf16.mxu0 %v10672
      %10928 = vmatpush1.bf16.msra.mxu0 %v10671
      %10929 = vmatprep.subr.bf16.mxu0 %v10674
      %10930 = vmatpush1.bf16.msra.mxu0 %v10673
      %10931 = vmatprep.subr.bf16.mxu0 %v10676
      %10932 = vmatpush1.bf16.msra.mxu0 %v10675
      %10933 = vmatprep.subr.bf16.mxu0 %v10678
      %10934 = vmatpush1.bf16.msra.mxu0 %v10677
      %10935 = vmatprep.subr.bf16.mxu0 %v10680
      %10936 = vmatpush1.bf16.msra.mxu0 %v10679
      %10937 = vmatprep.subr.bf16.mxu0 %v10682
      %10938 = vmatpush1.bf16.msra.mxu0 %v10681
      %10939 = vmatprep.subr.bf16.mxu0 %v10684
      %10940 = vmatpush1.bf16.msra.mxu0 %v10683
      %10941 = vmatprep.subr.bf16.mxu0 %v10686
      %10942 = vmatpush1.bf16.msra.mxu0 %v10685
      %10943 = vmatprep.subr.bf16.mxu0 %v10688
      %10944 = vmatpush1.bf16.msra.mxu0 %v10687
      %10945 = vmatprep.subr.bf16.mxu0 %v10690
      %10946 = vmatpush1.bf16.msra.mxu0 %v10689
      %10947 = vmatprep.subr.bf16.mxu0 %v10692
      %10948 = vmatpush1.bf16.msra.mxu0 %v10691
      %10949 = vmatprep.subr.bf16.mxu0 %v10694
      %10950 = vmatpush1.bf16.msra.mxu0 %v10693
      %10951 = vmatprep.subr.bf16.mxu0 %v10696
      %10952 = vmatpush1.bf16.msra.mxu0 %v10695
      %10953 = vmatprep.subr.bf16.mxu0 %v10698
      %10954 = vmatpush1.bf16.msra.mxu0 %v10697
      %10955 = vmatprep.subr.bf16.mxu0 %v10700
      %10956 = vmatpush1.bf16.msra.mxu0 %v10699
      %10957 = vmatprep.subr.bf16.mxu0 %v10702
      %10958 = vmatpush1.bf16.msra.mxu0 %v10701
      %10959 = vmatprep.mubr.bf16.mxu0 %v10140
      %10960 = vmatmul.mubr.bf16.gmra.mrb[0].mxu0 %v10139
      %v10961 = vpop.f32.mrb[0].mxu0
      %v10962 = vadd.f32 %v10280, %v10961
      %v10963 = vpop.f32.mrb[0].mxu0
      %v10964 = vadd.f32 %v10284, %v10963
      %v10965 = vpop.f32.mrb[0].mxu0
      %v10966 = vadd.f32 %v10280, %v10965
      %v10967 = vpop.f32.mrb[0].mxu0
      %v10968 = vadd.f32 %v10284, %v10967
      %10969 = vdwg.mxu0
      %10970 = vmatprep.subr.bf16.mxu0 %v10704
      %10971 = vmatpush1.bf16.msra.mxu0 %v10703
      %10972 = vmatprep.subr.bf16.mxu0 %v10706
      %10973 = vmatpush1.bf16.msra.mxu0 %v10705
      %10974 = vmatprep.subr.bf16.mxu0 %v10708
      %10975 = vmatpush1.bf16.msra.mxu0 %v10707
      %10976 = vmatprep.subr.bf16.mxu0 %v10710
      %10977 = vmatpush1.bf16.msra.mxu0 %v10709
      %10978 = vmatprep.subr.bf16.mxu0 %v10712
      %10979 = vmatpush1.bf16.msra.mxu0 %v10711
      %10980 = vmatprep.subr.bf16.mxu0 %v10714
      %10981 = vmatpush1.bf16.msra.mxu0 %v10713
      %10982 = vmatprep.subr.bf16.mxu0 %v10716
      %10983 = vmatpush1.bf16.msra.mxu0 %v10715
      %10984 = vmatprep.subr.bf16.mxu0 %v10718
      %10985 = vmatpush1.bf16.msra.mxu0 %v10717
      %10986 = vmatprep.subr.bf16.mxu0 %v10720
      %10987 = vmatpush1.bf16.msra.mxu0 %v10719
      %10988 = vmatprep.subr.bf16.mxu0 %v10722
      %10989 = vmatpush1.bf16.msra.mxu0 %v10721
      %10990 = vmatprep.subr.bf16.mxu0 %v10724
      %10991 = vmatpush1.bf16.msra.mxu0 %v10723
      %10992 = vmatprep.subr.bf16.mxu0 %v10726
      %10993 = vmatpush1.bf16.msra.mxu0 %v10725
      %10994 = vmatprep.subr.bf16.mxu0 %v10728
      %10995 = vmatpush1.bf16.msra.mxu0 %v10727
      %10996 = vmatprep.subr.bf16.mxu0 %v10730
      %10997 = vmatpush1.bf16.msra.mxu0 %v10729
      %10998 = vmatprep.subr.bf16.mxu0 %v10732
      %10999 = vmatpush1.bf16.msra.mxu0 %v10731
      %11000 = vmatprep.subr.bf16.mxu0 %v10734
      %11001 = vmatpush1.bf16.msra.mxu0 %v10733
      %11002 = vmatprep.mubr.bf16.mxu0 %v10142
      %11003 = vmatmul.mubr.bf16.gmra.mrb[0].mxu0 %v10141
      %v11004 = vpop.f32.mrb[0].mxu0
      %v11005 = vadd.f32 %v10962, %v11004
      %v11006 = vpop.f32.mrb[0].mxu0
      %v11007 = vadd.f32 %v10964, %v11006
      %v11008 = vpop.f32.mrb[0].mxu0
      %v11009 = vadd.f32 %v10966, %v11008
      %v11010 = vpop.f32.mrb[0].mxu0
      %v11011 = vadd.f32 %v10968, %v11010
      %11012 = vdwg.mxu0
      %11013 = vmatprep.subr.bf16.mxu0 %v10736
      %11014 = vmatpush1.bf16.msra.mxu0 %v10735
      %11015 = vmatprep.subr.bf16.mxu0 %v10738
      %11016 = vmatpush1.bf16.msra.mxu0 %v10737
      %11017 = vmatprep.subr.bf16.mxu0 %v10740
      %11018 = vmatpush1.bf16.msra.mxu0 %v10739
      %11019 = vmatprep.subr.bf16.mxu0 %v10742
      %11020 = vmatpush1.bf16.msra.mxu0 %v10741
      %11021 = vmatprep.subr.bf16.mxu0 %v10744
      %11022 = vmatpush1.bf16.msra.mxu0 %v10743
      %11023 = vmatprep.subr.bf16.mxu0 %v10746
      %11024 = vmatpush1.bf16.msra.mxu0 %v10745
      %11025 = vmatprep.subr.bf16.mxu0 %v10748
      %11026 = vmatpush1.bf16.msra.mxu0 %v10747
      %11027 = vmatprep.subr.bf16.mxu0 %v10750
      %11028 = vmatpush1.bf16.msra.mxu0 %v10749
      %11029 = vmatprep.subr.bf16.mxu0 %v10752
      %11030 = vmatpush1.bf16.msra.mxu0 %v10751
      %11031 = vmatprep.subr.bf16.mxu0 %v10754
      %11032 = vmatpush1.bf16.msra.mxu0 %v10753
      %11033 = vmatprep.subr.bf16.mxu0 %v10756
      %11034 = vmatpush1.bf16.msra.mxu0 %v10755
      %11035 = vmatprep.subr.bf16.mxu0 %v10758
      %11036 = vmatpush1.bf16.msra.mxu0 %v10757
      %11037 = vmatprep.subr.bf16.mxu0 %v10760
      %11038 = vmatpush1.bf16.msra.mxu0 %v10759
      %11039 = vmatprep.subr.bf16.mxu0 %v10762
      %11040 = vmatpush1.bf16.msra.mxu0 %v10761
      %11041 = vmatprep.subr.bf16.mxu0 %v10764
      %11042 = vmatpush1.bf16.msra.mxu0 %v10763
      %11043 = vmatprep.subr.bf16.mxu0 %v10766
      %11044 = vmatpush1.bf16.msra.mxu0 %v10765
      %11045 = vmatprep.mubr.bf16.mxu0 %v10144
      %11046 = vmatmul.mubr.bf16.gmra.mrb[0].mxu0 %v10143
      %v11047 = vpop.f32.mrb[0].mxu0
      %v11048 = vadd.f32 %v11005, %v11047
      %v11049 = vpop.f32.mrb[0].mxu0
      %v11050 = vadd.f32 %v11007, %v11049
      %v11051 = vpop.f32.mrb[0].mxu0
      %v11052 = vadd.f32 %v11009, %v11051
      %v11053 = vpop.f32.mrb[0].mxu0
      %v11054 = vadd.f32 %v11011, %v11053
      %11055 = vdwg.mxu0
      %11056 = vmatprep.subr.bf16.mxu0 %v10768
      %11057 = vmatpush1.bf16.msra.mxu0 %v10767
      %11058 = vmatprep.subr.bf16.mxu0 %v10770
      %11059 = vmatpush1.bf16.msra.mxu0 %v10769
      %11060 = vmatprep.subr.bf16.mxu0 %v10772
      %11061 = vmatpush1.bf16.msra.mxu0 %v10771
      %11062 = vmatprep.subr.bf16.mxu0 %v10774
      %11063 = vmatpush1.bf16.msra.mxu0 %v10773
      %11064 = vmatprep.subr.bf16.mxu0 %v10776
      %11065 = vmatpush1.bf16.msra.mxu0 %v10775
      %11066 = vmatprep.subr.bf16.mxu0 %v10778
      %11067 = vmatpush1.bf16.msra.mxu0 %v10777
      %11068 = vmatprep.subr.bf16.mxu0 %v10780
      %11069 = vmatpush1.bf16.msra.mxu0 %v10779
      %11070 = vmatprep.subr.bf16.mxu0 %v10782
      %11071 = vmatpush1.bf16.msra.mxu0 %v10781
      %11072 = vmatprep.subr.bf16.mxu0 %v10784
      %11073 = vmatpush1.bf16.msra.mxu0 %v10783
      %11074 = vmatprep.subr.bf16.mxu0 %v10786
      %11075 = vmatpush1.bf16.msra.mxu0 %v10785
      %11076 = vmatprep.subr.bf16.mxu0 %v10788
      %11077 = vmatpush1.bf16.msra.mxu0 %v10787
      %11078 = vmatprep.subr.bf16.mxu0 %v10790
      %11079 = vmatpush1.bf16.msra.mxu0 %v10789
      %11080 = vmatprep.subr.bf16.mxu0 %v10792
      %11081 = vmatpush1.bf16.msra.mxu0 %v10791
      %11082 = vmatprep.subr.bf16.mxu0 %v10794
      %11083 = vmatpush1.bf16.msra.mxu0 %v10793
      %11084 = vmatprep.subr.bf16.mxu0 %v10796
      %11085 = vmatpush1.bf16.msra.mxu0 %v10795
      %11086 = vmatprep.subr.bf16.mxu0 %v10798
      %11087 = vmatpush1.bf16.msra.mxu0 %v10797
      %11088 = vmatprep.mubr.bf16.mxu0 %v10146
      %11089 = vmatmul.mubr.bf16.gmra.mrb[0].mxu0 %v10145
      %v11090 = vpop.f32.mrb[0].mxu0
      %v11091 = vadd.f32 %v11048, %v11090
      %v11092 = vpop.f32.mrb[0].mxu0
      %v11093 = vadd.f32 %v11050, %v11092
      %v11094 = vpop.f32.mrb[0].mxu0
      %v11095 = vadd.f32 %v11052, %v11094
      %v11096 = vpop.f32.mrb[0].mxu0
      %v11097 = vadd.f32 %v11054, %v11096
      %11098 = vdwg.mxu0
      %v11099 = vrcp.pop 10.0
      %v11100 = vmul.f32 %v11093, %v11099
      %v11101 = vmul.f32 %v11097, %v11099
      %v11102 = vmul.f32 %v11100, 1.442695
      %v11103 = vpow.pop %v11102
      %v11104 = vmul.f32 %v11101, 1.442695
      %v11105 = vpow.pop %v11104
      %v11106 = vadd.f32 %v11103, 1.0
      %v11107 = vadd.f32 %v11105, 1.0
      %v11108 = vld [vmem:[%s9] sm:$0x1]
      %v11110 = vlaneseq
      %v11111 = vshrl.u32 %v11110, 7
      %v11112 = vsub.s32 0, %v11111
      %v11113 = vrot.slane %v11108, %v11112
      %v11115 = vsub.f32 %v11113, %v11091
      %v11116 = vsub.f32 %v11113, %v11095
      %v11117 = vrcp.pop %v11106
      %v11118 = vmul.f32 %v11115, %v11117
      %v11119 = vrcp.pop %v11107
      %v11120 = vmul.f32 %v11116, %v11119
      %v11121 = vmul.f32 %v11118, %v11118
      %v11122 = vmul.f32 %v11120, %v11120
      %v11123 = vsub.f32 0.0, %v11121
      %v11124 = vsub.f32 0.0, %v11122
      %v11125 = vmul.f32 %v11123, 1.442695
      %v11126 = vpow.pop %v11125
      %v11127 = vmul.f32 %v11124, 1.442695
      %v11128 = vpow.pop %v11127
      %v11129 = vld [vmem:[%s10] sm:$0xff]
      %v11130 = vld [vmem:[%s10 + $0x8] sm:$0xff]
      %v11131 = vld [vmem:[%s10 + $0x10] sm:$0xff]
      %v11132 = vld [vmem:[%s10 + $0x18] sm:$0xff]
      %v11133 = vld [vmem:[%s10 + $0x20] sm:$0xff]
      %v11134 = vld [vmem:[%s10 + $0x28] sm:$0xff]
      %v11135 = vld [vmem:[%s10 + $0x30] sm:$0xff]
      %v11136 = vld [vmem:[%s10 + $0x38] sm:$0xff]
      %v11137 = vld [vmem:[%s10 + $0x40] sm:$0xff]
      %v11138 = vld [vmem:[%s10 + $0x48] sm:$0xff]
      %v11139 = vld [vmem:[%s10 + $0x50] sm:$0xff]
      %v11140 = vld [vmem:[%s10 + $0x58] sm:$0xff]
      %v11141 = vld [vmem:[%s10 + $0x60] sm:$0xff]
      %v11142 = vld [vmem:[%s10 + $0x68] sm:$0xff]
      %v11143 = vld [vmem:[%s10 + $0x70] sm:$0xff]
      %v11144 = vld [vmem:[%s10 + $0x78] sm:$0xff]
      %11145 = vmatprep.subr.mxu0 0.0
      %11146 = vmatpush1.msra.mxu0 %v11129
      %11147 = vmatprep.subr.mxu0 0.0
      %11148 = vmatpush1.msra.mxu0 %v11130
      %11149 = vmatprep.subr.mxu0 0.0
      %11150 = vmatpush1.msra.mxu0 %v11131
      %11151 = vmatprep.subr.mxu0 0.0
      %11152 = vmatpush1.msra.mxu0 %v11132
      %11153 = vmatprep.subr.mxu0 0.0
      %11154 = vmatpush1.msra.mxu0 %v11133
      %11155 = vmatprep.subr.mxu0 0.0
      %11156 = vmatpush1.msra.mxu0 %v11134
      %11157 = vmatprep.subr.mxu0 0.0
      %11158 = vmatpush1.msra.mxu0 %v11135
      %11159 = vmatprep.subr.mxu0 0.0
      %11160 = vmatpush1.msra.mxu0 %v11136
      %11161 = vmatprep.subr.mxu0 0.0
      %11162 = vmatpush1.msra.mxu0 %v11137
      %11163 = vmatprep.subr.mxu0 0.0
      %11164 = vmatpush1.msra.mxu0 %v11138
      %11165 = vmatprep.subr.mxu0 0.0
      %11166 = vmatpush1.msra.mxu0 %v11139
      %11167 = vmatprep.subr.mxu0 0.0
      %11168 = vmatpush1.msra.mxu0 %v11140
      %11169 = vmatprep.subr.mxu0 0.0
      %11170 = vmatpush1.msra.mxu0 %v11141
      %11171 = vmatprep.subr.mxu0 0.0
      %11172 = vmatpush1.msra.mxu0 %v11142
      %11173 = vmatprep.subr.mxu0 0.0
      %11174 = vmatpush1.msra.mxu0 %v11143
      %11175 = vmatprep.subr.mxu0 0.0
      %11176 = vmatpush1.msra.mxu0 %v11144
      %11177 = vmatprep.subr.mxu0 0.0
      %11178 = vmatpush1.msra.mxu0 0.0
      %11179 = vmatprep.subr.mxu0 0.0
      %11180 = vmatpush1.msra.mxu0 0.0
      %11181 = vmatprep.subr.mxu0 0.0
      %11182 = vmatpush1.msra.mxu0 0.0
      %11183 = vmatprep.subr.mxu0 0.0
      %11184 = vmatpush1.msra.mxu0 0.0
      %11185 = vmatprep.subr.mxu0 0.0
      %11186 = vmatpush1.msra.mxu0 0.0
      %11187 = vmatprep.subr.mxu0 0.0
      %11188 = vmatpush1.msra.mxu0 0.0
      %11189 = vmatprep.subr.mxu0 0.0
      %11190 = vmatpush1.msra.mxu0 0.0
      %11191 = vmatprep.subr.mxu0 0.0
      %11192 = vmatpush1.msra.mxu0 0.0
      %11193 = vmatprep.subr.mxu0 0.0
      %11194 = vmatpush1.msra.mxu0 0.0
      %11195 = vmatprep.subr.mxu0 0.0
      %11196 = vmatpush1.msra.mxu0 0.0
      %11197 = vmatprep.subr.mxu0 0.0
      %11198 = vmatpush1.msra.mxu0 0.0
      %11199 = vmatprep.subr.mxu0 0.0
      %11200 = vmatpush1.msra.mxu0 0.0
      %11201 = vmatprep.subr.mxu0 0.0
      %11202 = vmatpush1.msra.mxu0 0.0
      %11203 = vmatprep.subr.mxu0 0.0
      %11204 = vmatpush1.msra.mxu0 0.0
      %11205 = vmatprep.subr.mxu0 0.0
      %11206 = vmatpush1.msra.mxu0 0.0
      %11207 = vmatprep.subr.mxu0 0.0
      %11208 = vmatpush1.msra.mxu0 0.0
      %11209 = vmatprep.mubr.f32.mxu0 0.0
      %11210 = vmatmul.mubr.f32.gmra.mrb[0].mxu0 %v11126
      %v11211 = vpop.f32.mrb[0].mxu0
      %v11212 = vadd.f32 0.0, %v11211
      %v11213 = vpop.f32.mrb[0].mxu0
      %11214 = vmatprep.mubr.f32.mxu0 0.0
      %11215 = vmatmul.mubr.f32.gmra.mrb[0].mxu0 %v11128
      %v11216 = vpop.f32.mrb[0].mxu0
      %v11217 = vadd.f32 0.0, %v11216
      %v11218 = vpop.f32.mrb[0].mxu0
      %11219 = vdwg.mxu0
      %v11220 = vrcp.pop %v11212
      %v11221 = vmul.f32 %v11126, %v11220
      %v11222 = vrcp.pop %v11217
      %v11223 = vmul.f32 %v11128, %v11222
      %11224 = vst [vmem:[%s391] sm:$0xff] %v11221
      %11225 = vst [vmem:[%s391 + $0x8] sm:$0xff] %v11223
      %s11226 = smul.u32 2, %s22
      %p11227 = scmp.lt.s32.totalorder %s11226, 3
      %s11228 = scalar_select %p11227, %s11226, 3
      %s11229 = smul.addr %s11228, 8
      %s11230 = scalar_lea.vmem %s11, %s11229
      // Predicated region
      $region65: #{_lambda_.1} parent=63 // pred_check
        %p11231 = pneg %p276
      $region66: #{_lambda_.1} parent=63 // pred_check_branch
        %11233 = sbr.rel (%p11231) target = $region68
      $region67: #{_lambda_.1} parent=63 // pred_region
        %s11234 = smul.u32 2, %s22
      $region68: #{_lambda_.1} parent=63 // pred_fallthru
        _
    $region64: #{_lambda_.1} parent=5 // pred_fallthru
      _
    %p11235 = scmp.le.s32.totalorder 2, %s17
    // Predicated region
    $region69: #{_lambda_.1} parent=5 // pred_check
      %p11236 = pneg %p11235
    $region70: #{_lambda_.1} parent=5 // pred_check_branch
      %11238 = sbr.rel (%p11236) target = $region72
    $region71: #{_lambda_.1} parent=5 // pred_region
      %s11239 = ssub.s32 %s17, 2
      // Predicated region
      $region73: #{_lambda_.1} parent=71 // pred_check
        %p11240 = pneg %p282
      $region74: #{_lambda_.1} parent=71 // pred_check_branch
        %11242 = sbr.rel (%p11240) target = $region76
      $region75: #{_lambda_.1} parent=71 // pred_region
        %s11243 = smul.u32 2, %s23
        %p11244 = scmp.lt.s32.totalorder %s11243, 3
        %s11245 = scalar_select %p11244, %s11243, 3
        %s11246 = smul.addr %s11245, 8
        %s11247 = scalar_lea.vmem %s11, %s11246
      $region76: #{_lambda_.1} parent=71 // pred_fallthru
        _
    $region72: #{_lambda_.1} parent=5 // pred_fallthru
      _
  $region6: #{_lambda_.1} parent=0 // loop_footer
    %s21 = sadd.s32 1, %s17
  $region7: #{_lambda_.1} parent=0 // loop_footer_branch
    %16 = sbr.rel target = $region3
  $region8: #{_lambda_.1} parent=0 // loop_exit
    _

</llo_original>
